<compile_context>
chip_gen: v5e
topology: v5e:2x2
jax: 0.10.0
libtpu: 0.0.40
codegen_flags: <defaults>
</compile_context>

<pallas_src>
import functools

import jax
import jax.numpy as jnp
from jax.experimental import pallas as pl
from jax.experimental.pallas import tpu as pltpu

_LANE = 128
_VMEM_LIMIT = 32 * 1024 * 1024


def _round_up(x, m):
    return (x + m - 1) // m * m


# ----------------------------- Pallas kernels ------------------------------

def _make_conv_kernel(D, H, W, *, fuse_affine, fuse_stats, fuse_skip, pad_out):
    """3x3x3 conv (padding=1) + bias + ReLU for one (n, d) output depth slice.

    grid = (N, D, 3); the last axis (kd) is the depth-tap reduction axis.
    fuse_affine: apply per-channel a*x+b (BatchNorm) to the interior of the
                 input slab before the matmuls (halo border stays zero).
    fuse_stats : emit per-(n, d) sum / sum-of-squares of the ReLU output.
    fuse_skip  : add the skip tensor (interior of a padded slab) to the result.
    pad_out    : write the result into a spatially padded (H+2, W+2) slab at
                 padded depth d+1 so the next conv consumes it directly.
    """

    def kernel(*refs):
        i = 0
        if fuse_affine:
            a_ref, b_ref = refs[0], refs[1]
            i = 2
        x_ref, w_ref, bias_ref = refs[i], refs[i + 1], refs[i + 2]
        i += 3
        if fuse_skip:
            skip_ref = refs[i]
            i += 1
        out_ref = refs[i]
        i += 1
        if fuse_stats:
            sum_ref, ssq_ref = refs[i], refs[i + 1]
            i += 2
        acc_ref = refs[i]
        slab_ref = refs[i + 1] if fuse_affine else None

        d = pl.program_id(1)
        kd = pl.program_id(2)
        cin_p = w_ref.shape[1]
        cout_p = w_ref.shape[2]

        @pl.when(kd == 0)
        def _():
            acc_ref[...] = jnp.zeros_like(acc_ref)
            if fuse_affine:
                # Zero the staging slab so its 1-voxel halo border is 0.
                slab_ref[...] = jnp.zeros_like(slab_ref)

        pd = d + kd                                   # padded-depth index read
        depth_ok = jnp.logical_and(pd >= 1, pd <= D)  # skip pad / unwritten slabs

        @pl.when(depth_ok)
        def _():
            if fuse_affine:
                # BatchNorm affine fused into the conv input load; only the
                # interior is written, the border of slab_ref stays zero
                # (matches torch zero-padding of BN(x1)).
                a = a_ref[...].reshape(1, 1, cin_p)
                b = b_ref[...].reshape(1, 1, cin_p)
                xi = x_ref[0, 0, 1:H + 1, 1:W + 1, :].astype(jnp.float32)
                slab_ref[1:H + 1, 1:W + 1, :] = (xi * a + b).astype(jnp.bfloat16)

            acc = acc_ref[...]
            for kh in range(3):
                for kw in range(3):
                    if fuse_affine:
                        lhs = slab_ref[kh:kh + H, kw:kw + W, :]
                    else:
                        lhs = x_ref[0, 0, kh:kh + H, kw:kw + W, :]
                    lhs = lhs.reshape(H * W, cin_p)
                    rhs = w_ref[9 * kd + 3 * kh + kw]          # (Cin_p, Cout_p) bf16
                    acc = acc + jnp.dot(lhs, rhs,
                                        preferred_element_type=jnp.float32)
            acc_ref[...] = acc

        @pl.when(kd == 2)
        def _():
            r = jnp.maximum(acc_ref[...] + bias_ref[...], 0.0)   # (H*W, Cout_p) f32
            if fuse_stats:
                sum_ref[0, 0] = jnp.sum(r, axis=0, keepdims=True)
                ssq_ref[0, 0] = jnp.sum(r * r, axis=0, keepdims=True)
            if fuse_skip:
                skip = skip_ref[0, 0, 1:H + 1, 1:W + 1, :]
                r = r + skip.reshape(H * W, cout_p).astype(jnp.float32)
            res = r.reshape(H, W, cout_p).astype(out_ref.dtype)
            if pad_out:
                out_ref[...] = jnp.zeros_like(out_ref)           # zero halo border
                out_ref[0, 0, 1:H + 1, 1:W + 1, :] = res
            else:
                out_ref[0, 0] = res

    return kernel


def _maxpool_kernel(x_ref, o_ref):
    # block: (2, Hp, 2, Wp, 2, C) -> (1, Hp, Wp, C); C is lane-dense (128k).
    a = x_ref[0]                          # (Hp, 2, Wp, 2, C)
    b = x_ref[1]
    m = jnp.maximum(a, b)                 # pool over D
    m = jnp.maximum(m[:, 0], m[:, 1])     # pool over H -> (Hp, Wp, 2, C)
    m = jnp.max(m, axis=2)                # pool over W -> (Hp, Wp, C)
    o_ref[0] = m


# ------------------------------ host wrappers -------------------------------

def _conv_block(x_p, w, bias, *, D, H, W, a=None, b=None, skip=None,
                fuse_stats=False, pad_out=True, out_dtype=jnp.bfloat16):
    """x_p: (N, D+2, H+2, W+2, Cin_p) bf16 spatially padded, channels last."""
    N = x_p.shape[0]
    cin_p = x_p.shape[-1]
    cout_p = w.shape[-1]
    fuse_affine = a is not None
    fuse_skip = skip is not None

    kernel = _make_conv_kernel(D, H, W, fuse_affine=fuse_affine,
                               fuse_stats=fuse_stats, fuse_skip=fuse_skip,
                               pad_out=pad_out)

    inputs, in_specs = [], []
    if fuse_affine:
        in_specs += [pl.BlockSpec((1, cin_p), lambda n, d, kd: (0, 0)),
                     pl.BlockSpec((1, cin_p), lambda n, d, kd: (0, 0))]
        inputs += [a, b]
    in_specs += [
        pl.BlockSpec((1, 1, H + 2, W + 2, cin_p),
                     lambda n, d, kd: (n, d + kd, 0, 0, 0)),       # halo slab
        pl.BlockSpec((27, cin_p, cout_p), lambda n, d, kd: (0, 0, 0)),  # resident
        pl.BlockSpec((1, cout_p), lambda n, d, kd: (0, 0)),
    ]
    inputs += [x_p, w, bias]
    if fuse_skip:
        in_specs.append(pl.BlockSpec((1, 1, H + 2, W + 2, cout_p),
                                     lambda n, d, kd: (n, d + 1, 0, 0, 0)))
        inputs.append(skip)

    if pad_out:
        out_shapes = [jax.ShapeDtypeStruct((N, D + 2, H + 2, W + 2, cout_p),
                                           out_dtype)]
        out_specs = [pl.BlockSpec((1, 1, H + 2, W + 2, cout_p),
                                  lambda n, d, kd: (n, d + 1, 0, 0, 0))]
    else:
        out_shapes = [jax.ShapeDtypeStruct((N, D, H, W, cout_p), out_dtype)]
        out_specs = [pl.BlockSpec((1, 1, H, W, cout_p),
                                  lambda n, d, kd: (n, d, 0, 0, 0))]
    if fuse_stats:
        out_shapes += [jax.ShapeDtypeStruct((N, D, 1, cout_p), jnp.float32)] * 2
        out_specs += [pl.BlockSpec((1, 1, 1, cout_p),
                                   lambda n, d, kd: (n, d, 0, 0))] * 2

    scratch = [pltpu.VMEM((H * W, cout_p), jnp.float32)]
    if fuse_affine:
        scratch.append(pltpu.VMEM((H + 2, W + 2, cin_p), jnp.bfloat16))

    multi = len(out_shapes) > 1
    return pl.pallas_call(
        kernel,
        out_shape=tuple(out_shapes) if multi else out_shapes[0],
        grid=(N, D, 3),
        in_specs=in_specs,
        out_specs=tuple(out_specs) if multi else out_specs[0],
        scratch_shapes=scratch,
        compiler_params=pltpu.CompilerParams(
            dimension_semantics=("parallel", "parallel", "arbitrary"),
            vmem_limit_bytes=_VMEM_LIMIT),
    )(*inputs)


def _maxpool2(x):
    """x: (N, D, H, W, C) -> (N, D//2, H//2, W//2, C), 2x2x2 / stride-2 max pool."""
    N, D, H, W, C = x.shape
    Dp, Hp, Wp = D // 2, H // 2, W // 2
    xr = x.reshape(N * D, Hp, 2, Wp, 2, C)
    out = pl.pallas_call(
        _maxpool_kernel,
        out_shape=jax.ShapeDtypeStruct((N * Dp, Hp, Wp, C), x.dtype),
        grid=(N * Dp,),
        in_specs=[pl.BlockSpec((2, Hp, 2, Wp, 2, C),
                               lambda i: (i, 0, 0, 0, 0, 0))],
        out_specs=pl.BlockSpec((1, Hp, Wp, C), lambda i: (i, 0, 0, 0)),
        compiler_params=pltpu.CompilerParams(
            dimension_semantics=("parallel",),
            vmem_limit_bytes=_VMEM_LIMIT),
    )(xr)
    return out.reshape(N, Dp, Hp, Wp, C)


def _prep_conv_params(w, bias, cin_p, cout_p):
    _, _, _, cin, cout = w.shape
    wp = jnp.pad(w, ((0, 0), (0, 0), (0, 0),
                     (0, cin_p - cin), (0, cout_p - cout)))
    wp = wp.reshape(27, cin_p, cout_p).astype(jnp.bfloat16)
    bp = jnp.pad(bias, (0, cout_p - cout)).reshape(1, cout_p).astype(jnp.float32)
    return wp, bp


# ------------------------------ DownBlock ----------------------------------

def init_params(key, in_ch, out_ch):
    k1, k2, k3, k4, k5, k6 = jax.random.split(key, 6)
    # Weights stored as (kd, kh, kw, Cin, Cout); synthetic deterministic init.
    return {
        "w1": 0.1 * jax.random.normal(k1, (3, 3, 3, in_ch, out_ch), jnp.float32),
        "b1": 0.05 * jax.random.normal(k2, (out_ch,), jnp.float32),
        "w2": 0.1 * jax.random.normal(k3, (3, 3, 3, out_ch, out_ch), jnp.float32),
        "b2": 0.05 * jax.random.normal(k4, (out_ch,), jnp.float32),
        "w3": 0.1 * jax.random.normal(k5, (3, 3, 3, out_ch, out_ch), jnp.float32),
        "b3": 0.05 * jax.random.normal(k6, (out_ch,), jnp.float32),
        "gamma": jnp.ones((out_ch,), jnp.float32),   # nn.BatchNorm3d default
        "beta": jnp.zeros((out_ch,), jnp.float32),
    }


def down_block_forward(x_ncdhw, params, eps=1e-5):
    """PyTorch DownBlock.forward (BatchNorm3d in training mode), NCDHW in/out."""
    x = jnp.transpose(x_ncdhw, (0, 2, 3, 4, 1)).astype(jnp.float32)   # NDHWC
    N, D, H, W, cin = x.shape
    cout = params["b1"].shape[0]
    cin_p = _round_up(cin, _LANE)
    cout_p = _round_up(cout, _LANE)

    w1, b1 = _prep_conv_params(params["w1"], params["b1"], cin_p, cout_p)
    w2, b2 = _prep_conv_params(params["w2"], params["b2"], cout_p, cout_p)
    w3, b3 = _prep_conv_params(params["w3"], params["b3"], cout_p, cout_p)
    gamma = jnp.pad(params["gamma"], (0, cout_p - cout)).reshape(1, cout_p)
    beta = jnp.pad(params["beta"], (0, cout_p - cout)).reshape(1, cout_p)

    # Pad the external input once (spatial halo + lane-dense channels), bf16.
    xp = jnp.pad(x, ((0, 0), (1, 1), (1, 1), (1, 1),
                     (0, cin_p - cin))).astype(jnp.bfloat16)

    # x1 = relu(conv1(x)): padded bf16 output + fused per-(n, d) BN statistics.
    x1p, psum, pssq = _conv_block(xp, w1, b1, D=D, H=H, W=W,
                                  fuse_stats=True, pad_out=True)

    # BatchNorm3d training-mode batch statistics (biased variance).
    m = float(N * D * H * W)
    mean = jnp.sum(psum, axis=(0, 1, 2)).reshape(1, cout_p) / m
    var = jnp.sum(pssq, axis=(0, 1, 2)).reshape(1, cout_p) / m - mean * mean
    # TODO(synk): E[x^2]-E[x]^2 can cancel for large activations; a two-pass /
    # Welford scheme would be more robust.  Clamp keeps rsqrt well defined.
    var = jnp.maximum(var, 0.0)
    # TODO(synk): running_mean / running_var buffer updates (torch module
    # state) are omitted; only the batch-normalized forward value is computed.
    a = gamma * jax.lax.rsqrt(var + eps)
    b = beta - mean * a

    # x2 = relu(conv2(BN(x1)))  -- BN affine fused into conv2's input load.
    # (stats come from the f32 epilogue; conv2 consumes the bf16-stored x1.)
    x2p = _conv_block(x1p, w2, b2, D=D, H=H, W=W, a=a, b=b, pad_out=True)

    # x2 = relu(conv3(x2)) + x1  -- skip add (pre-BN x1, as in the torch
    # reference) fused into conv3's epilogue; unpadded f32 output.
    y = _conv_block(x2p, w3, b3, D=D, H=H, W=W, skip=x1p,
                    pad_out=False, out_dtype=jnp.float32)

    # maxpool(x1 + x2), 2x2x2 / stride 2.
    pooled = _maxpool2(y)                                  # (N, Dp, Hp, Wp, Cp)
    out = pooled[..., :cout]
    return jnp.transpose(out, (0, 4, 1, 2, 3))             # back to NCDHW


if __name__ == "__main__":
    N, Cin, Cout, D, H, W = 2, 4, 8, 8, 8, 8
    key = jax.random.PRNGKey(0)
    kx, kp = jax.random.split(key)
    x = jax.random.normal(kx, (N, Cin, D, H, W), jnp.float32)          # NCDHW
    params = init_params(kp, Cin, Cout)

    fwd = jax.jit(functools.partial(down_block_forward, params=params))
    out = fwd(x)
    jax.block_until_ready(out)
    assert out.shape == (N, Cout, D // 2, H // 2, W // 2), out.shape
    assert bool(jnp.all(jnp.isfinite(out)))
    print("KERNEL_OK")
</pallas_src>

<mosaic_0001>
module attributes {stable_mosaic.version = 11 : i64} {
  func.func @kernel(%arg0: i32, %arg1: i32, %arg2: i32, %arg3: memref<1x1x10x10x128xbf16, #tpu.memory_space<vmem>>, %arg4: memref<27x128x128xbf16, #tpu.memory_space<vmem>>, %arg5: memref<1x128xf32, #tpu.memory_space<vmem>>, %arg6: memref<1x1x10x10x128xbf16, #tpu.memory_space<vmem>>, %arg7: memref<1x1x1x128xf32, #tpu.memory_space<vmem>>, %arg8: memref<1x1x1x128xf32, #tpu.memory_space<vmem>>, %arg9: memref<64x128xf32, #tpu.memory_space<vmem>>) attributes {dimension_semantics = [#tpu.dimension_semantics<parallel>, #tpu.dimension_semantics<parallel>, #tpu.dimension_semantics<arbitrary>], iteration_bounds = array<i64: 2, 8, 3>, scalar_prefetch = 0 : i64, scratch_operands = 1 : i64, tpu.core_type = #tpu.core_type<tc>, window_params = [{transform_indices = @transform_0, window_bounds = array<i64: 1, 1, 10, 10, 128>}, {pipeline_mode = #tpu.pipeline_mode<synchronous>, transform_indices = @transform_1, window_bounds = array<i64: 27, 128, 128>}, {pipeline_mode = #tpu.pipeline_mode<synchronous>, transform_indices = @transform_2, window_bounds = array<i64: 1, 128>}, {transform_indices = @transform_3, window_bounds = array<i64: 1, 1, 10, 10, 128>}, {transform_indices = @transform_4, window_bounds = array<i64: 1, 1, 1, 128>}, {transform_indices = @transform_5, window_bounds = array<i64: 1, 1, 1, 128>}]} {
    %c0_i32 = arith.constant 0 : i32
    %0 = arith.cmpi eq, %arg2, %c0_i32 : i32
    %1 = arith.extui %0 : i1 to i32
    %c0_i32_0 = arith.constant 0 : i32
    %2 = arith.cmpi ne, %1, %c0_i32_0 : i32
    scf.if %2 {
      %cst = arith.constant 0.000000e+00 : f32
      %12 = vector.broadcast %cst : f32 to vector<64x128xf32>
      %c0 = arith.constant 0 : index
      %c0_3 = arith.constant 0 : index
      %13 = vector.load %arg9[%c0, %c0_3] : memref<64x128xf32, #tpu.memory_space<vmem>>, vector<64x128xf32>
      tpu.vector_store %arg9[%c0, %c0_3], %12 {strides = array<i32>} : memref<64x128xf32, #tpu.memory_space<vmem>>, vector<64x128xf32>,
    } else {
    }
    %3 = arith.addi %arg1, %arg2 : i32
    %c1_i32 = arith.constant 1 : i32
    %4 = arith.cmpi sge, %3, %c1_i32 : i32
    %c8_i32 = arith.constant 8 : i32
    %5 = arith.cmpi sle, %3, %c8_i32 : i32
    %6 = arith.andi %4, %5 : i1
    %7 = arith.extui %6 : i1 to i32
    %c0_i32_1 = arith.constant 0 : i32
    %8 = arith.cmpi ne, %7, %c0_i32_1 : i32
    scf.if %8 {
      %c0 = arith.constant 0 : index
      %c0_3 = arith.constant 0 : index
      %12 = vector.load %arg9[%c0, %c0_3] : memref<64x128xf32, #tpu.memory_space<vmem>>, vector<64x128xf32>
      %c0_4 = arith.constant 0 : index
      %c0_5 = arith.constant 0 : index
      %c0_6 = arith.constant 0 : index
      %c0_7 = arith.constant 0 : index
      %c0_8 = arith.constant 0 : index
      %13 = vector.load %arg3[%c0_4, %c0_5, %c0_6, %c0_7, %c0_8] : memref<1x1x10x10x128xbf16, #tpu.memory_space<vmem>>, vector<1x1x8x8x128xbf16>
      %14 = vector.shape_cast %13 : vector<1x1x8x8x128xbf16> to vector<8x8x128xbf16>
      %15 = vector.shape_cast %14 : vector<8x8x128xbf16> to vector<64x128xbf16>
      %c9_i32 = arith.constant 9 : i32
      %16 = arith.muli %c9_i32, %arg2 : i32
      %c0_i32_9 = arith.constant 0 : i32
      %17 = arith.addi %16, %c0_i32_9 : i32
      %c0_i32_10 = arith.constant 0 : i32
      %18 = arith.addi %17, %c0_i32_10 : i32
      %19 = arith.index_cast %18 : i32 to index
      %c0_11 = arith.constant 0 : index
      %c0_12 = arith.constant 0 : index
      %20 = vector.load %arg4[%19, %c0_11, %c0_12] : memref<27x128x128xbf16, #tpu.memory_space<vmem>>, vector<1x128x128xbf16>
      %21 = vector.shape_cast %20 : vector<1x128x128xbf16> to vector<128x128xbf16>
      %cst = arith.constant dense<0.000000e+00> : vector<64x128xf32>
      %22 = tpu.matmul %15, %21, %cst {dimension_numbers = #tpu.dot_dimension_numbers<[1], [0], [0], [1], [0, 0, 1, 1], [], []>} : vector<64x128xbf16>, vector<128x128xbf16>, vector<64x128xf32> -> vector<64x128xf32>
      %23 = arith.addf %12, %22 : vector<64x128xf32>
      %c0_13 = arith.constant 0 : index
      %c0_14 = arith.constant 0 : index
      %c0_15 = arith.constant 0 : index
      %c1 = arith.constant 1 : index
      %c0_16 = arith.constant 0 : index
      %24 = vector.load %arg3[%c0_13, %c0_14, %c0_15, %c1, %c0_16] : memref<1x1x10x10x128xbf16, #tpu.memory_space<vmem>>, vector<1x1x8x8x128xbf16>
      %25 = vector.shape_cast %24 : vector<1x1x8x8x128xbf16> to vector<8x8x128xbf16>
      %26 = vector.shape_cast %25 : vector<8x8x128xbf16> to vector<64x128xbf16>
      %c9_i32_17 = arith.constant 9 : i32
      %27 = arith.muli %c9_i32_17, %arg2 : i32
      %c0_i32_18 = arith.constant 0 : i32
      %28 = arith.addi %27, %c0_i32_18 : i32
      %c1_i32_19 = arith.constant 1 : i32
      %29 = arith.addi %28, %c1_i32_19 : i32
      %30 = arith.index_cast %29 : i32 to index
      %c0_20 = arith.constant 0 : index
      %c0_21 = arith.constant 0 : index
      %31 = vector.load %arg4[%30, %c0_20, %c0_21] : memref<27x128x128xbf16, #tpu.memory_space<vmem>>, vector<1x128x128xbf16>
      %32 = vector.shape_cast %31 : vector<1x128x128xbf16> to vector<128x128xbf16>
      %cst_22 = arith.constant dense<0.000000e+00> : vector<64x128xf32>
      %33 = tpu.matmul %26, %32, %cst_22 {dimension_numbers = #tpu.dot_dimension_numbers<[1], [0], [0], [1], [0, 0, 1, 1], [], []>} : vector<64x128xbf16>, vector<128x128xbf16>, vector<64x128xf32> -> vector<64x128xf32>
      %34 = arith.addf %23, %33 : vector<64x128xf32>
      %c0_23 = arith.constant 0 : index
      %c0_24 = arith.constant 0 : index
      %c0_25 = arith.constant 0 : index
      %c2 = arith.constant 2 : index
      %c0_26 = arith.constant 0 : index
      %35 = vector.load %arg3[%c0_23, %c0_24, %c0_25, %c2, %c0_26] : memref<1x1x10x10x128xbf16, #tpu.memory_space<vmem>>, vector<1x1x8x8x128xbf16>
      %36 = vector.shape_cast %35 : vector<1x1x8x8x128xbf16> to vector<8x8x128xbf16>
      %37 = vector.shape_cast %36 : vector<8x8x128xbf16> to vector<64x128xbf16>
      %c9_i32_27 = arith.constant 9 : i32
      %38 = arith.muli %c9_i32_27, %arg2 : i32
      %c0_i32_28 = arith.constant 0 : i32
      %39 = arith.addi %38, %c0_i32_28 : i32
      %c2_i32_29 = arith.constant 2 : i32
      %40 = arith.addi %39, %c2_i32_29 : i32
      %41 = arith.index_cast %40 : i32 to index
      %c0_30 = arith.constant 0 : index
      %c0_31 = arith.constant 0 : index
      %42 = vector.load %arg4[%41, %c0_30, %c0_31] : memref<27x128x128xbf16, #tpu.memory_space<vmem>>, vector<1x128x128xbf16>
      %43 = vector.shape_cast %42 : vector<1x128x128xbf16> to vector<128x128xbf16>
      %cst_32 = arith.constant dense<0.000000e+00> : vector<64x128xf32>
      %44 = tpu.matmul %37, %43, %cst_32 {dimension_numbers = #tpu.dot_dimension_numbers<[1], [0], [0], [1], [0, 0, 1, 1], [], []>} : vector<64x128xbf16>, vector<128x128xbf16>, vector<64x128xf32> -> vector<64x128xf32>
      %45 = arith.addf %34, %44 : vector<64x128xf32>
      %c0_33 = arith.constant 0 : index
      %c0_34 = arith.constant 0 : index
      %c1_35 = arith.constant 1 : index
      %c0_36 = arith.constant 0 : index
      %c0_37 = arith.constant 0 : index
      %46 = vector.load %arg3[%c0_33, %c0_34, %c1_35, %c0_36, %c0_37] : memref<1x1x10x10x128xbf16, #tpu.memory_space<vmem>>, vector<1x1x8x8x128xbf16>
      %47 = vector.shape_cast %46 : vector<1x1x8x8x128xbf16> to vector<8x8x128xbf16>
      %48 = vector.shape_cast %47 : vector<8x8x128xbf16> to vector<64x128xbf16>
      %c9_i32_38 = arith.constant 9 : i32
      %49 = arith.muli %c9_i32_38, %arg2 : i32
      %c3_i32 = arith.constant 3 : i32
      %50 = arith.addi %49, %c3_i32 : i32
      %c0_i32_39 = arith.constant 0 : i32
      %51 = arith.addi %50, %c0_i32_39 : i32
      %52 = arith.index_cast %51 : i32 to index
      %c0_40 = arith.constant 0 : index
      %c0_41 = arith.constant 0 : index
      %53 = vector.load %arg4[%52, %c0_40, %c0_41] : memref<27x128x128xbf16, #tpu.memory_space<vmem>>, vector<1x128x128xbf16>
      %54 = vector.shape_cast %53 : vector<1x128x128xbf16> to vector<128x128xbf16>
      %cst_42 = arith.constant dense<0.000000e+00> : vector<64x128xf32>
      %55 = tpu.matmul %48, %54, %cst_42 {dimension_numbers = #tpu.dot_dimension_numbers<[1], [0], [0], [1], [0, 0, 1, 1], [], []>} : vector<64x128xbf16>, vector<128x128xbf16>, vector<64x128xf32> -> vector<64x128xf32>
      %56 = arith.addf %45, %55 : vector<64x128xf32>
      %c0_43 = arith.constant 0 : index
      %c0_44 = arith.constant 0 : index
      %c1_45 = arith.constant 1 : index
      %c1_46 = arith.constant 1 : index
      %c0_47 = arith.constant 0 : index
      %57 = vector.load %arg3[%c0_43, %c0_44, %c1_45, %c1_46, %c0_47] : memref<1x1x10x10x128xbf16, #tpu.memory_space<vmem>>, vector<1x1x8x8x128xbf16>
      %58 = vector.shape_cast %57 : vector<1x1x8x8x128xbf16> to vector<8x8x128xbf16>
      %59 = vector.shape_cast %58 : vector<8x8x128xbf16> to vector<64x128xbf16>
      %c9_i32_48 = arith.constant 9 : i32
      %60 = arith.muli %c9_i32_48, %arg2 : i32
      %c3_i32_49 = arith.constant 3 : i32
      %61 = arith.addi %60, %c3_i32_49 : i32
      %c1_i32_50 = arith.constant 1 : i32
      %62 = arith.addi %61, %c1_i32_50 : i32
      %63 = arith.index_cast %62 : i32 to index
      %c0_51 = arith.constant 0 : index
      %c0_52 = arith.constant 0 : index
      %64 = vector.load %arg4[%63, %c0_51, %c0_52] : memref<27x128x128xbf16, #tpu.memory_space<vmem>>, vector<1x128x128xbf16>
      %65 = vector.shape_cast %64 : vector<1x128x128xbf16> to vector<128x128xbf16>
      %cst_53 = arith.constant dense<0.000000e+00> : vector<64x128xf32>
      %66 = tpu.matmul %59, %65, %cst_53 {dimension_numbers = #tpu.dot_dimension_numbers<[1], [0], [0], [1], [0, 0, 1, 1], [], []>} : vector<64x128xbf16>, vector<128x128xbf16>, vector<64x128xf32> -> vector<64x128xf32>
      %67 = arith.addf %56, %66 : vector<64x128xf32>
      %c0_54 = arith.constant 0 : index
      %c0_55 = arith.constant 0 : index
      %c1_56 = arith.constant 1 : index
      %c2_57 = arith.constant 2 : index
      %c0_58 = arith.constant 0 : index
      %68 = vector.load %arg3[%c0_54, %c0_55, %c1_56, %c2_57, %c0_58] : memref<1x1x10x10x128xbf16, #tpu.memory_space<vmem>>, vector<1x1x8x8x128xbf16>
      %69 = vector.shape_cast %68 : vector<1x1x8x8x128xbf16> to vector<8x8x128xbf16>
      %70 = vector.shape_cast %69 : vector<8x8x128xbf16> to vector<64x128xbf16>
      %c9_i32_59 = arith.constant 9 : i32
      %71 = arith.muli %c9_i32_59, %arg2 : i32
      %c3_i32_60 = arith.constant 3 : i32
      %72 = arith.addi %71, %c3_i32_60 : i32
      %c2_i32_61 = arith.constant 2 : i32
      %73 = arith.addi %72, %c2_i32_61 : i32
      %74 = arith.index_cast %73 : i32 to index
      %c0_62 = arith.constant 0 : index
      %c0_63 = arith.constant 0 : index
      %75 = vector.load %arg4[%74, %c0_62, %c0_63] : memref<27x128x128xbf16, #tpu.memory_space<vmem>>, vector<1x128x128xbf16>
      %76 = vector.shape_cast %75 : vector<1x128x128xbf16> to vector<128x128xbf16>
      %cst_64 = arith.constant dense<0.000000e+00> : vector<64x128xf32>
      %77 = tpu.matmul %70, %76, %cst_64 {dimension_numbers = #tpu.dot_dimension_numbers<[1], [0], [0], [1], [0, 0, 1, 1], [], []>} : vector<64x128xbf16>, vector<128x128xbf16>, vector<64x128xf32> -> vector<64x128xf32>
      %78 = arith.addf %67, %77 : vector<64x128xf32>
      %c0_65 = arith.constant 0 : index
      %c0_66 = arith.constant 0 : index
      %c2_67 = arith.constant 2 : index
      %c0_68 = arith.constant 0 : index
      %c0_69 = arith.constant 0 : index
      %79 = vector.load %arg3[%c0_65, %c0_66, %c2_67, %c0_68, %c0_69] : memref<1x1x10x10x128xbf16, #tpu.memory_space<vmem>>, vector<1x1x8x8x128xbf16>
      %80 = vector.shape_cast %79 : vector<1x1x8x8x128xbf16> to vector<8x8x128xbf16>
      %81 = vector.shape_cast %80 : vector<8x8x128xbf16> to vector<64x128xbf16>
      %c9_i32_70 = arith.constant 9 : i32
      %82 = arith.muli %c9_i32_70, %arg2 : i32
      %c6_i32 = arith.constant 6 : i32
      %83 = arith.addi %82, %c6_i32 : i32
      %c0_i32_71 = arith.constant 0 : i32
      %84 = arith.addi %83, %c0_i32_71 : i32
      %85 = arith.index_cast %84 : i32 to index
      %c0_72 = arith.constant 0 : index
      %c0_73 = arith.constant 0 : index
      %86 = vector.load %arg4[%85, %c0_72, %c0_73] : memref<27x128x128xbf16, #tpu.memory_space<vmem>>, vector<1x128x128xbf16>
      %87 = vector.shape_cast %86 : vector<1x128x128xbf16> to vector<128x128xbf16>
      %cst_74 = arith.constant dense<0.000000e+00> : vector<64x128xf32>
      %88 = tpu.matmul %81, %87, %cst_74 {dimension_numbers = #tpu.dot_dimension_numbers<[1], [0], [0], [1], [0, 0, 1, 1], [], []>} : vector<64x128xbf16>, vector<128x128xbf16>, vector<64x128xf32> -> vector<64x128xf32>
      %89 = arith.addf %78, %88 : vector<64x128xf32>
      %c0_75 = arith.constant 0 : index
      %c0_76 = arith.constant 0 : index
      %c2_77 = arith.constant 2 : index
      %c1_78 = arith.constant 1 : index
      %c0_79 = arith.constant 0 : index
      %90 = vector.load %arg3[%c0_75, %c0_76, %c2_77, %c1_78, %c0_79] : memref<1x1x10x10x128xbf16, #tpu.memory_space<vmem>>, vector<1x1x8x8x128xbf16>
      %91 = vector.shape_cast %90 : vector<1x1x8x8x128xbf16> to vector<8x8x128xbf16>
      %92 = vector.shape_cast %91 : vector<8x8x128xbf16> to vector<64x128xbf16>
      %c9_i32_80 = arith.constant 9 : i32
      %93 = arith.muli %c9_i32_80, %arg2 : i32
      %c6_i32_81 = arith.constant 6 : i32
      %94 = arith.addi %93, %c6_i32_81 : i32
      %c1_i32_82 = arith.constant 1 : i32
      %95 = arith.addi %94, %c1_i32_82 : i32
      %96 = arith.index_cast %95 : i32 to index
      %c0_83 = arith.constant 0 : index
      %c0_84 = arith.constant 0 : index
      %97 = vector.load %arg4[%96, %c0_83, %c0_84] : memref<27x128x128xbf16, #tpu.memory_space<vmem>>, vector<1x128x128xbf16>
      %98 = vector.shape_cast %97 : vector<1x128x128xbf16> to vector<128x128xbf16>
      %cst_85 = arith.constant dense<0.000000e+00> : vector<64x128xf32>
      %99 = tpu.matmul %92, %98, %cst_85 {dimension_numbers = #tpu.dot_dimension_numbers<[1], [0], [0], [1], [0, 0, 1, 1], [], []>} : vector<64x128xbf16>, vector<128x128xbf16>, vector<64x128xf32> -> vector<64x128xf32>
      %100 = arith.addf %89, %99 : vector<64x128xf32>
      %c0_86 = arith.constant 0 : index
      %c0_87 = arith.constant 0 : index
      %c2_88 = arith.constant 2 : index
      %c2_89 = arith.constant 2 : index
      %c0_90 = arith.constant 0 : index
      %101 = vector.load %arg3[%c0_86, %c0_87, %c2_88, %c2_89, %c0_90] : memref<1x1x10x10x128xbf16, #tpu.memory_space<vmem>>, vector<1x1x8x8x128xbf16>
      %102 = vector.shape_cast %101 : vector<1x1x8x8x128xbf16> to vector<8x8x128xbf16>
      %103 = vector.shape_cast %102 : vector<8x8x128xbf16> to vector<64x128xbf16>
      %c9_i32_91 = arith.constant 9 : i32
      %104 = arith.muli %c9_i32_91, %arg2 : i32
      %c6_i32_92 = arith.constant 6 : i32
      %105 = arith.addi %104, %c6_i32_92 : i32
      %c2_i32_93 = arith.constant 2 : i32
      %106 = arith.addi %105, %c2_i32_93 : i32
      %107 = arith.index_cast %106 : i32 to index
      %c0_94 = arith.constant 0 : index
      %c0_95 = arith.constant 0 : index
      %108 = vector.load %arg4[%107, %c0_94, %c0_95] : memref<27x128x128xbf16, #tpu.memory_space<vmem>>, vector<1x128x128xbf16>
      %109 = vector.shape_cast %108 : vector<1x128x128xbf16> to vector<128x128xbf16>
      %cst_96 = arith.constant dense<0.000000e+00> : vector<64x128xf32>
      %110 = tpu.matmul %103, %109, %cst_96 {dimension_numbers = #tpu.dot_dimension_numbers<[1], [0], [0], [1], [0, 0, 1, 1], [], []>} : vector<64x128xbf16>, vector<128x128xbf16>, vector<64x128xf32> -> vector<64x128xf32>
      %111 = arith.addf %100, %110 : vector<64x128xf32>
      %c0_97 = arith.constant 0 : index
      %c0_98 = arith.constant 0 : index
      %112 = vector.load %arg9[%c0_97, %c0_98] : memref<64x128xf32, #tpu.memory_space<vmem>>, vector<64x128xf32>
      tpu.vector_store %arg9[%c0_97, %c0_98], %111 {strides = array<i32>} : memref<64x128xf32, #tpu.memory_space<vmem>>, vector<64x128xf32>,
    } else {
    }
    %c2_i32 = arith.constant 2 : i32
    %9 = arith.cmpi eq, %arg2, %c2_i32 : i32
    %10 = arith.extui %9 : i1 to i32
    %c0_i32_2 = arith.constant 0 : i32
    %11 = arith.cmpi ne, %10, %c0_i32_2 : i32
    scf.if %11 {
      %c0 = arith.constant 0 : index
      %c0_3 = arith.constant 0 : index
      %12 = vector.load %arg9[%c0, %c0_3] : memref<64x128xf32, #tpu.memory_space<vmem>>, vector<64x128xf32>
      %c0_4 = arith.constant 0 : index
      %c0_5 = arith.constant 0 : index
      %13 = vector.load %arg5[%c0_4, %c0_5] : memref<1x128xf32, #tpu.memory_space<vmem>>, vector<1x128xf32>
      %14 = vector.broadcast %13 : vector<1x128xf32> to vector<64x128xf32>
      %15 = arith.addf %12, %14 : vector<64x128xf32>
      %cst = arith.constant 0.000000e+00 : f32
      %16 = vector.broadcast %cst : f32 to vector<64x128xf32>
      %17 = arith.maximumf %15, %16 : vector<64x128xf32>
      %cst_6 = arith.constant dense<0.000000e+00> : vector<128xf32>
      %18 = vector.multi_reduction <add>, %17, %cst_6 [0] : vector<64x128xf32> to vector<128xf32>
      %19 = vector.shape_cast %18 : vector<128xf32> to vector<1x128xf32>
      %c0_7 = arith.constant 0 : index
      %c0_8 = arith.constant 0 : index
      %c0_9 = arith.constant 0 : index
      %c0_10 = arith.constant 0 : index
      %20 = vector.load %arg7[%c0_7, %c0_8, %c0_9, %c0_10] : memref<1x1x1x128xf32, #tpu.memory_space<vmem>>, vector<1x1x1x128xf32>
      %21 = vector.shape_cast %20 : vector<1x1x1x128xf32> to vector<1x128xf32>
      %22 = vector.shape_cast %19 : vector<1x128xf32> to vector<1x1x1x128xf32>
      tpu.vector_store %arg7[%c0_7, %c0_8, %c0_9, %c0_10], %22 {strides = array<i32>} : memref<1x1x1x128xf32, #tpu.memory_space<vmem>>, vector<1x1x1x128xf32>,
      %23 = arith.mulf %17, %17 : vector<64x128xf32>
      %cst_11 = arith.constant dense<0.000000e+00> : vector<128xf32>
      %24 = vector.multi_reduction <add>, %23, %cst_11 [0] : vector<64x128xf32> to vector<128xf32>
      %25 = vector.shape_cast %24 : vector<128xf32> to vector<1x128xf32>
      %c0_12 = arith.constant 0 : index
      %c0_13 = arith.constant 0 : index
      %c0_14 = arith.constant 0 : index
      %c0_15 = arith.constant 0 : index
      %26 = vector.load %arg8[%c0_12, %c0_13, %c0_14, %c0_15] : memref<1x1x1x128xf32, #tpu.memory_space<vmem>>, vector<1x1x1x128xf32>
      %27 = vector.shape_cast %26 : vector<1x1x1x128xf32> to vector<1x128xf32>
      %28 = vector.shape_cast %25 : vector<1x128xf32> to vector<1x1x1x128xf32>
      tpu.vector_store %arg8[%c0_12, %c0_13, %c0_14, %c0_15], %28 {strides = array<i32>} : memref<1x1x1x128xf32, #tpu.memory_space<vmem>>, vector<1x1x1x128xf32>,
      %29 = vector.shape_cast %17 : vector<64x128xf32> to vector<8x8x128xf32>
      %30 = arith.truncf %29 : vector<8x8x128xf32> to vector<8x8x128xbf16>
      %cst_16 = arith.constant 0.000000e+00 : bf16
      %31 = vector.broadcast %cst_16 : bf16 to vector<1x1x10x10x128xbf16>
      %c0_17 = arith.constant 0 : index
      %c0_18 = arith.constant 0 : index
      %c0_19 = arith.constant 0 : index
      %c0_20 = arith.constant 0 : index
      %c0_21 = arith.constant 0 : index
      %32 = vector.load %arg6[%c0_17, %c0_18, %c0_19, %c0_20, %c0_21] : memref<1x1x10x10x128xbf16, #tpu.memory_space<vmem>>, vector<1x1x10x10x128xbf16>
      tpu.vector_store %arg6[%c0_17, %c0_18, %c0_19, %c0_20, %c0_21], %31 {strides = array<i32>} : memref<1x1x10x10x128xbf16, #tpu.memory_space<vmem>>, vector<1x1x10x10x128xbf16>,
      %c0_22 = arith.constant 0 : index
      %c0_23 = arith.constant 0 : index
      %c1 = arith.constant 1 : index
      %c1_24 = arith.constant 1 : index
      %c0_25 = arith.constant 0 : index
      %33 = vector.load %arg6[%c0_22, %c0_23, %c1, %c1_24, %c0_25] : memref<1x1x10x10x128xbf16, #tpu.memory_space<vmem>>, vector<1x1x8x8x128xbf16>
      %34 = vector.shape_cast %33 : vector<1x1x8x8x128xbf16> to vector<8x8x128xbf16>
      %35 = vector.shape_cast %30 : vector<8x8x128xbf16> to vector<1x1x8x8x128xbf16>
      tpu.vector_store %arg6[%c0_22, %c0_23, %c1, %c1_24, %c0_25], %35 {strides = array<i32>} : memref<1x1x10x10x128xbf16, #tpu.memory_space<vmem>>, vector<1x1x8x8x128xbf16>,
    } else {
    }
    return
  }
  func.func @transform_0(%arg0: i32, %arg1: i32, %arg2: i32) -> (i32, i32, i32, i32, i32) {
    %0 = arith.addi %arg1, %arg2 : i32
    %c0_i32 = arith.constant 0 : i32
    %c0_i32_0 = arith.constant 0 : i32
    %c0_i32_1 = arith.constant 0 : i32
    %c0_i32_2 = arith.constant 0 : i32
    return %arg0, %0, %c0_i32, %c0_i32_0, %c0_i32_1 : i32, i32, i32, i32, i32
  }
  func.func @transform_1(%arg0: i32, %arg1: i32, %arg2: i32) -> (i32, i32, i32) {
    %c0_i32 = arith.constant 0 : i32
    %c0_i32_0 = arith.constant 0 : i32
    %c0_i32_1 = arith.constant 0 : i32
    %c0_i32_2 = arith.constant 0 : i32
    return %c0_i32, %c0_i32_0, %c0_i32_1 : i32, i32, i32
  }
  func.func @transform_2(%arg0: i32, %arg1: i32, %arg2: i32) -> (i32, i32) {
    %c0_i32 = arith.constant 0 : i32
    %c0_i32_0 = arith.constant 0 : i32
    %c0_i32_1 = arith.constant 0 : i32
    return %c0_i32, %c0_i32_0 : i32, i32
  }
  func.func @transform_3(%arg0: i32, %arg1: i32, %arg2: i32) -> (i32, i32, i32, i32, i32) {
    %c1_i32 = arith.constant 1 : i32
    %0 = arith.addi %arg1, %c1_i32 : i32
    %c0_i32 = arith.constant 0 : i32
    %c0_i32_0 = arith.constant 0 : i32
    %c0_i32_1 = arith.constant 0 : i32
    %c0_i32_2 = arith.constant 0 : i32
    return %arg0, %0, %c0_i32, %c0_i32_0, %c0_i32_1 : i32, i32, i32, i32, i32
  }
  func.func @transform_4(%arg0: i32, %arg1: i32, %arg2: i32) -> (i32, i32, i32, i32) {
    %c0_i32 = arith.constant 0 : i32
    %c0_i32_0 = arith.constant 0 : i32
    %c0_i32_1 = arith.constant 0 : i32
    return %arg0, %arg1, %c0_i32, %c0_i32_0 : i32, i32, i32, i32
  }
  func.func @transform_5(%arg0: i32, %arg1: i32, %arg2: i32) -> (i32, i32, i32, i32) {
    %c0_i32 = arith.constant 0 : i32
    %c0_i32_0 = arith.constant 0 : i32
    %c0_i32_1 = arith.constant 0 : i32
    return %arg0, %arg1, %c0_i32, %c0_i32_0 : i32, i32, i32, i32
  }
}

module attributes {stable_mosaic.version = 11 : i64} {
  func.func @kernel(%arg0: i32, %arg1: i32, %arg2: i32, %arg3: memref<1x128xf32, #tpu.memory_space<vmem>>, %arg4: memref<1x128xf32, #tpu.memory_space<vmem>>, %arg5: memref<1x1x10x10x128xbf16, #tpu.memory_space<vmem>>, %arg6: memref<27x128x128xbf16, #tpu.memory_space<vmem>>, %arg7: memref<1x128xf32, #tpu.memory_space<vmem>>, %arg8: memref<1x1x10x10x128xbf16, #tpu.memory_space<vmem>>, %arg9: memref<64x128xf32, #tpu.memory_space<vmem>>, %arg10: memref<10x10x128xbf16, #tpu.memory_space<vmem>>) attributes {dimension_semantics = [#tpu.dimension_semantics<parallel>, #tpu.dimension_semantics<parallel>, #tpu.dimension_semantics<arbitrary>], iteration_bounds = array<i64: 2, 8, 3>, scalar_prefetch = 0 : i64, scratch_operands = 2 : i64, tpu.core_type = #tpu.core_type<tc>, window_params = [{pipeline_mode = #tpu.pipeline_mode<synchronous>, transform_indices = @transform_0, window_bounds = array<i64: 1, 128>}, {pipeline_mode = #tpu.pipeline_mode<synchronous>, transform_indices = @transform_1, window_bounds = array<i64: 1, 128>}, {transform_indices = @transform_2, window_bounds = array<i64: 1, 1, 10, 10, 128>}, {pipeline_mode = #tpu.pipeline_mode<synchronous>, transform_indices = @transform_3, window_bounds = array<i64: 27, 128, 128>}, {pipeline_mode = #tpu.pipeline_mode<synchronous>, transform_indices = @transform_4, window_bounds = array<i64: 1, 128>}, {transform_indices = @transform_5, window_bounds = array<i64: 1, 1, 10, 10, 128>}]} {
    %c0_i32 = arith.constant 0 : i32
    %0 = arith.cmpi eq, %arg2, %c0_i32 : i32
    %1 = arith.extui %0 : i1 to i32
    %c0_i32_0 = arith.constant 0 : i32
    %2 = arith.cmpi ne, %1, %c0_i32_0 : i32
    scf.if %2 {
      %cst = arith.constant 0.000000e+00 : f32
      %12 = vector.broadcast %cst : f32 to vector<64x128xf32>
      %c0 = arith.constant 0 : index
      %c0_3 = arith.constant 0 : index
      %13 = vector.load %arg9[%c0, %c0_3] : memref<64x128xf32, #tpu.memory_space<vmem>>, vector<64x128xf32>
      tpu.vector_store %arg9[%c0, %c0_3], %12 {strides = array<i32>} : memref<64x128xf32, #tpu.memory_space<vmem>>, vector<64x128xf32>,
      %cst_4 = arith.constant 0.000000e+00 : bf16
      %14 = vector.broadcast %cst_4 : bf16 to vector<10x10x128xbf16>
      %c0_5 = arith.constant 0 : index
      %c0_6 = arith.constant 0 : index
      %c0_7 = arith.constant 0 : index
      %15 = vector.load %arg10[%c0_5, %c0_6, %c0_7] : memref<10x10x128xbf16, #tpu.memory_space<vmem>>, vector<10x10x128xbf16>
      tpu.vector_store %arg10[%c0_5, %c0_6, %c0_7], %14 {strides = array<i32>} : memref<10x10x128xbf16, #tpu.memory_space<vmem>>, vector<10x10x128xbf16>,
    } else {
    }
    %3 = arith.addi %arg1, %arg2 : i32
    %c1_i32 = arith.constant 1 : i32
    %4 = arith.cmpi sge, %3, %c1_i32 : i32
    %c8_i32 = arith.constant 8 : i32
    %5 = arith.cmpi sle, %3, %c8_i32 : i32
    %6 = arith.andi %4, %5 : i1
    %7 = arith.extui %6 : i1 to i32
    %c0_i32_1 = arith.constant 0 : i32
    %8 = arith.cmpi ne, %7, %c0_i32_1 : i32
    scf.if %8 {
      %c0 = arith.constant 0 : index
      %c0_3 = arith.constant 0 : index
      %12 = vector.load %arg3[%c0, %c0_3] : memref<1x128xf32, #tpu.memory_space<vmem>>, vector<1x128xf32>
      %13 = vector.shape_cast %12 : vector<1x128xf32> to vector<1x1x128xf32>
      %c0_4 = arith.constant 0 : index
      %c0_5 = arith.constant 0 : index
      %14 = vector.load %arg4[%c0_4, %c0_5] : memref<1x128xf32, #tpu.memory_space<vmem>>, vector<1x128xf32>
      %15 = vector.shape_cast %14 : vector<1x128xf32> to vector<1x1x128xf32>
      %c0_6 = arith.constant 0 : index
      %c0_7 = arith.constant 0 : index
      %c1 = arith.constant 1 : index
      %c1_8 = arith.constant 1 : index
      %c0_9 = arith.constant 0 : index
      %16 = vector.load %arg5[%c0_6, %c0_7, %c1, %c1_8, %c0_9] : memref<1x1x10x10x128xbf16, #tpu.memory_space<vmem>>, vector<1x1x8x8x128xbf16>
      %17 = vector.shape_cast %16 : vector<1x1x8x8x128xbf16> to vector<8x8x128xbf16>
      %18 = arith.extf %17 : vector<8x8x128xbf16> to vector<8x8x128xf32>
      %19 = vector.broadcast %13 : vector<1x1x128xf32> to vector<8x8x128xf32>
      %20 = arith.mulf %18, %19 : vector<8x8x128xf32>
      %21 = vector.broadcast %15 : vector<1x1x128xf32> to vector<8x8x128xf32>
      %22 = arith.addf %20, %21 : vector<8x8x128xf32>
      %23 = arith.truncf %22 : vector<8x8x128xf32> to vector<8x8x128xbf16>
      %c1_10 = arith.constant 1 : index
      %c1_11 = arith.constant 1 : index
      %c0_12 = arith.constant 0 : index
      %24 = vector.load %arg10[%c1_10, %c1_11, %c0_12] : memref<10x10x128xbf16, #tpu.memory_space<vmem>>, vector<8x8x128xbf16>
      tpu.vector_store %arg10[%c1_10, %c1_11, %c0_12], %23 {strides = array<i32>} : memref<10x10x128xbf16, #tpu.memory_space<vmem>>, vector<8x8x128xbf16>,
      %c0_13 = arith.constant 0 : index
      %c0_14 = arith.constant 0 : index
      %25 = vector.load %arg9[%c0_13, %c0_14] : memref<64x128xf32, #tpu.memory_space<vmem>>, vector<64x128xf32>
      %c0_15 = arith.constant 0 : index
      %c0_16 = arith.constant 0 : index
      %c0_17 = arith.constant 0 : index
      %26 = vector.load %arg10[%c0_15, %c0_16, %c0_17] : memref<10x10x128xbf16, #tpu.memory_space<vmem>>, vector<8x8x128xbf16>
      %27 = vector.shape_cast %26 : vector<8x8x128xbf16> to vector<64x128xbf16>
      %c9_i32 = arith.constant 9 : i32
      %28 = arith.muli %c9_i32, %arg2 : i32
      %c0_i32_18 = arith.constant 0 : i32
      %29 = arith.addi %28, %c0_i32_18 : i32
      %c0_i32_19 = arith.constant 0 : i32
      %30 = arith.addi %29, %c0_i32_19 : i32
      %31 = arith.index_cast %30 : i32 to index
      %c0_20 = arith.constant 0 : index
      %c0_21 = arith.constant 0 : index
      %32 = vector.load %arg6[%31, %c0_20, %c0_21] : memref<27x128x128xbf16, #tpu.memory_space<vmem>>, vector<1x128x128xbf16>
      %33 = vector.shape_cast %32 : vector<1x128x128xbf16> to vector<128x128xbf16>
      %cst = arith.constant dense<0.000000e+00> : vector<64x128xf32>
      %34 = tpu.matmul %27, %33, %cst {dimension_numbers = #tpu.dot_dimension_numbers<[1], [0], [0], [1], [0, 0, 1, 1], [], []>} : vector<64x128xbf16>, vector<128x128xbf16>, vector<64x128xf32> -> vector<64x128xf32>
      %35 = arith.addf %25, %34 : vector<64x128xf32>
      %c0_22 = arith.constant 0 : index
      %c1_23 = arith.constant 1 : index
      %c0_24 = arith.constant 0 : index
      %36 = vector.load %arg10[%c0_22, %c1_23, %c0_24] : memref<10x10x128xbf16, #tpu.memory_space<vmem>>, vector<8x8x128xbf16>
      %37 = vector.shape_cast %36 : vector<8x8x128xbf16> to vector<64x128xbf16>
      %c9_i32_25 = arith.constant 9 : i32
      %38 = arith.muli %c9_i32_25, %arg2 : i32
      %c0_i32_26 = arith.constant 0 : i32
      %39 = arith.addi %38, %c0_i32_26 : i32
      %c1_i32_27 = arith.constant 1 : i32
      %40 = arith.addi %39, %c1_i32_27 : i32
      %41 = arith.index_cast %40 : i32 to index
      %c0_28 = arith.constant 0 : index
      %c0_29 = arith.constant 0 : index
      %42 = vector.load %arg6[%41, %c0_28, %c0_29] : memref<27x128x128xbf16, #tpu.memory_space<vmem>>, vector<1x128x128xbf16>
      %43 = vector.shape_cast %42 : vector<1x128x128xbf16> to vector<128x128xbf16>
      %cst_30 = arith.constant dense<0.000000e+00> : vector<64x128xf32>
      %44 = tpu.matmul %37, %43, %cst_30 {dimension_numbers = #tpu.dot_dimension_numbers<[1], [0], [0], [1], [0, 0, 1, 1], [], []>} : vector<64x128xbf16>, vector<128x128xbf16>, vector<64x128xf32> -> vector<64x128xf32>
      %45 = arith.addf %35, %44 : vector<64x128xf32>
      %c0_31 = arith.constant 0 : index
      %c2 = arith.constant 2 : index
      %c0_32 = arith.constant 0 : index
      %46 = vector.load %arg10[%c0_31, %c2, %c0_32] : memref<10x10x128xbf16, #tpu.memory_space<vmem>>, vector<8x8x128xbf16>
      %47 = vector.shape_cast %46 : vector<8x8x128xbf16> to vector<64x128xbf16>
      %c9_i32_33 = arith.constant 9 : i32
      %48 = arith.muli %c9_i32_33, %arg2 : i32
      %c0_i32_34 = arith.constant 0 : i32
      %49 = arith.addi %48, %c0_i32_34 : i32
      %c2_i32_35 = arith.constant 2 : i32
      %50 = arith.addi %49, %c2_i32_35 : i32
      %51 = arith.index_cast %50 : i32 to index
      %c0_36 = arith.constant 0 : index
      %c0_37 = arith.constant 0 : index
      %52 = vector.load %arg6[%51, %c0_36, %c0_37] : memref<27x128x128xbf16, #tpu.memory_space<vmem>>, vector<1x128x128xbf16>
      %53 = vector.shape_cast %52 : vector<1x128x128xbf16> to vector<128x128xbf16>
      %cst_38 = arith.constant dense<0.000000e+00> : vector<64x128xf32>
      %54 = tpu.matmul %47, %53, %cst_38 {dimension_numbers = #tpu.dot_dimension_numbers<[1], [0], [0], [1], [0, 0, 1, 1], [], []>} : vector<64x128xbf16>, vector<128x128xbf16>, vector<64x128xf32> -> vector<64x128xf32>
      %55 = arith.addf %45, %54 : vector<64x128xf32>
      %c1_39 = arith.constant 1 : index
      %c0_40 = arith.constant 0 : index
      %c0_41 = arith.constant 0 : index
      %56 = vector.load %arg10[%c1_39, %c0_40, %c0_41] : memref<10x10x128xbf16, #tpu.memory_space<vmem>>, vector<8x8x128xbf16>
      %57 = vector.shape_cast %56 : vector<8x8x128xbf16> to vector<64x128xbf16>
      %c9_i32_42 = arith.constant 9 : i32
      %58 = arith.muli %c9_i32_42, %arg2 : i32
      %c3_i32 = arith.constant 3 : i32
      %59 = arith.addi %58, %c3_i32 : i32
      %c0_i32_43 = arith.constant 0 : i32
      %60 = arith.addi %59, %c0_i32_43 : i32
      %61 = arith.index_cast %60 : i32 to index
      %c0_44 = arith.constant 0 : index
      %c0_45 = arith.constant 0 : index
      %62 = vector.load %arg6[%61, %c0_44, %c0_45] : memref<27x128x128xbf16, #tpu.memory_space<vmem>>, vector<1x128x128xbf16>
      %63 = vector.shape_cast %62 : vector<1x128x128xbf16> to vector<128x128xbf16>
      %cst_46 = arith.constant dense<0.000000e+00> : vector<64x128xf32>
      %64 = tpu.matmul %57, %63, %cst_46 {dimension_numbers = #tpu.dot_dimension_numbers<[1], [0], [0], [1], [0, 0, 1, 1], [], []>} : vector<64x128xbf16>, vector<128x128xbf16>, vector<64x128xf32> -> vector<64x128xf32>
      %65 = arith.addf %55, %64 : vector<64x128xf32>
      %c1_47 = arith.constant 1 : index
      %c1_48 = arith.constant 1 : index
      %c0_49 = arith.constant 0 : index
      %66 = vector.load %arg10[%c1_47, %c1_48, %c0_49] : memref<10x10x128xbf16, #tpu.memory_space<vmem>>, vector<8x8x128xbf16>
      %67 = vector.shape_cast %66 : vector<8x8x128xbf16> to vector<64x128xbf16>
      %c9_i32_50 = arith.constant 9 : i32
      %68 = arith.muli %c9_i32_50, %arg2 : i32
      %c3_i32_51 = arith.constant 3 : i32
      %69 = arith.addi %68, %c3_i32_51 : i32
      %c1_i32_52 = arith.constant 1 : i32
      %70 = arith.addi %69, %c1_i32_52 : i32
      %71 = arith.index_cast %70 : i32 to index
      %c0_53 = arith.constant 0 : index
      %c0_54 = arith.constant 0 : index
      %72 = vector.load %arg6[%71, %c0_53, %c0_54] : memref<27x128x128xbf16, #tpu.memory_space<vmem>>, vector<1x128x128xbf16>
      %73 = vector.shape_cast %72 : vector<1x128x128xbf16> to vector<128x128xbf16>
      %cst_55 = arith.constant dense<0.000000e+00> : vector<64x128xf32>
      %74 = tpu.matmul %67, %73, %cst_55 {dimension_numbers = #tpu.dot_dimension_numbers<[1], [0], [0], [1], [0, 0, 1, 1], [], []>} : vector<64x128xbf16>, vector<128x128xbf16>, vector<64x128xf32> -> vector<64x128xf32>
      %75 = arith.addf %65, %74 : vector<64x128xf32>
      %c1_56 = arith.constant 1 : index
      %c2_57 = arith.constant 2 : index
      %c0_58 = arith.constant 0 : index
      %76 = vector.load %arg10[%c1_56, %c2_57, %c0_58] : memref<10x10x128xbf16, #tpu.memory_space<vmem>>, vector<8x8x128xbf16>
      %77 = vector.shape_cast %76 : vector<8x8x128xbf16> to vector<64x128xbf16>
      %c9_i32_59 = arith.constant 9 : i32
      %78 = arith.muli %c9_i32_59, %arg2 : i32
      %c3_i32_60 = arith.constant 3 : i32
      %79 = arith.addi %78, %c3_i32_60 : i32
      %c2_i32_61 = arith.constant 2 : i32
      %80 = arith.addi %79, %c2_i32_61 : i32
      %81 = arith.index_cast %80 : i32 to index
      %c0_62 = arith.constant 0 : index
      %c0_63 = arith.constant 0 : index
      %82 = vector.load %arg6[%81, %c0_62, %c0_63] : memref<27x128x128xbf16, #tpu.memory_space<vmem>>, vector<1x128x128xbf16>
      %83 = vector.shape_cast %82 : vector<1x128x128xbf16> to vector<128x128xbf16>
      %cst_64 = arith.constant dense<0.000000e+00> : vector<64x128xf32>
      %84 = tpu.matmul %77, %83, %cst_64 {dimension_numbers = #tpu.dot_dimension_numbers<[1], [0], [0], [1], [0, 0, 1, 1], [], []>} : vector<64x128xbf16>, vector<128x128xbf16>, vector<64x128xf32> -> vector<64x128xf32>
      %85 = arith.addf %75, %84 : vector<64x128xf32>
      %c2_65 = arith.constant 2 : index
      %c0_66 = arith.constant 0 : index
      %c0_67 = arith.constant 0 : index
      %86 = vector.load %arg10[%c2_65, %c0_66, %c0_67] : memref<10x10x128xbf16, #tpu.memory_space<vmem>>, vector<8x8x128xbf16>
      %87 = vector.shape_cast %86 : vector<8x8x128xbf16> to vector<64x128xbf16>
      %c9_i32_68 = arith.constant 9 : i32
      %88 = arith.muli %c9_i32_68, %arg2 : i32
      %c6_i32 = arith.constant 6 : i32
      %89 = arith.addi %88, %c6_i32 : i32
      %c0_i32_69 = arith.constant 0 : i32
      %90 = arith.addi %89, %c0_i32_69 : i32
      %91 = arith.index_cast %90 : i32 to index
      %c0_70 = arith.constant 0 : index
      %c0_71 = arith.constant 0 : index
      %92 = vector.load %arg6[%91, %c0_70, %c0_71] : memref<27x128x128xbf16, #tpu.memory_space<vmem>>, vector<1x128x128xbf16>
      %93 = vector.shape_cast %92 : vector<1x128x128xbf16> to vector<128x128xbf16>
      %cst_72 = arith.constant dense<0.000000e+00> : vector<64x128xf32>
      %94 = tpu.matmul %87, %93, %cst_72 {dimension_numbers = #tpu.dot_dimension_numbers<[1], [0], [0], [1], [0, 0, 1, 1], [], []>} : vector<64x128xbf16>, vector<128x128xbf16>, vector<64x128xf32> -> vector<64x128xf32>
      %95 = arith.addf %85, %94 : vector<64x128xf32>
      %c2_73 = arith.constant 2 : index
      %c1_74 = arith.constant 1 : index
      %c0_75 = arith.constant 0 : index
      %96 = vector.load %arg10[%c2_73, %c1_74, %c0_75] : memref<10x10x128xbf16, #tpu.memory_space<vmem>>, vector<8x8x128xbf16>
      %97 = vector.shape_cast %96 : vector<8x8x128xbf16> to vector<64x128xbf16>
      %c9_i32_76 = arith.constant 9 : i32
      %98 = arith.muli %c9_i32_76, %arg2 : i32
      %c6_i32_77 = arith.constant 6 : i32
      %99 = arith.addi %98, %c6_i32_77 : i32
      %c1_i32_78 = arith.constant 1 : i32
      %100 = arith.addi %99, %c1_i32_78 : i32
      %101 = arith.index_cast %100 : i32 to index
      %c0_79 = arith.constant 0 : index
      %c0_80 = arith.constant 0 : index
      %102 = vector.load %arg6[%101, %c0_79, %c0_80] : memref<27x128x128xbf16, #tpu.memory_space<vmem>>, vector<1x128x128xbf16>
      %103 = vector.shape_cast %102 : vector<1x128x128xbf16> to vector<128x128xbf16>
      %cst_81 = arith.constant dense<0.000000e+00> : vector<64x128xf32>
      %104 = tpu.matmul %97, %103, %cst_81 {dimension_numbers = #tpu.dot_dimension_numbers<[1], [0], [0], [1], [0, 0, 1, 1], [], []>} : vector<64x128xbf16>, vector<128x128xbf16>, vector<64x128xf32> -> vector<64x128xf32>
      %105 = arith.addf %95, %104 : vector<64x128xf32>
      %c2_82 = arith.constant 2 : index
      %c2_83 = arith.constant 2 : index
      %c0_84 = arith.constant 0 : index
      %106 = vector.load %arg10[%c2_82, %c2_83, %c0_84] : memref<10x10x128xbf16, #tpu.memory_space<vmem>>, vector<8x8x128xbf16>
      %107 = vector.shape_cast %106 : vector<8x8x128xbf16> to vector<64x128xbf16>
      %c9_i32_85 = arith.constant 9 : i32
      %108 = arith.muli %c9_i32_85, %arg2 : i32
      %c6_i32_86 = arith.constant 6 : i32
      %109 = arith.addi %108, %c6_i32_86 : i32
      %c2_i32_87 = arith.constant 2 : i32
      %110 = arith.addi %109, %c2_i32_87 : i32
      %111 = arith.index_cast %110 : i32 to index
      %c0_88 = arith.constant 0 : index
      %c0_89 = arith.constant 0 : index
      %112 = vector.load %arg6[%111, %c0_88, %c0_89] : memref<27x128x128xbf16, #tpu.memory_space<vmem>>, vector<1x128x128xbf16>
      %113 = vector.shape_cast %112 : vector<1x128x128xbf16> to vector<128x128xbf16>
      %cst_90 = arith.constant dense<0.000000e+00> : vector<64x128xf32>
      %114 = tpu.matmul %107, %113, %cst_90 {dimension_numbers = #tpu.dot_dimension_numbers<[1], [0], [0], [1], [0, 0, 1, 1], [], []>} : vector<64x128xbf16>, vector<128x128xbf16>, vector<64x128xf32> -> vector<64x128xf32>
      %115 = arith.addf %105, %114 : vector<64x128xf32>
      %c0_91 = arith.constant 0 : index
      %c0_92 = arith.constant 0 : index
      %116 = vector.load %arg9[%c0_91, %c0_92] : memref<64x128xf32, #tpu.memory_space<vmem>>, vector<64x128xf32>
      tpu.vector_store %arg9[%c0_91, %c0_92], %115 {strides = array<i32>} : memref<64x128xf32, #tpu.memory_space<vmem>>, vector<64x128xf32>,
    } else {
    }
    %c2_i32 = arith.constant 2 : i32
    %9 = arith.cmpi eq, %arg2, %c2_i32 : i32
    %10 = arith.extui %9 : i1 to i32
    %c0_i32_2 = arith.constant 0 : i32
    %11 = arith.cmpi ne, %10, %c0_i32_2 : i32
    scf.if %11 {
      %c0 = arith.constant 0 : index
      %c0_3 = arith.constant 0 : index
      %12 = vector.load %arg9[%c0, %c0_3] : memref<64x128xf32, #tpu.memory_space<vmem>>, vector<64x128xf32>
      %c0_4 = arith.constant 0 : index
      %c0_5 = arith.constant 0 : index
      %13 = vector.load %arg7[%c0_4, %c0_5] : memref<1x128xf32, #tpu.memory_space<vmem>>, vector<1x128xf32>
      %14 = vector.broadcast %13 : vector<1x128xf32> to vector<64x128xf32>
      %15 = arith.addf %12, %14 : vector<64x128xf32>
      %cst = arith.constant 0.000000e+00 : f32
      %16 = vector.broadcast %cst : f32 to vector<64x128xf32>
      %17 = arith.maximumf %15, %16 : vector<64x128xf32>
      %18 = vector.shape_cast %17 : vector<64x128xf32> to vector<8x8x128xf32>
      %19 = arith.truncf %18 : vector<8x8x128xf32> to vector<8x8x128xbf16>
      %cst_6 = arith.constant 0.000000e+00 : bf16
      %20 = vector.broadcast %cst_6 : bf16 to vector<1x1x10x10x128xbf16>
      %c0_7 = arith.constant 0 : index
      %c0_8 = arith.constant 0 : index
      %c0_9 = arith.constant 0 : index
      %c0_10 = arith.constant 0 : index
      %c0_11 = arith.constant 0 : index
      %21 = vector.load %arg8[%c0_7, %c0_8, %c0_9, %c0_10, %c0_11] : memref<1x1x10x10x128xbf16, #tpu.memory_space<vmem>>, vector<1x1x10x10x128xbf16>
      tpu.vector_store %arg8[%c0_7, %c0_8, %c0_9, %c0_10, %c0_11], %20 {strides = array<i32>} : memref<1x1x10x10x128xbf16, #tpu.memory_space<vmem>>, vector<1x1x10x10x128xbf16>,
      %c0_12 = arith.constant 0 : index
      %c0_13 = arith.constant 0 : index
      %c1 = arith.constant 1 : index
      %c1_14 = arith.constant 1 : index
      %c0_15 = arith.constant 0 : index
      %22 = vector.load %arg8[%c0_12, %c0_13, %c1, %c1_14, %c0_15] : memref<1x1x10x10x128xbf16, #tpu.memory_space<vmem>>, vector<1x1x8x8x128xbf16>
      %23 = vector.shape_cast %22 : vector<1x1x8x8x128xbf16> to vector<8x8x128xbf16>
      %24 = vector.shape_cast %19 : vector<8x8x128xbf16> to vector<1x1x8x8x128xbf16>
      tpu.vector_store %arg8[%c0_12, %c0_13, %c1, %c1_14, %c0_15], %24 {strides = array<i32>} : memref<1x1x10x10x128xbf16, #tpu.memory_space<vmem>>, vector<1x1x8x8x128xbf16>,
    } else {
    }
    return
  }
  func.func @transform_0(%arg0: i32, %arg1: i32, %arg2: i32) -> (i32, i32) {
    %c0_i32 = arith.constant 0 : i32
    %c0_i32_0 = arith.constant 0 : i32
    %c0_i32_1 = arith.constant 0 : i32
    return %c0_i32, %c0_i32_0 : i32, i32
  }
  func.func @transform_1(%arg0: i32, %arg1: i32, %arg2: i32) -> (i32, i32) {
    %c0_i32 = arith.constant 0 : i32
    %c0_i32_0 = arith.constant 0 : i32
    %c0_i32_1 = arith.constant 0 : i32
    return %c0_i32, %c0_i32_0 : i32, i32
  }
  func.func @transform_2(%arg0: i32, %arg1: i32, %arg2: i32) -> (i32, i32, i32, i32, i32) {
    %0 = arith.addi %arg1, %arg2 : i32
    %c0_i32 = arith.constant 0 : i32
    %c0_i32_0 = arith.constant 0 : i32
    %c0_i32_1 = arith.constant 0 : i32
    %c0_i32_2 = arith.constant 0 : i32
    return %arg0, %0, %c0_i32, %c0_i32_0, %c0_i32_1 : i32, i32, i32, i32, i32
  }
  func.func @transform_3(%arg0: i32, %arg1: i32, %arg2: i32) -> (i32, i32, i32) {
    %c0_i32 = arith.constant 0 : i32
    %c0_i32_0 = arith.constant 0 : i32
    %c0_i32_1 = arith.constant 0 : i32
    %c0_i32_2 = arith.constant 0 : i32
    return %c0_i32, %c0_i32_0, %c0_i32_1 : i32, i32, i32
  }
  func.func @transform_4(%arg0: i32, %arg1: i32, %arg2: i32) -> (i32, i32) {
    %c0_i32 = arith.constant 0 : i32
    %c0_i32_0 = arith.constant 0 : i32
    %c0_i32_1 = arith.constant 0 : i32
    return %c0_i32, %c0_i32_0 : i32, i32
  }
  func.func @transform_5(%arg0: i32, %arg1: i32, %arg2: i32) -> (i32, i32, i32, i32, i32) {
    %c1_i32 = arith.constant 1 : i32
    %0 = arith.addi %arg1, %c1_i32 : i32
    %c0_i32 = arith.constant 0 : i32
    %c0_i32_0 = arith.constant 0 : i32
    %c0_i32_1 = arith.constant 0 : i32
    %c0_i32_2 = arith.constant 0 : i32
    return %arg0, %0, %c0_i32, %c0_i32_0, %c0_i32_1 : i32, i32, i32, i32, i32
  }
}

module attributes {stable_mosaic.version = 11 : i64} {
  func.func @kernel(%arg0: i32, %arg1: i32, %arg2: i32, %arg3: memref<1x1x10x10x128xbf16, #tpu.memory_space<vmem>>, %arg4: memref<27x128x128xbf16, #tpu.memory_space<vmem>>, %arg5: memref<1x128xf32, #tpu.memory_space<vmem>>, %arg6: memref<1x1x10x10x128xbf16, #tpu.memory_space<vmem>>, %arg7: memref<1x1x8x8x128xf32, #tpu.memory_space<vmem>>, %arg8: memref<64x128xf32, #tpu.memory_space<vmem>>) attributes {dimension_semantics = [#tpu.dimension_semantics<parallel>, #tpu.dimension_semantics<parallel>, #tpu.dimension_semantics<arbitrary>], iteration_bounds = array<i64: 2, 8, 3>, scalar_prefetch = 0 : i64, scratch_operands = 1 : i64, tpu.core_type = #tpu.core_type<tc>, window_params = [{transform_indices = @transform_0, window_bounds = array<i64: 1, 1, 10, 10, 128>}, {pipeline_mode = #tpu.pipeline_mode<synchronous>, transform_indices = @transform_1, window_bounds = array<i64: 27, 128, 128>}, {pipeline_mode = #tpu.pipeline_mode<synchronous>, transform_indices = @transform_2, window_bounds = array<i64: 1, 128>}, {transform_indices = @transform_3, window_bounds = array<i64: 1, 1, 10, 10, 128>}, {transform_indices = @transform_4, window_bounds = array<i64: 1, 1, 8, 8, 128>}]} {
    %c0_i32 = arith.constant 0 : i32
    %0 = arith.cmpi eq, %arg2, %c0_i32 : i32
    %1 = arith.extui %0 : i1 to i32
    %c0_i32_0 = arith.constant 0 : i32
    %2 = arith.cmpi ne, %1, %c0_i32_0 : i32
    scf.if %2 {
      %cst = arith.constant 0.000000e+00 : f32
      %12 = vector.broadcast %cst : f32 to vector<64x128xf32>
      %c0 = arith.constant 0 : index
      %c0_3 = arith.constant 0 : index
      %13 = vector.load %arg8[%c0, %c0_3] : memref<64x128xf32, #tpu.memory_space<vmem>>, vector<64x128xf32>
      tpu.vector_store %arg8[%c0, %c0_3], %12 {strides = array<i32>} : memref<64x128xf32, #tpu.memory_space<vmem>>, vector<64x128xf32>,
    } else {
    }
    %3 = arith.addi %arg1, %arg2 : i32
    %c1_i32 = arith.constant 1 : i32
    %4 = arith.cmpi sge, %3, %c1_i32 : i32
    %c8_i32 = arith.constant 8 : i32
    %5 = arith.cmpi sle, %3, %c8_i32 : i32
    %6 = arith.andi %4, %5 : i1
    %7 = arith.extui %6 : i1 to i32
    %c0_i32_1 = arith.constant 0 : i32
    %8 = arith.cmpi ne, %7, %c0_i32_1 : i32
    scf.if %8 {
      %c0 = arith.constant 0 : index
      %c0_3 = arith.constant 0 : index
      %12 = vector.load %arg8[%c0, %c0_3] : memref<64x128xf32, #tpu.memory_space<vmem>>, vector<64x128xf32>
      %c0_4 = arith.constant 0 : index
      %c0_5 = arith.constant 0 : index
      %c0_6 = arith.constant 0 : index
      %c0_7 = arith.constant 0 : index
      %c0_8 = arith.constant 0 : index
      %13 = vector.load %arg3[%c0_4, %c0_5, %c0_6, %c0_7, %c0_8] : memref<1x1x10x10x128xbf16, #tpu.memory_space<vmem>>, vector<1x1x8x8x128xbf16>
      %14 = vector.shape_cast %13 : vector<1x1x8x8x128xbf16> to vector<8x8x128xbf16>
      %15 = vector.shape_cast %14 : vector<8x8x128xbf16> to vector<64x128xbf16>
      %c9_i32 = arith.constant 9 : i32
      %16 = arith.muli %c9_i32, %arg2 : i32
      %c0_i32_9 = arith.constant 0 : i32
      %17 = arith.addi %16, %c0_i32_9 : i32
      %c0_i32_10 = arith.constant 0 : i32
      %18 = arith.addi %17, %c0_i32_10 : i32
      %19 = arith.index_cast %18 : i32 to index
      %c0_11 = arith.constant 0 : index
      %c0_12 = arith.constant 0 : index
      %20 = vector.load %arg4[%19, %c0_11, %c0_12] : memref<27x128x128xbf16, #tpu.memory_space<vmem>>, vector<1x128x128xbf16>
      %21 = vector.shape_cast %20 : vector<1x128x128xbf16> to vector<128x128xbf16>
      %cst = arith.constant dense<0.000000e+00> : vector<64x128xf32>
      %22 = tpu.matmul %15, %21, %cst {dimension_numbers = #tpu.dot_dimension_numbers<[1], [0], [0], [1], [0, 0, 1, 1], [], []>} : vector<64x128xbf16>, vector<128x128xbf16>, vector<64x128xf32> -> vector<64x128xf32>
      %23 = arith.addf %12, %22 : vector<64x128xf32>
      %c0_13 = arith.constant 0 : index
      %c0_14 = arith.constant 0 : index
      %c0_15 = arith.constant 0 : index
      %c1 = arith.constant 1 : index
      %c0_16 = arith.constant 0 : index
      %24 = vector.load %arg3[%c0_13, %c0_14, %c0_15, %c1, %c0_16] : memref<1x1x10x10x128xbf16, #tpu.memory_space<vmem>>, vector<1x1x8x8x128xbf16>
      %25 = vector.shape_cast %24 : vector<1x1x8x8x128xbf16> to vector<8x8x128xbf16>
      %26 = vector.shape_cast %25 : vector<8x8x128xbf16> to vector<64x128xbf16>
      %c9_i32_17 = arith.constant 9 : i32
      %27 = arith.muli %c9_i32_17, %arg2 : i32
      %c0_i32_18 = arith.constant 0 : i32
      %28 = arith.addi %27, %c0_i32_18 : i32
      %c1_i32_19 = arith.constant 1 : i32
      %29 = arith.addi %28, %c1_i32_19 : i32
      %30 = arith.index_cast %29 : i32 to index
      %c0_20 = arith.constant 0 : index
      %c0_21 = arith.constant 0 : index
      %31 = vector.load %arg4[%30, %c0_20, %c0_21] : memref<27x128x128xbf16, #tpu.memory_space<vmem>>, vector<1x128x128xbf16>
      %32 = vector.shape_cast %31 : vector<1x128x128xbf16> to vector<128x128xbf16>
      %cst_22 = arith.constant dense<0.000000e+00> : vector<64x128xf32>
      %33 = tpu.matmul %26, %32, %cst_22 {dimension_numbers = #tpu.dot_dimension_numbers<[1], [0], [0], [1], [0, 0, 1, 1], [], []>} : vector<64x128xbf16>, vector<128x128xbf16>, vector<64x128xf32> -> vector<64x128xf32>
      %34 = arith.addf %23, %33 : vector<64x128xf32>
      %c0_23 = arith.constant 0 : index
      %c0_24 = arith.constant 0 : index
      %c0_25 = arith.constant 0 : index
      %c2 = arith.constant 2 : index
      %c0_26 = arith.constant 0 : index
      %35 = vector.load %arg3[%c0_23, %c0_24, %c0_25, %c2, %c0_26] : memref<1x1x10x10x128xbf16, #tpu.memory_space<vmem>>, vector<1x1x8x8x128xbf16>
      %36 = vector.shape_cast %35 : vector<1x1x8x8x128xbf16> to vector<8x8x128xbf16>
      %37 = vector.shape_cast %36 : vector<8x8x128xbf16> to vector<64x128xbf16>
      %c9_i32_27 = arith.constant 9 : i32
      %38 = arith.muli %c9_i32_27, %arg2 : i32
      %c0_i32_28 = arith.constant 0 : i32
      %39 = arith.addi %38, %c0_i32_28 : i32
      %c2_i32_29 = arith.constant 2 : i32
      %40 = arith.addi %39, %c2_i32_29 : i32
      %41 = arith.index_cast %40 : i32 to index
      %c0_30 = arith.constant 0 : index
      %c0_31 = arith.constant 0 : index
      %42 = vector.load %arg4[%41, %c0_30, %c0_31] : memref<27x128x128xbf16, #tpu.memory_space<vmem>>, vector<1x128x128xbf16>
      %43 = vector.shape_cast %42 : vector<1x128x128xbf16> to vector<128x128xbf16>
      %cst_32 = arith.constant dense<0.000000e+00> : vector<64x128xf32>
      %44 = tpu.matmul %37, %43, %cst_32 {dimension_numbers = #tpu.dot_dimension_numbers<[1], [0], [0], [1], [0, 0, 1, 1], [], []>} : vector<64x128xbf16>, vector<128x128xbf16>, vector<64x128xf32> -> vector<64x128xf32>
      %45 = arith.addf %34, %44 : vector<64x128xf32>
      %c0_33 = arith.constant 0 : index
      %c0_34 = arith.constant 0 : index
      %c1_35 = arith.constant 1 : index
      %c0_36 = arith.constant 0 : index
      %c0_37 = arith.constant 0 : index
      %46 = vector.load %arg3[%c0_33, %c0_34, %c1_35, %c0_36, %c0_37] : memref<1x1x10x10x128xbf16, #tpu.memory_space<vmem>>, vector<1x1x8x8x128xbf16>
      %47 = vector.shape_cast %46 : vector<1x1x8x8x128xbf16> to vector<8x8x128xbf16>
      %48 = vector.shape_cast %47 : vector<8x8x128xbf16> to vector<64x128xbf16>
      %c9_i32_38 = arith.constant 9 : i32
      %49 = arith.muli %c9_i32_38, %arg2 : i32
      %c3_i32 = arith.constant 3 : i32
      %50 = arith.addi %49, %c3_i32 : i32
      %c0_i32_39 = arith.constant 0 : i32
      %51 = arith.addi %50, %c0_i32_39 : i32
      %52 = arith.index_cast %51 : i32 to index
      %c0_40 = arith.constant 0 : index
      %c0_41 = arith.constant 0 : index
      %53 = vector.load %arg4[%52, %c0_40, %c0_41] : memref<27x128x128xbf16, #tpu.memory_space<vmem>>, vector<1x128x128xbf16>
      %54 = vector.shape_cast %53 : vector<1x128x128xbf16> to vector<128x128xbf16>
      %cst_42 = arith.constant dense<0.000000e+00> : vector<64x128xf32>
      %55 = tpu.matmul %48, %54, %cst_42 {dimension_numbers = #tpu.dot_dimension_numbers<[1], [0], [0], [1], [0, 0, 1, 1], [], []>} : vector<64x128xbf16>, vector<128x128xbf16>, vector<64x128xf32> -> vector<64x128xf32>
      %56 = arith.addf %45, %55 : vector<64x128xf32>
      %c0_43 = arith.constant 0 : index
      %c0_44 = arith.constant 0 : index
      %c1_45 = arith.constant 1 : index
      %c1_46 = arith.constant 1 : index
      %c0_47 = arith.constant 0 : index
      %57 = vector.load %arg3[%c0_43, %c0_44, %c1_45, %c1_46, %c0_47] : memref<1x1x10x10x128xbf16, #tpu.memory_space<vmem>>, vector<1x1x8x8x128xbf16>
      %58 = vector.shape_cast %57 : vector<1x1x8x8x128xbf16> to vector<8x8x128xbf16>
      %59 = vector.shape_cast %58 : vector<8x8x128xbf16> to vector<64x128xbf16>
      %c9_i32_48 = arith.constant 9 : i32
      %60 = arith.muli %c9_i32_48, %arg2 : i32
      %c3_i32_49 = arith.constant 3 : i32
      %61 = arith.addi %60, %c3_i32_49 : i32
      %c1_i32_50 = arith.constant 1 : i32
      %62 = arith.addi %61, %c1_i32_50 : i32
      %63 = arith.index_cast %62 : i32 to index
      %c0_51 = arith.constant 0 : index
      %c0_52 = arith.constant 0 : index
      %64 = vector.load %arg4[%63, %c0_51, %c0_52] : memref<27x128x128xbf16, #tpu.memory_space<vmem>>, vector<1x128x128xbf16>
      %65 = vector.shape_cast %64 : vector<1x128x128xbf16> to vector<128x128xbf16>
      %cst_53 = arith.constant dense<0.000000e+00> : vector<64x128xf32>
      %66 = tpu.matmul %59, %65, %cst_53 {dimension_numbers = #tpu.dot_dimension_numbers<[1], [0], [0], [1], [0, 0, 1, 1], [], []>} : vector<64x128xbf16>, vector<128x128xbf16>, vector<64x128xf32> -> vector<64x128xf32>
      %67 = arith.addf %56, %66 : vector<64x128xf32>
      %c0_54 = arith.constant 0 : index
      %c0_55 = arith.constant 0 : index
      %c1_56 = arith.constant 1 : index
      %c2_57 = arith.constant 2 : index
      %c0_58 = arith.constant 0 : index
      %68 = vector.load %arg3[%c0_54, %c0_55, %c1_56, %c2_57, %c0_58] : memref<1x1x10x10x128xbf16, #tpu.memory_space<vmem>>, vector<1x1x8x8x128xbf16>
      %69 = vector.shape_cast %68 : vector<1x1x8x8x128xbf16> to vector<8x8x128xbf16>
      %70 = vector.shape_cast %69 : vector<8x8x128xbf16> to vector<64x128xbf16>
      %c9_i32_59 = arith.constant 9 : i32
      %71 = arith.muli %c9_i32_59, %arg2 : i32
      %c3_i32_60 = arith.constant 3 : i32
      %72 = arith.addi %71, %c3_i32_60 : i32
      %c2_i32_61 = arith.constant 2 : i32
      %73 = arith.addi %72, %c2_i32_61 : i32
      %74 = arith.index_cast %73 : i32 to index
      %c0_62 = arith.constant 0 : index
      %c0_63 = arith.constant 0 : index
      %75 = vector.load %arg4[%74, %c0_62, %c0_63] : memref<27x128x128xbf16, #tpu.memory_space<vmem>>, vector<1x128x128xbf16>
      %76 = vector.shape_cast %75 : vector<1x128x128xbf16> to vector<128x128xbf16>
      %cst_64 = arith.constant dense<0.000000e+00> : vector<64x128xf32>
      %77 = tpu.matmul %70, %76, %cst_64 {dimension_numbers = #tpu.dot_dimension_numbers<[1], [0], [0], [1], [0, 0, 1, 1], [], []>} : vector<64x128xbf16>, vector<128x128xbf16>, vector<64x128xf32> -> vector<64x128xf32>
      %78 = arith.addf %67, %77 : vector<64x128xf32>
      %c0_65 = arith.constant 0 : index
      %c0_66 = arith.constant 0 : index
      %c2_67 = arith.constant 2 : index
      %c0_68 = arith.constant 0 : index
      %c0_69 = arith.constant 0 : index
      %79 = vector.load %arg3[%c0_65, %c0_66, %c2_67, %c0_68, %c0_69] : memref<1x1x10x10x128xbf16, #tpu.memory_space<vmem>>, vector<1x1x8x8x128xbf16>
      %80 = vector.shape_cast %79 : vector<1x1x8x8x128xbf16> to vector<8x8x128xbf16>
      %81 = vector.shape_cast %80 : vector<8x8x128xbf16> to vector<64x128xbf16>
      %c9_i32_70 = arith.constant 9 : i32
      %82 = arith.muli %c9_i32_70, %arg2 : i32
      %c6_i32 = arith.constant 6 : i32
      %83 = arith.addi %82, %c6_i32 : i32
      %c0_i32_71 = arith.constant 0 : i32
      %84 = arith.addi %83, %c0_i32_71 : i32
      %85 = arith.index_cast %84 : i32 to index
      %c0_72 = arith.constant 0 : index
      %c0_73 = arith.constant 0 : index
      %86 = vector.load %arg4[%85, %c0_72, %c0_73] : memref<27x128x128xbf16, #tpu.memory_space<vmem>>, vector<1x128x128xbf16>
      %87 = vector.shape_cast %86 : vector<1x128x128xbf16> to vector<128x128xbf16>
      %cst_74 = arith.constant dense<0.000000e+00> : vector<64x128xf32>
      %88 = tpu.matmul %81, %87, %cst_74 {dimension_numbers = #tpu.dot_dimension_numbers<[1], [0], [0], [1], [0, 0, 1, 1], [], []>} : vector<64x128xbf16>, vector<128x128xbf16>, vector<64x128xf32> -> vector<64x128xf32>
      %89 = arith.addf %78, %88 : vector<64x128xf32>
      %c0_75 = arith.constant 0 : index
      %c0_76 = arith.constant 0 : index
      %c2_77 = arith.constant 2 : index
      %c1_78 = arith.constant 1 : index
      %c0_79 = arith.constant 0 : index
      %90 = vector.load %arg3[%c0_75, %c0_76, %c2_77, %c1_78, %c0_79] : memref<1x1x10x10x128xbf16, #tpu.memory_space<vmem>>, vector<1x1x8x8x128xbf16>
      %91 = vector.shape_cast %90 : vector<1x1x8x8x128xbf16> to vector<8x8x128xbf16>
      %92 = vector.shape_cast %91 : vector<8x8x128xbf16> to vector<64x128xbf16>
      %c9_i32_80 = arith.constant 9 : i32
      %93 = arith.muli %c9_i32_80, %arg2 : i32
      %c6_i32_81 = arith.constant 6 : i32
      %94 = arith.addi %93, %c6_i32_81 : i32
      %c1_i32_82 = arith.constant 1 : i32
      %95 = arith.addi %94, %c1_i32_82 : i32
      %96 = arith.index_cast %95 : i32 to index
      %c0_83 = arith.constant 0 : index
      %c0_84 = arith.constant 0 : index
      %97 = vector.load %arg4[%96, %c0_83, %c0_84] : memref<27x128x128xbf16, #tpu.memory_space<vmem>>, vector<1x128x128xbf16>
      %98 = vector.shape_cast %97 : vector<1x128x128xbf16> to vector<128x128xbf16>
      %cst_85 = arith.constant dense<0.000000e+00> : vector<64x128xf32>
      %99 = tpu.matmul %92, %98, %cst_85 {dimension_numbers = #tpu.dot_dimension_numbers<[1], [0], [0], [1], [0, 0, 1, 1], [], []>} : vector<64x128xbf16>, vector<128x128xbf16>, vector<64x128xf32> -> vector<64x128xf32>
      %100 = arith.addf %89, %99 : vector<64x128xf32>
      %c0_86 = arith.constant 0 : index
      %c0_87 = arith.constant 0 : index
      %c2_88 = arith.constant 2 : index
      %c2_89 = arith.constant 2 : index
      %c0_90 = arith.constant 0 : index
      %101 = vector.load %arg3[%c0_86, %c0_87, %c2_88, %c2_89, %c0_90] : memref<1x1x10x10x128xbf16, #tpu.memory_space<vmem>>, vector<1x1x8x8x128xbf16>
      %102 = vector.shape_cast %101 : vector<1x1x8x8x128xbf16> to vector<8x8x128xbf16>
      %103 = vector.shape_cast %102 : vector<8x8x128xbf16> to vector<64x128xbf16>
      %c9_i32_91 = arith.constant 9 : i32
      %104 = arith.muli %c9_i32_91, %arg2 : i32
      %c6_i32_92 = arith.constant 6 : i32
      %105 = arith.addi %104, %c6_i32_92 : i32
      %c2_i32_93 = arith.constant 2 : i32
      %106 = arith.addi %105, %c2_i32_93 : i32
      %107 = arith.index_cast %106 : i32 to index
      %c0_94 = arith.constant 0 : index
      %c0_95 = arith.constant 0 : index
      %108 = vector.load %arg4[%107, %c0_94, %c0_95] : memref<27x128x128xbf16, #tpu.memory_space<vmem>>, vector<1x128x128xbf16>
      %109 = vector.shape_cast %108 : vector<1x128x128xbf16> to vector<128x128xbf16>
      %cst_96 = arith.constant dense<0.000000e+00> : vector<64x128xf32>
      %110 = tpu.matmul %103, %109, %cst_96 {dimension_numbers = #tpu.dot_dimension_numbers<[1], [0], [0], [1], [0, 0, 1, 1], [], []>} : vector<64x128xbf16>, vector<128x128xbf16>, vector<64x128xf32> -> vector<64x128xf32>
      %111 = arith.addf %100, %110 : vector<64x128xf32>
      %c0_97 = arith.constant 0 : index
      %c0_98 = arith.constant 0 : index
      %112 = vector.load %arg8[%c0_97, %c0_98] : memref<64x128xf32, #tpu.memory_space<vmem>>, vector<64x128xf32>
      tpu.vector_store %arg8[%c0_97, %c0_98], %111 {strides = array<i32>} : memref<64x128xf32, #tpu.memory_space<vmem>>, vector<64x128xf32>,
    } else {
    }
    %c2_i32 = arith.constant 2 : i32
    %9 = arith.cmpi eq, %arg2, %c2_i32 : i32
    %10 = arith.extui %9 : i1 to i32
    %c0_i32_2 = arith.constant 0 : i32
    %11 = arith.cmpi ne, %10, %c0_i32_2 : i32
    scf.if %11 {
      %c0 = arith.constant 0 : index
      %c0_3 = arith.constant 0 : index
      %12 = vector.load %arg8[%c0, %c0_3] : memref<64x128xf32, #tpu.memory_space<vmem>>, vector<64x128xf32>
      %c0_4 = arith.constant 0 : index
      %c0_5 = arith.constant 0 : index
      %13 = vector.load %arg5[%c0_4, %c0_5] : memref<1x128xf32, #tpu.memory_space<vmem>>, vector<1x128xf32>
      %14 = vector.broadcast %13 : vector<1x128xf32> to vector<64x128xf32>
      %15 = arith.addf %12, %14 : vector<64x128xf32>
      %cst = arith.constant 0.000000e+00 : f32
      %16 = vector.broadcast %cst : f32 to vector<64x128xf32>
      %17 = arith.maximumf %15, %16 : vector<64x128xf32>
      %c0_6 = arith.constant 0 : index
      %c0_7 = arith.constant 0 : index
      %c1 = arith.constant 1 : index
      %c1_8 = arith.constant 1 : index
      %c0_9 = arith.constant 0 : index
      %18 = vector.load %arg6[%c0_6, %c0_7, %c1, %c1_8, %c0_9] : memref<1x1x10x10x128xbf16, #tpu.memory_space<vmem>>, vector<1x1x8x8x128xbf16>
      %19 = vector.shape_cast %18 : vector<1x1x8x8x128xbf16> to vector<8x8x128xbf16>
      %20 = vector.shape_cast %19 : vector<8x8x128xbf16> to vector<64x128xbf16>
      %21 = arith.extf %20 : vector<64x128xbf16> to vector<64x128xf32>
      %22 = arith.addf %17, %21 : vector<64x128xf32>
      %23 = vector.shape_cast %22 : vector<64x128xf32> to vector<8x8x128xf32>
      %c0_10 = arith.constant 0 : index
      %c0_11 = arith.constant 0 : index
      %c0_12 = arith.constant 0 : index
      %c0_13 = arith.constant 0 : index
      %c0_14 = arith.constant 0 : index
      %24 = vector.load %arg7[%c0_10, %c0_11, %c0_12, %c0_13, %c0_14] : memref<1x1x8x8x128xf32, #tpu.memory_space<vmem>>, vector<1x1x8x8x128xf32>
      %25 = vector.shape_cast %24 : vector<1x1x8x8x128xf32> to vector<8x8x128xf32>
      %26 = vector.shape_cast %23 : vector<8x8x128xf32> to vector<1x1x8x8x128xf32>
      tpu.vector_store %arg7[%c0_10, %c0_11, %c0_12, %c0_13, %c0_14], %26 {strides = array<i32>} : memref<1x1x8x8x128xf32, #tpu.memory_space<vmem>>, vector<1x1x8x8x128xf32>,
    } else {
    }
    return
  }
  func.func @transform_0(%arg0: i32, %arg1: i32, %arg2: i32) -> (i32, i32, i32, i32, i32) {
    %0 = arith.addi %arg1, %arg2 : i32
    %c0_i32 = arith.constant 0 : i32
    %c0_i32_0 = arith.constant 0 : i32
    %c0_i32_1 = arith.constant 0 : i32
    %c0_i32_2 = arith.constant 0 : i32
    return %arg0, %0, %c0_i32, %c0_i32_0, %c0_i32_1 : i32, i32, i32, i32, i32
  }
  func.func @transform_1(%arg0: i32, %arg1: i32, %arg2: i32) -> (i32, i32, i32) {
    %c0_i32 = arith.constant 0 : i32
    %c0_i32_0 = arith.constant 0 : i32
    %c0_i32_1 = arith.constant 0 : i32
    %c0_i32_2 = arith.constant 0 : i32
    return %c0_i32, %c0_i32_0, %c0_i32_1 : i32, i32, i32
  }
  func.func @transform_2(%arg0: i32, %arg1: i32, %arg2: i32) -> (i32, i32) {
    %c0_i32 = arith.constant 0 : i32
    %c0_i32_0 = arith.constant 0 : i32
    %c0_i32_1 = arith.constant 0 : i32
    return %c0_i32, %c0_i32_0 : i32, i32
  }
  func.func @transform_3(%arg0: i32, %arg1: i32, %arg2: i32) -> (i32, i32, i32, i32, i32) {
    %c1_i32 = arith.constant 1 : i32
    %0 = arith.addi %arg1, %c1_i32 : i32
    %c0_i32 = arith.constant 0 : i32
    %c0_i32_0 = arith.constant 0 : i32
    %c0_i32_1 = arith.constant 0 : i32
    %c0_i32_2 = arith.constant 0 : i32
    return %arg0, %0, %c0_i32, %c0_i32_0, %c0_i32_1 : i32, i32, i32, i32, i32
  }
  func.func @transform_4(%arg0: i32, %arg1: i32, %arg2: i32) -> (i32, i32, i32, i32, i32) {
    %c0_i32 = arith.constant 0 : i32
    %c0_i32_0 = arith.constant 0 : i32
    %c0_i32_1 = arith.constant 0 : i32
    %c0_i32_2 = arith.constant 0 : i32
    return %arg0, %arg1, %c0_i32, %c0_i32_0, %c0_i32_1 : i32, i32, i32, i32, i32
  }
}

module attributes {stable_mosaic.version = 11 : i64} {
  func.func @_maxpool_kernel(%arg0: i32, %arg1: memref<2x4x2x4x2x128xf32, #tpu.memory_space<vmem>>, %arg2: memref<1x4x4x128xf32, #tpu.memory_space<vmem>>) attributes {dimension_semantics = [#tpu.dimension_semantics<parallel>], iteration_bounds = array<i64: 8>, scalar_prefetch = 0 : i64, scratch_operands = 0 : i64, tpu.core_type = #tpu.core_type<tc>, window_params = [{transform_indices = @transform_0, window_bounds = array<i64: 2, 4, 2, 4, 2, 128>}, {transform_indices = @transform_1, window_bounds = array<i64: 1, 4, 4, 128>}]} {
    %c0 = arith.constant 0 : index
    %c0_0 = arith.constant 0 : index
    %c0_1 = arith.constant 0 : index
    %c0_2 = arith.constant 0 : index
    %c0_3 = arith.constant 0 : index
    %c0_4 = arith.constant 0 : index
    %0 = vector.load %arg1[%c0, %c0_0, %c0_1, %c0_2, %c0_3, %c0_4] : memref<2x4x2x4x2x128xf32, #tpu.memory_space<vmem>>, vector<1x4x2x4x2x128xf32>
    %1 = vector.shape_cast %0 : vector<1x4x2x4x2x128xf32> to vector<4x2x4x2x128xf32>
    %c1 = arith.constant 1 : index
    %c0_5 = arith.constant 0 : index
    %c0_6 = arith.constant 0 : index
    %c0_7 = arith.constant 0 : index
    %c0_8 = arith.constant 0 : index
    %c0_9 = arith.constant 0 : index
    %2 = vector.load %arg1[%c1, %c0_5, %c0_6, %c0_7, %c0_8, %c0_9] : memref<2x4x2x4x2x128xf32, #tpu.memory_space<vmem>>, vector<1x4x2x4x2x128xf32>
    %3 = vector.shape_cast %2 : vector<1x4x2x4x2x128xf32> to vector<4x2x4x2x128xf32>
    %4 = arith.maximumf %1, %3 : vector<4x2x4x2x128xf32>
    %5 = vector.extract_strided_slice %4 {offsets = [0, 0, 0, 0, 0], sizes = [4, 1, 4, 2, 128], strides = [1, 1, 1, 1, 1]} : vector<4x2x4x2x128xf32> to vector<4x1x4x2x128xf32>
    %6 = vector.shape_cast %5 : vector<4x1x4x2x128xf32> to vector<4x4x2x128xf32>
    %7 = vector.extract_strided_slice %4 {offsets = [0, 1, 0, 0, 0], sizes = [4, 1, 4, 2, 128], strides = [1, 1, 1, 1, 1]} : vector<4x2x4x2x128xf32> to vector<4x1x4x2x128xf32>
    %8 = vector.shape_cast %7 : vector<4x1x4x2x128xf32> to vector<4x4x2x128xf32>
    %9 = arith.maximumf %6, %8 : vector<4x4x2x128xf32>
    %cst = arith.constant dense<0xFF800000> : vector<4x4x128xf32>
    %10 = vector.multi_reduction <maximumf>, %9, %cst [2] : vector<4x4x2x128xf32> to vector<4x4x128xf32>
    %c0_10 = arith.constant 0 : index
    %c0_11 = arith.constant 0 : index
    %c0_12 = arith.constant 0 : index
    %c0_13 = arith.constant 0 : index
    %11 = vector.load %arg2[%c0_10, %c0_11, %c0_12, %c0_13] : memref<1x4x4x128xf32, #tpu.memory_space<vmem>>, vector<1x4x4x128xf32>
    %12 = vector.shape_cast %11 : vector<1x4x4x128xf32> to vector<4x4x128xf32>
    %13 = vector.shape_cast %10 : vector<4x4x128xf32> to vector<1x4x4x128xf32>
    tpu.vector_store %arg2[%c0_10, %c0_11, %c0_12, %c0_13], %13 {strides = array<i32>} : memref<1x4x4x128xf32, #tpu.memory_space<vmem>>, vector<1x4x4x128xf32>,
    return
  }
  func.func @transform_0(%arg0: i32) -> (i32, i32, i32, i32, i32, i32) {
    %c0_i32 = arith.constant 0 : i32
    %c0_i32_0 = arith.constant 0 : i32
    %c0_i32_1 = arith.constant 0 : i32
    %c0_i32_2 = arith.constant 0 : i32
    %c0_i32_3 = arith.constant 0 : i32
    %c0_i32_4 = arith.constant 0 : i32
    return %arg0, %c0_i32, %c0_i32_0, %c0_i32_1, %c0_i32_2, %c0_i32_3 : i32, i32, i32, i32, i32, i32
  }
  func.func @transform_1(%arg0: i32) -> (i32, i32, i32, i32) {
    %c0_i32 = arith.constant 0 : i32
    %c0_i32_0 = arith.constant 0 : i32
    %c0_i32_1 = arith.constant 0 : i32
    %c0_i32_2 = arith.constant 0 : i32
    return %arg0, %c0_i32, %c0_i32_0, %c0_i32_1 : i32, i32, i32, i32
  }
}

</mosaic_0001>

<llo_original>
// kernel: down_block_forward.4
$region0: #{down_block_forward.4}
  #allocation0 [shape = 'u32[]', space=smem, size = 0x4, offset = 0x4, fixed_abs, tag = 'smem constant byte address 0x4 - core index']
  #allocation1 [shape = 'u32[72,128]{1,0:T(1,128)}', space=vmem, size = 0x9000, scoped, tag = 'internal scratch']
  #allocation2 [shape = 'f32[64,128]{1,0:T(8,128)}', space=vmem, size = 0x8000, scoped, tag = 'scratch operand']
  %s0 = inlined_call_operand.vmem [shape: bf16[2,10,10,10,128], index: 0, kind: input, shape index: {}]
  %s1 = inlined_call_operand.hbm [shape: bf16[27,128,128], index: 1, kind: input, shape index: {}]
  %s2 = inlined_call_operand.vmem [shape: f32[1,128], index: 2, kind: input, shape index: {}]
  %s3 = inlined_call_operand.vmem [shape: bf16[2,10,10,10,128], index: 3, kind: output, shape index: {0}]
  %s4 = inlined_call_operand.vmem [shape: f32[2,8,1,128], index: 4, kind: output, shape index: {1}]
  %s5 = inlined_call_operand.vmem [shape: f32[2,8,1,128], index: 5, kind: output, shape index: {2}]
  %6 = xla_tuple %s3, %s4, %s5
  %s7 = sld [smem:[#allocation0]]
  $region77: #{down_block_forward.4} parent=0
    _
  %s9 = ssub.s32 1, %s7
  %s10 = scalar_select 0, %s9, %s7
  $region1: #{down_block_forward.4} parent=0
    #allocation3 [shape = 'u8[884736]{0}', space=vmem, size = 0xd8000, scoped, tag = 'input window, operand 1, single buffered']
    #allocation4 [shape = 's32[2]{0}', space=sflag, size = 0x8, scoped, tag = 'scoped memory for down_block_forward.4']
    %11 = vsyncpa [#allocation4], 0
    loop: start=0, step=1, limit=50
    $region2: #{down_block_forward.4} parent=1 // loop_pre_header
      _
    $region3: #{down_block_forward.4} parent=1 // loop_header
      %s13 = sphi 0, %s17
      %p14 = scmp.ge.s32.totalorder %s13, 50
      %s20 = sphi 0, %s39
      %s21 = sphi 0, %s35
      %s22 = sphi 0, %s31
      %s23 = sphi 0, %s20
      %s24 = sphi 0, %s21
      %s25 = sphi 0, %s22
      %s26 = sphi 0, %s23
      %s27 = sphi 0, %s24
      %s28 = sphi 0, %s25
      %s46 = sphi 0, %s48
      %s49 = sphi 0, %s46
      %s50 = sphi 0, %s49
      %s66 = sphi 0, %s50
      %s70 = sphi 0, %s70
      %s72 = sphi 0, %s70
      %s73 = sphi 0, %s72
      %s87 = sphi 0, %s73
      %s91 = sphi 0, %s91
      %s93 = sphi 0, %s91
      %s94 = sphi 0, %s93
      %s108 = sphi 0, %s94
      %s118 = sphi 0, %s120
      %s121 = sphi 0, %s118
      %s122 = sphi 0, %s121
      %s138 = sphi 0, %s122
      %s146 = sphi 0, %s148
      %s149 = sphi 0, %s146
      %s150 = sphi 0, %s149
      %s166 = sphi 0, %s150
      %s174 = sphi 0, %s176
      %s177 = sphi 0, %s174
      %s178 = sphi 0, %s177
      %s194 = sphi 0, %s178
    $region4: #{down_block_forward.4} parent=1 // loop_header_branch
      %16 = sbr.rel (%p14) target = $region8
    $region5: #{down_block_forward.4} parent=1 // loop_body
      %s18 = ssub.s32 %s13, 1
      %s19 = ssub.s32 %s13, 2
      %s29 = sadd.s32 1, %s22
      %p30 = scmp.ge.s32.totalorder %s29, 3
      %s31 = scalar_select %p30, 0, %s29
      %s32 = sadd.s32 1, %s21
      %s33 = scalar_select %p30, %s32, %s21
      %p34 = scmp.ge.s32.totalorder %s33, 8
      %s35 = scalar_select %p34, 0, %s33
      %s36 = sadd.s32 1, %s20
      %s37 = scalar_select %p34, %s36, %s20
      %p38 = scmp.ge.s32.totalorder %s37, 2
      %s39 = scalar_select %p38, 0, %s37
      %s40 = sadd.s32 %s21, %s22
      %s41 = sadd.s32 %s35, %s31
      %s42 = ssub.s32 %s20, %s39
      %s43 = ssub.s32 %s40, %s41
      %s44 = sor.u32 %s42, %s43
      %p45 = scmp.eq.s32.totalorder %s44, 0
      %s47 = sadd.s32 %s46, 1
      %s48 = scalar_select %p45, %s46, %s47
      %p51 = pneg %p45
      %p52 = scmp.eq.s32.totalorder %s13, 47
      %p53 = por %p51, %p52
      %p54 = scmp.ne.s32.totalorder %s46, %s49
      %p55 = scmp.eq.s32.totalorder %s13, 0
      %p56 = por %p54, %p55
      %p57 = scmp.ne.s32.totalorder %s46, %s49
      %p58 = scmp.eq.s32.totalorder %s18, 47
      %p59 = por %p57, %p58
      %p60 = scmp.ne.s32.totalorder %s49, %s50
      %p61 = scmp.eq.s32.totalorder %s18, 0
      %p62 = por %p60, %p61
      %p63 = scmp.ne.s32.totalorder %s49, %s50
      %p64 = scmp.eq.s32.totalorder %s19, 47
      %p65 = por %p63, %p64
      %p67 = scmp.ne.s32.totalorder %s50, %s66
      %p68 = scmp.eq.s32.totalorder %s19, 0
      %p69 = por %p67, %p68
      %s71 = sadd.s32 %s70, 1
      %p74 = scmp.eq.s32.totalorder %s13, 47
      %p75 = scmp.ne.s32.totalorder %s70, %s72
      %p76 = scmp.eq.s32.totalorder %s13, 0
      %p77 = por %p75, %p76
      %p78 = scmp.ne.s32.totalorder %s70, %s72
      %p79 = scmp.eq.s32.totalorder %s18, 47
      %p80 = por %p78, %p79
      %p81 = scmp.ne.s32.totalorder %s72, %s73
      %p82 = scmp.eq.s32.totalorder %s18, 0
      %p83 = por %p81, %p82
      %p84 = scmp.ne.s32.totalorder %s72, %s73
      %p85 = scmp.eq.s32.totalorder %s19, 47
      %p86 = por %p84, %p85
      %p88 = scmp.ne.s32.totalorder %s73, %s87
      %p89 = scmp.eq.s32.totalorder %s19, 0
      %p90 = por %p88, %p89
      %s92 = sadd.s32 %s91, 1
      %p95 = scmp.eq.s32.totalorder %s13, 47
      %p96 = scmp.ne.s32.totalorder %s91, %s93
      %p97 = scmp.eq.s32.totalorder %s13, 0
      %p98 = por %p96, %p97
      %p99 = scmp.ne.s32.totalorder %s91, %s93
      %p100 = scmp.eq.s32.totalorder %s18, 47
      %p101 = por %p99, %p100
      %p102 = scmp.ne.s32.totalorder %s93, %s94
      %p103 = scmp.eq.s32.totalorder %s18, 0
      %p104 = por %p102, %p103
      %p105 = scmp.ne.s32.totalorder %s93, %s94
      %p106 = scmp.eq.s32.totalorder %s19, 47
      %p107 = por %p105, %p106
      %p109 = scmp.ne.s32.totalorder %s94, %s108
      %p110 = scmp.eq.s32.totalorder %s19, 0
      %p111 = por %p109, %p110
      %s112 = sadd.s32 %s21, 1
      %s113 = sadd.s32 %s35, 1
      %s114 = ssub.s32 %s20, %s39
      %s115 = ssub.s32 %s112, %s113
      %s116 = sor.u32 %s114, %s115
      %p117 = scmp.eq.s32.totalorder %s116, 0
      %s119 = sadd.s32 %s118, 1
      %s120 = scalar_select %p117, %s118, %s119
      %p123 = pneg %p117
      %p124 = scmp.eq.s32.totalorder %s13, 47
      %p125 = por %p123, %p124
      %p126 = scmp.ne.s32.totalorder %s118, %s121
      %p127 = scmp.eq.s32.totalorder %s13, 0
      %p128 = por %p126, %p127
      %p129 = scmp.ne.s32.totalorder %s118, %s121
      %p130 = scmp.eq.s32.totalorder %s18, 47
      %p131 = por %p129, %p130
      %p132 = scmp.ne.s32.totalorder %s121, %s122
      %p133 = scmp.eq.s32.totalorder %s18, 0
      %p134 = por %p132, %p133
      %p135 = scmp.ne.s32.totalorder %s121, %s122
      %p136 = scmp.eq.s32.totalorder %s19, 47
      %p137 = por %p135, %p136
      %p139 = scmp.ne.s32.totalorder %s122, %s138
      %p140 = scmp.eq.s32.totalorder %s19, 0
      %p141 = por %p139, %p140
      %s142 = ssub.s32 %s20, %s39
      %s143 = ssub.s32 %s21, %s35
      %s144 = sor.u32 %s142, %s143
      %p145 = scmp.eq.s32.totalorder %s144, 0
      %s147 = sadd.s32 %s146, 1
      %s148 = scalar_select %p145, %s146, %s147
      %p151 = pneg %p145
      %p152 = scmp.eq.s32.totalorder %s13, 47
      %p153 = por %p151, %p152
      %p154 = scmp.ne.s32.totalorder %s146, %s149
      %p155 = scmp.eq.s32.totalorder %s13, 0
      %p156 = por %p154, %p155
      %p157 = scmp.ne.s32.totalorder %s146, %s149
      %p158 = scmp.eq.s32.totalorder %s18, 47
      %p159 = por %p157, %p158
      %p160 = scmp.ne.s32.totalorder %s149, %s150
      %p161 = scmp.eq.s32.totalorder %s18, 0
      %p162 = por %p160, %p161
      %p163 = scmp.ne.s32.totalorder %s149, %s150
      %p164 = scmp.eq.s32.totalorder %s19, 47
      %p165 = por %p163, %p164
      %p167 = scmp.ne.s32.totalorder %s150, %s166
      %p168 = scmp.eq.s32.totalorder %s19, 0
      %p169 = por %p167, %p168
      %s170 = ssub.s32 %s20, %s39
      %s171 = ssub.s32 %s21, %s35
      %s172 = sor.u32 %s170, %s171
      %p173 = scmp.eq.s32.totalorder %s172, 0
      %s175 = sadd.s32 %s174, 1
      %s176 = scalar_select %p173, %s174, %s175
      %p179 = pneg %p173
      %p180 = scmp.eq.s32.totalorder %s13, 47
      %p181 = por %p179, %p180
      %p182 = scmp.ne.s32.totalorder %s174, %s177
      %p183 = scmp.eq.s32.totalorder %s13, 0
      %p184 = por %p182, %p183
      %p185 = scmp.ne.s32.totalorder %s174, %s177
      %p186 = scmp.eq.s32.totalorder %s18, 47
      %p187 = por %p185, %p186
      %p188 = scmp.ne.s32.totalorder %s177, %s178
      %p189 = scmp.eq.s32.totalorder %s18, 0
      %p190 = por %p188, %p189
      %p191 = scmp.ne.s32.totalorder %s177, %s178
      %p192 = scmp.eq.s32.totalorder %s19, 47
      %p193 = por %p191, %p192
      %p195 = scmp.ne.s32.totalorder %s178, %s194
      %p196 = scmp.eq.s32.totalorder %s19, 0
      %p197 = por %p195, %p196
      %p198 = scmp.le.s32.totalorder 1, %s13
      %p199 = scmp.lt.s32.totalorder %s13, 49
      %p200 = pnand %p198, %p199
      %p201 = pneg %p200
      // Predicated region
      $region9: #{down_block_forward.4} parent=5 // pred_check
        _
      $region10: #{down_block_forward.4} parent=5 // pred_check_branch
        %203 = sbr.rel (%p200) target = $region12
      $region11: #{down_block_forward.4} parent=5 // pred_region
        %s204 = ssub.s32 %s13, 1
        // Predicated region
        $region13: #{down_block_forward.4} parent=11 // pred_check
          %p205 = pneg %p83
        $region14: #{down_block_forward.4} parent=11 // pred_check_branch
          %207 = sbr.rel (%p205) target = $region16
        $region15: #{down_block_forward.4} parent=11 // pred_region
          %209 = vsyncadd [#allocation4], 0
          %s210 = sshll.u32 %s1, 4
          %s211 = int_to_ptr.hbm [resolvable:$true] %s210
          %s212 = sshll.u32 [#allocation3], 4
          %s213 = int_to_ptr.vmem [resolvable:$true] %s212
          %218 = dma.hbm_to_vmem [thread:$0]  %s211, 27648, %s213, [#allocation4], 64, 64, 4
        $region16: #{down_block_forward.4} parent=11 // pred_fallthru
          _
        // Predicated region
        $region17: #{down_block_forward.4} parent=11 // pred_check
          %p219 = pneg %p104
        $region18: #{down_block_forward.4} parent=11 // pred_check_branch
          %221 = sbr.rel (%p219) target = $region20
        $region19: #{down_block_forward.4} parent=11 // pred_region
          _
        $region20: #{down_block_forward.4} parent=11 // pred_fallthru
          _
      $region12: #{down_block_forward.4} parent=5 // pred_fallthru
        _
      %p222 = scmp.lt.s32.totalorder %s13, 48
      // Predicated region
      $region21: #{down_block_forward.4} parent=5 // pred_check
        %p223 = pneg %p222
      $region22: #{down_block_forward.4} parent=5 // pred_check_branch
        %225 = sbr.rel (%p223) target = $region24
      $region23: #{down_block_forward.4} parent=5 // pred_region
        // Predicated region
        $region25: #{down_block_forward.4} parent=23 // pred_check
          %p226 = pneg %p56
        $region26: #{down_block_forward.4} parent=23 // pred_check_branch
          %228 = sbr.rel (%p226) target = $region28
        $region27: #{down_block_forward.4} parent=23 // pred_region
          %s229 = sadd.s32 %s21, %s22
          %p230 = scmp.lt.s32.totalorder %s20, 1
          %s231 = scalar_select %p230, %s20, 1
          %p232 = scmp.lt.s32.totalorder %s229, 9
          %s233 = scalar_select %p232, %s229, 9
          %s234 = smul.addr %s233, 20
          %s235 = smul.addr %s231, 200
          %s236 = sadd.s32 %s234, %s235
          %s237 = smul.addr %s236, 4
          %s238 = scalar_lea.vmem %s0, %s237
          %s239 = sadd.s32 %s21, %s22
        $region28: #{down_block_forward.4} parent=23 // pred_fallthru
          _
      $region24: #{down_block_forward.4} parent=5 // pred_fallthru
        _
      %p240 = scmp.le.s32.totalorder 1, %s13
      %p241 = scmp.lt.s32.totalorder %s13, 49
      %p242 = pnand %p240, %p241
      %p243 = pneg %p242
      // Predicated region
      $region29: #{down_block_forward.4} parent=5 // pred_check
        _
      $region30: #{down_block_forward.4} parent=5 // pred_check_branch
        %245 = sbr.rel (%p242) target = $region32
      $region31: #{down_block_forward.4} parent=5 // pred_region
        %s246 = ssub.s32 %s13, 1
        // Predicated region
        $region33: #{down_block_forward.4} parent=31 // pred_check
          %p247 = pneg %p83
        $region34: #{down_block_forward.4} parent=31 // pred_check_branch
          %249 = sbr.rel (%p247) target = $region36
        $region35: #{down_block_forward.4} parent=31 // pred_region
          %251 = dma.done [#allocation4], 27648
        $region36: #{down_block_forward.4} parent=31 // pred_fallthru
          _
        %s252 = sadd.s32 %s24, %s25
        %p253 = scmp.lt.s32.totalorder %s23, 1
        %s254 = scalar_select %p253, %s23, 1
        %p255 = scmp.lt.s32.totalorder %s252, 9
        %s256 = scalar_select %p255, %s252, 9
        %s257 = smul.addr %s256, 20
        %s258 = smul.addr %s254, 200
        %s259 = sadd.s32 %s257, %s258
        %s260 = smul.addr %s259, 4
        %s261 = scalar_lea.vmem %s0, %s260
        %p262 = pneg %p62
        %p263 = pneg %p59
        %p264 = pneg %p83
        %p265 = pneg %p80
        %p266 = pneg %p104
        %p267 = pneg %p101
        %p268 = pneg %p134
        %p269 = pneg %p131
        %s270 = sadd.s32 %s24, 1
        %p271 = scmp.lt.s32.totalorder %s23, 1
        %s272 = scalar_select %p271, %s23, 1
        %p273 = scmp.lt.s32.totalorder %s270, 9
        %s274 = scalar_select %p273, %s270, 9
        %s275 = smul.addr %s274, 20
        %s276 = smul.addr %s272, 200
        %s277 = sadd.s32 %s275, %s276
        %s278 = smul.addr %s277, 4
        %s279 = scalar_lea.vmem %s3, %s278
        %p280 = pneg %p162
        %p281 = pneg %p159
        %p282 = scmp.lt.s32.totalorder %s23, 1
        %s283 = scalar_select %p282, %s23, 1
        %p284 = scmp.lt.s32.totalorder %s24, 7
        %s285 = scalar_select %p284, %s24, 7
        %s286 = smul.addr %s283, 8
        %s287 = sadd.s32 %s285, %s286
        %s288 = scalar_lea.vmem %s4, %s287
        %p289 = pneg %p190
        %p290 = pneg %p187
        %p291 = scmp.lt.s32.totalorder %s23, 1
        %s292 = scalar_select %p291, %s23, 1
        %p293 = scmp.lt.s32.totalorder %s24, 7
        %s294 = scalar_select %p293, %s24, 7
        %s295 = smul.addr %s292, 8
        %s296 = sadd.s32 %s294, %s295
        %s297 = scalar_lea.vmem %s5, %s296
        %s298 = sadd.s32 %s24, %s25
        %p299 = scmp.lt.s32.totalorder %s23, 1
        %s300 = scalar_select %p299, %s23, 1
        %p301 = scmp.lt.s32.totalorder %s298, 9
        %s302 = scalar_select %p301, %s298, 9
        %s303 = smul.addr %s302, 20
        %s304 = smul.addr %s300, 200
        %s305 = sadd.s32 %s303, %s304
        %s306 = smul.addr %s305, 4
        %s307 = scalar_lea.vmem %s0, %s306
        %s308 = sadd.s32 %s24, %s25
        %s309 = sadd.s32 %s24, 1
        %p310 = scmp.lt.s32.totalorder %s23, 1
        %s311 = scalar_select %p310, %s23, 1
        %p312 = scmp.lt.s32.totalorder %s309, 9
        %s313 = scalar_select %p312, %s309, 9
        %s314 = smul.addr %s313, 20
        %s315 = smul.addr %s311, 200
        %s316 = sadd.s32 %s314, %s315
        %s317 = smul.addr %s316, 4
        %s318 = scalar_lea.vmem %s3, %s317
        %s319 = sadd.s32 %s24, 1
        %p320 = scmp.lt.s32.totalorder %s23, 1
        %s321 = scalar_select %p320, %s23, 1
        %p322 = scmp.lt.s32.totalorder %s24, 7
        %s323 = scalar_select %p322, %s24, 7
        %s324 = smul.addr %s321, 8
        %s325 = sadd.s32 %s323, %s324
        %s326 = scalar_lea.vmem %s4, %s325
        %p327 = scmp.lt.s32.totalorder %s23, 1
        %s328 = scalar_select %p327, %s23, 1
        %p329 = scmp.lt.s32.totalorder %s24, 7
        %s330 = scalar_select %p329, %s24, 7
        %s331 = smul.addr %s328, 8
        %s332 = sadd.s32 %s330, %s331
        %s333 = scalar_lea.vmem %s5, %s332
        %p335 = scmp.eq.s32.totalorder %s25, 0
        // Predicated region
        $region37: #{down_block_forward.4} parent=31 // pred_check
          %p336 = pneg %p335
        $region38: #{down_block_forward.4} parent=31 // pred_check_branch
          %338 = sbr.rel (%p336) target = $region40
        $region39: #{down_block_forward.4} parent=31 // pred_region
          %339 = vst [vmem:[#allocation2] sm:$0xff] 0.0
          %340 = vst [vmem:[#allocation2 + $0x8] sm:$0xff] 0.0
          %341 = vst [vmem:[#allocation2 + $0x10] sm:$0xff] 0.0
          %342 = vst [vmem:[#allocation2 + $0x18] sm:$0xff] 0.0
          %343 = vst [vmem:[#allocation2 + $0x20] sm:$0xff] 0.0
          %344 = vst [vmem:[#allocation2 + $0x28] sm:$0xff] 0.0
          %345 = vst [vmem:[#allocation2 + $0x30] sm:$0xff] 0.0
          %346 = vst [vmem:[#allocation2 + $0x38] sm:$0xff] 0.0
        $region40: #{down_block_forward.4} parent=31 // pred_fallthru
          _
        %s347 = sadd.s32 %s24, %s25
        %p348 = scmp.ge.s32.totalorder %s347, 1
        %p349 = scmp.le.s32.totalorder %s347, 8
        %p350 = pnand %p348, %p349
        %p351 = pneg %p350
        // Predicated region
        $region41: #{down_block_forward.4} parent=31 // pred_check
          _
        $region42: #{down_block_forward.4} parent=31 // pred_check_branch
          %353 = sbr.rel (%p350) target = $region44
        $region43: #{down_block_forward.4} parent=31 // pred_region
          %v354 = vld [vmem:[#allocation2] sm:$0xff]
          %v355 = vld [vmem:[#allocation2 + $0x8] sm:$0xff]
          %v356 = vld [vmem:[#allocation2 + $0x10] sm:$0xff]
          %v357 = vld [vmem:[#allocation2 + $0x18] sm:$0xff]
          %v358 = vld [vmem:[#allocation2 + $0x20] sm:$0xff]
          %v359 = vld [vmem:[#allocation2 + $0x28] sm:$0xff]
          %v360 = vld [vmem:[#allocation2 + $0x30] sm:$0xff]
          %v361 = vld [vmem:[#allocation2 + $0x38] sm:$0xff]
          %v362 = vld [vmem:[%s307] sm:$0xf]
          %v363 = vld [vmem:[%s307 + $0x8] sm:$0xf]
          %v364 = vld [vmem:[%s307 + $0x10] sm:$0xf]
          %v365 = vld [vmem:[%s307 + $0x18] sm:$0xf]
          %v366 = vld [vmem:[%s307 + $0x20] sm:$0xf]
          %v367 = vld [vmem:[%s307 + $0x28] sm:$0xf]
          %v368 = vld [vmem:[%s307 + $0x30] sm:$0xf]
          %v369 = vld [vmem:[%s307 + $0x38] sm:$0xf]
          %s370 = smul.u32 %s25, 9
          %s371 = smul.u32 %s370, 16
          %s372 = smul.addr %s371, 4
          %s373 = scalar_lea.vmem [#allocation3], %s372
          %v374 = vld [vmem:[%s373] sm:$0xf]
          %v375 = vld [vmem:[%s373 + $0x4] sm:$0xf]
          %v376 = vld [vmem:[%s373 + $0x8] sm:$0xf]
          %v377 = vld [vmem:[%s373 + $0xc] sm:$0xf]
          %v378 = vld [vmem:[%s373 + $0x10] sm:$0xf]
          %v379 = vld [vmem:[%s373 + $0x14] sm:$0xf]
          %v380 = vld [vmem:[%s373 + $0x18] sm:$0xf]
          %v381 = vld [vmem:[%s373 + $0x1c] sm:$0xf]
          %v382 = vld [vmem:[%s373 + $0x20] sm:$0xf]
          %v383 = vld [vmem:[%s373 + $0x24] sm:$0xf]
          %v384 = vld [vmem:[%s373 + $0x28] sm:$0xf]
          %v385 = vld [vmem:[%s373 + $0x2c] sm:$0xf]
          %v386 = vld [vmem:[%s373 + $0x30] sm:$0xf]
          %v387 = vld [vmem:[%s373 + $0x34] sm:$0xf]
          %v388 = vld [vmem:[%s373 + $0x38] sm:$0xf]
          %v389 = vld [vmem:[%s373 + $0x3c] sm:$0xf]
          %v398 = vunpack.c.l.b16 %v362
          %v399 = vunpack.c.l.b16 %v363
          %v400 = vunpack.c.l.b16 %v364
          %v401 = vunpack.c.l.b16 %v365
          %v402 = vunpack.c.l.b16 %v366
          %v403 = vunpack.c.l.b16 %v367
          %v404 = vunpack.c.l.b16 %v368
          %v405 = vunpack.c.l.b16 %v369
          %v406 = vpack.c.b16 %v399, %v398
          %v407 = vpack.c.b16 %v401, %v400
          %v408 = vpack.c.b16 %v403, %v402
          %v409 = vpack.c.b16 %v405, %v404
          %v430 = vunpack.c.l.b16 %v374
          %v431 = vunpack.c.l.b16 %v375
          %v432 = vunpack.c.l.b16 %v376
          %v433 = vunpack.c.l.b16 %v377
          %v434 = vunpack.c.l.b16 %v378
          %v435 = vunpack.c.l.b16 %v379
          %v436 = vunpack.c.l.b16 %v380
          %v437 = vunpack.c.l.b16 %v381
          %v438 = vunpack.c.l.b16 %v382
          %v439 = vunpack.c.l.b16 %v383
          %v440 = vunpack.c.l.b16 %v384
          %v441 = vunpack.c.l.b16 %v385
          %v442 = vunpack.c.l.b16 %v386
          %v443 = vunpack.c.l.b16 %v387
          %v444 = vunpack.c.l.b16 %v388
          %v445 = vunpack.c.l.b16 %v389
          %v446 = vpack.c.b16 %v431, %v430
          %v447 = vpack.c.b16 %v433, %v432
          %v448 = vpack.c.b16 %v435, %v434
          %v449 = vpack.c.b16 %v437, %v436
          %v450 = vpack.c.b16 %v439, %v438
          %v451 = vpack.c.b16 %v441, %v440
          %v452 = vpack.c.b16 %v443, %v442
          %v453 = vpack.c.b16 %v445, %v444
          %462 = vmatpush.bf16.msra.mxu0 %v453
          %463 = vmatpush.bf16.msra.mxu0 %v452
          %464 = vmatpush.bf16.msra.mxu0 %v451
          %465 = vmatpush.bf16.msra.mxu0 %v450
          %466 = vmatpush.bf16.msra.mxu0 %v449
          %467 = vmatpush.bf16.msra.mxu0 %v448
          %468 = vmatpush.bf16.msra.mxu0 %v447
          %469 = vmatpush.bf16.msra.mxu0 %v446
          %470 = vmatmul.bf16.gmra.mxu0 %v406
          %v471 = vpop.f32.mrf.mxu0
          %v472 = vadd.f32 0.0, %v471
          %v473 = vpop.f32.mrf.mxu0
          %v474 = vadd.f32 0.0, %v473
          %475 = vmatmul.bf16.gmra.mxu0 %v407
          %v476 = vpop.f32.mrf.mxu0
          %v477 = vadd.f32 0.0, %v476
          %v478 = vpop.f32.mrf.mxu0
          %v479 = vadd.f32 0.0, %v478
          %480 = vmatmul.bf16.gmra.mxu0 %v408
          %v481 = vpop.f32.mrf.mxu0
          %v482 = vadd.f32 0.0, %v481
          %v483 = vpop.f32.mrf.mxu0
          %v484 = vadd.f32 0.0, %v483
          %485 = vmatmul.bf16.gmra.mxu0 %v409
          %v486 = vpop.f32.mrf.mxu0
          %v487 = vadd.f32 0.0, %v486
          %v488 = vpop.f32.mrf.mxu0
          %v489 = vadd.f32 0.0, %v488
          %490 = vdwg.mxu0
          %v491 = vadd.f32 %v354, %v472
          %v492 = vadd.f32 %v355, %v474
          %v493 = vadd.f32 %v356, %v477
          %v494 = vadd.f32 %v357, %v479
          %v495 = vadd.f32 %v358, %v482
          %v496 = vadd.f32 %v359, %v484
          %v497 = vadd.f32 %v360, %v487
          %v498 = vadd.f32 %v361, %v489
          %v499 = vld [vmem:[%s307] sm:$0xf]
          %v500 = vld [vmem:[%s307 + $0x4] sm:$0x1]
          %v501 = vld [vmem:[%s307 + $0x8] sm:$0xf]
          %v502 = vld [vmem:[%s307 + $0xc] sm:$0x1]
          %v503 = vld [vmem:[%s307 + $0x10] sm:$0xf]
          %v504 = vld [vmem:[%s307 + $0x14] sm:$0x1]
          %v505 = vld [vmem:[%s307 + $0x18] sm:$0xf]
          %v506 = vld [vmem:[%s307 + $0x1c] sm:$0x1]
          %v507 = vld [vmem:[%s307 + $0x20] sm:$0xf]
          %v508 = vld [vmem:[%s307 + $0x24] sm:$0x1]
          %v509 = vld [vmem:[%s307 + $0x28] sm:$0xf]
          %v510 = vld [vmem:[%s307 + $0x2c] sm:$0x1]
          %v511 = vld [vmem:[%s307 + $0x30] sm:$0xf]
          %v512 = vld [vmem:[%s307 + $0x34] sm:$0x1]
          %v513 = vld [vmem:[%s307 + $0x38] sm:$0xf]
          %v514 = vld [vmem:[%s307 + $0x3c] sm:$0x1]
          %vm515 = vsmask.f32 3328
          %vm516 = vsmask.f32 7440
          %vm517 = vmor %vm515, %vm516
          %v519 = vshrl.u32 %v499, 16
          %v521 = vrot.slane %v519, 4
          %v522 = vshll.u32 %v499, 16
          %v524 = vrot.slane %v522, 5
          %v525 = vor.u32 %v521, %v524
          %v526 = vrot.slane %v525, 4
          %v528 = vshll.u32 %v500, 16
          %v530 = vrot.slane %v528, 5
          %v531 = vsel %vm517, %v526, %v530
          %v533 = vshrl.u32 %v501, 16
          %v535 = vrot.slane %v533, 4
          %v536 = vshll.u32 %v501, 16
          %v538 = vrot.slane %v536, 5
          %v539 = vor.u32 %v535, %v538
          %v540 = vrot.slane %v539, 4
          %v542 = vshll.u32 %v502, 16
          %v544 = vrot.slane %v542, 5
          %v545 = vsel %vm517, %v540, %v544
          %v547 = vshrl.u32 %v503, 16
          %v549 = vrot.slane %v547, 4
          %v550 = vshll.u32 %v503, 16
          %v552 = vrot.slane %v550, 5
          %v553 = vor.u32 %v549, %v552
          %v554 = vrot.slane %v553, 4
          %v556 = vshll.u32 %v504, 16
          %v558 = vrot.slane %v556, 5
          %v559 = vsel %vm517, %v554, %v558
          %v561 = vshrl.u32 %v505, 16
          %v563 = vrot.slane %v561, 4
          %v564 = vshll.u32 %v505, 16
          %v566 = vrot.slane %v564, 5
          %v567 = vor.u32 %v563, %v566
          %v568 = vrot.slane %v567, 4
          %v570 = vshll.u32 %v506, 16
          %v572 = vrot.slane %v570, 5
          %v573 = vsel %vm517, %v568, %v572
          %v575 = vshrl.u32 %v507, 16
          %v577 = vrot.slane %v575, 4
          %v578 = vshll.u32 %v507, 16
          %v580 = vrot.slane %v578, 5
          %v581 = vor.u32 %v577, %v580
          %v582 = vrot.slane %v581, 4
          %v584 = vshll.u32 %v508, 16
          %v586 = vrot.slane %v584, 5
          %v587 = vsel %vm517, %v582, %v586
          %v589 = vshrl.u32 %v509, 16
          %v591 = vrot.slane %v589, 4
          %v592 = vshll.u32 %v509, 16
          %v594 = vrot.slane %v592, 5
          %v595 = vor.u32 %v591, %v594
          %v596 = vrot.slane %v595, 4
          %v598 = vshll.u32 %v510, 16
          %v600 = vrot.slane %v598, 5
          %v601 = vsel %vm517, %v596, %v600
          %v603 = vshrl.u32 %v511, 16
          %v605 = vrot.slane %v603, 4
          %v606 = vshll.u32 %v511, 16
          %v608 = vrot.slane %v606, 5
          %v609 = vor.u32 %v605, %v608
          %v610 = vrot.slane %v609, 4
          %v612 = vshll.u32 %v512, 16
          %v614 = vrot.slane %v612, 5
          %v615 = vsel %vm517, %v610, %v614
          %v617 = vshrl.u32 %v513, 16
          %v619 = vrot.slane %v617, 4
          %v620 = vshll.u32 %v513, 16
          %v622 = vrot.slane %v620, 5
          %v623 = vor.u32 %v619, %v622
          %v624 = vrot.slane %v623, 4
          %v626 = vshll.u32 %v514, 16
          %v628 = vrot.slane %v626, 5
          %v629 = vsel %vm517, %v624, %v628
          %s630 = sadd.s32 %s370, 1
          %s631 = smul.u32 %s630, 16
          %s632 = smul.addr %s631, 4
          %s633 = scalar_lea.vmem [#allocation3], %s632
          %v634 = vld [vmem:[%s633] sm:$0xf]
          %v635 = vld [vmem:[%s633 + $0x4] sm:$0xf]
          %v636 = vld [vmem:[%s633 + $0x8] sm:$0xf]
          %v637 = vld [vmem:[%s633 + $0xc] sm:$0xf]
          %v638 = vld [vmem:[%s633 + $0x10] sm:$0xf]
          %v639 = vld [vmem:[%s633 + $0x14] sm:$0xf]
          %v640 = vld [vmem:[%s633 + $0x18] sm:$0xf]
          %v641 = vld [vmem:[%s633 + $0x1c] sm:$0xf]
          %v642 = vld [vmem:[%s633 + $0x20] sm:$0xf]
          %v643 = vld [vmem:[%s633 + $0x24] sm:$0xf]
          %v644 = vld [vmem:[%s633 + $0x28] sm:$0xf]
          %v645 = vld [vmem:[%s633 + $0x2c] sm:$0xf]
          %v646 = vld [vmem:[%s633 + $0x30] sm:$0xf]
          %v647 = vld [vmem:[%s633 + $0x34] sm:$0xf]
          %v648 = vld [vmem:[%s633 + $0x38] sm:$0xf]
          %v649 = vld [vmem:[%s633 + $0x3c] sm:$0xf]
          %v650 = vunpack.c.l.b16 %v531
          %v651 = vunpack.c.l.b16 %v545
          %v652 = vunpack.c.l.b16 %v559
          %v653 = vunpack.c.l.b16 %v573
          %v654 = vunpack.c.l.b16 %v587
          %v655 = vunpack.c.l.b16 %v601
          %v656 = vunpack.c.l.b16 %v615
          %v657 = vunpack.c.l.b16 %v629
          %v658 = vpack.c.b16 %v651, %v650
          %v659 = vpack.c.b16 %v653, %v652
          %v660 = vpack.c.b16 %v655, %v654
          %v661 = vpack.c.b16 %v657, %v656
          %v682 = vunpack.c.l.b16 %v634
          %v683 = vunpack.c.l.b16 %v635
          %v684 = vunpack.c.l.b16 %v636
          %v685 = vunpack.c.l.b16 %v637
          %v686 = vunpack.c.l.b16 %v638
          %v687 = vunpack.c.l.b16 %v639
          %v688 = vunpack.c.l.b16 %v640
          %v689 = vunpack.c.l.b16 %v641
          %v690 = vunpack.c.l.b16 %v642
          %v691 = vunpack.c.l.b16 %v643
          %v692 = vunpack.c.l.b16 %v644
          %v693 = vunpack.c.l.b16 %v645
          %v694 = vunpack.c.l.b16 %v646
          %v695 = vunpack.c.l.b16 %v647
          %v696 = vunpack.c.l.b16 %v648
          %v697 = vunpack.c.l.b16 %v649
          %v698 = vpack.c.b16 %v683, %v682
          %v699 = vpack.c.b16 %v685, %v684
          %v700 = vpack.c.b16 %v687, %v686
          %v701 = vpack.c.b16 %v689, %v688
          %v702 = vpack.c.b16 %v691, %v690
          %v703 = vpack.c.b16 %v693, %v692
          %v704 = vpack.c.b16 %v695, %v694
          %v705 = vpack.c.b16 %v697, %v696
          %714 = vmatpush.bf16.msra.mxu0 %v705
          %715 = vmatpush.bf16.msra.mxu0 %v704
          %716 = vmatpush.bf16.msra.mxu0 %v703
          %717 = vmatpush.bf16.msra.mxu0 %v702
          %718 = vmatpush.bf16.msra.mxu0 %v701
          %719 = vmatpush.bf16.msra.mxu0 %v700
          %720 = vmatpush.bf16.msra.mxu0 %v699
          %721 = vmatpush.bf16.msra.mxu0 %v698
          %722 = vmatmul.bf16.gmra.mxu0 %v658
          %v723 = vpop.f32.mrf.mxu0
          %v724 = vadd.f32 0.0, %v723
          %v725 = vpop.f32.mrf.mxu0
          %v726 = vadd.f32 0.0, %v725
          %727 = vmatmul.bf16.gmra.mxu0 %v659
          %v728 = vpop.f32.mrf.mxu0
          %v729 = vadd.f32 0.0, %v728
          %v730 = vpop.f32.mrf.mxu0
          %v731 = vadd.f32 0.0, %v730
          %732 = vmatmul.bf16.gmra.mxu0 %v660
          %v733 = vpop.f32.mrf.mxu0
          %v734 = vadd.f32 0.0, %v733
          %v735 = vpop.f32.mrf.mxu0
          %v736 = vadd.f32 0.0, %v735
          %737 = vmatmul.bf16.gmra.mxu0 %v661
          %v738 = vpop.f32.mrf.mxu0
          %v739 = vadd.f32 0.0, %v738
          %v740 = vpop.f32.mrf.mxu0
          %v741 = vadd.f32 0.0, %v740
          %742 = vdwg.mxu0
          %v743 = vadd.f32 %v491, %v724
          %v744 = vadd.f32 %v492, %v726
          %v745 = vadd.f32 %v493, %v729
          %v746 = vadd.f32 %v494, %v731
          %v747 = vadd.f32 %v495, %v734
          %v748 = vadd.f32 %v496, %v736
          %v749 = vadd.f32 %v497, %v739
          %v750 = vadd.f32 %v498, %v741
          %v751 = vld [vmem:[%s307] sm:$0xe]
          %v752 = vld [vmem:[%s307 + $0x8] sm:$0xe]
          %v753 = vld [vmem:[%s307 + $0x10] sm:$0xe]
          %v754 = vld [vmem:[%s307 + $0x18] sm:$0xe]
          %v755 = vld [vmem:[%s307 + $0x20] sm:$0xe]
          %v756 = vld [vmem:[%s307 + $0x28] sm:$0xe]
          %v757 = vld [vmem:[%s307 + $0x30] sm:$0xe]
          %v758 = vld [vmem:[%s307 + $0x38] sm:$0xe]
          %vm775 = vcmask 1042432
          %vm776 = vcmask 1046532
          %vm777 = vmor %vm775, %vm776
          %v778 = vrot.slane %v751, 5
          %v779 = vrot.slane %v778, 4
          %v780 = vrot.slane %v500, 5
          %v781 = vsel %vm777, %v779, %v780
          %v782 = vrot.slane %v752, 5
          %v783 = vrot.slane %v782, 4
          %v784 = vrot.slane %v502, 5
          %v785 = vsel %vm777, %v783, %v784
          %v786 = vrot.slane %v753, 5
          %v787 = vrot.slane %v786, 4
          %v788 = vrot.slane %v504, 5
          %v789 = vsel %vm777, %v787, %v788
          %v790 = vrot.slane %v754, 5
          %v791 = vrot.slane %v790, 4
          %v792 = vrot.slane %v506, 5
          %v793 = vsel %vm777, %v791, %v792
          %v794 = vrot.slane %v755, 5
          %v795 = vrot.slane %v794, 4
          %v796 = vrot.slane %v508, 5
          %v797 = vsel %vm777, %v795, %v796
          %v798 = vrot.slane %v756, 5
          %v799 = vrot.slane %v798, 4
          %v800 = vrot.slane %v510, 5
          %v801 = vsel %vm777, %v799, %v800
          %v802 = vrot.slane %v757, 5
          %v803 = vrot.slane %v802, 4
          %v804 = vrot.slane %v512, 5
          %v805 = vsel %vm777, %v803, %v804
          %v806 = vrot.slane %v758, 5
          %v807 = vrot.slane %v806, 4
          %v808 = vrot.slane %v514, 5
          %v809 = vsel %vm777, %v807, %v808
          %s810 = sadd.s32 %s370, 2
          %s811 = smul.u32 %s810, 16
          %s812 = smul.addr %s811, 4
          %s813 = scalar_lea.vmem [#allocation3], %s812
          %v814 = vld [vmem:[%s813] sm:$0xf]
          %v815 = vld [vmem:[%s813 + $0x4] sm:$0xf]
          %v816 = vld [vmem:[%s813 + $0x8] sm:$0xf]
          %v817 = vld [vmem:[%s813 + $0xc] sm:$0xf]
          %v818 = vld [vmem:[%s813 + $0x10] sm:$0xf]
          %v819 = vld [vmem:[%s813 + $0x14] sm:$0xf]
          %v820 = vld [vmem:[%s813 + $0x18] sm:$0xf]
          %v821 = vld [vmem:[%s813 + $0x1c] sm:$0xf]
          %v822 = vld [vmem:[%s813 + $0x20] sm:$0xf]
          %v823 = vld [vmem:[%s813 + $0x24] sm:$0xf]
          %v824 = vld [vmem:[%s813 + $0x28] sm:$0xf]
          %v825 = vld [vmem:[%s813 + $0x2c] sm:$0xf]
          %v826 = vld [vmem:[%s813 + $0x30] sm:$0xf]
          %v827 = vld [vmem:[%s813 + $0x34] sm:$0xf]
          %v828 = vld [vmem:[%s813 + $0x38] sm:$0xf]
          %v829 = vld [vmem:[%s813 + $0x3c] sm:$0xf]
          %v830 = vunpack.c.l.b16 %v781
          %v831 = vunpack.c.l.b16 %v785
          %v832 = vunpack.c.l.b16 %v789
          %v833 = vunpack.c.l.b16 %v793
          %v834 = vunpack.c.l.b16 %v797
          %v835 = vunpack.c.l.b16 %v801
          %v836 = vunpack.c.l.b16 %v805
          %v837 = vunpack.c.l.b16 %v809
          %v838 = vpack.c.b16 %v831, %v830
          %v839 = vpack.c.b16 %v833, %v832
          %v840 = vpack.c.b16 %v835, %v834
          %v841 = vpack.c.b16 %v837, %v836
          %v862 = vunpack.c.l.b16 %v814
          %v863 = vunpack.c.l.b16 %v815
          %v864 = vunpack.c.l.b16 %v816
          %v865 = vunpack.c.l.b16 %v817
          %v866 = vunpack.c.l.b16 %v818
          %v867 = vunpack.c.l.b16 %v819
          %v868 = vunpack.c.l.b16 %v820
          %v869 = vunpack.c.l.b16 %v821
          %v870 = vunpack.c.l.b16 %v822
          %v871 = vunpack.c.l.b16 %v823
          %v872 = vunpack.c.l.b16 %v824
          %v873 = vunpack.c.l.b16 %v825
          %v874 = vunpack.c.l.b16 %v826
          %v875 = vunpack.c.l.b16 %v827
          %v876 = vunpack.c.l.b16 %v828
          %v877 = vunpack.c.l.b16 %v829
          %v878 = vpack.c.b16 %v863, %v862
          %v879 = vpack.c.b16 %v865, %v864
          %v880 = vpack.c.b16 %v867, %v866
          %v881 = vpack.c.b16 %v869, %v868
          %v882 = vpack.c.b16 %v871, %v870
          %v883 = vpack.c.b16 %v873, %v872
          %v884 = vpack.c.b16 %v875, %v874
          %v885 = vpack.c.b16 %v877, %v876
          %894 = vmatpush.bf16.msra.mxu0 %v885
          %895 = vmatpush.bf16.msra.mxu0 %v884
          %896 = vmatpush.bf16.msra.mxu0 %v883
          %897 = vmatpush.bf16.msra.mxu0 %v882
          %898 = vmatpush.bf16.msra.mxu0 %v881
          %899 = vmatpush.bf16.msra.mxu0 %v880
          %900 = vmatpush.bf16.msra.mxu0 %v879
          %901 = vmatpush.bf16.msra.mxu0 %v878
          %902 = vmatmul.bf16.gmra.mxu0 %v838
          %v903 = vpop.f32.mrf.mxu0
          %v904 = vadd.f32 0.0, %v903
          %v905 = vpop.f32.mrf.mxu0
          %v906 = vadd.f32 0.0, %v905
          %907 = vmatmul.bf16.gmra.mxu0 %v839
          %v908 = vpop.f32.mrf.mxu0
          %v909 = vadd.f32 0.0, %v908
          %v910 = vpop.f32.mrf.mxu0
          %v911 = vadd.f32 0.0, %v910
          %912 = vmatmul.bf16.gmra.mxu0 %v840
          %v913 = vpop.f32.mrf.mxu0
          %v914 = vadd.f32 0.0, %v913
          %v915 = vpop.f32.mrf.mxu0
          %v916 = vadd.f32 0.0, %v915
          %917 = vmatmul.bf16.gmra.mxu0 %v841
          %v918 = vpop.f32.mrf.mxu0
          %v919 = vadd.f32 0.0, %v918
          %v920 = vpop.f32.mrf.mxu0
          %v921 = vadd.f32 0.0, %v920
          %922 = vdwg.mxu0
          %v923 = vadd.f32 %v743, %v904
          %v924 = vadd.f32 %v744, %v906
          %v925 = vadd.f32 %v745, %v909
          %v926 = vadd.f32 %v746, %v911
          %v927 = vadd.f32 %v747, %v914
          %v928 = vadd.f32 %v748, %v916
          %v929 = vadd.f32 %v749, %v919
          %v930 = vadd.f32 %v750, %v921
          %s931 = scalar_lea.vmem %s307, 8
          %v932 = vld [vmem:[%s931] sm:$0xf]
          %v933 = vld [vmem:[%s931 + $0x8] sm:$0xf]
          %v934 = vld [vmem:[%s931 + $0x10] sm:$0xf]
          %v935 = vld [vmem:[%s931 + $0x18] sm:$0xf]
          %v936 = vld [vmem:[%s931 + $0x20] sm:$0xf]
          %v937 = vld [vmem:[%s931 + $0x28] sm:$0xf]
          %v938 = vld [vmem:[%s931 + $0x30] sm:$0xf]
          %v939 = vld [vmem:[%s931 + $0x38] sm:$0xf]
          %s940 = sadd.s32 %s370, 3
          %s941 = smul.u32 %s940, 16
          %s942 = smul.addr %s941, 4
          %s943 = scalar_lea.vmem [#allocation3], %s942
          %v944 = vld [vmem:[%s943] sm:$0xf]
          %v945 = vld [vmem:[%s943 + $0x4] sm:$0xf]
          %v946 = vld [vmem:[%s943 + $0x8] sm:$0xf]
          %v947 = vld [vmem:[%s943 + $0xc] sm:$0xf]
          %v948 = vld [vmem:[%s943 + $0x10] sm:$0xf]
          %v949 = vld [vmem:[%s943 + $0x14] sm:$0xf]
          %v950 = vld [vmem:[%s943 + $0x18] sm:$0xf]
          %v951 = vld [vmem:[%s943 + $0x1c] sm:$0xf]
          %v952 = vld [vmem:[%s943 + $0x20] sm:$0xf]
          %v953 = vld [vmem:[%s943 + $0x24] sm:$0xf]
          %v954 = vld [vmem:[%s943 + $0x28] sm:$0xf]
          %v955 = vld [vmem:[%s943 + $0x2c] sm:$0xf]
          %v956 = vld [vmem:[%s943 + $0x30] sm:$0xf]
          %v957 = vld [vmem:[%s943 + $0x34] sm:$0xf]
          %v958 = vld [vmem:[%s943 + $0x38] sm:$0xf]
          %v959 = vld [vmem:[%s943 + $0x3c] sm:$0xf]
          %v968 = vunpack.c.l.b16 %v932
          %v969 = vunpack.c.l.b16 %v933
          %v970 = vunpack.c.l.b16 %v934
          %v971 = vunpack.c.l.b16 %v935
          %v972 = vunpack.c.l.b16 %v936
          %v973 = vunpack.c.l.b16 %v937
          %v974 = vunpack.c.l.b16 %v938
          %v975 = vunpack.c.l.b16 %v939
          %v976 = vpack.c.b16 %v969, %v968
          %v977 = vpack.c.b16 %v971, %v970
          %v978 = vpack.c.b16 %v973, %v972
          %v979 = vpack.c.b16 %v975, %v974
          %v1000 = vunpack.c.l.b16 %v944
          %v1001 = vunpack.c.l.b16 %v945
          %v1002 = vunpack.c.l.b16 %v946
          %v1003 = vunpack.c.l.b16 %v947
          %v1004 = vunpack.c.l.b16 %v948
          %v1005 = vunpack.c.l.b16 %v949
          %v1006 = vunpack.c.l.b16 %v950
          %v1007 = vunpack.c.l.b16 %v951
          %v1008 = vunpack.c.l.b16 %v952
          %v1009 = vunpack.c.l.b16 %v953
          %v1010 = vunpack.c.l.b16 %v954
          %v1011 = vunpack.c.l.b16 %v955
          %v1012 = vunpack.c.l.b16 %v956
          %v1013 = vunpack.c.l.b16 %v957
          %v1014 = vunpack.c.l.b16 %v958
          %v1015 = vunpack.c.l.b16 %v959
          %v1016 = vpack.c.b16 %v1001, %v1000
          %v1017 = vpack.c.b16 %v1003, %v1002
          %v1018 = vpack.c.b16 %v1005, %v1004
          %v1019 = vpack.c.b16 %v1007, %v1006
          %v1020 = vpack.c.b16 %v1009, %v1008
          %v1021 = vpack.c.b16 %v1011, %v1010
          %v1022 = vpack.c.b16 %v1013, %v1012
          %v1023 = vpack.c.b16 %v1015, %v1014
          %1032 = vmatpush.bf16.msra.mxu0 %v1023
          %1033 = vmatpush.bf16.msra.mxu0 %v1022
          %1034 = vmatpush.bf16.msra.mxu0 %v1021
          %1035 = vmatpush.bf16.msra.mxu0 %v1020
          %1036 = vmatpush.bf16.msra.mxu0 %v1019
          %1037 = vmatpush.bf16.msra.mxu0 %v1018
          %1038 = vmatpush.bf16.msra.mxu0 %v1017
          %1039 = vmatpush.bf16.msra.mxu0 %v1016
          %1040 = vmatmul.bf16.gmra.mxu0 %v976
          %v1041 = vpop.f32.mrf.mxu0
          %v1042 = vadd.f32 0.0, %v1041
          %v1043 = vpop.f32.mrf.mxu0
          %v1044 = vadd.f32 0.0, %v1043
          %1045 = vmatmul.bf16.gmra.mxu0 %v977
          %v1046 = vpop.f32.mrf.mxu0
          %v1047 = vadd.f32 0.0, %v1046
          %v1048 = vpop.f32.mrf.mxu0
          %v1049 = vadd.f32 0.0, %v1048
          %1050 = vmatmul.bf16.gmra.mxu0 %v978
          %v1051 = vpop.f32.mrf.mxu0
          %v1052 = vadd.f32 0.0, %v1051
          %v1053 = vpop.f32.mrf.mxu0
          %v1054 = vadd.f32 0.0, %v1053
          %1055 = vmatmul.bf16.gmra.mxu0 %v979
          %v1056 = vpop.f32.mrf.mxu0
          %v1057 = vadd.f32 0.0, %v1056
          %v1058 = vpop.f32.mrf.mxu0
          %v1059 = vadd.f32 0.0, %v1058
          %1060 = vdwg.mxu0
          %v1061 = vadd.f32 %v923, %v1042
          %v1062 = vadd.f32 %v924, %v1044
          %v1063 = vadd.f32 %v925, %v1047
          %v1064 = vadd.f32 %v926, %v1049
          %v1065 = vadd.f32 %v927, %v1052
          %v1066 = vadd.f32 %v928, %v1054
          %v1067 = vadd.f32 %v929, %v1057
          %v1068 = vadd.f32 %v930, %v1059
          %v1069 = vld [vmem:[%s931] sm:$0xf]
          %v1070 = vld [vmem:[%s931 + $0x4] sm:$0x1]
          %v1071 = vld [vmem:[%s931 + $0x8] sm:$0xf]
          %v1072 = vld [vmem:[%s931 + $0xc] sm:$0x1]
          %v1073 = vld [vmem:[%s931 + $0x10] sm:$0xf]
          %v1074 = vld [vmem:[%s931 + $0x14] sm:$0x1]
          %v1075 = vld [vmem:[%s931 + $0x18] sm:$0xf]
          %v1076 = vld [vmem:[%s931 + $0x1c] sm:$0x1]
          %v1077 = vld [vmem:[%s931 + $0x20] sm:$0xf]
          %v1078 = vld [vmem:[%s931 + $0x24] sm:$0x1]
          %v1079 = vld [vmem:[%s931 + $0x28] sm:$0xf]
          %v1080 = vld [vmem:[%s931 + $0x2c] sm:$0x1]
          %v1081 = vld [vmem:[%s931 + $0x30] sm:$0xf]
          %v1082 = vld [vmem:[%s931 + $0x34] sm:$0x1]
          %v1083 = vld [vmem:[%s931 + $0x38] sm:$0xf]
          %v1084 = vld [vmem:[%s931 + $0x3c] sm:$0x1]
          %v1086 = vshrl.u32 %v1069, 16
          %v1088 = vrot.slane %v1086, 4
          %v1089 = vshll.u32 %v1069, 16
          %v1091 = vrot.slane %v1089, 5
          %v1092 = vor.u32 %v1088, %v1091
          %v1093 = vrot.slane %v1092, 4
          %v1095 = vshll.u32 %v1070, 16
          %v1097 = vrot.slane %v1095, 5
          %v1098 = vsel %vm517, %v1093, %v1097
          %v1100 = vshrl.u32 %v1071, 16
          %v1102 = vrot.slane %v1100, 4
          %v1103 = vshll.u32 %v1071, 16
          %v1105 = vrot.slane %v1103, 5
          %v1106 = vor.u32 %v1102, %v1105
          %v1107 = vrot.slane %v1106, 4
          %v1109 = vshll.u32 %v1072, 16
          %v1111 = vrot.slane %v1109, 5
          %v1112 = vsel %vm517, %v1107, %v1111
          %v1114 = vshrl.u32 %v1073, 16
          %v1116 = vrot.slane %v1114, 4
          %v1117 = vshll.u32 %v1073, 16
          %v1119 = vrot.slane %v1117, 5
          %v1120 = vor.u32 %v1116, %v1119
          %v1121 = vrot.slane %v1120, 4
          %v1123 = vshll.u32 %v1074, 16
          %v1125 = vrot.slane %v1123, 5
          %v1126 = vsel %vm517, %v1121, %v1125
          %v1128 = vshrl.u32 %v1075, 16
          %v1130 = vrot.slane %v1128, 4
          %v1131 = vshll.u32 %v1075, 16
          %v1133 = vrot.slane %v1131, 5
          %v1134 = vor.u32 %v1130, %v1133
          %v1135 = vrot.slane %v1134, 4
          %v1137 = vshll.u32 %v1076, 16
          %v1139 = vrot.slane %v1137, 5
          %v1140 = vsel %vm517, %v1135, %v1139
          %v1142 = vshrl.u32 %v1077, 16
          %v1144 = vrot.slane %v1142, 4
          %v1145 = vshll.u32 %v1077, 16
          %v1147 = vrot.slane %v1145, 5
          %v1148 = vor.u32 %v1144, %v1147
          %v1149 = vrot.slane %v1148, 4
          %v1151 = vshll.u32 %v1078, 16
          %v1153 = vrot.slane %v1151, 5
          %v1154 = vsel %vm517, %v1149, %v1153
          %v1156 = vshrl.u32 %v1079, 16
          %v1158 = vrot.slane %v1156, 4
          %v1159 = vshll.u32 %v1079, 16
          %v1161 = vrot.slane %v1159, 5
          %v1162 = vor.u32 %v1158, %v1161
          %v1163 = vrot.slane %v1162, 4
          %v1165 = vshll.u32 %v1080, 16
          %v1167 = vrot.slane %v1165, 5
          %v1168 = vsel %vm517, %v1163, %v1167
          %v1170 = vshrl.u32 %v1081, 16
          %v1172 = vrot.slane %v1170, 4
          %v1173 = vshll.u32 %v1081, 16
          %v1175 = vrot.slane %v1173, 5
          %v1176 = vor.u32 %v1172, %v1175
          %v1177 = vrot.slane %v1176, 4
          %v1179 = vshll.u32 %v1082, 16
          %v1181 = vrot.slane %v1179, 5
          %v1182 = vsel %vm517, %v1177, %v1181
          %v1184 = vshrl.u32 %v1083, 16
          %v1186 = vrot.slane %v1184, 4
          %v1187 = vshll.u32 %v1083, 16
          %v1189 = vrot.slane %v1187, 5
          %v1190 = vor.u32 %v1186, %v1189
          %v1191 = vrot.slane %v1190, 4
          %v1193 = vshll.u32 %v1084, 16
          %v1195 = vrot.slane %v1193, 5
          %v1196 = vsel %vm517, %v1191, %v1195
          %s1197 = sadd.s32 %s370, 4
          %s1198 = smul.u32 %s1197, 16
          %s1199 = smul.addr %s1198, 4
          %s1200 = scalar_lea.vmem [#allocation3], %s1199
          %v1201 = vld [vmem:[%s1200] sm:$0xf]
          %v1202 = vld [vmem:[%s1200 + $0x4] sm:$0xf]
          %v1203 = vld [vmem:[%s1200 + $0x8] sm:$0xf]
          %v1204 = vld [vmem:[%s1200 + $0xc] sm:$0xf]
          %v1205 = vld [vmem:[%s1200 + $0x10] sm:$0xf]
          %v1206 = vld [vmem:[%s1200 + $0x14] sm:$0xf]
          %v1207 = vld [vmem:[%s1200 + $0x18] sm:$0xf]
          %v1208 = vld [vmem:[%s1200 + $0x1c] sm:$0xf]
          %v1209 = vld [vmem:[%s1200 + $0x20] sm:$0xf]
          %v1210 = vld [vmem:[%s1200 + $0x24] sm:$0xf]
          %v1211 = vld [vmem:[%s1200 + $0x28] sm:$0xf]
          %v1212 = vld [vmem:[%s1200 + $0x2c] sm:$0xf]
          %v1213 = vld [vmem:[%s1200 + $0x30] sm:$0xf]
          %v1214 = vld [vmem:[%s1200 + $0x34] sm:$0xf]
          %v1215 = vld [vmem:[%s1200 + $0x38] sm:$0xf]
          %v1216 = vld [vmem:[%s1200 + $0x3c] sm:$0xf]
          %v1217 = vunpack.c.l.b16 %v1098
          %v1218 = vunpack.c.l.b16 %v1112
          %v1219 = vunpack.c.l.b16 %v1126
          %v1220 = vunpack.c.l.b16 %v1140
          %v1221 = vunpack.c.l.b16 %v1154
          %v1222 = vunpack.c.l.b16 %v1168
          %v1223 = vunpack.c.l.b16 %v1182
          %v1224 = vunpack.c.l.b16 %v1196
          %v1225 = vpack.c.b16 %v1218, %v1217
          %v1226 = vpack.c.b16 %v1220, %v1219
          %v1227 = vpack.c.b16 %v1222, %v1221
          %v1228 = vpack.c.b16 %v1224, %v1223
          %v1249 = vunpack.c.l.b16 %v1201
          %v1250 = vunpack.c.l.b16 %v1202
          %v1251 = vunpack.c.l.b16 %v1203
          %v1252 = vunpack.c.l.b16 %v1204
          %v1253 = vunpack.c.l.b16 %v1205
          %v1254 = vunpack.c.l.b16 %v1206
          %v1255 = vunpack.c.l.b16 %v1207
          %v1256 = vunpack.c.l.b16 %v1208
          %v1257 = vunpack.c.l.b16 %v1209
          %v1258 = vunpack.c.l.b16 %v1210
          %v1259 = vunpack.c.l.b16 %v1211
          %v1260 = vunpack.c.l.b16 %v1212
          %v1261 = vunpack.c.l.b16 %v1213
          %v1262 = vunpack.c.l.b16 %v1214
          %v1263 = vunpack.c.l.b16 %v1215
          %v1264 = vunpack.c.l.b16 %v1216
          %v1265 = vpack.c.b16 %v1250, %v1249
          %v1266 = vpack.c.b16 %v1252, %v1251
          %v1267 = vpack.c.b16 %v1254, %v1253
          %v1268 = vpack.c.b16 %v1256, %v1255
          %v1269 = vpack.c.b16 %v1258, %v1257
          %v1270 = vpack.c.b16 %v1260, %v1259
          %v1271 = vpack.c.b16 %v1262, %v1261
          %v1272 = vpack.c.b16 %v1264, %v1263
          %1281 = vmatpush.bf16.msra.mxu0 %v1272
          %1282 = vmatpush.bf16.msra.mxu0 %v1271
          %1283 = vmatpush.bf16.msra.mxu0 %v1270
          %1284 = vmatpush.bf16.msra.mxu0 %v1269
          %1285 = vmatpush.bf16.msra.mxu0 %v1268
          %1286 = vmatpush.bf16.msra.mxu0 %v1267
          %1287 = vmatpush.bf16.msra.mxu0 %v1266
          %1288 = vmatpush.bf16.msra.mxu0 %v1265
          %1289 = vmatmul.bf16.gmra.mxu0 %v1225
          %v1290 = vpop.f32.mrf.mxu0
          %v1291 = vadd.f32 0.0, %v1290
          %v1292 = vpop.f32.mrf.mxu0
          %v1293 = vadd.f32 0.0, %v1292
          %1294 = vmatmul.bf16.gmra.mxu0 %v1226
          %v1295 = vpop.f32.mrf.mxu0
          %v1296 = vadd.f32 0.0, %v1295
          %v1297 = vpop.f32.mrf.mxu0
          %v1298 = vadd.f32 0.0, %v1297
          %1299 = vmatmul.bf16.gmra.mxu0 %v1227
          %v1300 = vpop.f32.mrf.mxu0
          %v1301 = vadd.f32 0.0, %v1300
          %v1302 = vpop.f32.mrf.mxu0
          %v1303 = vadd.f32 0.0, %v1302
          %1304 = vmatmul.bf16.gmra.mxu0 %v1228
          %v1305 = vpop.f32.mrf.mxu0
          %v1306 = vadd.f32 0.0, %v1305
          %v1307 = vpop.f32.mrf.mxu0
          %v1308 = vadd.f32 0.0, %v1307
          %1309 = vdwg.mxu0
          %v1310 = vadd.f32 %v1061, %v1291
          %v1311 = vadd.f32 %v1062, %v1293
          %v1312 = vadd.f32 %v1063, %v1296
          %v1313 = vadd.f32 %v1064, %v1298
          %v1314 = vadd.f32 %v1065, %v1301
          %v1315 = vadd.f32 %v1066, %v1303
          %v1316 = vadd.f32 %v1067, %v1306
          %v1317 = vadd.f32 %v1068, %v1308
          %v1318 = vld [vmem:[%s931] sm:$0xe]
          %v1319 = vld [vmem:[%s931 + $0x8] sm:$0xe]
          %v1320 = vld [vmem:[%s931 + $0x10] sm:$0xe]
          %v1321 = vld [vmem:[%s931 + $0x18] sm:$0xe]
          %v1322 = vld [vmem:[%s931 + $0x20] sm:$0xe]
          %v1323 = vld [vmem:[%s931 + $0x28] sm:$0xe]
          %v1324 = vld [vmem:[%s931 + $0x30] sm:$0xe]
          %v1325 = vld [vmem:[%s931 + $0x38] sm:$0xe]
          %v1342 = vrot.slane %v1318, 5
          %v1343 = vrot.slane %v1342, 4
          %v1344 = vrot.slane %v1070, 5
          %v1345 = vsel %vm777, %v1343, %v1344
          %v1346 = vrot.slane %v1319, 5
          %v1347 = vrot.slane %v1346, 4
          %v1348 = vrot.slane %v1072, 5
          %v1349 = vsel %vm777, %v1347, %v1348
          %v1350 = vrot.slane %v1320, 5
          %v1351 = vrot.slane %v1350, 4
          %v1352 = vrot.slane %v1074, 5
          %v1353 = vsel %vm777, %v1351, %v1352
          %v1354 = vrot.slane %v1321, 5
          %v1355 = vrot.slane %v1354, 4
          %v1356 = vrot.slane %v1076, 5
          %v1357 = vsel %vm777, %v1355, %v1356
          %v1358 = vrot.slane %v1322, 5
          %v1359 = vrot.slane %v1358, 4
          %v1360 = vrot.slane %v1078, 5
          %v1361 = vsel %vm777, %v1359, %v1360
          %v1362 = vrot.slane %v1323, 5
          %v1363 = vrot.slane %v1362, 4
          %v1364 = vrot.slane %v1080, 5
          %v1365 = vsel %vm777, %v1363, %v1364
          %v1366 = vrot.slane %v1324, 5
          %v1367 = vrot.slane %v1366, 4
          %v1368 = vrot.slane %v1082, 5
          %v1369 = vsel %vm777, %v1367, %v1368
          %v1370 = vrot.slane %v1325, 5
          %v1371 = vrot.slane %v1370, 4
          %v1372 = vrot.slane %v1084, 5
          %v1373 = vsel %vm777, %v1371, %v1372
          %s1374 = sadd.s32 %s370, 5
          %s1375 = smul.u32 %s1374, 16
          %s1376 = smul.addr %s1375, 4
          %s1377 = scalar_lea.vmem [#allocation3], %s1376
          %v1378 = vld [vmem:[%s1377] sm:$0xf]
          %v1379 = vld [vmem:[%s1377 + $0x4] sm:$0xf]
          %v1380 = vld [vmem:[%s1377 + $0x8] sm:$0xf]
          %v1381 = vld [vmem:[%s1377 + $0xc] sm:$0xf]
          %v1382 = vld [vmem:[%s1377 + $0x10] sm:$0xf]
          %v1383 = vld [vmem:[%s1377 + $0x14] sm:$0xf]
          %v1384 = vld [vmem:[%s1377 + $0x18] sm:$0xf]
          %v1385 = vld [vmem:[%s1377 + $0x1c] sm:$0xf]
          %v1386 = vld [vmem:[%s1377 + $0x20] sm:$0xf]
          %v1387 = vld [vmem:[%s1377 + $0x24] sm:$0xf]
          %v1388 = vld [vmem:[%s1377 + $0x28] sm:$0xf]
          %v1389 = vld [vmem:[%s1377 + $0x2c] sm:$0xf]
          %v1390 = vld [vmem:[%s1377 + $0x30] sm:$0xf]
          %v1391 = vld [vmem:[%s1377 + $0x34] sm:$0xf]
          %v1392 = vld [vmem:[%s1377 + $0x38] sm:$0xf]
          %v1393 = vld [vmem:[%s1377 + $0x3c] sm:$0xf]
          %v1394 = vunpack.c.l.b16 %v1345
          %v1395 = vunpack.c.l.b16 %v1349
          %v1396 = vunpack.c.l.b16 %v1353
          %v1397 = vunpack.c.l.b16 %v1357
          %v1398 = vunpack.c.l.b16 %v1361
          %v1399 = vunpack.c.l.b16 %v1365
          %v1400 = vunpack.c.l.b16 %v1369
          %v1401 = vunpack.c.l.b16 %v1373
          %v1402 = vpack.c.b16 %v1395, %v1394
          %v1403 = vpack.c.b16 %v1397, %v1396
          %v1404 = vpack.c.b16 %v1399, %v1398
          %v1405 = vpack.c.b16 %v1401, %v1400
          %v1426 = vunpack.c.l.b16 %v1378
          %v1427 = vunpack.c.l.b16 %v1379
          %v1428 = vunpack.c.l.b16 %v1380
          %v1429 = vunpack.c.l.b16 %v1381
          %v1430 = vunpack.c.l.b16 %v1382
          %v1431 = vunpack.c.l.b16 %v1383
          %v1432 = vunpack.c.l.b16 %v1384
          %v1433 = vunpack.c.l.b16 %v1385
          %v1434 = vunpack.c.l.b16 %v1386
          %v1435 = vunpack.c.l.b16 %v1387
          %v1436 = vunpack.c.l.b16 %v1388
          %v1437 = vunpack.c.l.b16 %v1389
          %v1438 = vunpack.c.l.b16 %v1390
          %v1439 = vunpack.c.l.b16 %v1391
          %v1440 = vunpack.c.l.b16 %v1392
          %v1441 = vunpack.c.l.b16 %v1393
          %v1442 = vpack.c.b16 %v1427, %v1426
          %v1443 = vpack.c.b16 %v1429, %v1428
          %v1444 = vpack.c.b16 %v1431, %v1430
          %v1445 = vpack.c.b16 %v1433, %v1432
          %v1446 = vpack.c.b16 %v1435, %v1434
          %v1447 = vpack.c.b16 %v1437, %v1436
          %v1448 = vpack.c.b16 %v1439, %v1438
          %v1449 = vpack.c.b16 %v1441, %v1440
          %1458 = vmatpush.bf16.msra.mxu0 %v1449
          %1459 = vmatpush.bf16.msra.mxu0 %v1448
          %1460 = vmatpush.bf16.msra.mxu0 %v1447
          %1461 = vmatpush.bf16.msra.mxu0 %v1446
          %1462 = vmatpush.bf16.msra.mxu0 %v1445
          %1463 = vmatpush.bf16.msra.mxu0 %v1444
          %1464 = vmatpush.bf16.msra.mxu0 %v1443
          %1465 = vmatpush.bf16.msra.mxu0 %v1442
          %1466 = vmatmul.bf16.gmra.mxu0 %v1402
          %v1467 = vpop.f32.mrf.mxu0
          %v1468 = vadd.f32 0.0, %v1467
          %v1469 = vpop.f32.mrf.mxu0
          %v1470 = vadd.f32 0.0, %v1469
          %1471 = vmatmul.bf16.gmra.mxu0 %v1403
          %v1472 = vpop.f32.mrf.mxu0
          %v1473 = vadd.f32 0.0, %v1472
          %v1474 = vpop.f32.mrf.mxu0
          %v1475 = vadd.f32 0.0, %v1474
          %1476 = vmatmul.bf16.gmra.mxu0 %v1404
          %v1477 = vpop.f32.mrf.mxu0
          %v1478 = vadd.f32 0.0, %v1477
          %v1479 = vpop.f32.mrf.mxu0
          %v1480 = vadd.f32 0.0, %v1479
          %1481 = vmatmul.bf16.gmra.mxu0 %v1405
          %v1482 = vpop.f32.mrf.mxu0
          %v1483 = vadd.f32 0.0, %v1482
          %v1484 = vpop.f32.mrf.mxu0
          %v1485 = vadd.f32 0.0, %v1484
          %1486 = vdwg.mxu0
          %v1487 = vadd.f32 %v1310, %v1468
          %v1488 = vadd.f32 %v1311, %v1470
          %v1489 = vadd.f32 %v1312, %v1473
          %v1490 = vadd.f32 %v1313, %v1475
          %v1491 = vadd.f32 %v1314, %v1478
          %v1492 = vadd.f32 %v1315, %v1480
          %v1493 = vadd.f32 %v1316, %v1483
          %v1494 = vadd.f32 %v1317, %v1485
          %s1495 = scalar_lea.vmem %s307, 16
          %v1496 = vld [vmem:[%s1495] sm:$0xf]
          %v1497 = vld [vmem:[%s1495 + $0x8] sm:$0xf]
          %v1498 = vld [vmem:[%s1495 + $0x10] sm:$0xf]
          %v1499 = vld [vmem:[%s1495 + $0x18] sm:$0xf]
          %v1500 = vld [vmem:[%s1495 + $0x20] sm:$0xf]
          %v1501 = vld [vmem:[%s1495 + $0x28] sm:$0xf]
          %v1502 = vld [vmem:[%s1495 + $0x30] sm:$0xf]
          %v1503 = vld [vmem:[%s1495 + $0x38] sm:$0xf]
          %s1504 = sadd.s32 %s370, 6
          %s1505 = smul.u32 %s1504, 16
          %s1506 = smul.addr %s1505, 4
          %s1507 = scalar_lea.vmem [#allocation3], %s1506
          %v1508 = vld [vmem:[%s1507] sm:$0xf]
          %v1509 = vld [vmem:[%s1507 + $0x4] sm:$0xf]
          %v1510 = vld [vmem:[%s1507 + $0x8] sm:$0xf]
          %v1511 = vld [vmem:[%s1507 + $0xc] sm:$0xf]
          %v1512 = vld [vmem:[%s1507 + $0x10] sm:$0xf]
          %v1513 = vld [vmem:[%s1507 + $0x14] sm:$0xf]
          %v1514 = vld [vmem:[%s1507 + $0x18] sm:$0xf]
          %v1515 = vld [vmem:[%s1507 + $0x1c] sm:$0xf]
          %v1516 = vld [vmem:[%s1507 + $0x20] sm:$0xf]
          %v1517 = vld [vmem:[%s1507 + $0x24] sm:$0xf]
          %v1518 = vld [vmem:[%s1507 + $0x28] sm:$0xf]
          %v1519 = vld [vmem:[%s1507 + $0x2c] sm:$0xf]
          %v1520 = vld [vmem:[%s1507 + $0x30] sm:$0xf]
          %v1521 = vld [vmem:[%s1507 + $0x34] sm:$0xf]
          %v1522 = vld [vmem:[%s1507 + $0x38] sm:$0xf]
          %v1523 = vld [vmem:[%s1507 + $0x3c] sm:$0xf]
          %v1532 = vunpack.c.l.b16 %v1496
          %v1533 = vunpack.c.l.b16 %v1497
          %v1534 = vunpack.c.l.b16 %v1498
          %v1535 = vunpack.c.l.b16 %v1499
          %v1536 = vunpack.c.l.b16 %v1500
          %v1537 = vunpack.c.l.b16 %v1501
          %v1538 = vunpack.c.l.b16 %v1502
          %v1539 = vunpack.c.l.b16 %v1503
          %v1540 = vpack.c.b16 %v1533, %v1532
          %v1541 = vpack.c.b16 %v1535, %v1534
          %v1542 = vpack.c.b16 %v1537, %v1536
          %v1543 = vpack.c.b16 %v1539, %v1538
          %v1564 = vunpack.c.l.b16 %v1508
          %v1565 = vunpack.c.l.b16 %v1509
          %v1566 = vunpack.c.l.b16 %v1510
          %v1567 = vunpack.c.l.b16 %v1511
          %v1568 = vunpack.c.l.b16 %v1512
          %v1569 = vunpack.c.l.b16 %v1513
          %v1570 = vunpack.c.l.b16 %v1514
          %v1571 = vunpack.c.l.b16 %v1515
          %v1572 = vunpack.c.l.b16 %v1516
          %v1573 = vunpack.c.l.b16 %v1517
          %v1574 = vunpack.c.l.b16 %v1518
          %v1575 = vunpack.c.l.b16 %v1519
          %v1576 = vunpack.c.l.b16 %v1520
          %v1577 = vunpack.c.l.b16 %v1521
          %v1578 = vunpack.c.l.b16 %v1522
          %v1579 = vunpack.c.l.b16 %v1523
          %v1580 = vpack.c.b16 %v1565, %v1564
          %v1581 = vpack.c.b16 %v1567, %v1566
          %v1582 = vpack.c.b16 %v1569, %v1568
          %v1583 = vpack.c.b16 %v1571, %v1570
          %v1584 = vpack.c.b16 %v1573, %v1572
          %v1585 = vpack.c.b16 %v1575, %v1574
          %v1586 = vpack.c.b16 %v1577, %v1576
          %v1587 = vpack.c.b16 %v1579, %v1578
          %1596 = vmatpush.bf16.msra.mxu0 %v1587
          %1597 = vmatpush.bf16.msra.mxu0 %v1586
          %1598 = vmatpush.bf16.msra.mxu0 %v1585
          %1599 = vmatpush.bf16.msra.mxu0 %v1584
          %1600 = vmatpush.bf16.msra.mxu0 %v1583
          %1601 = vmatpush.bf16.msra.mxu0 %v1582
          %1602 = vmatpush.bf16.msra.mxu0 %v1581
          %1603 = vmatpush.bf16.msra.mxu0 %v1580
          %1604 = vmatmul.bf16.gmra.mxu0 %v1540
          %v1605 = vpop.f32.mrf.mxu0
          %v1606 = vadd.f32 0.0, %v1605
          %v1607 = vpop.f32.mrf.mxu0
          %v1608 = vadd.f32 0.0, %v1607
          %1609 = vmatmul.bf16.gmra.mxu0 %v1541
          %v1610 = vpop.f32.mrf.mxu0
          %v1611 = vadd.f32 0.0, %v1610
          %v1612 = vpop.f32.mrf.mxu0
          %v1613 = vadd.f32 0.0, %v1612
          %1614 = vmatmul.bf16.gmra.mxu0 %v1542
          %v1615 = vpop.f32.mrf.mxu0
          %v1616 = vadd.f32 0.0, %v1615
          %v1617 = vpop.f32.mrf.mxu0
          %v1618 = vadd.f32 0.0, %v1617
          %1619 = vmatmul.bf16.gmra.mxu0 %v1543
          %v1620 = vpop.f32.mrf.mxu0
          %v1621 = vadd.f32 0.0, %v1620
          %v1622 = vpop.f32.mrf.mxu0
          %v1623 = vadd.f32 0.0, %v1622
          %1624 = vdwg.mxu0
          %v1625 = vadd.f32 %v1487, %v1606
          %v1626 = vadd.f32 %v1488, %v1608
          %v1627 = vadd.f32 %v1489, %v1611
          %v1628 = vadd.f32 %v1490, %v1613
          %v1629 = vadd.f32 %v1491, %v1616
          %v1630 = vadd.f32 %v1492, %v1618
          %v1631 = vadd.f32 %v1493, %v1621
          %v1632 = vadd.f32 %v1494, %v1623
          %v1633 = vld [vmem:[%s1495] sm:$0xf]
          %v1634 = vld [vmem:[%s1495 + $0x4] sm:$0x1]
          %v1635 = vld [vmem:[%s1495 + $0x8] sm:$0xf]
          %v1636 = vld [vmem:[%s1495 + $0xc] sm:$0x1]
          %v1637 = vld [vmem:[%s1495 + $0x10] sm:$0xf]
          %v1638 = vld [vmem:[%s1495 + $0x14] sm:$0x1]
          %v1639 = vld [vmem:[%s1495 + $0x18] sm:$0xf]
          %v1640 = vld [vmem:[%s1495 + $0x1c] sm:$0x1]
          %v1641 = vld [vmem:[%s1495 + $0x20] sm:$0xf]
          %v1642 = vld [vmem:[%s1495 + $0x24] sm:$0x1]
          %v1643 = vld [vmem:[%s1495 + $0x28] sm:$0xf]
          %v1644 = vld [vmem:[%s1495 + $0x2c] sm:$0x1]
          %v1645 = vld [vmem:[%s1495 + $0x30] sm:$0xf]
          %v1646 = vld [vmem:[%s1495 + $0x34] sm:$0x1]
          %v1647 = vld [vmem:[%s1495 + $0x38] sm:$0xf]
          %v1648 = vld [vmem:[%s1495 + $0x3c] sm:$0x1]
          %v1650 = vshrl.u32 %v1633, 16
          %v1652 = vrot.slane %v1650, 4
          %v1653 = vshll.u32 %v1633, 16
          %v1655 = vrot.slane %v1653, 5
          %v1656 = vor.u32 %v1652, %v1655
          %v1657 = vrot.slane %v1656, 4
          %v1659 = vshll.u32 %v1634, 16
          %v1661 = vrot.slane %v1659, 5
          %v1662 = vsel %vm517, %v1657, %v1661
          %v1664 = vshrl.u32 %v1635, 16
          %v1666 = vrot.slane %v1664, 4
          %v1667 = vshll.u32 %v1635, 16
          %v1669 = vrot.slane %v1667, 5
          %v1670 = vor.u32 %v1666, %v1669
          %v1671 = vrot.slane %v1670, 4
          %v1673 = vshll.u32 %v1636, 16
          %v1675 = vrot.slane %v1673, 5
          %v1676 = vsel %vm517, %v1671, %v1675
          %v1678 = vshrl.u32 %v1637, 16
          %v1680 = vrot.slane %v1678, 4
          %v1681 = vshll.u32 %v1637, 16
          %v1683 = vrot.slane %v1681, 5
          %v1684 = vor.u32 %v1680, %v1683
          %v1685 = vrot.slane %v1684, 4
          %v1687 = vshll.u32 %v1638, 16
          %v1689 = vrot.slane %v1687, 5
          %v1690 = vsel %vm517, %v1685, %v1689
          %v1692 = vshrl.u32 %v1639, 16
          %v1694 = vrot.slane %v1692, 4
          %v1695 = vshll.u32 %v1639, 16
          %v1697 = vrot.slane %v1695, 5
          %v1698 = vor.u32 %v1694, %v1697
          %v1699 = vrot.slane %v1698, 4
          %v1701 = vshll.u32 %v1640, 16
          %v1703 = vrot.slane %v1701, 5
          %v1704 = vsel %vm517, %v1699, %v1703
          %v1706 = vshrl.u32 %v1641, 16
          %v1708 = vrot.slane %v1706, 4
          %v1709 = vshll.u32 %v1641, 16
          %v1711 = vrot.slane %v1709, 5
          %v1712 = vor.u32 %v1708, %v1711
          %v1713 = vrot.slane %v1712, 4
          %v1715 = vshll.u32 %v1642, 16
          %v1717 = vrot.slane %v1715, 5
          %v1718 = vsel %vm517, %v1713, %v1717
          %v1720 = vshrl.u32 %v1643, 16
          %v1722 = vrot.slane %v1720, 4
          %v1723 = vshll.u32 %v1643, 16
          %v1725 = vrot.slane %v1723, 5
          %v1726 = vor.u32 %v1722, %v1725
          %v1727 = vrot.slane %v1726, 4
          %v1729 = vshll.u32 %v1644, 16
          %v1731 = vrot.slane %v1729, 5
          %v1732 = vsel %vm517, %v1727, %v1731
          %v1734 = vshrl.u32 %v1645, 16
          %v1736 = vrot.slane %v1734, 4
          %v1737 = vshll.u32 %v1645, 16
          %v1739 = vrot.slane %v1737, 5
          %v1740 = vor.u32 %v1736, %v1739
          %v1741 = vrot.slane %v1740, 4
          %v1743 = vshll.u32 %v1646, 16
          %v1745 = vrot.slane %v1743, 5
          %v1746 = vsel %vm517, %v1741, %v1745
          %v1748 = vshrl.u32 %v1647, 16
          %v1750 = vrot.slane %v1748, 4
          %v1751 = vshll.u32 %v1647, 16
          %v1753 = vrot.slane %v1751, 5
          %v1754 = vor.u32 %v1750, %v1753
          %v1755 = vrot.slane %v1754, 4
          %v1757 = vshll.u32 %v1648, 16
          %v1759 = vrot.slane %v1757, 5
          %v1760 = vsel %vm517, %v1755, %v1759
          %s1761 = sadd.s32 %s370, 7
          %s1762 = smul.u32 %s1761, 16
          %s1763 = smul.addr %s1762, 4
          %s1764 = scalar_lea.vmem [#allocation3], %s1763
          %v1765 = vld [vmem:[%s1764] sm:$0xf]
          %v1766 = vld [vmem:[%s1764 + $0x4] sm:$0xf]
          %v1767 = vld [vmem:[%s1764 + $0x8] sm:$0xf]
          %v1768 = vld [vmem:[%s1764 + $0xc] sm:$0xf]
          %v1769 = vld [vmem:[%s1764 + $0x10] sm:$0xf]
          %v1770 = vld [vmem:[%s1764 + $0x14] sm:$0xf]
          %v1771 = vld [vmem:[%s1764 + $0x18] sm:$0xf]
          %v1772 = vld [vmem:[%s1764 + $0x1c] sm:$0xf]
          %v1773 = vld [vmem:[%s1764 + $0x20] sm:$0xf]
          %v1774 = vld [vmem:[%s1764 + $0x24] sm:$0xf]
          %v1775 = vld [vmem:[%s1764 + $0x28] sm:$0xf]
          %v1776 = vld [vmem:[%s1764 + $0x2c] sm:$0xf]
          %v1777 = vld [vmem:[%s1764 + $0x30] sm:$0xf]
          %v1778 = vld [vmem:[%s1764 + $0x34] sm:$0xf]
          %v1779 = vld [vmem:[%s1764 + $0x38] sm:$0xf]
          %v1780 = vld [vmem:[%s1764 + $0x3c] sm:$0xf]
          %v1781 = vunpack.c.l.b16 %v1662
          %v1782 = vunpack.c.l.b16 %v1676
          %v1783 = vunpack.c.l.b16 %v1690
          %v1784 = vunpack.c.l.b16 %v1704
          %v1785 = vunpack.c.l.b16 %v1718
          %v1786 = vunpack.c.l.b16 %v1732
          %v1787 = vunpack.c.l.b16 %v1746
          %v1788 = vunpack.c.l.b16 %v1760
          %v1789 = vpack.c.b16 %v1782, %v1781
          %v1790 = vpack.c.b16 %v1784, %v1783
          %v1791 = vpack.c.b16 %v1786, %v1785
          %v1792 = vpack.c.b16 %v1788, %v1787
          %v1813 = vunpack.c.l.b16 %v1765
          %v1814 = vunpack.c.l.b16 %v1766
          %v1815 = vunpack.c.l.b16 %v1767
          %v1816 = vunpack.c.l.b16 %v1768
          %v1817 = vunpack.c.l.b16 %v1769
          %v1818 = vunpack.c.l.b16 %v1770
          %v1819 = vunpack.c.l.b16 %v1771
          %v1820 = vunpack.c.l.b16 %v1772
          %v1821 = vunpack.c.l.b16 %v1773
          %v1822 = vunpack.c.l.b16 %v1774
          %v1823 = vunpack.c.l.b16 %v1775
          %v1824 = vunpack.c.l.b16 %v1776
          %v1825 = vunpack.c.l.b16 %v1777
          %v1826 = vunpack.c.l.b16 %v1778
          %v1827 = vunpack.c.l.b16 %v1779
          %v1828 = vunpack.c.l.b16 %v1780
          %v1829 = vpack.c.b16 %v1814, %v1813
          %v1830 = vpack.c.b16 %v1816, %v1815
          %v1831 = vpack.c.b16 %v1818, %v1817
          %v1832 = vpack.c.b16 %v1820, %v1819
          %v1833 = vpack.c.b16 %v1822, %v1821
          %v1834 = vpack.c.b16 %v1824, %v1823
          %v1835 = vpack.c.b16 %v1826, %v1825
          %v1836 = vpack.c.b16 %v1828, %v1827
          %1845 = vmatpush.bf16.msra.mxu0 %v1836
          %1846 = vmatpush.bf16.msra.mxu0 %v1835
          %1847 = vmatpush.bf16.msra.mxu0 %v1834
          %1848 = vmatpush.bf16.msra.mxu0 %v1833
          %1849 = vmatpush.bf16.msra.mxu0 %v1832
          %1850 = vmatpush.bf16.msra.mxu0 %v1831
          %1851 = vmatpush.bf16.msra.mxu0 %v1830
          %1852 = vmatpush.bf16.msra.mxu0 %v1829
          %1853 = vmatmul.bf16.gmra.mxu0 %v1789
          %v1854 = vpop.f32.mrf.mxu0
          %v1855 = vadd.f32 0.0, %v1854
          %v1856 = vpop.f32.mrf.mxu0
          %v1857 = vadd.f32 0.0, %v1856
          %1858 = vmatmul.bf16.gmra.mxu0 %v1790
          %v1859 = vpop.f32.mrf.mxu0
          %v1860 = vadd.f32 0.0, %v1859
          %v1861 = vpop.f32.mrf.mxu0
          %v1862 = vadd.f32 0.0, %v1861
          %1863 = vmatmul.bf16.gmra.mxu0 %v1791
          %v1864 = vpop.f32.mrf.mxu0
          %v1865 = vadd.f32 0.0, %v1864
          %v1866 = vpop.f32.mrf.mxu0
          %v1867 = vadd.f32 0.0, %v1866
          %1868 = vmatmul.bf16.gmra.mxu0 %v1792
          %v1869 = vpop.f32.mrf.mxu0
          %v1870 = vadd.f32 0.0, %v1869
          %v1871 = vpop.f32.mrf.mxu0
          %v1872 = vadd.f32 0.0, %v1871
          %1873 = vdwg.mxu0
          %v1874 = vadd.f32 %v1625, %v1855
          %v1875 = vadd.f32 %v1626, %v1857
          %v1876 = vadd.f32 %v1627, %v1860
          %v1877 = vadd.f32 %v1628, %v1862
          %v1878 = vadd.f32 %v1629, %v1865
          %v1879 = vadd.f32 %v1630, %v1867
          %v1880 = vadd.f32 %v1631, %v1870
          %v1881 = vadd.f32 %v1632, %v1872
          %v1882 = vld [vmem:[%s1495] sm:$0xe]
          %v1883 = vld [vmem:[%s1495 + $0x8] sm:$0xe]
          %v1884 = vld [vmem:[%s1495 + $0x10] sm:$0xe]
          %v1885 = vld [vmem:[%s1495 + $0x18] sm:$0xe]
          %v1886 = vld [vmem:[%s1495 + $0x20] sm:$0xe]
          %v1887 = vld [vmem:[%s1495 + $0x28] sm:$0xe]
          %v1888 = vld [vmem:[%s1495 + $0x30] sm:$0xe]
          %v1889 = vld [vmem:[%s1495 + $0x38] sm:$0xe]
          %v1906 = vrot.slane %v1882, 5
          %v1907 = vrot.slane %v1906, 4
          %v1908 = vrot.slane %v1634, 5
          %v1909 = vsel %vm777, %v1907, %v1908
          %v1910 = vrot.slane %v1883, 5
          %v1911 = vrot.slane %v1910, 4
          %v1912 = vrot.slane %v1636, 5
          %v1913 = vsel %vm777, %v1911, %v1912
          %v1914 = vrot.slane %v1884, 5
          %v1915 = vrot.slane %v1914, 4
          %v1916 = vrot.slane %v1638, 5
          %v1917 = vsel %vm777, %v1915, %v1916
          %v1918 = vrot.slane %v1885, 5
          %v1919 = vrot.slane %v1918, 4
          %v1920 = vrot.slane %v1640, 5
          %v1921 = vsel %vm777, %v1919, %v1920
          %v1922 = vrot.slane %v1886, 5
          %v1923 = vrot.slane %v1922, 4
          %v1924 = vrot.slane %v1642, 5
          %v1925 = vsel %vm777, %v1923, %v1924
          %v1926 = vrot.slane %v1887, 5
          %v1927 = vrot.slane %v1926, 4
          %v1928 = vrot.slane %v1644, 5
          %v1929 = vsel %vm777, %v1927, %v1928
          %v1930 = vrot.slane %v1888, 5
          %v1931 = vrot.slane %v1930, 4
          %v1932 = vrot.slane %v1646, 5
          %v1933 = vsel %vm777, %v1931, %v1932
          %v1934 = vrot.slane %v1889, 5
          %v1935 = vrot.slane %v1934, 4
          %v1936 = vrot.slane %v1648, 5
          %v1937 = vsel %vm777, %v1935, %v1936
          %s1938 = sadd.s32 %s370, 8
          %s1939 = smul.u32 %s1938, 16
          %s1940 = smul.addr %s1939, 4
          %s1941 = scalar_lea.vmem [#allocation3], %s1940
          %v1942 = vld [vmem:[%s1941] sm:$0xf]
          %v1943 = vld [vmem:[%s1941 + $0x4] sm:$0xf]
          %v1944 = vld [vmem:[%s1941 + $0x8] sm:$0xf]
          %v1945 = vld [vmem:[%s1941 + $0xc] sm:$0xf]
          %v1946 = vld [vmem:[%s1941 + $0x10] sm:$0xf]
          %v1947 = vld [vmem:[%s1941 + $0x14] sm:$0xf]
          %v1948 = vld [vmem:[%s1941 + $0x18] sm:$0xf]
          %v1949 = vld [vmem:[%s1941 + $0x1c] sm:$0xf]
          %v1950 = vld [vmem:[%s1941 + $0x20] sm:$0xf]
          %v1951 = vld [vmem:[%s1941 + $0x24] sm:$0xf]
          %v1952 = vld [vmem:[%s1941 + $0x28] sm:$0xf]
          %v1953 = vld [vmem:[%s1941 + $0x2c] sm:$0xf]
          %v1954 = vld [vmem:[%s1941 + $0x30] sm:$0xf]
          %v1955 = vld [vmem:[%s1941 + $0x34] sm:$0xf]
          %v1956 = vld [vmem:[%s1941 + $0x38] sm:$0xf]
          %v1957 = vld [vmem:[%s1941 + $0x3c] sm:$0xf]
          %v1958 = vunpack.c.l.b16 %v1909
          %v1959 = vunpack.c.l.b16 %v1913
          %v1960 = vunpack.c.l.b16 %v1917
          %v1961 = vunpack.c.l.b16 %v1921
          %v1962 = vunpack.c.l.b16 %v1925
          %v1963 = vunpack.c.l.b16 %v1929
          %v1964 = vunpack.c.l.b16 %v1933
          %v1965 = vunpack.c.l.b16 %v1937
          %v1966 = vpack.c.b16 %v1959, %v1958
          %v1967 = vpack.c.b16 %v1961, %v1960
          %v1968 = vpack.c.b16 %v1963, %v1962
          %v1969 = vpack.c.b16 %v1965, %v1964
          %v1990 = vunpack.c.l.b16 %v1942
          %v1991 = vunpack.c.l.b16 %v1943
          %v1992 = vunpack.c.l.b16 %v1944
          %v1993 = vunpack.c.l.b16 %v1945
          %v1994 = vunpack.c.l.b16 %v1946
          %v1995 = vunpack.c.l.b16 %v1947
          %v1996 = vunpack.c.l.b16 %v1948
          %v1997 = vunpack.c.l.b16 %v1949
          %v1998 = vunpack.c.l.b16 %v1950
          %v1999 = vunpack.c.l.b16 %v1951
          %v2000 = vunpack.c.l.b16 %v1952
          %v2001 = vunpack.c.l.b16 %v1953
          %v2002 = vunpack.c.l.b16 %v1954
          %v2003 = vunpack.c.l.b16 %v1955
          %v2004 = vunpack.c.l.b16 %v1956
          %v2005 = vunpack.c.l.b16 %v1957
          %v2006 = vpack.c.b16 %v1991, %v1990
          %v2007 = vpack.c.b16 %v1993, %v1992
          %v2008 = vpack.c.b16 %v1995, %v1994
          %v2009 = vpack.c.b16 %v1997, %v1996
          %v2010 = vpack.c.b16 %v1999, %v1998
          %v2011 = vpack.c.b16 %v2001, %v2000
          %v2012 = vpack.c.b16 %v2003, %v2002
          %v2013 = vpack.c.b16 %v2005, %v2004
          %2022 = vmatpush.bf16.msra.mxu0 %v2013
          %2023 = vmatpush.bf16.msra.mxu0 %v2012
          %2024 = vmatpush.bf16.msra.mxu0 %v2011
          %2025 = vmatpush.bf16.msra.mxu0 %v2010
          %2026 = vmatpush.bf16.msra.mxu0 %v2009
          %2027 = vmatpush.bf16.msra.mxu0 %v2008
          %2028 = vmatpush.bf16.msra.mxu0 %v2007
          %2029 = vmatpush.bf16.msra.mxu0 %v2006
          %2030 = vmatmul.bf16.gmra.mxu0 %v1966
          %v2031 = vpop.f32.mrf.mxu0
          %v2032 = vadd.f32 0.0, %v2031
          %v2033 = vpop.f32.mrf.mxu0
          %v2034 = vadd.f32 0.0, %v2033
          %2035 = vmatmul.bf16.gmra.mxu0 %v1967
          %v2036 = vpop.f32.mrf.mxu0
          %v2037 = vadd.f32 0.0, %v2036
          %v2038 = vpop.f32.mrf.mxu0
          %v2039 = vadd.f32 0.0, %v2038
          %2040 = vmatmul.bf16.gmra.mxu0 %v1968
          %v2041 = vpop.f32.mrf.mxu0
          %v2042 = vadd.f32 0.0, %v2041
          %v2043 = vpop.f32.mrf.mxu0
          %v2044 = vadd.f32 0.0, %v2043
          %2045 = vmatmul.bf16.gmra.mxu0 %v1969
          %v2046 = vpop.f32.mrf.mxu0
          %v2047 = vadd.f32 0.0, %v2046
          %v2048 = vpop.f32.mrf.mxu0
          %v2049 = vadd.f32 0.0, %v2048
          %2050 = vdwg.mxu0
          %v2051 = vadd.f32 %v1874, %v2032
          %v2052 = vadd.f32 %v1875, %v2034
          %v2053 = vadd.f32 %v1876, %v2037
          %v2054 = vadd.f32 %v1877, %v2039
          %v2055 = vadd.f32 %v1878, %v2042
          %v2056 = vadd.f32 %v1879, %v2044
          %v2057 = vadd.f32 %v1880, %v2047
          %v2058 = vadd.f32 %v1881, %v2049
          %2059 = vst [vmem:[#allocation2] sm:$0xff] %v2051
          %2060 = vst [vmem:[#allocation2 + $0x8] sm:$0xff] %v2052
          %2061 = vst [vmem:[#allocation2 + $0x10] sm:$0xff] %v2053
          %2062 = vst [vmem:[#allocation2 + $0x18] sm:$0xff] %v2054
          %2063 = vst [vmem:[#allocation2 + $0x20] sm:$0xff] %v2055
          %2064 = vst [vmem:[#allocation2 + $0x28] sm:$0xff] %v2056
          %2065 = vst [vmem:[#allocation2 + $0x30] sm:$0xff] %v2057
          %2066 = vst [vmem:[#allocation2 + $0x38] sm:$0xff] %v2058
        $region44: #{down_block_forward.4} parent=31 // pred_fallthru
          _
        %p2067 = scmp.eq.s32.totalorder %s25, 2
        // Predicated region
        $region45: #{down_block_forward.4} parent=31 // pred_check
          %p2068 = pneg %p2067
        $region46: #{down_block_forward.4} parent=31 // pred_check_branch
          %2070 = sbr.rel (%p2068) target = $region48
        $region47: #{down_block_forward.4} parent=31 // pred_region
          %v2071 = vld [vmem:[#allocation2] sm:$0xff]
          %v2072 = vld [vmem:[#allocation2 + $0x8] sm:$0xff]
          %v2073 = vld [vmem:[#allocation2 + $0x10] sm:$0xff]
          %v2074 = vld [vmem:[#allocation2 + $0x18] sm:$0xff]
          %v2075 = vld [vmem:[#allocation2 + $0x20] sm:$0xff]
          %v2076 = vld [vmem:[#allocation2 + $0x28] sm:$0xff]
          %v2077 = vld [vmem:[#allocation2 + $0x30] sm:$0xff]
          %v2078 = vld [vmem:[#allocation2 + $0x38] sm:$0xff]
          %v2079 = vld [vmem:[%s2] sm:$0x1]
          %v2081 = vperm.slane %v2079, 0
          %v2083 = vadd.f32 %v2071, %v2081
          %v2084 = vadd.f32 %v2072, %v2081
          %v2085 = vadd.f32 %v2073, %v2081
          %v2086 = vadd.f32 %v2074, %v2081
          %v2087 = vadd.f32 %v2075, %v2081
          %v2088 = vadd.f32 %v2076, %v2081
          %v2089 = vadd.f32 %v2077, %v2081
          %v2090 = vadd.f32 %v2078, %v2081
          %v2091 = vmax.f32 %v2083, 0.0
          %v2092 = vmax.f32 %v2084, 0.0
          %v2093 = vmax.f32 %v2085, 0.0
          %v2094 = vmax.f32 %v2086, 0.0
          %v2095 = vmax.f32 %v2087, 0.0
          %v2096 = vmax.f32 %v2088, 0.0
          %v2097 = vmax.f32 %v2089, 0.0
          %v2098 = vmax.f32 %v2090, 0.0
          %v2099 = vadd.f32 %v2091, %v2092
          %v2100 = vadd.f32 %v2099, %v2093
          %v2101 = vadd.f32 %v2100, %v2094
          %v2102 = vadd.f32 %v2101, %v2095
          %v2103 = vadd.f32 %v2102, %v2096
          %v2104 = vadd.f32 %v2103, %v2097
          %v2105 = vadd.f32 %v2104, %v2098
          %v2106 = vrot.slane %v2105, 4
          %v2107 = vadd.f32 %v2105, %v2106
          %v2108 = vrot.slane %v2107, 2
          %v2109 = vadd.f32 %v2107, %v2108
          %v2110 = vrot.slane %v2109, 1
          %v2111 = vadd.f32 %v2109, %v2110
          %2112 = vst [vmem:[%s326] sm:$0x1] %v2111
          %v2113 = vmul.f32 %v2091, %v2091
          %v2114 = vmul.f32 %v2092, %v2092
          %v2115 = vmul.f32 %v2093, %v2093
          %v2116 = vmul.f32 %v2094, %v2094
          %v2117 = vmul.f32 %v2095, %v2095
          %v2118 = vmul.f32 %v2096, %v2096
          %v2119 = vmul.f32 %v2097, %v2097
          %v2120 = vmul.f32 %v2098, %v2098
          %v2121 = vadd.f32 %v2113, %v2114
          %v2122 = vadd.f32 %v2121, %v2115
          %v2123 = vadd.f32 %v2122, %v2116
          %v2124 = vadd.f32 %v2123, %v2117
          %v2125 = vadd.f32 %v2124, %v2118
          %v2126 = vadd.f32 %v2125, %v2119
          %v2127 = vadd.f32 %v2126, %v2120
          %v2128 = vrot.slane %v2127, 4
          %v2129 = vadd.f32 %v2127, %v2128
          %v2130 = vrot.slane %v2129, 2
          %v2131 = vadd.f32 %v2129, %v2130
          %v2132 = vrot.slane %v2131, 1
          %v2133 = vadd.f32 %v2131, %v2132
          %2134 = vst [vmem:[%s333] sm:$0x1] %v2133
          %v2135 = vpack.c.bf16 %v2091, %v2091
          %v2136 = vpack.c.bf16 %v2092, %v2092
          %v2137 = vpack.c.bf16 %v2093, %v2093
          %v2138 = vpack.c.bf16 %v2094, %v2094
          %v2139 = vpack.c.bf16 %v2095, %v2095
          %v2140 = vpack.c.bf16 %v2096, %v2096
          %v2141 = vpack.c.bf16 %v2097, %v2097
          %v2142 = vpack.c.bf16 %v2098, %v2098
          %2143 = vst [vmem:[%s318] sm:$0xf] 0
          %2144 = vst [vmem:[%s318 + $0x4] sm:$0x1] 0
          %2145 = vst [vmem:[%s318 + $0x8] sm:$0xf] 0
          %2146 = vst [vmem:[%s318 + $0xc] sm:$0x1] 0
          %2147 = vst [vmem:[%s318 + $0x10] sm:$0xf] 0
          %2148 = vst [vmem:[%s318 + $0x14] sm:$0x1] 0
          %2149 = vst [vmem:[%s318 + $0x18] sm:$0xf] 0
          %2150 = vst [vmem:[%s318 + $0x1c] sm:$0x1] 0
          %2151 = vst [vmem:[%s318 + $0x20] sm:$0xf] 0
          %2152 = vst [vmem:[%s318 + $0x24] sm:$0x1] 0
          %2153 = vst [vmem:[%s318 + $0x28] sm:$0xf] 0
          %2154 = vst [vmem:[%s318 + $0x2c] sm:$0x1] 0
          %2155 = vst [vmem:[%s318 + $0x30] sm:$0xf] 0
          %2156 = vst [vmem:[%s318 + $0x34] sm:$0x1] 0
          %2157 = vst [vmem:[%s318 + $0x38] sm:$0xf] 0
          %2158 = vst [vmem:[%s318 + $0x3c] sm:$0x1] 0
          %2159 = vst [vmem:[%s318 + $0x40] sm:$0xf] 0
          %2160 = vst [vmem:[%s318 + $0x44] sm:$0x1] 0
          %2161 = vst [vmem:[%s318 + $0x48] sm:$0xf] 0
          %2162 = vst [vmem:[%s318 + $0x4c] sm:$0x1] 0
          %v2164 = vshrl.u32 %v2135, 16
          %v2166 = vrot.slane %v2164, 7
          %v2167 = vshll.u32 %v2135, 16
          %v2169 = vor.u32 %v2166, %v2167
          %v2170 = vrot.slane %v2166, 4
          %v2172 = vshrl.u32 %v2136, 16
          %v2174 = vrot.slane %v2172, 7
          %v2175 = vshll.u32 %v2136, 16
          %v2177 = vor.u32 %v2174, %v2175
          %v2178 = vrot.slane %v2174, 4
          %v2180 = vshrl.u32 %v2137, 16
          %v2182 = vrot.slane %v2180, 7
          %v2183 = vshll.u32 %v2137, 16
          %v2185 = vor.u32 %v2182, %v2183
          %v2186 = vrot.slane %v2182, 4
          %v2188 = vshrl.u32 %v2138, 16
          %v2190 = vrot.slane %v2188, 7
          %v2191 = vshll.u32 %v2138, 16
          %v2193 = vor.u32 %v2190, %v2191
          %v2194 = vrot.slane %v2190, 4
          %v2196 = vshrl.u32 %v2139, 16
          %v2198 = vrot.slane %v2196, 7
          %v2199 = vshll.u32 %v2139, 16
          %v2201 = vor.u32 %v2198, %v2199
          %v2202 = vrot.slane %v2198, 4
          %v2204 = vshrl.u32 %v2140, 16
          %v2206 = vrot.slane %v2204, 7
          %v2207 = vshll.u32 %v2140, 16
          %v2209 = vor.u32 %v2206, %v2207
          %v2210 = vrot.slane %v2206, 4
          %v2212 = vshrl.u32 %v2141, 16
          %v2214 = vrot.slane %v2212, 7
          %v2215 = vshll.u32 %v2141, 16
          %v2217 = vor.u32 %v2214, %v2215
          %v2218 = vrot.slane %v2214, 4
          %v2220 = vshrl.u32 %v2142, 16
          %v2222 = vrot.slane %v2220, 7
          %v2223 = vshll.u32 %v2142, 16
          %v2225 = vor.u32 %v2222, %v2223
          %v2226 = vrot.slane %v2222, 4
          %s2243 = scalar_lea.vmem %s318, 8
          %vm2244 = vcmask 1043456
          %vm2245 = vsmask.f32 7938
          %vm2246 = vmand %vm2244, %vm2245
          %v2247 = vld [vmem:[%s2243] sm:$0xf]
          %v2248 = vsel %vm2246, %v2169, %v2247
          %2249 = vst [vmem:[%s2243] sm:$0xf] %v2248
          %vm2250 = vcmask 1040384
          %vm2251 = vsmask.f32 256
          %vm2252 = vmand %vm2250, %vm2251
          %v2253 = vld [vmem:[%s2243 + $0x4] sm:$0x1]
          %v2254 = vsel %vm2252, %v2170, %v2253
          %2255 = vst [vmem:[%s2243 + $0x4] sm:$0x1] %v2254
          %v2256 = vld [vmem:[%s2243 + $0x8] sm:$0xf]
          %v2257 = vsel %vm2246, %v2177, %v2256
          %2258 = vst [vmem:[%s2243 + $0x8] sm:$0xf] %v2257
          %v2259 = vld [vmem:[%s2243 + $0xc] sm:$0x1]
          %v2260 = vsel %vm2252, %v2178, %v2259
          %2261 = vst [vmem:[%s2243 + $0xc] sm:$0x1] %v2260
          %v2262 = vld [vmem:[%s2243 + $0x10] sm:$0xf]
          %v2263 = vsel %vm2246, %v2185, %v2262
          %2264 = vst [vmem:[%s2243 + $0x10] sm:$0xf] %v2263
          %v2265 = vld [vmem:[%s2243 + $0x14] sm:$0x1]
          %v2266 = vsel %vm2252, %v2186, %v2265
          %2267 = vst [vmem:[%s2243 + $0x14] sm:$0x1] %v2266
          %v2268 = vld [vmem:[%s2243 + $0x18] sm:$0xf]
          %v2269 = vsel %vm2246, %v2193, %v2268
          %2270 = vst [vmem:[%s2243 + $0x18] sm:$0xf] %v2269
          %v2271 = vld [vmem:[%s2243 + $0x1c] sm:$0x1]
          %v2272 = vsel %vm2252, %v2194, %v2271
          %2273 = vst [vmem:[%s2243 + $0x1c] sm:$0x1] %v2272
          %v2274 = vld [vmem:[%s2243 + $0x20] sm:$0xf]
          %v2275 = vsel %vm2246, %v2201, %v2274
          %2276 = vst [vmem:[%s2243 + $0x20] sm:$0xf] %v2275
          %v2277 = vld [vmem:[%s2243 + $0x24] sm:$0x1]
          %v2278 = vsel %vm2252, %v2202, %v2277
          %2279 = vst [vmem:[%s2243 + $0x24] sm:$0x1] %v2278
          %v2280 = vld [vmem:[%s2243 + $0x28] sm:$0xf]
          %v2281 = vsel %vm2246, %v2209, %v2280
          %2282 = vst [vmem:[%s2243 + $0x28] sm:$0xf] %v2281
          %v2283 = vld [vmem:[%s2243 + $0x2c] sm:$0x1]
          %v2284 = vsel %vm2252, %v2210, %v2283
          %2285 = vst [vmem:[%s2243 + $0x2c] sm:$0x1] %v2284
          %v2286 = vld [vmem:[%s2243 + $0x30] sm:$0xf]
          %v2287 = vsel %vm2246, %v2217, %v2286
          %2288 = vst [vmem:[%s2243 + $0x30] sm:$0xf] %v2287
          %v2289 = vld [vmem:[%s2243 + $0x34] sm:$0x1]
          %v2290 = vsel %vm2252, %v2218, %v2289
          %2291 = vst [vmem:[%s2243 + $0x34] sm:$0x1] %v2290
          %v2292 = vld [vmem:[%s2243 + $0x38] sm:$0xf]
          %v2293 = vsel %vm2246, %v2225, %v2292
          %2294 = vst [vmem:[%s2243 + $0x38] sm:$0xf] %v2293
          %v2295 = vld [vmem:[%s2243 + $0x3c] sm:$0x1]
          %v2296 = vsel %vm2252, %v2226, %v2295
          %2297 = vst [vmem:[%s2243 + $0x3c] sm:$0x1] %v2296
        $region48: #{down_block_forward.4} parent=31 // pred_fallthru
          _
        %s2298 = sadd.s32 %s24, 1
        %p2299 = scmp.lt.s32.totalorder %s23, 1
        %s2300 = scalar_select %p2299, %s23, 1
        %p2301 = scmp.lt.s32.totalorder %s2298, 9
        %s2302 = scalar_select %p2301, %s2298, 9
        %s2303 = smul.addr %s2302, 20
        %s2304 = smul.addr %s2300, 200
        %s2305 = sadd.s32 %s2303, %s2304
        %s2306 = smul.addr %s2305, 4
        %s2307 = scalar_lea.vmem %s3, %s2306
        %p2308 = scmp.lt.s32.totalorder %s23, 1
        %s2309 = scalar_select %p2308, %s23, 1
        %p2310 = scmp.lt.s32.totalorder %s24, 7
        %s2311 = scalar_select %p2310, %s24, 7
        %s2312 = smul.addr %s2309, 8
        %s2313 = sadd.s32 %s2311, %s2312
        %s2314 = scalar_lea.vmem %s4, %s2313
        %p2315 = scmp.lt.s32.totalorder %s23, 1
        %s2316 = scalar_select %p2315, %s23, 1
        %p2317 = scmp.lt.s32.totalorder %s24, 7
        %s2318 = scalar_select %p2317, %s24, 7
        %s2319 = smul.addr %s2316, 8
        %s2320 = sadd.s32 %s2318, %s2319
        %s2321 = scalar_lea.vmem %s5, %s2320
        // Predicated region
        $region49: #{down_block_forward.4} parent=31 // pred_check
          %p2322 = pneg %p131
        $region50: #{down_block_forward.4} parent=31 // pred_check_branch
          %2324 = sbr.rel (%p2322) target = $region52
        $region51: #{down_block_forward.4} parent=31 // pred_region
          %s2325 = sadd.s32 %s24, 1
        $region52: #{down_block_forward.4} parent=31 // pred_fallthru
          _
        // Predicated region
        $region53: #{down_block_forward.4} parent=31 // pred_check
          %p2326 = pneg %p159
        $region54: #{down_block_forward.4} parent=31 // pred_check_branch
          %2328 = sbr.rel (%p2326) target = $region56
        $region55: #{down_block_forward.4} parent=31 // pred_region
          _
        $region56: #{down_block_forward.4} parent=31 // pred_fallthru
          _
        // Predicated region
        $region57: #{down_block_forward.4} parent=31 // pred_check
          %p2329 = pneg %p187
        $region58: #{down_block_forward.4} parent=31 // pred_check_branch
          %2331 = sbr.rel (%p2329) target = $region60
        $region59: #{down_block_forward.4} parent=31 // pred_region
          _
        $region60: #{down_block_forward.4} parent=31 // pred_fallthru
          _
      $region32: #{down_block_forward.4} parent=5 // pred_fallthru
        _
      %p2332 = scmp.le.s32.totalorder 2, %s13
      // Predicated region
      $region61: #{down_block_forward.4} parent=5 // pred_check
        %p2333 = pneg %p2332
      $region62: #{down_block_forward.4} parent=5 // pred_check_branch
        %2335 = sbr.rel (%p2333) target = $region64
      $region63: #{down_block_forward.4} parent=5 // pred_region
        %s2336 = ssub.s32 %s13, 2
        // Predicated region
        $region65: #{down_block_forward.4} parent=63 // pred_check
          %p2337 = pneg %p137
        $region66: #{down_block_forward.4} parent=63 // pred_check_branch
          %2339 = sbr.rel (%p2337) target = $region68
        $region67: #{down_block_forward.4} parent=63 // pred_region
          %s2340 = sadd.s32 %s27, 1
          %p2341 = scmp.lt.s32.totalorder %s26, 1
          %s2342 = scalar_select %p2341, %s26, 1
          %p2343 = scmp.lt.s32.totalorder %s2340, 9
          %s2344 = scalar_select %p2343, %s2340, 9
          %s2345 = smul.addr %s2344, 20
          %s2346 = smul.addr %s2342, 200
          %s2347 = sadd.s32 %s2345, %s2346
          %s2348 = smul.addr %s2347, 4
          %s2349 = scalar_lea.vmem %s3, %s2348
        $region68: #{down_block_forward.4} parent=63 // pred_fallthru
          _
        // Predicated region
        $region69: #{down_block_forward.4} parent=63 // pred_check
          %p2350 = pneg %p165
        $region70: #{down_block_forward.4} parent=63 // pred_check_branch
          %2352 = sbr.rel (%p2350) target = $region72
        $region71: #{down_block_forward.4} parent=63 // pred_region
          %p2353 = scmp.lt.s32.totalorder %s26, 1
          %s2354 = scalar_select %p2353, %s26, 1
          %p2355 = scmp.lt.s32.totalorder %s27, 7
          %s2356 = scalar_select %p2355, %s27, 7
          %s2357 = smul.addr %s2354, 8
          %s2358 = sadd.s32 %s2356, %s2357
          %s2359 = scalar_lea.vmem %s4, %s2358
        $region72: #{down_block_forward.4} parent=63 // pred_fallthru
          _
        // Predicated region
        $region73: #{down_block_forward.4} parent=63 // pred_check
          %p2360 = pneg %p193
        $region74: #{down_block_forward.4} parent=63 // pred_check_branch
          %2362 = sbr.rel (%p2360) target = $region76
        $region75: #{down_block_forward.4} parent=63 // pred_region
          %p2363 = scmp.lt.s32.totalorder %s26, 1
          %s2364 = scalar_select %p2363, %s26, 1
          %p2365 = scmp.lt.s32.totalorder %s27, 7
          %s2366 = scalar_select %p2365, %s27, 7
          %s2367 = smul.addr %s2364, 8
          %s2368 = sadd.s32 %s2366, %s2367
          %s2369 = scalar_lea.vmem %s5, %s2368
        $region76: #{down_block_forward.4} parent=63 // pred_fallthru
          _
      $region64: #{down_block_forward.4} parent=5 // pred_fallthru
        _
    $region6: #{down_block_forward.4} parent=1 // loop_footer
      %s17 = sadd.s32 1, %s13
    $region7: #{down_block_forward.4} parent=1 // loop_footer_branch
      %12 = sbr.rel target = $region3
    $region8: #{down_block_forward.4} parent=1 // loop_exit
      _
    %2370 = vsyncpa [#allocation4], 1
    %s2371 = scalar_lea.sflag [#allocation4], 1
    %2372 = vsyncpa %s2371, 1

// kernel: down_block_forward.7
$region0: #{down_block_forward.7}
  #allocation0 [shape = 'u32[]', space=smem, size = 0x4, offset = 0x4, fixed_abs, tag = 'smem constant byte address 0x4 - core index']
  #allocation1 [shape = 'u32[72,128]{1,0:T(1,128)}', space=vmem, size = 0x9000, scoped, tag = 'internal scratch']
  %s0 = inlined_call_operand.vmem [shape: f32[16,4,2,4,2,128], index: 0, kind: input, shape index: {}]
  %s1 = inlined_call_operand.vmem [shape: f32[8,4,4,128], index: 1, kind: output, shape index: {}]
  %s2 = sld [smem:[#allocation0]]
  $region37: #{down_block_forward.7} parent=0
    _
  %s4 = ssub.s32 1, %s2
  %s5 = scalar_select 0, %s4, %s2
  loop: start=0, step=1, limit=10
  $region2: #{down_block_forward.7} parent=0 // loop_pre_header
    _
  $region3: #{down_block_forward.7} parent=0 // loop_header
    %s7 = sphi 0, %s11
    %p8 = scmp.ge.s32.totalorder %s7, 10
    %s17 = sphi 0, %s19
    %s20 = sphi 0, %s17
    %s21 = sphi 0, %s20
    %s37 = sphi 0, %s21
    %s43 = sphi 0, %s45
    %s46 = sphi 0, %s43
    %s47 = sphi 0, %s46
    %s63 = sphi 0, %s47
  $region4: #{down_block_forward.7} parent=0 // loop_header_branch
    %10 = sbr.rel (%p8) target = $region8
  $region5: #{down_block_forward.7} parent=0 // loop_body
    %s12 = ssub.s32 %s7, 1
    %s13 = ssub.s32 %s7, 2
    %s14 = sadd.s32 %s7, 1
    %s15 = ssub.s32 %s7, %s14
    %p16 = scmp.eq.s32.totalorder %s15, 0
    %s18 = sadd.s32 %s17, 1
    %s19 = scalar_select %p16, %s17, %s18
    %p22 = pneg %p16
    %p23 = scmp.eq.s32.totalorder %s7, 7
    %p24 = por %p22, %p23
    %p25 = scmp.ne.s32.totalorder %s17, %s20
    %p26 = scmp.eq.s32.totalorder %s7, 0
    %p27 = por %p25, %p26
    %p28 = scmp.ne.s32.totalorder %s17, %s20
    %p29 = scmp.eq.s32.totalorder %s12, 7
    %p30 = por %p28, %p29
    %p31 = scmp.ne.s32.totalorder %s20, %s21
    %p32 = scmp.eq.s32.totalorder %s12, 0
    %p33 = por %p31, %p32
    %p34 = scmp.ne.s32.totalorder %s20, %s21
    %p35 = scmp.eq.s32.totalorder %s13, 7
    %p36 = por %p34, %p35
    %p38 = scmp.ne.s32.totalorder %s21, %s37
    %p39 = scmp.eq.s32.totalorder %s13, 0
    %p40 = por %p38, %p39
    %s41 = ssub.s32 %s7, %s14
    %p42 = scmp.eq.s32.totalorder %s41, 0
    %s44 = sadd.s32 %s43, 1
    %s45 = scalar_select %p42, %s43, %s44
    %p48 = pneg %p42
    %p49 = scmp.eq.s32.totalorder %s7, 7
    %p50 = por %p48, %p49
    %p51 = scmp.ne.s32.totalorder %s43, %s46
    %p52 = scmp.eq.s32.totalorder %s7, 0
    %p53 = por %p51, %p52
    %p54 = scmp.ne.s32.totalorder %s43, %s46
    %p55 = scmp.eq.s32.totalorder %s12, 7
    %p56 = por %p54, %p55
    %p57 = scmp.ne.s32.totalorder %s46, %s47
    %p58 = scmp.eq.s32.totalorder %s12, 0
    %p59 = por %p57, %p58
    %p60 = scmp.ne.s32.totalorder %s46, %s47
    %p61 = scmp.eq.s32.totalorder %s13, 7
    %p62 = por %p60, %p61
    %p64 = scmp.ne.s32.totalorder %s47, %s63
    %p65 = scmp.eq.s32.totalorder %s13, 0
    %p66 = por %p64, %p65
    %p67 = scmp.le.s32.totalorder 1, %s7
    %p68 = scmp.lt.s32.totalorder %s7, 9
    %p69 = pnand %p67, %p68
    %p70 = pneg %p69
    // Predicated region
    $region9: #{down_block_forward.7} parent=5 // pred_check
      _
    $region10: #{down_block_forward.7} parent=5 // pred_check_branch
      %72 = sbr.rel (%p69) target = $region12
    $region11: #{down_block_forward.7} parent=5 // pred_region
      %s73 = ssub.s32 %s7, 1
    $region12: #{down_block_forward.7} parent=5 // pred_fallthru
      _
    %p74 = scmp.lt.s32.totalorder %s7, 8
    // Predicated region
    $region13: #{down_block_forward.7} parent=5 // pred_check
      %p75 = pneg %p74
    $region14: #{down_block_forward.7} parent=5 // pred_check_branch
      %77 = sbr.rel (%p75) target = $region16
    $region15: #{down_block_forward.7} parent=5 // pred_region
      // Predicated region
      $region17: #{down_block_forward.7} parent=15 // pred_check
        %p78 = pneg %p27
      $region18: #{down_block_forward.7} parent=15 // pred_check_branch
        %80 = sbr.rel (%p78) target = $region20
      $region19: #{down_block_forward.7} parent=15 // pred_region
        %s81 = smul.u32 2, %s7
        %p82 = scmp.lt.s32.totalorder %s81, 15
        %s83 = scalar_select %p82, %s81, 15
        %s84 = smul.addr %s83, 32
        %s85 = smul.addr %s84, 2
        %s86 = scalar_lea.vmem %s0, %s85
        %s87 = smul.u32 2, %s7
      $region20: #{down_block_forward.7} parent=15 // pred_fallthru
        _
    $region16: #{down_block_forward.7} parent=5 // pred_fallthru
      _
    %p88 = scmp.le.s32.totalorder 1, %s7
    %p89 = scmp.lt.s32.totalorder %s7, 9
    %p90 = pnand %p88, %p89
    %p91 = pneg %p90
    // Predicated region
    $region21: #{down_block_forward.7} parent=5 // pred_check
      _
    $region22: #{down_block_forward.7} parent=5 // pred_check_branch
      %93 = sbr.rel (%p90) target = $region24
    $region23: #{down_block_forward.7} parent=5 // pred_region
      %s94 = ssub.s32 %s7, 1
      %s95 = smul.u32 2, %s12
      %p96 = scmp.lt.s32.totalorder %s95, 15
      %s97 = scalar_select %p96, %s95, 15
      %s98 = smul.addr %s97, 32
      %s99 = smul.addr %s98, 2
      %s100 = scalar_lea.vmem %s0, %s99
      %p101 = pneg %p33
      %p102 = pneg %p30
      %p103 = pneg %p59
      %p104 = pneg %p56
      %p105 = scmp.lt.s32.totalorder %s12, 7
      %s106 = scalar_select %p105, %s12, 7
      %s107 = smul.addr %s106, 4
      %s108 = smul.addr %s107, 4
      %s109 = scalar_lea.vmem %s1, %s108
      %s110 = smul.u32 2, %s12
      %p111 = scmp.lt.s32.totalorder %s110, 15
      %s112 = scalar_select %p111, %s110, 15
      %s113 = smul.addr %s112, 32
      %s114 = smul.addr %s113, 2
      %s115 = scalar_lea.vmem %s0, %s114
      %s116 = smul.u32 2, %s12
      %p117 = scmp.lt.s32.totalorder %s12, 7
      %s118 = scalar_select %p117, %s12, 7
      %s119 = smul.addr %s118, 4
      %s120 = smul.addr %s119, 4
      %s121 = scalar_lea.vmem %s1, %s120
      %v122 = vld [vmem:[%s115] sm:$0x3]
      %v123 = vld [vmem:[%s115 + $0x2] sm:$0x3]
      %v124 = vld [vmem:[%s115 + $0x4] sm:$0x3]
      %v125 = vld [vmem:[%s115 + $0x6] sm:$0x3]
      %v126 = vld [vmem:[%s115 + $0x8] sm:$0x3]
      %v127 = vld [vmem:[%s115 + $0xa] sm:$0x3]
      %v128 = vld [vmem:[%s115 + $0xc] sm:$0x3]
      %v129 = vld [vmem:[%s115 + $0xe] sm:$0x3]
      %v130 = vld [vmem:[%s115 + $0x10] sm:$0x3]
      %v131 = vld [vmem:[%s115 + $0x12] sm:$0x3]
      %v132 = vld [vmem:[%s115 + $0x14] sm:$0x3]
      %v133 = vld [vmem:[%s115 + $0x16] sm:$0x3]
      %v134 = vld [vmem:[%s115 + $0x18] sm:$0x3]
      %v135 = vld [vmem:[%s115 + $0x1a] sm:$0x3]
      %v136 = vld [vmem:[%s115 + $0x1c] sm:$0x3]
      %v137 = vld [vmem:[%s115 + $0x1e] sm:$0x3]
      %v138 = vld [vmem:[%s115 + $0x20] sm:$0x3]
      %v139 = vld [vmem:[%s115 + $0x22] sm:$0x3]
      %v140 = vld [vmem:[%s115 + $0x24] sm:$0x3]
      %v141 = vld [vmem:[%s115 + $0x26] sm:$0x3]
      %v142 = vld [vmem:[%s115 + $0x28] sm:$0x3]
      %v143 = vld [vmem:[%s115 + $0x2a] sm:$0x3]
      %v144 = vld [vmem:[%s115 + $0x2c] sm:$0x3]
      %v145 = vld [vmem:[%s115 + $0x2e] sm:$0x3]
      %v146 = vld [vmem:[%s115 + $0x30] sm:$0x3]
      %v147 = vld [vmem:[%s115 + $0x32] sm:$0x3]
      %v148 = vld [vmem:[%s115 + $0x34] sm:$0x3]
      %v149 = vld [vmem:[%s115 + $0x36] sm:$0x3]
      %v150 = vld [vmem:[%s115 + $0x38] sm:$0x3]
      %v151 = vld [vmem:[%s115 + $0x3a] sm:$0x3]
      %v152 = vld [vmem:[%s115 + $0x3c] sm:$0x3]
      %v153 = vld [vmem:[%s115 + $0x3e] sm:$0x3]
      %s154 = scalar_lea.vmem %s115, 64
      %v155 = vld [vmem:[%s154] sm:$0x3]
      %v156 = vld [vmem:[%s154 + $0x2] sm:$0x3]
      %v157 = vld [vmem:[%s154 + $0x4] sm:$0x3]
      %v158 = vld [vmem:[%s154 + $0x6] sm:$0x3]
      %v159 = vld [vmem:[%s154 + $0x8] sm:$0x3]
      %v160 = vld [vmem:[%s154 + $0xa] sm:$0x3]
      %v161 = vld [vmem:[%s154 + $0xc] sm:$0x3]
      %v162 = vld [vmem:[%s154 + $0xe] sm:$0x3]
      %v163 = vld [vmem:[%s154 + $0x10] sm:$0x3]
      %v164 = vld [vmem:[%s154 + $0x12] sm:$0x3]
      %v165 = vld [vmem:[%s154 + $0x14] sm:$0x3]
      %v166 = vld [vmem:[%s154 + $0x16] sm:$0x3]
      %v167 = vld [vmem:[%s154 + $0x18] sm:$0x3]
      %v168 = vld [vmem:[%s154 + $0x1a] sm:$0x3]
      %v169 = vld [vmem:[%s154 + $0x1c] sm:$0x3]
      %v170 = vld [vmem:[%s154 + $0x1e] sm:$0x3]
      %v171 = vld [vmem:[%s154 + $0x20] sm:$0x3]
      %v172 = vld [vmem:[%s154 + $0x22] sm:$0x3]
      %v173 = vld [vmem:[%s154 + $0x24] sm:$0x3]
      %v174 = vld [vmem:[%s154 + $0x26] sm:$0x3]
      %v175 = vld [vmem:[%s154 + $0x28] sm:$0x3]
      %v176 = vld [vmem:[%s154 + $0x2a] sm:$0x3]
      %v177 = vld [vmem:[%s154 + $0x2c] sm:$0x3]
      %v178 = vld [vmem:[%s154 + $0x2e] sm:$0x3]
      %v179 = vld [vmem:[%s154 + $0x30] sm:$0x3]
      %v180 = vld [vmem:[%s154 + $0x32] sm:$0x3]
      %v181 = vld [vmem:[%s154 + $0x34] sm:$0x3]
      %v182 = vld [vmem:[%s154 + $0x36] sm:$0x3]
      %v183 = vld [vmem:[%s154 + $0x38] sm:$0x3]
      %v184 = vld [vmem:[%s154 + $0x3a] sm:$0x3]
      %v185 = vld [vmem:[%s154 + $0x3c] sm:$0x3]
      %v186 = vld [vmem:[%s154 + $0x3e] sm:$0x3]
      %v187 = vmax.f32 %v122, %v155
      %v188 = vmax.f32 %v123, %v156
      %v189 = vmax.f32 %v124, %v157
      %v190 = vmax.f32 %v125, %v158
      %v191 = vmax.f32 %v126, %v159
      %v192 = vmax.f32 %v127, %v160
      %v193 = vmax.f32 %v128, %v161
      %v194 = vmax.f32 %v129, %v162
      %v195 = vmax.f32 %v130, %v163
      %v196 = vmax.f32 %v131, %v164
      %v197 = vmax.f32 %v132, %v165
      %v198 = vmax.f32 %v133, %v166
      %v199 = vmax.f32 %v134, %v167
      %v200 = vmax.f32 %v135, %v168
      %v201 = vmax.f32 %v136, %v169
      %v202 = vmax.f32 %v137, %v170
      %v203 = vmax.f32 %v138, %v171
      %v204 = vmax.f32 %v139, %v172
      %v205 = vmax.f32 %v140, %v173
      %v206 = vmax.f32 %v141, %v174
      %v207 = vmax.f32 %v142, %v175
      %v208 = vmax.f32 %v143, %v176
      %v209 = vmax.f32 %v144, %v177
      %v210 = vmax.f32 %v145, %v178
      %v211 = vmax.f32 %v146, %v179
      %v212 = vmax.f32 %v147, %v180
      %v213 = vmax.f32 %v148, %v181
      %v214 = vmax.f32 %v149, %v182
      %v215 = vmax.f32 %v150, %v183
      %v216 = vmax.f32 %v151, %v184
      %v217 = vmax.f32 %v152, %v185
      %v218 = vmax.f32 %v153, %v186
      %v219 = vmax.f32 %v187, %v191
      %v220 = vmax.f32 %v188, %v192
      %v221 = vmax.f32 %v189, %v193
      %v222 = vmax.f32 %v190, %v194
      %v223 = vmax.f32 %v195, %v199
      %v224 = vmax.f32 %v196, %v200
      %v225 = vmax.f32 %v197, %v201
      %v226 = vmax.f32 %v198, %v202
      %v227 = vmax.f32 %v203, %v207
      %v228 = vmax.f32 %v204, %v208
      %v229 = vmax.f32 %v205, %v209
      %v230 = vmax.f32 %v206, %v210
      %v231 = vmax.f32 %v211, %v215
      %v232 = vmax.f32 %v212, %v216
      %v233 = vmax.f32 %v213, %v217
      %v234 = vmax.f32 %v214, %v218
      %vm235 = vcmask 1041408
      %v236 = vsel %vm235, %v219, -inf
      %v237 = vrot.slane %v236, 4
      %v238 = vmax.f32 %v236, %v237
      %v239 = vrot.slane %v238, 2
      %v240 = vmax.f32 %v238, %v239
      %v241 = vrot.slane %v240, 1
      %v242 = vmax.f32 %v240, %v241
      %v243 = vsel %vm235, %v220, -inf
      %v244 = vrot.slane %v243, 4
      %v245 = vmax.f32 %v243, %v244
      %v246 = vrot.slane %v245, 2
      %v247 = vmax.f32 %v245, %v246
      %v248 = vrot.slane %v247, 1
      %v249 = vmax.f32 %v247, %v248
      %v250 = vsel %vm235, %v221, -inf
      %v251 = vrot.slane %v250, 4
      %v252 = vmax.f32 %v250, %v251
      %v253 = vrot.slane %v252, 2
      %v254 = vmax.f32 %v252, %v253
      %v255 = vrot.slane %v254, 1
      %v256 = vmax.f32 %v254, %v255
      %v257 = vsel %vm235, %v222, -inf
      %v258 = vrot.slane %v257, 4
      %v259 = vmax.f32 %v257, %v258
      %v260 = vrot.slane %v259, 2
      %v261 = vmax.f32 %v259, %v260
      %v262 = vrot.slane %v261, 1
      %v263 = vmax.f32 %v261, %v262
      %v264 = vsel %vm235, %v223, -inf
      %v265 = vrot.slane %v264, 4
      %v266 = vmax.f32 %v264, %v265
      %v267 = vrot.slane %v266, 2
      %v268 = vmax.f32 %v266, %v267
      %v269 = vrot.slane %v268, 1
      %v270 = vmax.f32 %v268, %v269
      %v271 = vsel %vm235, %v224, -inf
      %v272 = vrot.slane %v271, 4
      %v273 = vmax.f32 %v271, %v272
      %v274 = vrot.slane %v273, 2
      %v275 = vmax.f32 %v273, %v274
      %v276 = vrot.slane %v275, 1
      %v277 = vmax.f32 %v275, %v276
      %v278 = vsel %vm235, %v225, -inf
      %v279 = vrot.slane %v278, 4
      %v280 = vmax.f32 %v278, %v279
      %v281 = vrot.slane %v280, 2
      %v282 = vmax.f32 %v280, %v281
      %v283 = vrot.slane %v282, 1
      %v284 = vmax.f32 %v282, %v283
      %v285 = vsel %vm235, %v226, -inf
      %v286 = vrot.slane %v285, 4
      %v287 = vmax.f32 %v285, %v286
      %v288 = vrot.slane %v287, 2
      %v289 = vmax.f32 %v287, %v288
      %v290 = vrot.slane %v289, 1
      %v291 = vmax.f32 %v289, %v290
      %v292 = vsel %vm235, %v227, -inf
      %v293 = vrot.slane %v292, 4
      %v294 = vmax.f32 %v292, %v293
      %v295 = vrot.slane %v294, 2
      %v296 = vmax.f32 %v294, %v295
      %v297 = vrot.slane %v296, 1
      %v298 = vmax.f32 %v296, %v297
      %v299 = vsel %vm235, %v228, -inf
      %v300 = vrot.slane %v299, 4
      %v301 = vmax.f32 %v299, %v300
      %v302 = vrot.slane %v301, 2
      %v303 = vmax.f32 %v301, %v302
      %v304 = vrot.slane %v303, 1
      %v305 = vmax.f32 %v303, %v304
      %v306 = vsel %vm235, %v229, -inf
      %v307 = vrot.slane %v306, 4
      %v308 = vmax.f32 %v306, %v307
      %v309 = vrot.slane %v308, 2
      %v310 = vmax.f32 %v308, %v309
      %v311 = vrot.slane %v310, 1
      %v312 = vmax.f32 %v310, %v311
      %v313 = vsel %vm235, %v230, -inf
      %v314 = vrot.slane %v313, 4
      %v315 = vmax.f32 %v313, %v314
      %v316 = vrot.slane %v315, 2
      %v317 = vmax.f32 %v315, %v316
      %v318 = vrot.slane %v317, 1
      %v319 = vmax.f32 %v317, %v318
      %v320 = vsel %vm235, %v231, -inf
      %v321 = vrot.slane %v320, 4
      %v322 = vmax.f32 %v320, %v321
      %v323 = vrot.slane %v322, 2
      %v324 = vmax.f32 %v322, %v323
      %v325 = vrot.slane %v324, 1
      %v326 = vmax.f32 %v324, %v325
      %v327 = vsel %vm235, %v232, -inf
      %v328 = vrot.slane %v327, 4
      %v329 = vmax.f32 %v327, %v328
      %v330 = vrot.slane %v329, 2
      %v331 = vmax.f32 %v329, %v330
      %v332 = vrot.slane %v331, 1
      %v333 = vmax.f32 %v331, %v332
      %v334 = vsel %vm235, %v233, -inf
      %v335 = vrot.slane %v334, 4
      %v336 = vmax.f32 %v334, %v335
      %v337 = vrot.slane %v336, 2
      %v338 = vmax.f32 %v336, %v337
      %v339 = vrot.slane %v338, 1
      %v340 = vmax.f32 %v338, %v339
      %v341 = vsel %vm235, %v234, -inf
      %v342 = vrot.slane %v341, 4
      %v343 = vmax.f32 %v341, %v342
      %v344 = vrot.slane %v343, 2
      %v345 = vmax.f32 %v343, %v344
      %v346 = vrot.slane %v345, 1
      %v347 = vmax.f32 %v345, %v346
      %vm364 = vcmask 1041409
      %v365 = vsel %vm364, %v249, %v242
      %vm366 = vcmask 1042434
      %v367 = vsel %vm366, %v256, %v365
      %vm368 = vcmask 1043459
      %v369 = vsel %vm368, %v263, %v367
      %v370 = vsel %vm364, %v277, %v270
      %v371 = vsel %vm366, %v284, %v370
      %v372 = vsel %vm368, %v291, %v371
      %v373 = vsel %vm364, %v305, %v298
      %v374 = vsel %vm366, %v312, %v373
      %v375 = vsel %vm368, %v319, %v374
      %v376 = vsel %vm364, %v333, %v326
      %v377 = vsel %vm366, %v340, %v376
      %v378 = vsel %vm368, %v347, %v377
      %383 = vst [vmem:[%s121] sm:$0xf] %v369
      %384 = vst [vmem:[%s121 + $0x4] sm:$0xf] %v372
      %385 = vst [vmem:[%s121 + $0x8] sm:$0xf] %v375
      %386 = vst [vmem:[%s121 + $0xc] sm:$0xf] %v378
      %p387 = scmp.lt.s32.totalorder %s12, 7
      %s388 = scalar_select %p387, %s12, 7
      %s389 = smul.addr %s388, 4
      %s390 = smul.addr %s389, 4
      %s391 = scalar_lea.vmem %s1, %s390
      // Predicated region
      $region25: #{down_block_forward.7} parent=23 // pred_check
        %p392 = pneg %p56
      $region26: #{down_block_forward.7} parent=23 // pred_check_branch
        %394 = sbr.rel (%p392) target = $region28
      $region27: #{down_block_forward.7} parent=23 // pred_region
        _
      $region28: #{down_block_forward.7} parent=23 // pred_fallthru
        _
    $region24: #{down_block_forward.7} parent=5 // pred_fallthru
      _
    %p395 = scmp.le.s32.totalorder 2, %s7
    // Predicated region
    $region29: #{down_block_forward.7} parent=5 // pred_check
      %p396 = pneg %p395
    $region30: #{down_block_forward.7} parent=5 // pred_check_branch
      %398 = sbr.rel (%p396) target = $region32
    $region31: #{down_block_forward.7} parent=5 // pred_region
      %s399 = ssub.s32 %s7, 2
      // Predicated region
      $region33: #{down_block_forward.7} parent=31 // pred_check
        %p400 = pneg %p62
      $region34: #{down_block_forward.7} parent=31 // pred_check_branch
        %402 = sbr.rel (%p400) target = $region36
      $region35: #{down_block_forward.7} parent=31 // pred_region
        %p403 = scmp.lt.s32.totalorder %s13, 7
        %s404 = scalar_select %p403, %s13, 7
        %s405 = smul.addr %s404, 4
        %s406 = smul.addr %s405, 4
        %s407 = scalar_lea.vmem %s1, %s406
      $region36: #{down_block_forward.7} parent=31 // pred_fallthru
        _
    $region32: #{down_block_forward.7} parent=5 // pred_fallthru
      _
  $region6: #{down_block_forward.7} parent=0 // loop_footer
    %s11 = sadd.s32 1, %s7
  $region7: #{down_block_forward.7} parent=0 // loop_footer_branch
    %6 = sbr.rel target = $region3
  $region8: #{down_block_forward.7} parent=0 // loop_exit
    _

// kernel: down_block_forward.5
$region0: #{down_block_forward.5}
  #allocation0 [shape = 'u32[]', space=smem, size = 0x4, offset = 0x4, fixed_abs, tag = 'smem constant byte address 0x4 - core index']
  #allocation1 [shape = 'u32[72,128]{1,0:T(1,128)}', space=vmem, size = 0x9000, scoped, tag = 'internal scratch']
  #allocation2 [shape = 'f32[64,128]{1,0:T(8,128)}', space=vmem, size = 0x8000, scoped, tag = 'scratch operand']
  #allocation3 [shape = 'bf16[10,10,128]{2,1,0:T(8,128)(2,1)}', space=vmem, size = 0xa000, scoped, tag = 'scratch operand']
  %s0 = inlined_call_operand.vmem [shape: f32[1,128], index: 0, kind: input, shape index: {}]
  %s1 = inlined_call_operand.vmem [shape: f32[1,128], index: 1, kind: input, shape index: {}]
  %s2 = inlined_call_operand.vmem [shape: bf16[2,10,10,10,128], index: 2, kind: input, shape index: {}]
  %s3 = inlined_call_operand.vmem [shape: bf16[27,128,128], index: 3, kind: input, shape index: {}]
  %s4 = inlined_call_operand.vmem [shape: f32[1,128], index: 4, kind: input, shape index: {}]
  %s5 = inlined_call_operand.vmem [shape: bf16[2,10,10,10,128], index: 5, kind: output, shape index: {}]
  %s6 = sld [smem:[#allocation0]]
  $region65: #{down_block_forward.5} parent=0
    _
  %s8 = ssub.s32 1, %s6
  %s9 = scalar_select 0, %s8, %s6
  loop: start=0, step=1, limit=50
  $region2: #{down_block_forward.5} parent=0 // loop_pre_header
    _
  $region3: #{down_block_forward.5} parent=0 // loop_header
    %s11 = sphi 0, %s15
    %p12 = scmp.ge.s32.totalorder %s11, 50
    %s18 = sphi 0, %s37
    %s19 = sphi 0, %s33
    %s20 = sphi 0, %s29
    %s21 = sphi 0, %s18
    %s22 = sphi 0, %s19
    %s23 = sphi 0, %s20
    %s24 = sphi 0, %s21
    %s25 = sphi 0, %s22
    %s26 = sphi 0, %s23
    %s38 = sphi 0, %s38
    %s40 = sphi 0, %s38
    %s41 = sphi 0, %s40
    %s55 = sphi 0, %s41
    %s59 = sphi 0, %s59
    %s61 = sphi 0, %s59
    %s62 = sphi 0, %s61
    %s76 = sphi 0, %s62
    %s86 = sphi 0, %s88
    %s89 = sphi 0, %s86
    %s90 = sphi 0, %s89
    %s106 = sphi 0, %s90
    %s110 = sphi 0, %s110
    %s112 = sphi 0, %s110
    %s113 = sphi 0, %s112
    %s127 = sphi 0, %s113
    %s131 = sphi 0, %s131
    %s133 = sphi 0, %s131
    %s134 = sphi 0, %s133
    %s148 = sphi 0, %s134
    %s158 = sphi 0, %s160
    %s161 = sphi 0, %s158
    %s162 = sphi 0, %s161
    %s178 = sphi 0, %s162
  $region4: #{down_block_forward.5} parent=0 // loop_header_branch
    %14 = sbr.rel (%p12) target = $region8
  $region5: #{down_block_forward.5} parent=0 // loop_body
    %s16 = ssub.s32 %s11, 1
    %s17 = ssub.s32 %s11, 2
    %s27 = sadd.s32 1, %s20
    %p28 = scmp.ge.s32.totalorder %s27, 3
    %s29 = scalar_select %p28, 0, %s27
    %s30 = sadd.s32 1, %s19
    %s31 = scalar_select %p28, %s30, %s19
    %p32 = scmp.ge.s32.totalorder %s31, 8
    %s33 = scalar_select %p32, 0, %s31
    %s34 = sadd.s32 1, %s18
    %s35 = scalar_select %p32, %s34, %s18
    %p36 = scmp.ge.s32.totalorder %s35, 2
    %s37 = scalar_select %p36, 0, %s35
    %s39 = sadd.s32 %s38, 1
    %p42 = scmp.eq.s32.totalorder %s11, 47
    %p43 = scmp.ne.s32.totalorder %s38, %s40
    %p44 = scmp.eq.s32.totalorder %s11, 0
    %p45 = por %p43, %p44
    %p46 = scmp.ne.s32.totalorder %s38, %s40
    %p47 = scmp.eq.s32.totalorder %s16, 47
    %p48 = por %p46, %p47
    %p49 = scmp.ne.s32.totalorder %s40, %s41
    %p50 = scmp.eq.s32.totalorder %s16, 0
    %p51 = por %p49, %p50
    %p52 = scmp.ne.s32.totalorder %s40, %s41
    %p53 = scmp.eq.s32.totalorder %s17, 47
    %p54 = por %p52, %p53
    %p56 = scmp.ne.s32.totalorder %s41, %s55
    %p57 = scmp.eq.s32.totalorder %s17, 0
    %p58 = por %p56, %p57
    %s60 = sadd.s32 %s59, 1
    %p63 = scmp.eq.s32.totalorder %s11, 47
    %p64 = scmp.ne.s32.totalorder %s59, %s61
    %p65 = scmp.eq.s32.totalorder %s11, 0
    %p66 = por %p64, %p65
    %p67 = scmp.ne.s32.totalorder %s59, %s61
    %p68 = scmp.eq.s32.totalorder %s16, 47
    %p69 = por %p67, %p68
    %p70 = scmp.ne.s32.totalorder %s61, %s62
    %p71 = scmp.eq.s32.totalorder %s16, 0
    %p72 = por %p70, %p71
    %p73 = scmp.ne.s32.totalorder %s61, %s62
    %p74 = scmp.eq.s32.totalorder %s17, 47
    %p75 = por %p73, %p74
    %p77 = scmp.ne.s32.totalorder %s62, %s76
    %p78 = scmp.eq.s32.totalorder %s17, 0
    %p79 = por %p77, %p78
    %s80 = sadd.s32 %s19, %s20
    %s81 = sadd.s32 %s33, %s29
    %s82 = ssub.s32 %s18, %s37
    %s83 = ssub.s32 %s80, %s81
    %s84 = sor.u32 %s82, %s83
    %p85 = scmp.eq.s32.totalorder %s84, 0
    %s87 = sadd.s32 %s86, 1
    %s88 = scalar_select %p85, %s86, %s87
    %p91 = pneg %p85
    %p92 = scmp.eq.s32.totalorder %s11, 47
    %p93 = por %p91, %p92
    %p94 = scmp.ne.s32.totalorder %s86, %s89
    %p95 = scmp.eq.s32.totalorder %s11, 0
    %p96 = por %p94, %p95
    %p97 = scmp.ne.s32.totalorder %s86, %s89
    %p98 = scmp.eq.s32.totalorder %s16, 47
    %p99 = por %p97, %p98
    %p100 = scmp.ne.s32.totalorder %s89, %s90
    %p101 = scmp.eq.s32.totalorder %s16, 0
    %p102 = por %p100, %p101
    %p103 = scmp.ne.s32.totalorder %s89, %s90
    %p104 = scmp.eq.s32.totalorder %s17, 47
    %p105 = por %p103, %p104
    %p107 = scmp.ne.s32.totalorder %s90, %s106
    %p108 = scmp.eq.s32.totalorder %s17, 0
    %p109 = por %p107, %p108
    %s111 = sadd.s32 %s110, 1
    %p114 = scmp.eq.s32.totalorder %s11, 47
    %p115 = scmp.ne.s32.totalorder %s110, %s112
    %p116 = scmp.eq.s32.totalorder %s11, 0
    %p117 = por %p115, %p116
    %p118 = scmp.ne.s32.totalorder %s110, %s112
    %p119 = scmp.eq.s32.totalorder %s16, 47
    %p120 = por %p118, %p119
    %p121 = scmp.ne.s32.totalorder %s112, %s113
    %p122 = scmp.eq.s32.totalorder %s16, 0
    %p123 = por %p121, %p122
    %p124 = scmp.ne.s32.totalorder %s112, %s113
    %p125 = scmp.eq.s32.totalorder %s17, 47
    %p126 = por %p124, %p125
    %p128 = scmp.ne.s32.totalorder %s113, %s127
    %p129 = scmp.eq.s32.totalorder %s17, 0
    %p130 = por %p128, %p129
    %s132 = sadd.s32 %s131, 1
    %p135 = scmp.eq.s32.totalorder %s11, 47
    %p136 = scmp.ne.s32.totalorder %s131, %s133
    %p137 = scmp.eq.s32.totalorder %s11, 0
    %p138 = por %p136, %p137
    %p139 = scmp.ne.s32.totalorder %s131, %s133
    %p140 = scmp.eq.s32.totalorder %s16, 47
    %p141 = por %p139, %p140
    %p142 = scmp.ne.s32.totalorder %s133, %s134
    %p143 = scmp.eq.s32.totalorder %s16, 0
    %p144 = por %p142, %p143
    %p145 = scmp.ne.s32.totalorder %s133, %s134
    %p146 = scmp.eq.s32.totalorder %s17, 47
    %p147 = por %p145, %p146
    %p149 = scmp.ne.s32.totalorder %s134, %s148
    %p150 = scmp.eq.s32.totalorder %s17, 0
    %p151 = por %p149, %p150
    %s152 = sadd.s32 %s19, 1
    %s153 = sadd.s32 %s33, 1
    %s154 = ssub.s32 %s18, %s37
    %s155 = ssub.s32 %s152, %s153
    %s156 = sor.u32 %s154, %s155
    %p157 = scmp.eq.s32.totalorder %s156, 0
    %s159 = sadd.s32 %s158, 1
    %s160 = scalar_select %p157, %s158, %s159
    %p163 = pneg %p157
    %p164 = scmp.eq.s32.totalorder %s11, 47
    %p165 = por %p163, %p164
    %p166 = scmp.ne.s32.totalorder %s158, %s161
    %p167 = scmp.eq.s32.totalorder %s11, 0
    %p168 = por %p166, %p167
    %p169 = scmp.ne.s32.totalorder %s158, %s161
    %p170 = scmp.eq.s32.totalorder %s16, 47
    %p171 = por %p169, %p170
    %p172 = scmp.ne.s32.totalorder %s161, %s162
    %p173 = scmp.eq.s32.totalorder %s16, 0
    %p174 = por %p172, %p173
    %p175 = scmp.ne.s32.totalorder %s161, %s162
    %p176 = scmp.eq.s32.totalorder %s17, 47
    %p177 = por %p175, %p176
    %p179 = scmp.ne.s32.totalorder %s162, %s178
    %p180 = scmp.eq.s32.totalorder %s17, 0
    %p181 = por %p179, %p180
    %p182 = scmp.le.s32.totalorder 1, %s11
    %p183 = scmp.lt.s32.totalorder %s11, 49
    %p184 = pnand %p182, %p183
    %p185 = pneg %p184
    // Predicated region
    $region9: #{down_block_forward.5} parent=5 // pred_check
      _
    $region10: #{down_block_forward.5} parent=5 // pred_check_branch
      %187 = sbr.rel (%p184) target = $region12
    $region11: #{down_block_forward.5} parent=5 // pred_region
      %s188 = ssub.s32 %s11, 1
      // Predicated region
      $region13: #{down_block_forward.5} parent=11 // pred_check
        %p189 = pneg %p51
      $region14: #{down_block_forward.5} parent=11 // pred_check_branch
        %191 = sbr.rel (%p189) target = $region16
      $region15: #{down_block_forward.5} parent=11 // pred_region
        _
      $region16: #{down_block_forward.5} parent=11 // pred_fallthru
        _
      // Predicated region
      $region17: #{down_block_forward.5} parent=11 // pred_check
        %p192 = pneg %p72
      $region18: #{down_block_forward.5} parent=11 // pred_check_branch
        %194 = sbr.rel (%p192) target = $region20
      $region19: #{down_block_forward.5} parent=11 // pred_region
        _
      $region20: #{down_block_forward.5} parent=11 // pred_fallthru
        _
      // Predicated region
      $region21: #{down_block_forward.5} parent=11 // pred_check
        %p195 = pneg %p123
      $region22: #{down_block_forward.5} parent=11 // pred_check_branch
        %197 = sbr.rel (%p195) target = $region24
      $region23: #{down_block_forward.5} parent=11 // pred_region
        _
      $region24: #{down_block_forward.5} parent=11 // pred_fallthru
        _
      // Predicated region
      $region25: #{down_block_forward.5} parent=11 // pred_check
        %p198 = pneg %p144
      $region26: #{down_block_forward.5} parent=11 // pred_check_branch
        %200 = sbr.rel (%p198) target = $region28
      $region27: #{down_block_forward.5} parent=11 // pred_region
        _
      $region28: #{down_block_forward.5} parent=11 // pred_fallthru
        _
    $region12: #{down_block_forward.5} parent=5 // pred_fallthru
      _
    %p201 = scmp.lt.s32.totalorder %s11, 48
    // Predicated region
    $region29: #{down_block_forward.5} parent=5 // pred_check
      %p202 = pneg %p201
    $region30: #{down_block_forward.5} parent=5 // pred_check_branch
      %204 = sbr.rel (%p202) target = $region32
    $region31: #{down_block_forward.5} parent=5 // pred_region
      // Predicated region
      $region33: #{down_block_forward.5} parent=31 // pred_check
        %p205 = pneg %p96
      $region34: #{down_block_forward.5} parent=31 // pred_check_branch
        %207 = sbr.rel (%p205) target = $region36
      $region35: #{down_block_forward.5} parent=31 // pred_region
        %s208 = sadd.s32 %s19, %s20
        %p209 = scmp.lt.s32.totalorder %s18, 1
        %s210 = scalar_select %p209, %s18, 1
        %p211 = scmp.lt.s32.totalorder %s208, 9
        %s212 = scalar_select %p211, %s208, 9
        %s213 = smul.addr %s212, 20
        %s214 = smul.addr %s210, 200
        %s215 = sadd.s32 %s213, %s214
        %s216 = smul.addr %s215, 4
        %s217 = scalar_lea.vmem %s2, %s216
        %s218 = sadd.s32 %s19, %s20
      $region36: #{down_block_forward.5} parent=31 // pred_fallthru
        _
    $region32: #{down_block_forward.5} parent=5 // pred_fallthru
      _
    %p219 = scmp.le.s32.totalorder 1, %s11
    %p220 = scmp.lt.s32.totalorder %s11, 49
    %p221 = pnand %p219, %p220
    %p222 = pneg %p221
    // Predicated region
    $region37: #{down_block_forward.5} parent=5 // pred_check
      _
    $region38: #{down_block_forward.5} parent=5 // pred_check_branch
      %224 = sbr.rel (%p221) target = $region40
    $region39: #{down_block_forward.5} parent=5 // pred_region
      %s225 = ssub.s32 %s11, 1
      %p226 = pneg %p51
      %p227 = pneg %p48
      %p228 = pneg %p72
      %p229 = pneg %p69
      %s230 = sadd.s32 %s22, %s23
      %p231 = scmp.lt.s32.totalorder %s21, 1
      %s232 = scalar_select %p231, %s21, 1
      %p233 = scmp.lt.s32.totalorder %s230, 9
      %s234 = scalar_select %p233, %s230, 9
      %s235 = smul.addr %s234, 20
      %s236 = smul.addr %s232, 200
      %s237 = sadd.s32 %s235, %s236
      %s238 = smul.addr %s237, 4
      %s239 = scalar_lea.vmem %s2, %s238
      %p240 = pneg %p102
      %p241 = pneg %p99
      %p242 = pneg %p123
      %p243 = pneg %p120
      %p244 = pneg %p144
      %p245 = pneg %p141
      %p246 = pneg %p174
      %p247 = pneg %p171
      %s248 = sadd.s32 %s22, 1
      %p249 = scmp.lt.s32.totalorder %s21, 1
      %s250 = scalar_select %p249, %s21, 1
      %p251 = scmp.lt.s32.totalorder %s248, 9
      %s252 = scalar_select %p251, %s248, 9
      %s253 = smul.addr %s252, 20
      %s254 = smul.addr %s250, 200
      %s255 = sadd.s32 %s253, %s254
      %s256 = smul.addr %s255, 4
      %s257 = scalar_lea.vmem %s5, %s256
      %s258 = sadd.s32 %s22, %s23
      %p259 = scmp.lt.s32.totalorder %s21, 1
      %s260 = scalar_select %p259, %s21, 1
      %p261 = scmp.lt.s32.totalorder %s258, 9
      %s262 = scalar_select %p261, %s258, 9
      %s263 = smul.addr %s262, 20
      %s264 = smul.addr %s260, 200
      %s265 = sadd.s32 %s263, %s264
      %s266 = smul.addr %s265, 4
      %s267 = scalar_lea.vmem %s2, %s266
      %s268 = sadd.s32 %s22, %s23
      %s269 = sadd.s32 %s22, 1
      %p270 = scmp.lt.s32.totalorder %s21, 1
      %s271 = scalar_select %p270, %s21, 1
      %p272 = scmp.lt.s32.totalorder %s269, 9
      %s273 = scalar_select %p272, %s269, 9
      %s274 = smul.addr %s273, 20
      %s275 = smul.addr %s271, 200
      %s276 = sadd.s32 %s274, %s275
      %s277 = smul.addr %s276, 4
      %s278 = scalar_lea.vmem %s5, %s277
      %s279 = sadd.s32 %s22, 1
      %p281 = scmp.eq.s32.totalorder %s23, 0
      // Predicated region
      $region41: #{down_block_forward.5} parent=39 // pred_check
        %p282 = pneg %p281
      $region42: #{down_block_forward.5} parent=39 // pred_check_branch
        %284 = sbr.rel (%p282) target = $region44
      $region43: #{down_block_forward.5} parent=39 // pred_region
        %285 = vst [vmem:[#allocation2] sm:$0xff] 0.0
        %286 = vst [vmem:[#allocation2 + $0x8] sm:$0xff] 0.0
        %287 = vst [vmem:[#allocation2 + $0x10] sm:$0xff] 0.0
        %288 = vst [vmem:[#allocation2 + $0x18] sm:$0xff] 0.0
        %289 = vst [vmem:[#allocation2 + $0x20] sm:$0xff] 0.0
        %290 = vst [vmem:[#allocation2 + $0x28] sm:$0xff] 0.0
        %291 = vst [vmem:[#allocation2 + $0x30] sm:$0xff] 0.0
        %292 = vst [vmem:[#allocation2 + $0x38] sm:$0xff] 0.0
        %293 = vst [vmem:[#allocation3] sm:$0xf] 0
        %294 = vst [vmem:[#allocation3 + $0x4] sm:$0x1] 0
        %295 = vst [vmem:[#allocation3 + $0x8] sm:$0xf] 0
        %296 = vst [vmem:[#allocation3 + $0xc] sm:$0x1] 0
        %297 = vst [vmem:[#allocation3 + $0x10] sm:$0xf] 0
        %298 = vst [vmem:[#allocation3 + $0x14] sm:$0x1] 0
        %299 = vst [vmem:[#allocation3 + $0x18] sm:$0xf] 0
        %300 = vst [vmem:[#allocation3 + $0x1c] sm:$0x1] 0
        %301 = vst [vmem:[#allocation3 + $0x20] sm:$0xf] 0
        %302 = vst [vmem:[#allocation3 + $0x24] sm:$0x1] 0
        %303 = vst [vmem:[#allocation3 + $0x28] sm:$0xf] 0
        %304 = vst [vmem:[#allocation3 + $0x2c] sm:$0x1] 0
        %305 = vst [vmem:[#allocation3 + $0x30] sm:$0xf] 0
        %306 = vst [vmem:[#allocation3 + $0x34] sm:$0x1] 0
        %307 = vst [vmem:[#allocation3 + $0x38] sm:$0xf] 0
        %308 = vst [vmem:[#allocation3 + $0x3c] sm:$0x1] 0
        %309 = vst [vmem:[#allocation3 + $0x40] sm:$0xf] 0
        %310 = vst [vmem:[#allocation3 + $0x44] sm:$0x1] 0
        %311 = vst [vmem:[#allocation3 + $0x48] sm:$0xf] 0
        %312 = vst [vmem:[#allocation3 + $0x4c] sm:$0x1] 0
      $region44: #{down_block_forward.5} parent=39 // pred_fallthru
        _
      %s313 = sadd.s32 %s22, %s23
      %p314 = scmp.ge.s32.totalorder %s313, 1
      %p315 = scmp.le.s32.totalorder %s313, 8
      %p316 = pnand %p314, %p315
      %p317 = pneg %p316
      // Predicated region
      $region45: #{down_block_forward.5} parent=39 // pred_check
        _
      $region46: #{down_block_forward.5} parent=39 // pred_check_branch
        %319 = sbr.rel (%p316) target = $region48
      $region47: #{down_block_forward.5} parent=39 // pred_region
        %v320 = vld [vmem:[%s0] sm:$0x1]
        %v321 = vld [vmem:[%s1] sm:$0x1]
        %s322 = scalar_lea.vmem %s267, 8
        %v323 = vld [vmem:[%s322] sm:$0xf]
        %v324 = vld [vmem:[%s322 + $0x4] sm:$0x1]
        %v325 = vld [vmem:[%s322 + $0x8] sm:$0xf]
        %v326 = vld [vmem:[%s322 + $0xc] sm:$0x1]
        %v327 = vld [vmem:[%s322 + $0x10] sm:$0xf]
        %v328 = vld [vmem:[%s322 + $0x14] sm:$0x1]
        %v329 = vld [vmem:[%s322 + $0x18] sm:$0xf]
        %v330 = vld [vmem:[%s322 + $0x1c] sm:$0x1]
        %v331 = vld [vmem:[%s322 + $0x20] sm:$0xf]
        %v332 = vld [vmem:[%s322 + $0x24] sm:$0x1]
        %v333 = vld [vmem:[%s322 + $0x28] sm:$0xf]
        %v334 = vld [vmem:[%s322 + $0x2c] sm:$0x1]
        %v335 = vld [vmem:[%s322 + $0x30] sm:$0xf]
        %v336 = vld [vmem:[%s322 + $0x34] sm:$0x1]
        %v337 = vld [vmem:[%s322 + $0x38] sm:$0xf]
        %v338 = vld [vmem:[%s322 + $0x3c] sm:$0x1]
        %v339 = vunpack.c.l.bf16 %v323
        %v340 = vunpack.c.l.bf16 %v324
        %v341 = vunpack.c.l.bf16 %v325
        %v342 = vunpack.c.l.bf16 %v326
        %v343 = vunpack.c.l.bf16 %v327
        %v344 = vunpack.c.l.bf16 %v328
        %v345 = vunpack.c.l.bf16 %v329
        %v346 = vunpack.c.l.bf16 %v330
        %v347 = vunpack.c.l.bf16 %v331
        %v348 = vunpack.c.l.bf16 %v332
        %v349 = vunpack.c.l.bf16 %v333
        %v350 = vunpack.c.l.bf16 %v334
        %v351 = vunpack.c.l.bf16 %v335
        %v352 = vunpack.c.l.bf16 %v336
        %v353 = vunpack.c.l.bf16 %v337
        %v354 = vunpack.c.l.bf16 %v338
        %v356 = vperm.slane %v320, 0
        %v358 = vmul.f32 %v339, %v356
        %v359 = vmul.f32 %v340, %v356
        %v360 = vmul.f32 %v341, %v356
        %v361 = vmul.f32 %v342, %v356
        %v362 = vmul.f32 %v343, %v356
        %v363 = vmul.f32 %v344, %v356
        %v364 = vmul.f32 %v345, %v356
        %v365 = vmul.f32 %v346, %v356
        %v366 = vmul.f32 %v347, %v356
        %v367 = vmul.f32 %v348, %v356
        %v368 = vmul.f32 %v349, %v356
        %v369 = vmul.f32 %v350, %v356
        %v370 = vmul.f32 %v351, %v356
        %v371 = vmul.f32 %v352, %v356
        %v372 = vmul.f32 %v353, %v356
        %v373 = vmul.f32 %v354, %v356
        %v375 = vperm.slane %v321, 0
        %v377 = vadd.f32 %v358, %v375
        %v378 = vadd.f32 %v359, %v375
        %v379 = vadd.f32 %v360, %v375
        %v380 = vadd.f32 %v361, %v375
        %v381 = vadd.f32 %v362, %v375
        %v382 = vadd.f32 %v363, %v375
        %v383 = vadd.f32 %v364, %v375
        %v384 = vadd.f32 %v365, %v375
        %v385 = vadd.f32 %v366, %v375
        %v386 = vadd.f32 %v367, %v375
        %v387 = vadd.f32 %v368, %v375
        %v388 = vadd.f32 %v369, %v375
        %v389 = vadd.f32 %v370, %v375
        %v390 = vadd.f32 %v371, %v375
        %v391 = vadd.f32 %v372, %v375
        %v392 = vadd.f32 %v373, %v375
        %v393 = vpack.c.bf16 %v377, %v377
        %v394 = vpack.c.bf16 %v378, %v378
        %v395 = vpack.c.bf16 %v379, %v379
        %v396 = vpack.c.bf16 %v380, %v380
        %v397 = vpack.c.bf16 %v381, %v381
        %v398 = vpack.c.bf16 %v382, %v382
        %v399 = vpack.c.bf16 %v383, %v383
        %v400 = vpack.c.bf16 %v384, %v384
        %v401 = vpack.c.bf16 %v385, %v385
        %v402 = vpack.c.bf16 %v386, %v386
        %v403 = vpack.c.bf16 %v387, %v387
        %v404 = vpack.c.bf16 %v388, %v388
        %v405 = vpack.c.bf16 %v389, %v389
        %v406 = vpack.c.bf16 %v390, %v390
        %v407 = vpack.c.bf16 %v391, %v391
        %v408 = vpack.c.bf16 %v392, %v392
        %s409 = scalar_lea.vmem [#allocation3], 8
        %vm410 = vcmask 1043456
        %vm411 = vsmask.f32 7938
        %vm412 = vmand %vm410, %vm411
        %v413 = vld [vmem:[%s409] sm:$0xf]
        %v414 = vsel %vm412, %v393, %v413
        %415 = vst [vmem:[%s409] sm:$0xf] %v414
        %vm416 = vcmask 1040384
        %vm417 = vsmask.f32 256
        %vm418 = vmand %vm416, %vm417
        %v419 = vld [vmem:[%s409 + $0x4] sm:$0x1]
        %v420 = vsel %vm418, %v394, %v419
        %421 = vst [vmem:[%s409 + $0x4] sm:$0x1] %v420
        %v422 = vld [vmem:[%s409 + $0x8] sm:$0xf]
        %v423 = vsel %vm412, %v395, %v422
        %424 = vst [vmem:[%s409 + $0x8] sm:$0xf] %v423
        %v425 = vld [vmem:[%s409 + $0xc] sm:$0x1]
        %v426 = vsel %vm418, %v396, %v425
        %427 = vst [vmem:[%s409 + $0xc] sm:$0x1] %v426
        %v428 = vld [vmem:[%s409 + $0x10] sm:$0xf]
        %v429 = vsel %vm412, %v397, %v428
        %430 = vst [vmem:[%s409 + $0x10] sm:$0xf] %v429
        %v431 = vld [vmem:[%s409 + $0x14] sm:$0x1]
        %v432 = vsel %vm418, %v398, %v431
        %433 = vst [vmem:[%s409 + $0x14] sm:$0x1] %v432
        %v434 = vld [vmem:[%s409 + $0x18] sm:$0xf]
        %v435 = vsel %vm412, %v399, %v434
        %436 = vst [vmem:[%s409 + $0x18] sm:$0xf] %v435
        %v437 = vld [vmem:[%s409 + $0x1c] sm:$0x1]
        %v438 = vsel %vm418, %v400, %v437
        %439 = vst [vmem:[%s409 + $0x1c] sm:$0x1] %v438
        %v440 = vld [vmem:[%s409 + $0x20] sm:$0xf]
        %v441 = vsel %vm412, %v401, %v440
        %442 = vst [vmem:[%s409 + $0x20] sm:$0xf] %v441
        %v443 = vld [vmem:[%s409 + $0x24] sm:$0x1]
        %v444 = vsel %vm418, %v402, %v443
        %445 = vst [vmem:[%s409 + $0x24] sm:$0x1] %v444
        %v446 = vld [vmem:[%s409 + $0x28] sm:$0xf]
        %v447 = vsel %vm412, %v403, %v446
        %448 = vst [vmem:[%s409 + $0x28] sm:$0xf] %v447
        %v449 = vld [vmem:[%s409 + $0x2c] sm:$0x1]
        %v450 = vsel %vm418, %v404, %v449
        %451 = vst [vmem:[%s409 + $0x2c] sm:$0x1] %v450
        %v452 = vld [vmem:[%s409 + $0x30] sm:$0xf]
        %v453 = vsel %vm412, %v405, %v452
        %454 = vst [vmem:[%s409 + $0x30] sm:$0xf] %v453
        %v455 = vld [vmem:[%s409 + $0x34] sm:$0x1]
        %v456 = vsel %vm418, %v406, %v455
        %457 = vst [vmem:[%s409 + $0x34] sm:$0x1] %v456
        %v458 = vld [vmem:[%s409 + $0x38] sm:$0xf]
        %v459 = vsel %vm412, %v407, %v458
        %460 = vst [vmem:[%s409 + $0x38] sm:$0xf] %v459
        %v461 = vld [vmem:[%s409 + $0x3c] sm:$0x1]
        %v462 = vsel %vm418, %v408, %v461
        %463 = vst [vmem:[%s409 + $0x3c] sm:$0x1] %v462
        %v464 = vld [vmem:[#allocation2] sm:$0xff]
        %v465 = vld [vmem:[#allocation2 + $0x8] sm:$0xff]
        %v466 = vld [vmem:[#allocation2 + $0x10] sm:$0xff]
        %v467 = vld [vmem:[#allocation2 + $0x18] sm:$0xff]
        %v468 = vld [vmem:[#allocation2 + $0x20] sm:$0xff]
        %v469 = vld [vmem:[#allocation2 + $0x28] sm:$0xff]
        %v470 = vld [vmem:[#allocation2 + $0x30] sm:$0xff]
        %v471 = vld [vmem:[#allocation2 + $0x38] sm:$0xff]
        %v472 = vld [vmem:[#allocation3] sm:$0xf]
        %v473 = vld [vmem:[#allocation3 + $0x8] sm:$0xf]
        %v474 = vld [vmem:[#allocation3 + $0x10] sm:$0xf]
        %v475 = vld [vmem:[#allocation3 + $0x18] sm:$0xf]
        %v476 = vld [vmem:[#allocation3 + $0x20] sm:$0xf]
        %v477 = vld [vmem:[#allocation3 + $0x28] sm:$0xf]
        %v478 = vld [vmem:[#allocation3 + $0x30] sm:$0xf]
        %v479 = vld [vmem:[#allocation3 + $0x38] sm:$0xf]
        %s480 = smul.u32 %s23, 9
        %s481 = smul.u32 %s480, 16
        %s482 = smul.addr %s481, 4
        %s483 = scalar_lea.vmem %s3, %s482
        %v484 = vld [vmem:[%s483] sm:$0xf]
        %v485 = vld [vmem:[%s483 + $0x4] sm:$0xf]
        %v486 = vld [vmem:[%s483 + $0x8] sm:$0xf]
        %v487 = vld [vmem:[%s483 + $0xc] sm:$0xf]
        %v488 = vld [vmem:[%s483 + $0x10] sm:$0xf]
        %v489 = vld [vmem:[%s483 + $0x14] sm:$0xf]
        %v490 = vld [vmem:[%s483 + $0x18] sm:$0xf]
        %v491 = vld [vmem:[%s483 + $0x1c] sm:$0xf]
        %v492 = vld [vmem:[%s483 + $0x20] sm:$0xf]
        %v493 = vld [vmem:[%s483 + $0x24] sm:$0xf]
        %v494 = vld [vmem:[%s483 + $0x28] sm:$0xf]
        %v495 = vld [vmem:[%s483 + $0x2c] sm:$0xf]
        %v496 = vld [vmem:[%s483 + $0x30] sm:$0xf]
        %v497 = vld [vmem:[%s483 + $0x34] sm:$0xf]
        %v498 = vld [vmem:[%s483 + $0x38] sm:$0xf]
        %v499 = vld [vmem:[%s483 + $0x3c] sm:$0xf]
        %v508 = vunpack.c.l.b16 %v472
        %v509 = vunpack.c.l.b16 %v473
        %v510 = vunpack.c.l.b16 %v474
        %v511 = vunpack.c.l.b16 %v475
        %v512 = vunpack.c.l.b16 %v476
        %v513 = vunpack.c.l.b16 %v477
        %v514 = vunpack.c.l.b16 %v478
        %v515 = vunpack.c.l.b16 %v479
        %v516 = vpack.c.b16 %v509, %v508
        %v517 = vpack.c.b16 %v511, %v510
        %v518 = vpack.c.b16 %v513, %v512
        %v519 = vpack.c.b16 %v515, %v514
        %v540 = vunpack.c.l.b16 %v484
        %v541 = vunpack.c.l.b16 %v485
        %v542 = vunpack.c.l.b16 %v486
        %v543 = vunpack.c.l.b16 %v487
        %v544 = vunpack.c.l.b16 %v488
        %v545 = vunpack.c.l.b16 %v489
        %v546 = vunpack.c.l.b16 %v490
        %v547 = vunpack.c.l.b16 %v491
        %v548 = vunpack.c.l.b16 %v492
        %v549 = vunpack.c.l.b16 %v493
        %v550 = vunpack.c.l.b16 %v494
        %v551 = vunpack.c.l.b16 %v495
        %v552 = vunpack.c.l.b16 %v496
        %v553 = vunpack.c.l.b16 %v497
        %v554 = vunpack.c.l.b16 %v498
        %v555 = vunpack.c.l.b16 %v499
        %v556 = vpack.c.b16 %v541, %v540
        %v557 = vpack.c.b16 %v543, %v542
        %v558 = vpack.c.b16 %v545, %v544
        %v559 = vpack.c.b16 %v547, %v546
        %v560 = vpack.c.b16 %v549, %v548
        %v561 = vpack.c.b16 %v551, %v550
        %v562 = vpack.c.b16 %v553, %v552
        %v563 = vpack.c.b16 %v555, %v554
        %572 = vmatpush.bf16.msra.mxu0 %v563
        %573 = vmatpush.bf16.msra.mxu0 %v562
        %574 = vmatpush.bf16.msra.mxu0 %v561
        %575 = vmatpush.bf16.msra.mxu0 %v560
        %576 = vmatpush.bf16.msra.mxu0 %v559
        %577 = vmatpush.bf16.msra.mxu0 %v558
        %578 = vmatpush.bf16.msra.mxu0 %v557
        %579 = vmatpush.bf16.msra.mxu0 %v556
        %580 = vmatmul.bf16.gmra.mxu0 %v516
        %v581 = vpop.f32.mrf.mxu0
        %v582 = vadd.f32 0.0, %v581
        %v583 = vpop.f32.mrf.mxu0
        %v584 = vadd.f32 0.0, %v583
        %585 = vmatmul.bf16.gmra.mxu0 %v517
        %v586 = vpop.f32.mrf.mxu0
        %v587 = vadd.f32 0.0, %v586
        %v588 = vpop.f32.mrf.mxu0
        %v589 = vadd.f32 0.0, %v588
        %590 = vmatmul.bf16.gmra.mxu0 %v518
        %v591 = vpop.f32.mrf.mxu0
        %v592 = vadd.f32 0.0, %v591
        %v593 = vpop.f32.mrf.mxu0
        %v594 = vadd.f32 0.0, %v593
        %595 = vmatmul.bf16.gmra.mxu0 %v519
        %v596 = vpop.f32.mrf.mxu0
        %v597 = vadd.f32 0.0, %v596
        %v598 = vpop.f32.mrf.mxu0
        %v599 = vadd.f32 0.0, %v598
        %600 = vdwg.mxu0
        %v601 = vadd.f32 %v464, %v582
        %v602 = vadd.f32 %v465, %v584
        %v603 = vadd.f32 %v466, %v587
        %v604 = vadd.f32 %v467, %v589
        %v605 = vadd.f32 %v468, %v592
        %v606 = vadd.f32 %v469, %v594
        %v607 = vadd.f32 %v470, %v597
        %v608 = vadd.f32 %v471, %v599
        %v609 = vld [vmem:[#allocation3] sm:$0xf]
        %v610 = vld [vmem:[#allocation3 + $0x4] sm:$0x1]
        %v611 = vld [vmem:[#allocation3 + $0x8] sm:$0xf]
        %v612 = vld [vmem:[#allocation3 + $0xc] sm:$0x1]
        %v613 = vld [vmem:[#allocation3 + $0x10] sm:$0xf]
        %v614 = vld [vmem:[#allocation3 + $0x14] sm:$0x1]
        %v615 = vld [vmem:[#allocation3 + $0x18] sm:$0xf]
        %v616 = vld [vmem:[#allocation3 + $0x1c] sm:$0x1]
        %v617 = vld [vmem:[#allocation3 + $0x20] sm:$0xf]
        %v618 = vld [vmem:[#allocation3 + $0x24] sm:$0x1]
        %v619 = vld [vmem:[#allocation3 + $0x28] sm:$0xf]
        %v620 = vld [vmem:[#allocation3 + $0x2c] sm:$0x1]
        %v621 = vld [vmem:[#allocation3 + $0x30] sm:$0xf]
        %v622 = vld [vmem:[#allocation3 + $0x34] sm:$0x1]
        %v623 = vld [vmem:[#allocation3 + $0x38] sm:$0xf]
        %v624 = vld [vmem:[#allocation3 + $0x3c] sm:$0x1]
        %vm625 = vsmask.f32 3328
        %vm626 = vsmask.f32 7440
        %vm627 = vmor %vm625, %vm626
        %v629 = vshrl.u32 %v609, 16
        %v631 = vrot.slane %v629, 4
        %v632 = vshll.u32 %v609, 16
        %v634 = vrot.slane %v632, 5
        %v635 = vor.u32 %v631, %v634
        %v636 = vrot.slane %v635, 4
        %v638 = vshll.u32 %v610, 16
        %v640 = vrot.slane %v638, 5
        %v641 = vsel %vm627, %v636, %v640
        %v643 = vshrl.u32 %v611, 16
        %v645 = vrot.slane %v643, 4
        %v646 = vshll.u32 %v611, 16
        %v648 = vrot.slane %v646, 5
        %v649 = vor.u32 %v645, %v648
        %v650 = vrot.slane %v649, 4
        %v652 = vshll.u32 %v612, 16
        %v654 = vrot.slane %v652, 5
        %v655 = vsel %vm627, %v650, %v654
        %v657 = vshrl.u32 %v613, 16
        %v659 = vrot.slane %v657, 4
        %v660 = vshll.u32 %v613, 16
        %v662 = vrot.slane %v660, 5
        %v663 = vor.u32 %v659, %v662
        %v664 = vrot.slane %v663, 4
        %v666 = vshll.u32 %v614, 16
        %v668 = vrot.slane %v666, 5
        %v669 = vsel %vm627, %v664, %v668
        %v671 = vshrl.u32 %v615, 16
        %v673 = vrot.slane %v671, 4
        %v674 = vshll.u32 %v615, 16
        %v676 = vrot.slane %v674, 5
        %v677 = vor.u32 %v673, %v676
        %v678 = vrot.slane %v677, 4
        %v680 = vshll.u32 %v616, 16
        %v682 = vrot.slane %v680, 5
        %v683 = vsel %vm627, %v678, %v682
        %v685 = vshrl.u32 %v617, 16
        %v687 = vrot.slane %v685, 4
        %v688 = vshll.u32 %v617, 16
        %v690 = vrot.slane %v688, 5
        %v691 = vor.u32 %v687, %v690
        %v692 = vrot.slane %v691, 4
        %v694 = vshll.u32 %v618, 16
        %v696 = vrot.slane %v694, 5
        %v697 = vsel %vm627, %v692, %v696
        %v699 = vshrl.u32 %v619, 16
        %v701 = vrot.slane %v699, 4
        %v702 = vshll.u32 %v619, 16
        %v704 = vrot.slane %v702, 5
        %v705 = vor.u32 %v701, %v704
        %v706 = vrot.slane %v705, 4
        %v708 = vshll.u32 %v620, 16
        %v710 = vrot.slane %v708, 5
        %v711 = vsel %vm627, %v706, %v710
        %v713 = vshrl.u32 %v621, 16
        %v715 = vrot.slane %v713, 4
        %v716 = vshll.u32 %v621, 16
        %v718 = vrot.slane %v716, 5
        %v719 = vor.u32 %v715, %v718
        %v720 = vrot.slane %v719, 4
        %v722 = vshll.u32 %v622, 16
        %v724 = vrot.slane %v722, 5
        %v725 = vsel %vm627, %v720, %v724
        %v727 = vshrl.u32 %v623, 16
        %v729 = vrot.slane %v727, 4
        %v730 = vshll.u32 %v623, 16
        %v732 = vrot.slane %v730, 5
        %v733 = vor.u32 %v729, %v732
        %v734 = vrot.slane %v733, 4
        %v736 = vshll.u32 %v624, 16
        %v738 = vrot.slane %v736, 5
        %v739 = vsel %vm627, %v734, %v738
        %s740 = sadd.s32 %s480, 1
        %s741 = smul.u32 %s740, 16
        %s742 = smul.addr %s741, 4
        %s743 = scalar_lea.vmem %s3, %s742
        %v744 = vld [vmem:[%s743] sm:$0xf]
        %v745 = vld [vmem:[%s743 + $0x4] sm:$0xf]
        %v746 = vld [vmem:[%s743 + $0x8] sm:$0xf]
        %v747 = vld [vmem:[%s743 + $0xc] sm:$0xf]
        %v748 = vld [vmem:[%s743 + $0x10] sm:$0xf]
        %v749 = vld [vmem:[%s743 + $0x14] sm:$0xf]
        %v750 = vld [vmem:[%s743 + $0x18] sm:$0xf]
        %v751 = vld [vmem:[%s743 + $0x1c] sm:$0xf]
        %v752 = vld [vmem:[%s743 + $0x20] sm:$0xf]
        %v753 = vld [vmem:[%s743 + $0x24] sm:$0xf]
        %v754 = vld [vmem:[%s743 + $0x28] sm:$0xf]
        %v755 = vld [vmem:[%s743 + $0x2c] sm:$0xf]
        %v756 = vld [vmem:[%s743 + $0x30] sm:$0xf]
        %v757 = vld [vmem:[%s743 + $0x34] sm:$0xf]
        %v758 = vld [vmem:[%s743 + $0x38] sm:$0xf]
        %v759 = vld [vmem:[%s743 + $0x3c] sm:$0xf]
        %v760 = vunpack.c.l.b16 %v641
        %v761 = vunpack.c.l.b16 %v655
        %v762 = vunpack.c.l.b16 %v669
        %v763 = vunpack.c.l.b16 %v683
        %v764 = vunpack.c.l.b16 %v697
        %v765 = vunpack.c.l.b16 %v711
        %v766 = vunpack.c.l.b16 %v725
        %v767 = vunpack.c.l.b16 %v739
        %v768 = vpack.c.b16 %v761, %v760
        %v769 = vpack.c.b16 %v763, %v762
        %v770 = vpack.c.b16 %v765, %v764
        %v771 = vpack.c.b16 %v767, %v766
        %v792 = vunpack.c.l.b16 %v744
        %v793 = vunpack.c.l.b16 %v745
        %v794 = vunpack.c.l.b16 %v746
        %v795 = vunpack.c.l.b16 %v747
        %v796 = vunpack.c.l.b16 %v748
        %v797 = vunpack.c.l.b16 %v749
        %v798 = vunpack.c.l.b16 %v750
        %v799 = vunpack.c.l.b16 %v751
        %v800 = vunpack.c.l.b16 %v752
        %v801 = vunpack.c.l.b16 %v753
        %v802 = vunpack.c.l.b16 %v754
        %v803 = vunpack.c.l.b16 %v755
        %v804 = vunpack.c.l.b16 %v756
        %v805 = vunpack.c.l.b16 %v757
        %v806 = vunpack.c.l.b16 %v758
        %v807 = vunpack.c.l.b16 %v759
        %v808 = vpack.c.b16 %v793, %v792
        %v809 = vpack.c.b16 %v795, %v794
        %v810 = vpack.c.b16 %v797, %v796
        %v811 = vpack.c.b16 %v799, %v798
        %v812 = vpack.c.b16 %v801, %v800
        %v813 = vpack.c.b16 %v803, %v802
        %v814 = vpack.c.b16 %v805, %v804
        %v815 = vpack.c.b16 %v807, %v806
        %824 = vmatpush.bf16.msra.mxu0 %v815
        %825 = vmatpush.bf16.msra.mxu0 %v814
        %826 = vmatpush.bf16.msra.mxu0 %v813
        %827 = vmatpush.bf16.msra.mxu0 %v812
        %828 = vmatpush.bf16.msra.mxu0 %v811
        %829 = vmatpush.bf16.msra.mxu0 %v810
        %830 = vmatpush.bf16.msra.mxu0 %v809
        %831 = vmatpush.bf16.msra.mxu0 %v808
        %832 = vmatmul.bf16.gmra.mxu0 %v768
        %v833 = vpop.f32.mrf.mxu0
        %v834 = vadd.f32 0.0, %v833
        %v835 = vpop.f32.mrf.mxu0
        %v836 = vadd.f32 0.0, %v835
        %837 = vmatmul.bf16.gmra.mxu0 %v769
        %v838 = vpop.f32.mrf.mxu0
        %v839 = vadd.f32 0.0, %v838
        %v840 = vpop.f32.mrf.mxu0
        %v841 = vadd.f32 0.0, %v840
        %842 = vmatmul.bf16.gmra.mxu0 %v770
        %v843 = vpop.f32.mrf.mxu0
        %v844 = vadd.f32 0.0, %v843
        %v845 = vpop.f32.mrf.mxu0
        %v846 = vadd.f32 0.0, %v845
        %847 = vmatmul.bf16.gmra.mxu0 %v771
        %v848 = vpop.f32.mrf.mxu0
        %v849 = vadd.f32 0.0, %v848
        %v850 = vpop.f32.mrf.mxu0
        %v851 = vadd.f32 0.0, %v850
        %852 = vdwg.mxu0
        %v853 = vadd.f32 %v601, %v834
        %v854 = vadd.f32 %v602, %v836
        %v855 = vadd.f32 %v603, %v839
        %v856 = vadd.f32 %v604, %v841
        %v857 = vadd.f32 %v605, %v844
        %v858 = vadd.f32 %v606, %v846
        %v859 = vadd.f32 %v607, %v849
        %v860 = vadd.f32 %v608, %v851
        %v861 = vld [vmem:[#allocation3] sm:$0xe]
        %v862 = vld [vmem:[#allocation3 + $0x8] sm:$0xe]
        %v863 = vld [vmem:[#allocation3 + $0x10] sm:$0xe]
        %v864 = vld [vmem:[#allocation3 + $0x18] sm:$0xe]
        %v865 = vld [vmem:[#allocation3 + $0x20] sm:$0xe]
        %v866 = vld [vmem:[#allocation3 + $0x28] sm:$0xe]
        %v867 = vld [vmem:[#allocation3 + $0x30] sm:$0xe]
        %v868 = vld [vmem:[#allocation3 + $0x38] sm:$0xe]
        %vm885 = vcmask 1042432
        %vm886 = vcmask 1046532
        %vm887 = vmor %vm885, %vm886
        %v888 = vrot.slane %v861, 5
        %v889 = vrot.slane %v888, 4
        %v890 = vrot.slane %v610, 5
        %v891 = vsel %vm887, %v889, %v890
        %v892 = vrot.slane %v862, 5
        %v893 = vrot.slane %v892, 4
        %v894 = vrot.slane %v612, 5
        %v895 = vsel %vm887, %v893, %v894
        %v896 = vrot.slane %v863, 5
        %v897 = vrot.slane %v896, 4
        %v898 = vrot.slane %v614, 5
        %v899 = vsel %vm887, %v897, %v898
        %v900 = vrot.slane %v864, 5
        %v901 = vrot.slane %v900, 4
        %v902 = vrot.slane %v616, 5
        %v903 = vsel %vm887, %v901, %v902
        %v904 = vrot.slane %v865, 5
        %v905 = vrot.slane %v904, 4
        %v906 = vrot.slane %v618, 5
        %v907 = vsel %vm887, %v905, %v906
        %v908 = vrot.slane %v866, 5
        %v909 = vrot.slane %v908, 4
        %v910 = vrot.slane %v620, 5
        %v911 = vsel %vm887, %v909, %v910
        %v912 = vrot.slane %v867, 5
        %v913 = vrot.slane %v912, 4
        %v914 = vrot.slane %v622, 5
        %v915 = vsel %vm887, %v913, %v914
        %v916 = vrot.slane %v868, 5
        %v917 = vrot.slane %v916, 4
        %v918 = vrot.slane %v624, 5
        %v919 = vsel %vm887, %v917, %v918
        %s920 = sadd.s32 %s480, 2
        %s921 = smul.u32 %s920, 16
        %s922 = smul.addr %s921, 4
        %s923 = scalar_lea.vmem %s3, %s922
        %v924 = vld [vmem:[%s923] sm:$0xf]
        %v925 = vld [vmem:[%s923 + $0x4] sm:$0xf]
        %v926 = vld [vmem:[%s923 + $0x8] sm:$0xf]
        %v927 = vld [vmem:[%s923 + $0xc] sm:$0xf]
        %v928 = vld [vmem:[%s923 + $0x10] sm:$0xf]
        %v929 = vld [vmem:[%s923 + $0x14] sm:$0xf]
        %v930 = vld [vmem:[%s923 + $0x18] sm:$0xf]
        %v931 = vld [vmem:[%s923 + $0x1c] sm:$0xf]
        %v932 = vld [vmem:[%s923 + $0x20] sm:$0xf]
        %v933 = vld [vmem:[%s923 + $0x24] sm:$0xf]
        %v934 = vld [vmem:[%s923 + $0x28] sm:$0xf]
        %v935 = vld [vmem:[%s923 + $0x2c] sm:$0xf]
        %v936 = vld [vmem:[%s923 + $0x30] sm:$0xf]
        %v937 = vld [vmem:[%s923 + $0x34] sm:$0xf]
        %v938 = vld [vmem:[%s923 + $0x38] sm:$0xf]
        %v939 = vld [vmem:[%s923 + $0x3c] sm:$0xf]
        %v940 = vunpack.c.l.b16 %v891
        %v941 = vunpack.c.l.b16 %v895
        %v942 = vunpack.c.l.b16 %v899
        %v943 = vunpack.c.l.b16 %v903
        %v944 = vunpack.c.l.b16 %v907
        %v945 = vunpack.c.l.b16 %v911
        %v946 = vunpack.c.l.b16 %v915
        %v947 = vunpack.c.l.b16 %v919
        %v948 = vpack.c.b16 %v941, %v940
        %v949 = vpack.c.b16 %v943, %v942
        %v950 = vpack.c.b16 %v945, %v944
        %v951 = vpack.c.b16 %v947, %v946
        %v972 = vunpack.c.l.b16 %v924
        %v973 = vunpack.c.l.b16 %v925
        %v974 = vunpack.c.l.b16 %v926
        %v975 = vunpack.c.l.b16 %v927
        %v976 = vunpack.c.l.b16 %v928
        %v977 = vunpack.c.l.b16 %v929
        %v978 = vunpack.c.l.b16 %v930
        %v979 = vunpack.c.l.b16 %v931
        %v980 = vunpack.c.l.b16 %v932
        %v981 = vunpack.c.l.b16 %v933
        %v982 = vunpack.c.l.b16 %v934
        %v983 = vunpack.c.l.b16 %v935
        %v984 = vunpack.c.l.b16 %v936
        %v985 = vunpack.c.l.b16 %v937
        %v986 = vunpack.c.l.b16 %v938
        %v987 = vunpack.c.l.b16 %v939
        %v988 = vpack.c.b16 %v973, %v972
        %v989 = vpack.c.b16 %v975, %v974
        %v990 = vpack.c.b16 %v977, %v976
        %v991 = vpack.c.b16 %v979, %v978
        %v992 = vpack.c.b16 %v981, %v980
        %v993 = vpack.c.b16 %v983, %v982
        %v994 = vpack.c.b16 %v985, %v984
        %v995 = vpack.c.b16 %v987, %v986
        %1004 = vmatpush.bf16.msra.mxu0 %v995
        %1005 = vmatpush.bf16.msra.mxu0 %v994
        %1006 = vmatpush.bf16.msra.mxu0 %v993
        %1007 = vmatpush.bf16.msra.mxu0 %v992
        %1008 = vmatpush.bf16.msra.mxu0 %v991
        %1009 = vmatpush.bf16.msra.mxu0 %v990
        %1010 = vmatpush.bf16.msra.mxu0 %v989
        %1011 = vmatpush.bf16.msra.mxu0 %v988
        %1012 = vmatmul.bf16.gmra.mxu0 %v948
        %v1013 = vpop.f32.mrf.mxu0
        %v1014 = vadd.f32 0.0, %v1013
        %v1015 = vpop.f32.mrf.mxu0
        %v1016 = vadd.f32 0.0, %v1015
        %1017 = vmatmul.bf16.gmra.mxu0 %v949
        %v1018 = vpop.f32.mrf.mxu0
        %v1019 = vadd.f32 0.0, %v1018
        %v1020 = vpop.f32.mrf.mxu0
        %v1021 = vadd.f32 0.0, %v1020
        %1022 = vmatmul.bf16.gmra.mxu0 %v950
        %v1023 = vpop.f32.mrf.mxu0
        %v1024 = vadd.f32 0.0, %v1023
        %v1025 = vpop.f32.mrf.mxu0
        %v1026 = vadd.f32 0.0, %v1025
        %1027 = vmatmul.bf16.gmra.mxu0 %v951
        %v1028 = vpop.f32.mrf.mxu0
        %v1029 = vadd.f32 0.0, %v1028
        %v1030 = vpop.f32.mrf.mxu0
        %v1031 = vadd.f32 0.0, %v1030
        %1032 = vdwg.mxu0
        %v1033 = vadd.f32 %v853, %v1014
        %v1034 = vadd.f32 %v854, %v1016
        %v1035 = vadd.f32 %v855, %v1019
        %v1036 = vadd.f32 %v856, %v1021
        %v1037 = vadd.f32 %v857, %v1024
        %v1038 = vadd.f32 %v858, %v1026
        %v1039 = vadd.f32 %v859, %v1029
        %v1040 = vadd.f32 %v860, %v1031
        %v1041 = vld [vmem:[%s409] sm:$0xf]
        %v1042 = vld [vmem:[%s409 + $0x8] sm:$0xf]
        %v1043 = vld [vmem:[%s409 + $0x10] sm:$0xf]
        %v1044 = vld [vmem:[%s409 + $0x18] sm:$0xf]
        %v1045 = vld [vmem:[%s409 + $0x20] sm:$0xf]
        %v1046 = vld [vmem:[%s409 + $0x28] sm:$0xf]
        %v1047 = vld [vmem:[%s409 + $0x30] sm:$0xf]
        %v1048 = vld [vmem:[%s409 + $0x38] sm:$0xf]
        %s1049 = sadd.s32 %s480, 3
        %s1050 = smul.u32 %s1049, 16
        %s1051 = smul.addr %s1050, 4
        %s1052 = scalar_lea.vmem %s3, %s1051
        %v1053 = vld [vmem:[%s1052] sm:$0xf]
        %v1054 = vld [vmem:[%s1052 + $0x4] sm:$0xf]
        %v1055 = vld [vmem:[%s1052 + $0x8] sm:$0xf]
        %v1056 = vld [vmem:[%s1052 + $0xc] sm:$0xf]
        %v1057 = vld [vmem:[%s1052 + $0x10] sm:$0xf]
        %v1058 = vld [vmem:[%s1052 + $0x14] sm:$0xf]
        %v1059 = vld [vmem:[%s1052 + $0x18] sm:$0xf]
        %v1060 = vld [vmem:[%s1052 + $0x1c] sm:$0xf]
        %v1061 = vld [vmem:[%s1052 + $0x20] sm:$0xf]
        %v1062 = vld [vmem:[%s1052 + $0x24] sm:$0xf]
        %v1063 = vld [vmem:[%s1052 + $0x28] sm:$0xf]
        %v1064 = vld [vmem:[%s1052 + $0x2c] sm:$0xf]
        %v1065 = vld [vmem:[%s1052 + $0x30] sm:$0xf]
        %v1066 = vld [vmem:[%s1052 + $0x34] sm:$0xf]
        %v1067 = vld [vmem:[%s1052 + $0x38] sm:$0xf]
        %v1068 = vld [vmem:[%s1052 + $0x3c] sm:$0xf]
        %v1077 = vunpack.c.l.b16 %v1041
        %v1078 = vunpack.c.l.b16 %v1042
        %v1079 = vunpack.c.l.b16 %v1043
        %v1080 = vunpack.c.l.b16 %v1044
        %v1081 = vunpack.c.l.b16 %v1045
        %v1082 = vunpack.c.l.b16 %v1046
        %v1083 = vunpack.c.l.b16 %v1047
        %v1084 = vunpack.c.l.b16 %v1048
        %v1085 = vpack.c.b16 %v1078, %v1077
        %v1086 = vpack.c.b16 %v1080, %v1079
        %v1087 = vpack.c.b16 %v1082, %v1081
        %v1088 = vpack.c.b16 %v1084, %v1083
        %v1109 = vunpack.c.l.b16 %v1053
        %v1110 = vunpack.c.l.b16 %v1054
        %v1111 = vunpack.c.l.b16 %v1055
        %v1112 = vunpack.c.l.b16 %v1056
        %v1113 = vunpack.c.l.b16 %v1057
        %v1114 = vunpack.c.l.b16 %v1058
        %v1115 = vunpack.c.l.b16 %v1059
        %v1116 = vunpack.c.l.b16 %v1060
        %v1117 = vunpack.c.l.b16 %v1061
        %v1118 = vunpack.c.l.b16 %v1062
        %v1119 = vunpack.c.l.b16 %v1063
        %v1120 = vunpack.c.l.b16 %v1064
        %v1121 = vunpack.c.l.b16 %v1065
        %v1122 = vunpack.c.l.b16 %v1066
        %v1123 = vunpack.c.l.b16 %v1067
        %v1124 = vunpack.c.l.b16 %v1068
        %v1125 = vpack.c.b16 %v1110, %v1109
        %v1126 = vpack.c.b16 %v1112, %v1111
        %v1127 = vpack.c.b16 %v1114, %v1113
        %v1128 = vpack.c.b16 %v1116, %v1115
        %v1129 = vpack.c.b16 %v1118, %v1117
        %v1130 = vpack.c.b16 %v1120, %v1119
        %v1131 = vpack.c.b16 %v1122, %v1121
        %v1132 = vpack.c.b16 %v1124, %v1123
        %1141 = vmatpush.bf16.msra.mxu0 %v1132
        %1142 = vmatpush.bf16.msra.mxu0 %v1131
        %1143 = vmatpush.bf16.msra.mxu0 %v1130
        %1144 = vmatpush.bf16.msra.mxu0 %v1129
        %1145 = vmatpush.bf16.msra.mxu0 %v1128
        %1146 = vmatpush.bf16.msra.mxu0 %v1127
        %1147 = vmatpush.bf16.msra.mxu0 %v1126
        %1148 = vmatpush.bf16.msra.mxu0 %v1125
        %1149 = vmatmul.bf16.gmra.mxu0 %v1085
        %v1150 = vpop.f32.mrf.mxu0
        %v1151 = vadd.f32 0.0, %v1150
        %v1152 = vpop.f32.mrf.mxu0
        %v1153 = vadd.f32 0.0, %v1152
        %1154 = vmatmul.bf16.gmra.mxu0 %v1086
        %v1155 = vpop.f32.mrf.mxu0
        %v1156 = vadd.f32 0.0, %v1155
        %v1157 = vpop.f32.mrf.mxu0
        %v1158 = vadd.f32 0.0, %v1157
        %1159 = vmatmul.bf16.gmra.mxu0 %v1087
        %v1160 = vpop.f32.mrf.mxu0
        %v1161 = vadd.f32 0.0, %v1160
        %v1162 = vpop.f32.mrf.mxu0
        %v1163 = vadd.f32 0.0, %v1162
        %1164 = vmatmul.bf16.gmra.mxu0 %v1088
        %v1165 = vpop.f32.mrf.mxu0
        %v1166 = vadd.f32 0.0, %v1165
        %v1167 = vpop.f32.mrf.mxu0
        %v1168 = vadd.f32 0.0, %v1167
        %1169 = vdwg.mxu0
        %v1170 = vadd.f32 %v1033, %v1151
        %v1171 = vadd.f32 %v1034, %v1153
        %v1172 = vadd.f32 %v1035, %v1156
        %v1173 = vadd.f32 %v1036, %v1158
        %v1174 = vadd.f32 %v1037, %v1161
        %v1175 = vadd.f32 %v1038, %v1163
        %v1176 = vadd.f32 %v1039, %v1166
        %v1177 = vadd.f32 %v1040, %v1168
        %v1178 = vld [vmem:[%s409] sm:$0xf]
        %v1179 = vld [vmem:[%s409 + $0x4] sm:$0x1]
        %v1180 = vld [vmem:[%s409 + $0x8] sm:$0xf]
        %v1181 = vld [vmem:[%s409 + $0xc] sm:$0x1]
        %v1182 = vld [vmem:[%s409 + $0x10] sm:$0xf]
        %v1183 = vld [vmem:[%s409 + $0x14] sm:$0x1]
        %v1184 = vld [vmem:[%s409 + $0x18] sm:$0xf]
        %v1185 = vld [vmem:[%s409 + $0x1c] sm:$0x1]
        %v1186 = vld [vmem:[%s409 + $0x20] sm:$0xf]
        %v1187 = vld [vmem:[%s409 + $0x24] sm:$0x1]
        %v1188 = vld [vmem:[%s409 + $0x28] sm:$0xf]
        %v1189 = vld [vmem:[%s409 + $0x2c] sm:$0x1]
        %v1190 = vld [vmem:[%s409 + $0x30] sm:$0xf]
        %v1191 = vld [vmem:[%s409 + $0x34] sm:$0x1]
        %v1192 = vld [vmem:[%s409 + $0x38] sm:$0xf]
        %v1193 = vld [vmem:[%s409 + $0x3c] sm:$0x1]
        %v1195 = vshrl.u32 %v1178, 16
        %v1197 = vrot.slane %v1195, 4
        %v1198 = vshll.u32 %v1178, 16
        %v1200 = vrot.slane %v1198, 5
        %v1201 = vor.u32 %v1197, %v1200
        %v1202 = vrot.slane %v1201, 4
        %v1204 = vshll.u32 %v1179, 16
        %v1206 = vrot.slane %v1204, 5
        %v1207 = vsel %vm627, %v1202, %v1206
        %v1209 = vshrl.u32 %v1180, 16
        %v1211 = vrot.slane %v1209, 4
        %v1212 = vshll.u32 %v1180, 16
        %v1214 = vrot.slane %v1212, 5
        %v1215 = vor.u32 %v1211, %v1214
        %v1216 = vrot.slane %v1215, 4
        %v1218 = vshll.u32 %v1181, 16
        %v1220 = vrot.slane %v1218, 5
        %v1221 = vsel %vm627, %v1216, %v1220
        %v1223 = vshrl.u32 %v1182, 16
        %v1225 = vrot.slane %v1223, 4
        %v1226 = vshll.u32 %v1182, 16
        %v1228 = vrot.slane %v1226, 5
        %v1229 = vor.u32 %v1225, %v1228
        %v1230 = vrot.slane %v1229, 4
        %v1232 = vshll.u32 %v1183, 16
        %v1234 = vrot.slane %v1232, 5
        %v1235 = vsel %vm627, %v1230, %v1234
        %v1237 = vshrl.u32 %v1184, 16
        %v1239 = vrot.slane %v1237, 4
        %v1240 = vshll.u32 %v1184, 16
        %v1242 = vrot.slane %v1240, 5
        %v1243 = vor.u32 %v1239, %v1242
        %v1244 = vrot.slane %v1243, 4
        %v1246 = vshll.u32 %v1185, 16
        %v1248 = vrot.slane %v1246, 5
        %v1249 = vsel %vm627, %v1244, %v1248
        %v1251 = vshrl.u32 %v1186, 16
        %v1253 = vrot.slane %v1251, 4
        %v1254 = vshll.u32 %v1186, 16
        %v1256 = vrot.slane %v1254, 5
        %v1257 = vor.u32 %v1253, %v1256
        %v1258 = vrot.slane %v1257, 4
        %v1260 = vshll.u32 %v1187, 16
        %v1262 = vrot.slane %v1260, 5
        %v1263 = vsel %vm627, %v1258, %v1262
        %v1265 = vshrl.u32 %v1188, 16
        %v1267 = vrot.slane %v1265, 4
        %v1268 = vshll.u32 %v1188, 16
        %v1270 = vrot.slane %v1268, 5
        %v1271 = vor.u32 %v1267, %v1270
        %v1272 = vrot.slane %v1271, 4
        %v1274 = vshll.u32 %v1189, 16
        %v1276 = vrot.slane %v1274, 5
        %v1277 = vsel %vm627, %v1272, %v1276
        %v1279 = vshrl.u32 %v1190, 16
        %v1281 = vrot.slane %v1279, 4
        %v1282 = vshll.u32 %v1190, 16
        %v1284 = vrot.slane %v1282, 5
        %v1285 = vor.u32 %v1281, %v1284
        %v1286 = vrot.slane %v1285, 4
        %v1288 = vshll.u32 %v1191, 16
        %v1290 = vrot.slane %v1288, 5
        %v1291 = vsel %vm627, %v1286, %v1290
        %v1293 = vshrl.u32 %v1192, 16
        %v1295 = vrot.slane %v1293, 4
        %v1296 = vshll.u32 %v1192, 16
        %v1298 = vrot.slane %v1296, 5
        %v1299 = vor.u32 %v1295, %v1298
        %v1300 = vrot.slane %v1299, 4
        %v1302 = vshll.u32 %v1193, 16
        %v1304 = vrot.slane %v1302, 5
        %v1305 = vsel %vm627, %v1300, %v1304
        %s1306 = sadd.s32 %s480, 4
        %s1307 = smul.u32 %s1306, 16
        %s1308 = smul.addr %s1307, 4
        %s1309 = scalar_lea.vmem %s3, %s1308
        %v1310 = vld [vmem:[%s1309] sm:$0xf]
        %v1311 = vld [vmem:[%s1309 + $0x4] sm:$0xf]
        %v1312 = vld [vmem:[%s1309 + $0x8] sm:$0xf]
        %v1313 = vld [vmem:[%s1309 + $0xc] sm:$0xf]
        %v1314 = vld [vmem:[%s1309 + $0x10] sm:$0xf]
        %v1315 = vld [vmem:[%s1309 + $0x14] sm:$0xf]
        %v1316 = vld [vmem:[%s1309 + $0x18] sm:$0xf]
        %v1317 = vld [vmem:[%s1309 + $0x1c] sm:$0xf]
        %v1318 = vld [vmem:[%s1309 + $0x20] sm:$0xf]
        %v1319 = vld [vmem:[%s1309 + $0x24] sm:$0xf]
        %v1320 = vld [vmem:[%s1309 + $0x28] sm:$0xf]
        %v1321 = vld [vmem:[%s1309 + $0x2c] sm:$0xf]
        %v1322 = vld [vmem:[%s1309 + $0x30] sm:$0xf]
        %v1323 = vld [vmem:[%s1309 + $0x34] sm:$0xf]
        %v1324 = vld [vmem:[%s1309 + $0x38] sm:$0xf]
        %v1325 = vld [vmem:[%s1309 + $0x3c] sm:$0xf]
        %v1326 = vunpack.c.l.b16 %v1207
        %v1327 = vunpack.c.l.b16 %v1221
        %v1328 = vunpack.c.l.b16 %v1235
        %v1329 = vunpack.c.l.b16 %v1249
        %v1330 = vunpack.c.l.b16 %v1263
        %v1331 = vunpack.c.l.b16 %v1277
        %v1332 = vunpack.c.l.b16 %v1291
        %v1333 = vunpack.c.l.b16 %v1305
        %v1334 = vpack.c.b16 %v1327, %v1326
        %v1335 = vpack.c.b16 %v1329, %v1328
        %v1336 = vpack.c.b16 %v1331, %v1330
        %v1337 = vpack.c.b16 %v1333, %v1332
        %v1358 = vunpack.c.l.b16 %v1310
        %v1359 = vunpack.c.l.b16 %v1311
        %v1360 = vunpack.c.l.b16 %v1312
        %v1361 = vunpack.c.l.b16 %v1313
        %v1362 = vunpack.c.l.b16 %v1314
        %v1363 = vunpack.c.l.b16 %v1315
        %v1364 = vunpack.c.l.b16 %v1316
        %v1365 = vunpack.c.l.b16 %v1317
        %v1366 = vunpack.c.l.b16 %v1318
        %v1367 = vunpack.c.l.b16 %v1319
        %v1368 = vunpack.c.l.b16 %v1320
        %v1369 = vunpack.c.l.b16 %v1321
        %v1370 = vunpack.c.l.b16 %v1322
        %v1371 = vunpack.c.l.b16 %v1323
        %v1372 = vunpack.c.l.b16 %v1324
        %v1373 = vunpack.c.l.b16 %v1325
        %v1374 = vpack.c.b16 %v1359, %v1358
        %v1375 = vpack.c.b16 %v1361, %v1360
        %v1376 = vpack.c.b16 %v1363, %v1362
        %v1377 = vpack.c.b16 %v1365, %v1364
        %v1378 = vpack.c.b16 %v1367, %v1366
        %v1379 = vpack.c.b16 %v1369, %v1368
        %v1380 = vpack.c.b16 %v1371, %v1370
        %v1381 = vpack.c.b16 %v1373, %v1372
        %1390 = vmatpush.bf16.msra.mxu0 %v1381
        %1391 = vmatpush.bf16.msra.mxu0 %v1380
        %1392 = vmatpush.bf16.msra.mxu0 %v1379
        %1393 = vmatpush.bf16.msra.mxu0 %v1378
        %1394 = vmatpush.bf16.msra.mxu0 %v1377
        %1395 = vmatpush.bf16.msra.mxu0 %v1376
        %1396 = vmatpush.bf16.msra.mxu0 %v1375
        %1397 = vmatpush.bf16.msra.mxu0 %v1374
        %1398 = vmatmul.bf16.gmra.mxu0 %v1334
        %v1399 = vpop.f32.mrf.mxu0
        %v1400 = vadd.f32 0.0, %v1399
        %v1401 = vpop.f32.mrf.mxu0
        %v1402 = vadd.f32 0.0, %v1401
        %1403 = vmatmul.bf16.gmra.mxu0 %v1335
        %v1404 = vpop.f32.mrf.mxu0
        %v1405 = vadd.f32 0.0, %v1404
        %v1406 = vpop.f32.mrf.mxu0
        %v1407 = vadd.f32 0.0, %v1406
        %1408 = vmatmul.bf16.gmra.mxu0 %v1336
        %v1409 = vpop.f32.mrf.mxu0
        %v1410 = vadd.f32 0.0, %v1409
        %v1411 = vpop.f32.mrf.mxu0
        %v1412 = vadd.f32 0.0, %v1411
        %1413 = vmatmul.bf16.gmra.mxu0 %v1337
        %v1414 = vpop.f32.mrf.mxu0
        %v1415 = vadd.f32 0.0, %v1414
        %v1416 = vpop.f32.mrf.mxu0
        %v1417 = vadd.f32 0.0, %v1416
        %1418 = vdwg.mxu0
        %v1419 = vadd.f32 %v1170, %v1400
        %v1420 = vadd.f32 %v1171, %v1402
        %v1421 = vadd.f32 %v1172, %v1405
        %v1422 = vadd.f32 %v1173, %v1407
        %v1423 = vadd.f32 %v1174, %v1410
        %v1424 = vadd.f32 %v1175, %v1412
        %v1425 = vadd.f32 %v1176, %v1415
        %v1426 = vadd.f32 %v1177, %v1417
        %v1427 = vld [vmem:[%s409] sm:$0xe]
        %v1428 = vld [vmem:[%s409 + $0x8] sm:$0xe]
        %v1429 = vld [vmem:[%s409 + $0x10] sm:$0xe]
        %v1430 = vld [vmem:[%s409 + $0x18] sm:$0xe]
        %v1431 = vld [vmem:[%s409 + $0x20] sm:$0xe]
        %v1432 = vld [vmem:[%s409 + $0x28] sm:$0xe]
        %v1433 = vld [vmem:[%s409 + $0x30] sm:$0xe]
        %v1434 = vld [vmem:[%s409 + $0x38] sm:$0xe]
        %v1451 = vrot.slane %v1427, 5
        %v1452 = vrot.slane %v1451, 4
        %v1453 = vrot.slane %v1179, 5
        %v1454 = vsel %vm887, %v1452, %v1453
        %v1455 = vrot.slane %v1428, 5
        %v1456 = vrot.slane %v1455, 4
        %v1457 = vrot.slane %v1181, 5
        %v1458 = vsel %vm887, %v1456, %v1457
        %v1459 = vrot.slane %v1429, 5
        %v1460 = vrot.slane %v1459, 4
        %v1461 = vrot.slane %v1183, 5
        %v1462 = vsel %vm887, %v1460, %v1461
        %v1463 = vrot.slane %v1430, 5
        %v1464 = vrot.slane %v1463, 4
        %v1465 = vrot.slane %v1185, 5
        %v1466 = vsel %vm887, %v1464, %v1465
        %v1467 = vrot.slane %v1431, 5
        %v1468 = vrot.slane %v1467, 4
        %v1469 = vrot.slane %v1187, 5
        %v1470 = vsel %vm887, %v1468, %v1469
        %v1471 = vrot.slane %v1432, 5
        %v1472 = vrot.slane %v1471, 4
        %v1473 = vrot.slane %v1189, 5
        %v1474 = vsel %vm887, %v1472, %v1473
        %v1475 = vrot.slane %v1433, 5
        %v1476 = vrot.slane %v1475, 4
        %v1477 = vrot.slane %v1191, 5
        %v1478 = vsel %vm887, %v1476, %v1477
        %v1479 = vrot.slane %v1434, 5
        %v1480 = vrot.slane %v1479, 4
        %v1481 = vrot.slane %v1193, 5
        %v1482 = vsel %vm887, %v1480, %v1481
        %s1483 = sadd.s32 %s480, 5
        %s1484 = smul.u32 %s1483, 16
        %s1485 = smul.addr %s1484, 4
        %s1486 = scalar_lea.vmem %s3, %s1485
        %v1487 = vld [vmem:[%s1486] sm:$0xf]
        %v1488 = vld [vmem:[%s1486 + $0x4] sm:$0xf]
        %v1489 = vld [vmem:[%s1486 + $0x8] sm:$0xf]
        %v1490 = vld [vmem:[%s1486 + $0xc] sm:$0xf]
        %v1491 = vld [vmem:[%s1486 + $0x10] sm:$0xf]
        %v1492 = vld [vmem:[%s1486 + $0x14] sm:$0xf]
        %v1493 = vld [vmem:[%s1486 + $0x18] sm:$0xf]
        %v1494 = vld [vmem:[%s1486 + $0x1c] sm:$0xf]
        %v1495 = vld [vmem:[%s1486 + $0x20] sm:$0xf]
        %v1496 = vld [vmem:[%s1486 + $0x24] sm:$0xf]
        %v1497 = vld [vmem:[%s1486 + $0x28] sm:$0xf]
        %v1498 = vld [vmem:[%s1486 + $0x2c] sm:$0xf]
        %v1499 = vld [vmem:[%s1486 + $0x30] sm:$0xf]
        %v1500 = vld [vmem:[%s1486 + $0x34] sm:$0xf]
        %v1501 = vld [vmem:[%s1486 + $0x38] sm:$0xf]
        %v1502 = vld [vmem:[%s1486 + $0x3c] sm:$0xf]
        %v1503 = vunpack.c.l.b16 %v1454
        %v1504 = vunpack.c.l.b16 %v1458
        %v1505 = vunpack.c.l.b16 %v1462
        %v1506 = vunpack.c.l.b16 %v1466
        %v1507 = vunpack.c.l.b16 %v1470
        %v1508 = vunpack.c.l.b16 %v1474
        %v1509 = vunpack.c.l.b16 %v1478
        %v1510 = vunpack.c.l.b16 %v1482
        %v1511 = vpack.c.b16 %v1504, %v1503
        %v1512 = vpack.c.b16 %v1506, %v1505
        %v1513 = vpack.c.b16 %v1508, %v1507
        %v1514 = vpack.c.b16 %v1510, %v1509
        %v1535 = vunpack.c.l.b16 %v1487
        %v1536 = vunpack.c.l.b16 %v1488
        %v1537 = vunpack.c.l.b16 %v1489
        %v1538 = vunpack.c.l.b16 %v1490
        %v1539 = vunpack.c.l.b16 %v1491
        %v1540 = vunpack.c.l.b16 %v1492
        %v1541 = vunpack.c.l.b16 %v1493
        %v1542 = vunpack.c.l.b16 %v1494
        %v1543 = vunpack.c.l.b16 %v1495
        %v1544 = vunpack.c.l.b16 %v1496
        %v1545 = vunpack.c.l.b16 %v1497
        %v1546 = vunpack.c.l.b16 %v1498
        %v1547 = vunpack.c.l.b16 %v1499
        %v1548 = vunpack.c.l.b16 %v1500
        %v1549 = vunpack.c.l.b16 %v1501
        %v1550 = vunpack.c.l.b16 %v1502
        %v1551 = vpack.c.b16 %v1536, %v1535
        %v1552 = vpack.c.b16 %v1538, %v1537
        %v1553 = vpack.c.b16 %v1540, %v1539
        %v1554 = vpack.c.b16 %v1542, %v1541
        %v1555 = vpack.c.b16 %v1544, %v1543
        %v1556 = vpack.c.b16 %v1546, %v1545
        %v1557 = vpack.c.b16 %v1548, %v1547
        %v1558 = vpack.c.b16 %v1550, %v1549
        %1567 = vmatpush.bf16.msra.mxu0 %v1558
        %1568 = vmatpush.bf16.msra.mxu0 %v1557
        %1569 = vmatpush.bf16.msra.mxu0 %v1556
        %1570 = vmatpush.bf16.msra.mxu0 %v1555
        %1571 = vmatpush.bf16.msra.mxu0 %v1554
        %1572 = vmatpush.bf16.msra.mxu0 %v1553
        %1573 = vmatpush.bf16.msra.mxu0 %v1552
        %1574 = vmatpush.bf16.msra.mxu0 %v1551
        %1575 = vmatmul.bf16.gmra.mxu0 %v1511
        %v1576 = vpop.f32.mrf.mxu0
        %v1577 = vadd.f32 0.0, %v1576
        %v1578 = vpop.f32.mrf.mxu0
        %v1579 = vadd.f32 0.0, %v1578
        %1580 = vmatmul.bf16.gmra.mxu0 %v1512
        %v1581 = vpop.f32.mrf.mxu0
        %v1582 = vadd.f32 0.0, %v1581
        %v1583 = vpop.f32.mrf.mxu0
        %v1584 = vadd.f32 0.0, %v1583
        %1585 = vmatmul.bf16.gmra.mxu0 %v1513
        %v1586 = vpop.f32.mrf.mxu0
        %v1587 = vadd.f32 0.0, %v1586
        %v1588 = vpop.f32.mrf.mxu0
        %v1589 = vadd.f32 0.0, %v1588
        %1590 = vmatmul.bf16.gmra.mxu0 %v1514
        %v1591 = vpop.f32.mrf.mxu0
        %v1592 = vadd.f32 0.0, %v1591
        %v1593 = vpop.f32.mrf.mxu0
        %v1594 = vadd.f32 0.0, %v1593
        %1595 = vdwg.mxu0
        %v1596 = vadd.f32 %v1419, %v1577
        %v1597 = vadd.f32 %v1420, %v1579
        %v1598 = vadd.f32 %v1421, %v1582
        %v1599 = vadd.f32 %v1422, %v1584
        %v1600 = vadd.f32 %v1423, %v1587
        %v1601 = vadd.f32 %v1424, %v1589
        %v1602 = vadd.f32 %v1425, %v1592
        %v1603 = vadd.f32 %v1426, %v1594
        %s1604 = scalar_lea.vmem [#allocation3], 16
        %v1605 = vld [vmem:[%s1604] sm:$0xf]
        %v1606 = vld [vmem:[%s1604 + $0x8] sm:$0xf]
        %v1607 = vld [vmem:[%s1604 + $0x10] sm:$0xf]
        %v1608 = vld [vmem:[%s1604 + $0x18] sm:$0xf]
        %v1609 = vld [vmem:[%s1604 + $0x20] sm:$0xf]
        %v1610 = vld [vmem:[%s1604 + $0x28] sm:$0xf]
        %v1611 = vld [vmem:[%s1604 + $0x30] sm:$0xf]
        %v1612 = vld [vmem:[%s1604 + $0x38] sm:$0xf]
        %s1613 = sadd.s32 %s480, 6
        %s1614 = smul.u32 %s1613, 16
        %s1615 = smul.addr %s1614, 4
        %s1616 = scalar_lea.vmem %s3, %s1615
        %v1617 = vld [vmem:[%s1616] sm:$0xf]
        %v1618 = vld [vmem:[%s1616 + $0x4] sm:$0xf]
        %v1619 = vld [vmem:[%s1616 + $0x8] sm:$0xf]
        %v1620 = vld [vmem:[%s1616 + $0xc] sm:$0xf]
        %v1621 = vld [vmem:[%s1616 + $0x10] sm:$0xf]
        %v1622 = vld [vmem:[%s1616 + $0x14] sm:$0xf]
        %v1623 = vld [vmem:[%s1616 + $0x18] sm:$0xf]
        %v1624 = vld [vmem:[%s1616 + $0x1c] sm:$0xf]
        %v1625 = vld [vmem:[%s1616 + $0x20] sm:$0xf]
        %v1626 = vld [vmem:[%s1616 + $0x24] sm:$0xf]
        %v1627 = vld [vmem:[%s1616 + $0x28] sm:$0xf]
        %v1628 = vld [vmem:[%s1616 + $0x2c] sm:$0xf]
        %v1629 = vld [vmem:[%s1616 + $0x30] sm:$0xf]
        %v1630 = vld [vmem:[%s1616 + $0x34] sm:$0xf]
        %v1631 = vld [vmem:[%s1616 + $0x38] sm:$0xf]
        %v1632 = vld [vmem:[%s1616 + $0x3c] sm:$0xf]
        %v1641 = vunpack.c.l.b16 %v1605
        %v1642 = vunpack.c.l.b16 %v1606
        %v1643 = vunpack.c.l.b16 %v1607
        %v1644 = vunpack.c.l.b16 %v1608
        %v1645 = vunpack.c.l.b16 %v1609
        %v1646 = vunpack.c.l.b16 %v1610
        %v1647 = vunpack.c.l.b16 %v1611
        %v1648 = vunpack.c.l.b16 %v1612
        %v1649 = vpack.c.b16 %v1642, %v1641
        %v1650 = vpack.c.b16 %v1644, %v1643
        %v1651 = vpack.c.b16 %v1646, %v1645
        %v1652 = vpack.c.b16 %v1648, %v1647
        %v1673 = vunpack.c.l.b16 %v1617
        %v1674 = vunpack.c.l.b16 %v1618
        %v1675 = vunpack.c.l.b16 %v1619
        %v1676 = vunpack.c.l.b16 %v1620
        %v1677 = vunpack.c.l.b16 %v1621
        %v1678 = vunpack.c.l.b16 %v1622
        %v1679 = vunpack.c.l.b16 %v1623
        %v1680 = vunpack.c.l.b16 %v1624
        %v1681 = vunpack.c.l.b16 %v1625
        %v1682 = vunpack.c.l.b16 %v1626
        %v1683 = vunpack.c.l.b16 %v1627
        %v1684 = vunpack.c.l.b16 %v1628
        %v1685 = vunpack.c.l.b16 %v1629
        %v1686 = vunpack.c.l.b16 %v1630
        %v1687 = vunpack.c.l.b16 %v1631
        %v1688 = vunpack.c.l.b16 %v1632
        %v1689 = vpack.c.b16 %v1674, %v1673
        %v1690 = vpack.c.b16 %v1676, %v1675
        %v1691 = vpack.c.b16 %v1678, %v1677
        %v1692 = vpack.c.b16 %v1680, %v1679
        %v1693 = vpack.c.b16 %v1682, %v1681
        %v1694 = vpack.c.b16 %v1684, %v1683
        %v1695 = vpack.c.b16 %v1686, %v1685
        %v1696 = vpack.c.b16 %v1688, %v1687
        %1705 = vmatpush.bf16.msra.mxu0 %v1696
        %1706 = vmatpush.bf16.msra.mxu0 %v1695
        %1707 = vmatpush.bf16.msra.mxu0 %v1694
        %1708 = vmatpush.bf16.msra.mxu0 %v1693
        %1709 = vmatpush.bf16.msra.mxu0 %v1692
        %1710 = vmatpush.bf16.msra.mxu0 %v1691
        %1711 = vmatpush.bf16.msra.mxu0 %v1690
        %1712 = vmatpush.bf16.msra.mxu0 %v1689
        %1713 = vmatmul.bf16.gmra.mxu0 %v1649
        %v1714 = vpop.f32.mrf.mxu0
        %v1715 = vadd.f32 0.0, %v1714
        %v1716 = vpop.f32.mrf.mxu0
        %v1717 = vadd.f32 0.0, %v1716
        %1718 = vmatmul.bf16.gmra.mxu0 %v1650
        %v1719 = vpop.f32.mrf.mxu0
        %v1720 = vadd.f32 0.0, %v1719
        %v1721 = vpop.f32.mrf.mxu0
        %v1722 = vadd.f32 0.0, %v1721
        %1723 = vmatmul.bf16.gmra.mxu0 %v1651
        %v1724 = vpop.f32.mrf.mxu0
        %v1725 = vadd.f32 0.0, %v1724
        %v1726 = vpop.f32.mrf.mxu0
        %v1727 = vadd.f32 0.0, %v1726
        %1728 = vmatmul.bf16.gmra.mxu0 %v1652
        %v1729 = vpop.f32.mrf.mxu0
        %v1730 = vadd.f32 0.0, %v1729
        %v1731 = vpop.f32.mrf.mxu0
        %v1732 = vadd.f32 0.0, %v1731
        %1733 = vdwg.mxu0
        %v1734 = vadd.f32 %v1596, %v1715
        %v1735 = vadd.f32 %v1597, %v1717
        %v1736 = vadd.f32 %v1598, %v1720
        %v1737 = vadd.f32 %v1599, %v1722
        %v1738 = vadd.f32 %v1600, %v1725
        %v1739 = vadd.f32 %v1601, %v1727
        %v1740 = vadd.f32 %v1602, %v1730
        %v1741 = vadd.f32 %v1603, %v1732
        %v1742 = vld [vmem:[%s1604] sm:$0xf]
        %v1743 = vld [vmem:[%s1604 + $0x4] sm:$0x1]
        %v1744 = vld [vmem:[%s1604 + $0x8] sm:$0xf]
        %v1745 = vld [vmem:[%s1604 + $0xc] sm:$0x1]
        %v1746 = vld [vmem:[%s1604 + $0x10] sm:$0xf]
        %v1747 = vld [vmem:[%s1604 + $0x14] sm:$0x1]
        %v1748 = vld [vmem:[%s1604 + $0x18] sm:$0xf]
        %v1749 = vld [vmem:[%s1604 + $0x1c] sm:$0x1]
        %v1750 = vld [vmem:[%s1604 + $0x20] sm:$0xf]
        %v1751 = vld [vmem:[%s1604 + $0x24] sm:$0x1]
        %v1752 = vld [vmem:[%s1604 + $0x28] sm:$0xf]
        %v1753 = vld [vmem:[%s1604 + $0x2c] sm:$0x1]
        %v1754 = vld [vmem:[%s1604 + $0x30] sm:$0xf]
        %v1755 = vld [vmem:[%s1604 + $0x34] sm:$0x1]
        %v1756 = vld [vmem:[%s1604 + $0x38] sm:$0xf]
        %v1757 = vld [vmem:[%s1604 + $0x3c] sm:$0x1]
        %v1759 = vshrl.u32 %v1742, 16
        %v1761 = vrot.slane %v1759, 4
        %v1762 = vshll.u32 %v1742, 16
        %v1764 = vrot.slane %v1762, 5
        %v1765 = vor.u32 %v1761, %v1764
        %v1766 = vrot.slane %v1765, 4
        %v1768 = vshll.u32 %v1743, 16
        %v1770 = vrot.slane %v1768, 5
        %v1771 = vsel %vm627, %v1766, %v1770
        %v1773 = vshrl.u32 %v1744, 16
        %v1775 = vrot.slane %v1773, 4
        %v1776 = vshll.u32 %v1744, 16
        %v1778 = vrot.slane %v1776, 5
        %v1779 = vor.u32 %v1775, %v1778
        %v1780 = vrot.slane %v1779, 4
        %v1782 = vshll.u32 %v1745, 16
        %v1784 = vrot.slane %v1782, 5
        %v1785 = vsel %vm627, %v1780, %v1784
        %v1787 = vshrl.u32 %v1746, 16
        %v1789 = vrot.slane %v1787, 4
        %v1790 = vshll.u32 %v1746, 16
        %v1792 = vrot.slane %v1790, 5
        %v1793 = vor.u32 %v1789, %v1792
        %v1794 = vrot.slane %v1793, 4
        %v1796 = vshll.u32 %v1747, 16
        %v1798 = vrot.slane %v1796, 5
        %v1799 = vsel %vm627, %v1794, %v1798
        %v1801 = vshrl.u32 %v1748, 16
        %v1803 = vrot.slane %v1801, 4
        %v1804 = vshll.u32 %v1748, 16
        %v1806 = vrot.slane %v1804, 5
        %v1807 = vor.u32 %v1803, %v1806
        %v1808 = vrot.slane %v1807, 4
        %v1810 = vshll.u32 %v1749, 16
        %v1812 = vrot.slane %v1810, 5
        %v1813 = vsel %vm627, %v1808, %v1812
        %v1815 = vshrl.u32 %v1750, 16
        %v1817 = vrot.slane %v1815, 4
        %v1818 = vshll.u32 %v1750, 16
        %v1820 = vrot.slane %v1818, 5
        %v1821 = vor.u32 %v1817, %v1820
        %v1822 = vrot.slane %v1821, 4
        %v1824 = vshll.u32 %v1751, 16
        %v1826 = vrot.slane %v1824, 5
        %v1827 = vsel %vm627, %v1822, %v1826
        %v1829 = vshrl.u32 %v1752, 16
        %v1831 = vrot.slane %v1829, 4
        %v1832 = vshll.u32 %v1752, 16
        %v1834 = vrot.slane %v1832, 5
        %v1835 = vor.u32 %v1831, %v1834
        %v1836 = vrot.slane %v1835, 4
        %v1838 = vshll.u32 %v1753, 16
        %v1840 = vrot.slane %v1838, 5
        %v1841 = vsel %vm627, %v1836, %v1840
        %v1843 = vshrl.u32 %v1754, 16
        %v1845 = vrot.slane %v1843, 4
        %v1846 = vshll.u32 %v1754, 16
        %v1848 = vrot.slane %v1846, 5
        %v1849 = vor.u32 %v1845, %v1848
        %v1850 = vrot.slane %v1849, 4
        %v1852 = vshll.u32 %v1755, 16
        %v1854 = vrot.slane %v1852, 5
        %v1855 = vsel %vm627, %v1850, %v1854
        %v1857 = vshrl.u32 %v1756, 16
        %v1859 = vrot.slane %v1857, 4
        %v1860 = vshll.u32 %v1756, 16
        %v1862 = vrot.slane %v1860, 5
        %v1863 = vor.u32 %v1859, %v1862
        %v1864 = vrot.slane %v1863, 4
        %v1866 = vshll.u32 %v1757, 16
        %v1868 = vrot.slane %v1866, 5
        %v1869 = vsel %vm627, %v1864, %v1868
        %s1870 = sadd.s32 %s480, 7
        %s1871 = smul.u32 %s1870, 16
        %s1872 = smul.addr %s1871, 4
        %s1873 = scalar_lea.vmem %s3, %s1872
        %v1874 = vld [vmem:[%s1873] sm:$0xf]
        %v1875 = vld [vmem:[%s1873 + $0x4] sm:$0xf]
        %v1876 = vld [vmem:[%s1873 + $0x8] sm:$0xf]
        %v1877 = vld [vmem:[%s1873 + $0xc] sm:$0xf]
        %v1878 = vld [vmem:[%s1873 + $0x10] sm:$0xf]
        %v1879 = vld [vmem:[%s1873 + $0x14] sm:$0xf]
        %v1880 = vld [vmem:[%s1873 + $0x18] sm:$0xf]
        %v1881 = vld [vmem:[%s1873 + $0x1c] sm:$0xf]
        %v1882 = vld [vmem:[%s1873 + $0x20] sm:$0xf]
        %v1883 = vld [vmem:[%s1873 + $0x24] sm:$0xf]
        %v1884 = vld [vmem:[%s1873 + $0x28] sm:$0xf]
        %v1885 = vld [vmem:[%s1873 + $0x2c] sm:$0xf]
        %v1886 = vld [vmem:[%s1873 + $0x30] sm:$0xf]
        %v1887 = vld [vmem:[%s1873 + $0x34] sm:$0xf]
        %v1888 = vld [vmem:[%s1873 + $0x38] sm:$0xf]
        %v1889 = vld [vmem:[%s1873 + $0x3c] sm:$0xf]
        %v1890 = vunpack.c.l.b16 %v1771
        %v1891 = vunpack.c.l.b16 %v1785
        %v1892 = vunpack.c.l.b16 %v1799
        %v1893 = vunpack.c.l.b16 %v1813
        %v1894 = vunpack.c.l.b16 %v1827
        %v1895 = vunpack.c.l.b16 %v1841
        %v1896 = vunpack.c.l.b16 %v1855
        %v1897 = vunpack.c.l.b16 %v1869
        %v1898 = vpack.c.b16 %v1891, %v1890
        %v1899 = vpack.c.b16 %v1893, %v1892
        %v1900 = vpack.c.b16 %v1895, %v1894
        %v1901 = vpack.c.b16 %v1897, %v1896
        %v1922 = vunpack.c.l.b16 %v1874
        %v1923 = vunpack.c.l.b16 %v1875
        %v1924 = vunpack.c.l.b16 %v1876
        %v1925 = vunpack.c.l.b16 %v1877
        %v1926 = vunpack.c.l.b16 %v1878
        %v1927 = vunpack.c.l.b16 %v1879
        %v1928 = vunpack.c.l.b16 %v1880
        %v1929 = vunpack.c.l.b16 %v1881
        %v1930 = vunpack.c.l.b16 %v1882
        %v1931 = vunpack.c.l.b16 %v1883
        %v1932 = vunpack.c.l.b16 %v1884
        %v1933 = vunpack.c.l.b16 %v1885
        %v1934 = vunpack.c.l.b16 %v1886
        %v1935 = vunpack.c.l.b16 %v1887
        %v1936 = vunpack.c.l.b16 %v1888
        %v1937 = vunpack.c.l.b16 %v1889
        %v1938 = vpack.c.b16 %v1923, %v1922
        %v1939 = vpack.c.b16 %v1925, %v1924
        %v1940 = vpack.c.b16 %v1927, %v1926
        %v1941 = vpack.c.b16 %v1929, %v1928
        %v1942 = vpack.c.b16 %v1931, %v1930
        %v1943 = vpack.c.b16 %v1933, %v1932
        %v1944 = vpack.c.b16 %v1935, %v1934
        %v1945 = vpack.c.b16 %v1937, %v1936
        %1954 = vmatpush.bf16.msra.mxu0 %v1945
        %1955 = vmatpush.bf16.msra.mxu0 %v1944
        %1956 = vmatpush.bf16.msra.mxu0 %v1943
        %1957 = vmatpush.bf16.msra.mxu0 %v1942
        %1958 = vmatpush.bf16.msra.mxu0 %v1941
        %1959 = vmatpush.bf16.msra.mxu0 %v1940
        %1960 = vmatpush.bf16.msra.mxu0 %v1939
        %1961 = vmatpush.bf16.msra.mxu0 %v1938
        %1962 = vmatmul.bf16.gmra.mxu0 %v1898
        %v1963 = vpop.f32.mrf.mxu0
        %v1964 = vadd.f32 0.0, %v1963
        %v1965 = vpop.f32.mrf.mxu0
        %v1966 = vadd.f32 0.0, %v1965
        %1967 = vmatmul.bf16.gmra.mxu0 %v1899
        %v1968 = vpop.f32.mrf.mxu0
        %v1969 = vadd.f32 0.0, %v1968
        %v1970 = vpop.f32.mrf.mxu0
        %v1971 = vadd.f32 0.0, %v1970
        %1972 = vmatmul.bf16.gmra.mxu0 %v1900
        %v1973 = vpop.f32.mrf.mxu0
        %v1974 = vadd.f32 0.0, %v1973
        %v1975 = vpop.f32.mrf.mxu0
        %v1976 = vadd.f32 0.0, %v1975
        %1977 = vmatmul.bf16.gmra.mxu0 %v1901
        %v1978 = vpop.f32.mrf.mxu0
        %v1979 = vadd.f32 0.0, %v1978
        %v1980 = vpop.f32.mrf.mxu0
        %v1981 = vadd.f32 0.0, %v1980
        %1982 = vdwg.mxu0
        %v1983 = vadd.f32 %v1734, %v1964
        %v1984 = vadd.f32 %v1735, %v1966
        %v1985 = vadd.f32 %v1736, %v1969
        %v1986 = vadd.f32 %v1737, %v1971
        %v1987 = vadd.f32 %v1738, %v1974
        %v1988 = vadd.f32 %v1739, %v1976
        %v1989 = vadd.f32 %v1740, %v1979
        %v1990 = vadd.f32 %v1741, %v1981
        %v1991 = vld [vmem:[%s1604] sm:$0xe]
        %v1992 = vld [vmem:[%s1604 + $0x8] sm:$0xe]
        %v1993 = vld [vmem:[%s1604 + $0x10] sm:$0xe]
        %v1994 = vld [vmem:[%s1604 + $0x18] sm:$0xe]
        %v1995 = vld [vmem:[%s1604 + $0x20] sm:$0xe]
        %v1996 = vld [vmem:[%s1604 + $0x28] sm:$0xe]
        %v1997 = vld [vmem:[%s1604 + $0x30] sm:$0xe]
        %v1998 = vld [vmem:[%s1604 + $0x38] sm:$0xe]
        %v2015 = vrot.slane %v1991, 5
        %v2016 = vrot.slane %v2015, 4
        %v2017 = vrot.slane %v1743, 5
        %v2018 = vsel %vm887, %v2016, %v2017
        %v2019 = vrot.slane %v1992, 5
        %v2020 = vrot.slane %v2019, 4
        %v2021 = vrot.slane %v1745, 5
        %v2022 = vsel %vm887, %v2020, %v2021
        %v2023 = vrot.slane %v1993, 5
        %v2024 = vrot.slane %v2023, 4
        %v2025 = vrot.slane %v1747, 5
        %v2026 = vsel %vm887, %v2024, %v2025
        %v2027 = vrot.slane %v1994, 5
        %v2028 = vrot.slane %v2027, 4
        %v2029 = vrot.slane %v1749, 5
        %v2030 = vsel %vm887, %v2028, %v2029
        %v2031 = vrot.slane %v1995, 5
        %v2032 = vrot.slane %v2031, 4
        %v2033 = vrot.slane %v1751, 5
        %v2034 = vsel %vm887, %v2032, %v2033
        %v2035 = vrot.slane %v1996, 5
        %v2036 = vrot.slane %v2035, 4
        %v2037 = vrot.slane %v1753, 5
        %v2038 = vsel %vm887, %v2036, %v2037
        %v2039 = vrot.slane %v1997, 5
        %v2040 = vrot.slane %v2039, 4
        %v2041 = vrot.slane %v1755, 5
        %v2042 = vsel %vm887, %v2040, %v2041
        %v2043 = vrot.slane %v1998, 5
        %v2044 = vrot.slane %v2043, 4
        %v2045 = vrot.slane %v1757, 5
        %v2046 = vsel %vm887, %v2044, %v2045
        %s2047 = sadd.s32 %s480, 8
        %s2048 = smul.u32 %s2047, 16
        %s2049 = smul.addr %s2048, 4
        %s2050 = scalar_lea.vmem %s3, %s2049
        %v2051 = vld [vmem:[%s2050] sm:$0xf]
        %v2052 = vld [vmem:[%s2050 + $0x4] sm:$0xf]
        %v2053 = vld [vmem:[%s2050 + $0x8] sm:$0xf]
        %v2054 = vld [vmem:[%s2050 + $0xc] sm:$0xf]
        %v2055 = vld [vmem:[%s2050 + $0x10] sm:$0xf]
        %v2056 = vld [vmem:[%s2050 + $0x14] sm:$0xf]
        %v2057 = vld [vmem:[%s2050 + $0x18] sm:$0xf]
        %v2058 = vld [vmem:[%s2050 + $0x1c] sm:$0xf]
        %v2059 = vld [vmem:[%s2050 + $0x20] sm:$0xf]
        %v2060 = vld [vmem:[%s2050 + $0x24] sm:$0xf]
        %v2061 = vld [vmem:[%s2050 + $0x28] sm:$0xf]
        %v2062 = vld [vmem:[%s2050 + $0x2c] sm:$0xf]
        %v2063 = vld [vmem:[%s2050 + $0x30] sm:$0xf]
        %v2064 = vld [vmem:[%s2050 + $0x34] sm:$0xf]
        %v2065 = vld [vmem:[%s2050 + $0x38] sm:$0xf]
        %v2066 = vld [vmem:[%s2050 + $0x3c] sm:$0xf]
        %v2067 = vunpack.c.l.b16 %v2018
        %v2068 = vunpack.c.l.b16 %v2022
        %v2069 = vunpack.c.l.b16 %v2026
        %v2070 = vunpack.c.l.b16 %v2030
        %v2071 = vunpack.c.l.b16 %v2034
        %v2072 = vunpack.c.l.b16 %v2038
        %v2073 = vunpack.c.l.b16 %v2042
        %v2074 = vunpack.c.l.b16 %v2046
        %v2075 = vpack.c.b16 %v2068, %v2067
        %v2076 = vpack.c.b16 %v2070, %v2069
        %v2077 = vpack.c.b16 %v2072, %v2071
        %v2078 = vpack.c.b16 %v2074, %v2073
        %v2099 = vunpack.c.l.b16 %v2051
        %v2100 = vunpack.c.l.b16 %v2052
        %v2101 = vunpack.c.l.b16 %v2053
        %v2102 = vunpack.c.l.b16 %v2054
        %v2103 = vunpack.c.l.b16 %v2055
        %v2104 = vunpack.c.l.b16 %v2056
        %v2105 = vunpack.c.l.b16 %v2057
        %v2106 = vunpack.c.l.b16 %v2058
        %v2107 = vunpack.c.l.b16 %v2059
        %v2108 = vunpack.c.l.b16 %v2060
        %v2109 = vunpack.c.l.b16 %v2061
        %v2110 = vunpack.c.l.b16 %v2062
        %v2111 = vunpack.c.l.b16 %v2063
        %v2112 = vunpack.c.l.b16 %v2064
        %v2113 = vunpack.c.l.b16 %v2065
        %v2114 = vunpack.c.l.b16 %v2066
        %v2115 = vpack.c.b16 %v2100, %v2099
        %v2116 = vpack.c.b16 %v2102, %v2101
        %v2117 = vpack.c.b16 %v2104, %v2103
        %v2118 = vpack.c.b16 %v2106, %v2105
        %v2119 = vpack.c.b16 %v2108, %v2107
        %v2120 = vpack.c.b16 %v2110, %v2109
        %v2121 = vpack.c.b16 %v2112, %v2111
        %v2122 = vpack.c.b16 %v2114, %v2113
        %2131 = vmatpush.bf16.msra.mxu0 %v2122
        %2132 = vmatpush.bf16.msra.mxu0 %v2121
        %2133 = vmatpush.bf16.msra.mxu0 %v2120
        %2134 = vmatpush.bf16.msra.mxu0 %v2119
        %2135 = vmatpush.bf16.msra.mxu0 %v2118
        %2136 = vmatpush.bf16.msra.mxu0 %v2117
        %2137 = vmatpush.bf16.msra.mxu0 %v2116
        %2138 = vmatpush.bf16.msra.mxu0 %v2115
        %2139 = vmatmul.bf16.gmra.mxu0 %v2075
        %v2140 = vpop.f32.mrf.mxu0
        %v2141 = vadd.f32 0.0, %v2140
        %v2142 = vpop.f32.mrf.mxu0
        %v2143 = vadd.f32 0.0, %v2142
        %2144 = vmatmul.bf16.gmra.mxu0 %v2076
        %v2145 = vpop.f32.mrf.mxu0
        %v2146 = vadd.f32 0.0, %v2145
        %v2147 = vpop.f32.mrf.mxu0
        %v2148 = vadd.f32 0.0, %v2147
        %2149 = vmatmul.bf16.gmra.mxu0 %v2077
        %v2150 = vpop.f32.mrf.mxu0
        %v2151 = vadd.f32 0.0, %v2150
        %v2152 = vpop.f32.mrf.mxu0
        %v2153 = vadd.f32 0.0, %v2152
        %2154 = vmatmul.bf16.gmra.mxu0 %v2078
        %v2155 = vpop.f32.mrf.mxu0
        %v2156 = vadd.f32 0.0, %v2155
        %v2157 = vpop.f32.mrf.mxu0
        %v2158 = vadd.f32 0.0, %v2157
        %2159 = vdwg.mxu0
        %v2160 = vadd.f32 %v1983, %v2141
        %v2161 = vadd.f32 %v1984, %v2143
        %v2162 = vadd.f32 %v1985, %v2146
        %v2163 = vadd.f32 %v1986, %v2148
        %v2164 = vadd.f32 %v1987, %v2151
        %v2165 = vadd.f32 %v1988, %v2153
        %v2166 = vadd.f32 %v1989, %v2156
        %v2167 = vadd.f32 %v1990, %v2158
        %2168 = vst [vmem:[#allocation2] sm:$0xff] %v2160
        %2169 = vst [vmem:[#allocation2 + $0x8] sm:$0xff] %v2161
        %2170 = vst [vmem:[#allocation2 + $0x10] sm:$0xff] %v2162
        %2171 = vst [vmem:[#allocation2 + $0x18] sm:$0xff] %v2163
        %2172 = vst [vmem:[#allocation2 + $0x20] sm:$0xff] %v2164
        %2173 = vst [vmem:[#allocation2 + $0x28] sm:$0xff] %v2165
        %2174 = vst [vmem:[#allocation2 + $0x30] sm:$0xff] %v2166
        %2175 = vst [vmem:[#allocation2 + $0x38] sm:$0xff] %v2167
      $region48: #{down_block_forward.5} parent=39 // pred_fallthru
        _
      %p2176 = scmp.eq.s32.totalorder %s23, 2
      // Predicated region
      $region49: #{down_block_forward.5} parent=39 // pred_check
        %p2177 = pneg %p2176
      $region50: #{down_block_forward.5} parent=39 // pred_check_branch
        %2179 = sbr.rel (%p2177) target = $region52
      $region51: #{down_block_forward.5} parent=39 // pred_region
        %v2180 = vld [vmem:[#allocation2] sm:$0xff]
        %v2181 = vld [vmem:[#allocation2 + $0x8] sm:$0xff]
        %v2182 = vld [vmem:[#allocation2 + $0x10] sm:$0xff]
        %v2183 = vld [vmem:[#allocation2 + $0x18] sm:$0xff]
        %v2184 = vld [vmem:[#allocation2 + $0x20] sm:$0xff]
        %v2185 = vld [vmem:[#allocation2 + $0x28] sm:$0xff]
        %v2186 = vld [vmem:[#allocation2 + $0x30] sm:$0xff]
        %v2187 = vld [vmem:[#allocation2 + $0x38] sm:$0xff]
        %v2188 = vld [vmem:[%s4] sm:$0x1]
        %v2190 = vperm.slane %v2188, 0
        %v2192 = vadd.f32 %v2180, %v2190
        %v2193 = vadd.f32 %v2181, %v2190
        %v2194 = vadd.f32 %v2182, %v2190
        %v2195 = vadd.f32 %v2183, %v2190
        %v2196 = vadd.f32 %v2184, %v2190
        %v2197 = vadd.f32 %v2185, %v2190
        %v2198 = vadd.f32 %v2186, %v2190
        %v2199 = vadd.f32 %v2187, %v2190
        %v2200 = vmax.f32 %v2192, 0.0
        %v2201 = vmax.f32 %v2193, 0.0
        %v2202 = vmax.f32 %v2194, 0.0
        %v2203 = vmax.f32 %v2195, 0.0
        %v2204 = vmax.f32 %v2196, 0.0
        %v2205 = vmax.f32 %v2197, 0.0
        %v2206 = vmax.f32 %v2198, 0.0
        %v2207 = vmax.f32 %v2199, 0.0
        %v2208 = vpack.c.bf16 %v2200, %v2200
        %v2209 = vpack.c.bf16 %v2201, %v2201
        %v2210 = vpack.c.bf16 %v2202, %v2202
        %v2211 = vpack.c.bf16 %v2203, %v2203
        %v2212 = vpack.c.bf16 %v2204, %v2204
        %v2213 = vpack.c.bf16 %v2205, %v2205
        %v2214 = vpack.c.bf16 %v2206, %v2206
        %v2215 = vpack.c.bf16 %v2207, %v2207
        %2216 = vst [vmem:[%s278] sm:$0xf] 0
        %2217 = vst [vmem:[%s278 + $0x4] sm:$0x1] 0
        %2218 = vst [vmem:[%s278 + $0x8] sm:$0xf] 0
        %2219 = vst [vmem:[%s278 + $0xc] sm:$0x1] 0
        %2220 = vst [vmem:[%s278 + $0x10] sm:$0xf] 0
        %2221 = vst [vmem:[%s278 + $0x14] sm:$0x1] 0
        %2222 = vst [vmem:[%s278 + $0x18] sm:$0xf] 0
        %2223 = vst [vmem:[%s278 + $0x1c] sm:$0x1] 0
        %2224 = vst [vmem:[%s278 + $0x20] sm:$0xf] 0
        %2225 = vst [vmem:[%s278 + $0x24] sm:$0x1] 0
        %2226 = vst [vmem:[%s278 + $0x28] sm:$0xf] 0
        %2227 = vst [vmem:[%s278 + $0x2c] sm:$0x1] 0
        %2228 = vst [vmem:[%s278 + $0x30] sm:$0xf] 0
        %2229 = vst [vmem:[%s278 + $0x34] sm:$0x1] 0
        %2230 = vst [vmem:[%s278 + $0x38] sm:$0xf] 0
        %2231 = vst [vmem:[%s278 + $0x3c] sm:$0x1] 0
        %2232 = vst [vmem:[%s278 + $0x40] sm:$0xf] 0
        %2233 = vst [vmem:[%s278 + $0x44] sm:$0x1] 0
        %2234 = vst [vmem:[%s278 + $0x48] sm:$0xf] 0
        %2235 = vst [vmem:[%s278 + $0x4c] sm:$0x1] 0
        %v2237 = vshrl.u32 %v2208, 16
        %v2239 = vrot.slane %v2237, 7
        %v2240 = vshll.u32 %v2208, 16
        %v2242 = vor.u32 %v2239, %v2240
        %v2243 = vrot.slane %v2239, 4
        %v2245 = vshrl.u32 %v2209, 16
        %v2247 = vrot.slane %v2245, 7
        %v2248 = vshll.u32 %v2209, 16
        %v2250 = vor.u32 %v2247, %v2248
        %v2251 = vrot.slane %v2247, 4
        %v2253 = vshrl.u32 %v2210, 16
        %v2255 = vrot.slane %v2253, 7
        %v2256 = vshll.u32 %v2210, 16
        %v2258 = vor.u32 %v2255, %v2256
        %v2259 = vrot.slane %v2255, 4
        %v2261 = vshrl.u32 %v2211, 16
        %v2263 = vrot.slane %v2261, 7
        %v2264 = vshll.u32 %v2211, 16
        %v2266 = vor.u32 %v2263, %v2264
        %v2267 = vrot.slane %v2263, 4
        %v2269 = vshrl.u32 %v2212, 16
        %v2271 = vrot.slane %v2269, 7
        %v2272 = vshll.u32 %v2212, 16
        %v2274 = vor.u32 %v2271, %v2272
        %v2275 = vrot.slane %v2271, 4
        %v2277 = vshrl.u32 %v2213, 16
        %v2279 = vrot.slane %v2277, 7
        %v2280 = vshll.u32 %v2213, 16
        %v2282 = vor.u32 %v2279, %v2280
        %v2283 = vrot.slane %v2279, 4
        %v2285 = vshrl.u32 %v2214, 16
        %v2287 = vrot.slane %v2285, 7
        %v2288 = vshll.u32 %v2214, 16
        %v2290 = vor.u32 %v2287, %v2288
        %v2291 = vrot.slane %v2287, 4
        %v2293 = vshrl.u32 %v2215, 16
        %v2295 = vrot.slane %v2293, 7
        %v2296 = vshll.u32 %v2215, 16
        %v2298 = vor.u32 %v2295, %v2296
        %v2299 = vrot.slane %v2295, 4
        %s2316 = scalar_lea.vmem %s278, 8
        %vm2317 = vcmask 1043456
        %vm2318 = vsmask.f32 7938
        %vm2319 = vmand %vm2317, %vm2318
        %v2320 = vld [vmem:[%s2316] sm:$0xf]
        %v2321 = vsel %vm2319, %v2242, %v2320
        %2322 = vst [vmem:[%s2316] sm:$0xf] %v2321
        %vm2323 = vcmask 1040384
        %vm2324 = vsmask.f32 256
        %vm2325 = vmand %vm2323, %vm2324
        %v2326 = vld [vmem:[%s2316 + $0x4] sm:$0x1]
        %v2327 = vsel %vm2325, %v2243, %v2326
        %2328 = vst [vmem:[%s2316 + $0x4] sm:$0x1] %v2327
        %v2329 = vld [vmem:[%s2316 + $0x8] sm:$0xf]
        %v2330 = vsel %vm2319, %v2250, %v2329
        %2331 = vst [vmem:[%s2316 + $0x8] sm:$0xf] %v2330
        %v2332 = vld [vmem:[%s2316 + $0xc] sm:$0x1]
        %v2333 = vsel %vm2325, %v2251, %v2332
        %2334 = vst [vmem:[%s2316 + $0xc] sm:$0x1] %v2333
        %v2335 = vld [vmem:[%s2316 + $0x10] sm:$0xf]
        %v2336 = vsel %vm2319, %v2258, %v2335
        %2337 = vst [vmem:[%s2316 + $0x10] sm:$0xf] %v2336
        %v2338 = vld [vmem:[%s2316 + $0x14] sm:$0x1]
        %v2339 = vsel %vm2325, %v2259, %v2338
        %2340 = vst [vmem:[%s2316 + $0x14] sm:$0x1] %v2339
        %v2341 = vld [vmem:[%s2316 + $0x18] sm:$0xf]
        %v2342 = vsel %vm2319, %v2266, %v2341
        %2343 = vst [vmem:[%s2316 + $0x18] sm:$0xf] %v2342
        %v2344 = vld [vmem:[%s2316 + $0x1c] sm:$0x1]
        %v2345 = vsel %vm2325, %v2267, %v2344
        %2346 = vst [vmem:[%s2316 + $0x1c] sm:$0x1] %v2345
        %v2347 = vld [vmem:[%s2316 + $0x20] sm:$0xf]
        %v2348 = vsel %vm2319, %v2274, %v2347
        %2349 = vst [vmem:[%s2316 + $0x20] sm:$0xf] %v2348
        %v2350 = vld [vmem:[%s2316 + $0x24] sm:$0x1]
        %v2351 = vsel %vm2325, %v2275, %v2350
        %2352 = vst [vmem:[%s2316 + $0x24] sm:$0x1] %v2351
        %v2353 = vld [vmem:[%s2316 + $0x28] sm:$0xf]
        %v2354 = vsel %vm2319, %v2282, %v2353
        %2355 = vst [vmem:[%s2316 + $0x28] sm:$0xf] %v2354
        %v2356 = vld [vmem:[%s2316 + $0x2c] sm:$0x1]
        %v2357 = vsel %vm2325, %v2283, %v2356
        %2358 = vst [vmem:[%s2316 + $0x2c] sm:$0x1] %v2357
        %v2359 = vld [vmem:[%s2316 + $0x30] sm:$0xf]
        %v2360 = vsel %vm2319, %v2290, %v2359
        %2361 = vst [vmem:[%s2316 + $0x30] sm:$0xf] %v2360
        %v2362 = vld [vmem:[%s2316 + $0x34] sm:$0x1]
        %v2363 = vsel %vm2325, %v2291, %v2362
        %2364 = vst [vmem:[%s2316 + $0x34] sm:$0x1] %v2363
        %v2365 = vld [vmem:[%s2316 + $0x38] sm:$0xf]
        %v2366 = vsel %vm2319, %v2298, %v2365
        %2367 = vst [vmem:[%s2316 + $0x38] sm:$0xf] %v2366
        %v2368 = vld [vmem:[%s2316 + $0x3c] sm:$0x1]
        %v2369 = vsel %vm2325, %v2299, %v2368
        %2370 = vst [vmem:[%s2316 + $0x3c] sm:$0x1] %v2369
      $region52: #{down_block_forward.5} parent=39 // pred_fallthru
        _
      %s2371 = sadd.s32 %s22, 1
      %p2372 = scmp.lt.s32.totalorder %s21, 1
      %s2373 = scalar_select %p2372, %s21, 1
      %p2374 = scmp.lt.s32.totalorder %s2371, 9
      %s2375 = scalar_select %p2374, %s2371, 9
      %s2376 = smul.addr %s2375, 20
      %s2377 = smul.addr %s2373, 200
      %s2378 = sadd.s32 %s2376, %s2377
      %s2379 = smul.addr %s2378, 4
      %s2380 = scalar_lea.vmem %s5, %s2379
      // Predicated region
      $region53: #{down_block_forward.5} parent=39 // pred_check
        %p2381 = pneg %p171
      $region54: #{down_block_forward.5} parent=39 // pred_check_branch
        %2383 = sbr.rel (%p2381) target = $region56
      $region55: #{down_block_forward.5} parent=39 // pred_region
        %s2384 = sadd.s32 %s22, 1
      $region56: #{down_block_forward.5} parent=39 // pred_fallthru
        _
    $region40: #{down_block_forward.5} parent=5 // pred_fallthru
      _
    %p2385 = scmp.le.s32.totalorder 2, %s11
    // Predicated region
    $region57: #{down_block_forward.5} parent=5 // pred_check
      %p2386 = pneg %p2385
    $region58: #{down_block_forward.5} parent=5 // pred_check_branch
      %2388 = sbr.rel (%p2386) target = $region60
    $region59: #{down_block_forward.5} parent=5 // pred_region
      %s2389 = ssub.s32 %s11, 2
      // Predicated region
      $region61: #{down_block_forward.5} parent=59 // pred_check
        %p2390 = pneg %p177
      $region62: #{down_block_forward.5} parent=59 // pred_check_branch
        %2392 = sbr.rel (%p2390) target = $region64
      $region63: #{down_block_forward.5} parent=59 // pred_region
        %s2393 = sadd.s32 %s25, 1
        %p2394 = scmp.lt.s32.totalorder %s24, 1
        %s2395 = scalar_select %p2394, %s24, 1
        %p2396 = scmp.lt.s32.totalorder %s2393, 9
        %s2397 = scalar_select %p2396, %s2393, 9
        %s2398 = smul.addr %s2397, 20
        %s2399 = smul.addr %s2395, 200
        %s2400 = sadd.s32 %s2398, %s2399
        %s2401 = smul.addr %s2400, 4
        %s2402 = scalar_lea.vmem %s5, %s2401
      $region64: #{down_block_forward.5} parent=59 // pred_fallthru
        _
    $region60: #{down_block_forward.5} parent=5 // pred_fallthru
      _
  $region6: #{down_block_forward.5} parent=0 // loop_footer
    %s15 = sadd.s32 1, %s11
  $region7: #{down_block_forward.5} parent=0 // loop_footer_branch
    %10 = sbr.rel target = $region3
  $region8: #{down_block_forward.5} parent=0 // loop_exit
    _

// kernel: down_block_forward.6
$region0: #{down_block_forward.6}
  #allocation0 [shape = 'u32[]', space=smem, size = 0x4, offset = 0x4, fixed_abs, tag = 'smem constant byte address 0x4 - core index']
  #allocation1 [shape = 'u32[72,128]{1,0:T(1,128)}', space=vmem, size = 0x9000, scoped, tag = 'internal scratch']
  #allocation2 [shape = 'f32[64,128]{1,0:T(8,128)}', space=vmem, size = 0x8000, scoped, tag = 'scratch operand']
  %s0 = inlined_call_operand.vmem [shape: bf16[2,10,10,10,128], index: 0, kind: input, shape index: {}]
  %s1 = inlined_call_operand.vmem [shape: bf16[27,128,128], index: 1, kind: input, shape index: {}]
  %s2 = inlined_call_operand.vmem [shape: f32[1,128], index: 2, kind: input, shape index: {}]
  %s3 = inlined_call_operand.vmem [shape: bf16[2,10,10,10,128], index: 3, kind: input, shape index: {}]
  %s4 = inlined_call_operand.vmem [shape: f32[2,8,8,8,128], index: 4, kind: output, shape index: {}]
  %s5 = sld [smem:[#allocation0]]
  $region61: #{down_block_forward.6} parent=0
    _
  %s7 = ssub.s32 1, %s5
  %s8 = scalar_select 0, %s7, %s5
  loop: start=0, step=1, limit=50
  $region2: #{down_block_forward.6} parent=0 // loop_pre_header
    _
  $region3: #{down_block_forward.6} parent=0 // loop_header
    %s10 = sphi 0, %s14
    %p11 = scmp.ge.s32.totalorder %s10, 50
    %s17 = sphi 0, %s36
    %s18 = sphi 0, %s32
    %s19 = sphi 0, %s28
    %s20 = sphi 0, %s17
    %s21 = sphi 0, %s18
    %s22 = sphi 0, %s19
    %s23 = sphi 0, %s20
    %s24 = sphi 0, %s21
    %s25 = sphi 0, %s22
    %s43 = sphi 0, %s45
    %s46 = sphi 0, %s43
    %s47 = sphi 0, %s46
    %s63 = sphi 0, %s47
    %s67 = sphi 0, %s67
    %s69 = sphi 0, %s67
    %s70 = sphi 0, %s69
    %s84 = sphi 0, %s70
    %s88 = sphi 0, %s88
    %s90 = sphi 0, %s88
    %s91 = sphi 0, %s90
    %s105 = sphi 0, %s91
    %s115 = sphi 0, %s117
    %s118 = sphi 0, %s115
    %s119 = sphi 0, %s118
    %s135 = sphi 0, %s119
    %s143 = sphi 0, %s145
    %s146 = sphi 0, %s143
    %s147 = sphi 0, %s146
    %s163 = sphi 0, %s147
  $region4: #{down_block_forward.6} parent=0 // loop_header_branch
    %13 = sbr.rel (%p11) target = $region8
  $region5: #{down_block_forward.6} parent=0 // loop_body
    %s15 = ssub.s32 %s10, 1
    %s16 = ssub.s32 %s10, 2
    %s26 = sadd.s32 1, %s19
    %p27 = scmp.ge.s32.totalorder %s26, 3
    %s28 = scalar_select %p27, 0, %s26
    %s29 = sadd.s32 1, %s18
    %s30 = scalar_select %p27, %s29, %s18
    %p31 = scmp.ge.s32.totalorder %s30, 8
    %s32 = scalar_select %p31, 0, %s30
    %s33 = sadd.s32 1, %s17
    %s34 = scalar_select %p31, %s33, %s17
    %p35 = scmp.ge.s32.totalorder %s34, 2
    %s36 = scalar_select %p35, 0, %s34
    %s37 = sadd.s32 %s18, %s19
    %s38 = sadd.s32 %s32, %s28
    %s39 = ssub.s32 %s17, %s36
    %s40 = ssub.s32 %s37, %s38
    %s41 = sor.u32 %s39, %s40
    %p42 = scmp.eq.s32.totalorder %s41, 0
    %s44 = sadd.s32 %s43, 1
    %s45 = scalar_select %p42, %s43, %s44
    %p48 = pneg %p42
    %p49 = scmp.eq.s32.totalorder %s10, 47
    %p50 = por %p48, %p49
    %p51 = scmp.ne.s32.totalorder %s43, %s46
    %p52 = scmp.eq.s32.totalorder %s10, 0
    %p53 = por %p51, %p52
    %p54 = scmp.ne.s32.totalorder %s43, %s46
    %p55 = scmp.eq.s32.totalorder %s15, 47
    %p56 = por %p54, %p55
    %p57 = scmp.ne.s32.totalorder %s46, %s47
    %p58 = scmp.eq.s32.totalorder %s15, 0
    %p59 = por %p57, %p58
    %p60 = scmp.ne.s32.totalorder %s46, %s47
    %p61 = scmp.eq.s32.totalorder %s16, 47
    %p62 = por %p60, %p61
    %p64 = scmp.ne.s32.totalorder %s47, %s63
    %p65 = scmp.eq.s32.totalorder %s16, 0
    %p66 = por %p64, %p65
    %s68 = sadd.s32 %s67, 1
    %p71 = scmp.eq.s32.totalorder %s10, 47
    %p72 = scmp.ne.s32.totalorder %s67, %s69
    %p73 = scmp.eq.s32.totalorder %s10, 0
    %p74 = por %p72, %p73
    %p75 = scmp.ne.s32.totalorder %s67, %s69
    %p76 = scmp.eq.s32.totalorder %s15, 47
    %p77 = por %p75, %p76
    %p78 = scmp.ne.s32.totalorder %s69, %s70
    %p79 = scmp.eq.s32.totalorder %s15, 0
    %p80 = por %p78, %p79
    %p81 = scmp.ne.s32.totalorder %s69, %s70
    %p82 = scmp.eq.s32.totalorder %s16, 47
    %p83 = por %p81, %p82
    %p85 = scmp.ne.s32.totalorder %s70, %s84
    %p86 = scmp.eq.s32.totalorder %s16, 0
    %p87 = por %p85, %p86
    %s89 = sadd.s32 %s88, 1
    %p92 = scmp.eq.s32.totalorder %s10, 47
    %p93 = scmp.ne.s32.totalorder %s88, %s90
    %p94 = scmp.eq.s32.totalorder %s10, 0
    %p95 = por %p93, %p94
    %p96 = scmp.ne.s32.totalorder %s88, %s90
    %p97 = scmp.eq.s32.totalorder %s15, 47
    %p98 = por %p96, %p97
    %p99 = scmp.ne.s32.totalorder %s90, %s91
    %p100 = scmp.eq.s32.totalorder %s15, 0
    %p101 = por %p99, %p100
    %p102 = scmp.ne.s32.totalorder %s90, %s91
    %p103 = scmp.eq.s32.totalorder %s16, 47
    %p104 = por %p102, %p103
    %p106 = scmp.ne.s32.totalorder %s91, %s105
    %p107 = scmp.eq.s32.totalorder %s16, 0
    %p108 = por %p106, %p107
    %s109 = sadd.s32 %s18, 1
    %s110 = sadd.s32 %s32, 1
    %s111 = ssub.s32 %s17, %s36
    %s112 = ssub.s32 %s109, %s110
    %s113 = sor.u32 %s111, %s112
    %p114 = scmp.eq.s32.totalorder %s113, 0
    %s116 = sadd.s32 %s115, 1
    %s117 = scalar_select %p114, %s115, %s116
    %p120 = pneg %p114
    %p121 = scmp.eq.s32.totalorder %s10, 47
    %p122 = por %p120, %p121
    %p123 = scmp.ne.s32.totalorder %s115, %s118
    %p124 = scmp.eq.s32.totalorder %s10, 0
    %p125 = por %p123, %p124
    %p126 = scmp.ne.s32.totalorder %s115, %s118
    %p127 = scmp.eq.s32.totalorder %s15, 47
    %p128 = por %p126, %p127
    %p129 = scmp.ne.s32.totalorder %s118, %s119
    %p130 = scmp.eq.s32.totalorder %s15, 0
    %p131 = por %p129, %p130
    %p132 = scmp.ne.s32.totalorder %s118, %s119
    %p133 = scmp.eq.s32.totalorder %s16, 47
    %p134 = por %p132, %p133
    %p136 = scmp.ne.s32.totalorder %s119, %s135
    %p137 = scmp.eq.s32.totalorder %s16, 0
    %p138 = por %p136, %p137
    %s139 = ssub.s32 %s17, %s36
    %s140 = ssub.s32 %s18, %s32
    %s141 = sor.u32 %s139, %s140
    %p142 = scmp.eq.s32.totalorder %s141, 0
    %s144 = sadd.s32 %s143, 1
    %s145 = scalar_select %p142, %s143, %s144
    %p148 = pneg %p142
    %p149 = scmp.eq.s32.totalorder %s10, 47
    %p150 = por %p148, %p149
    %p151 = scmp.ne.s32.totalorder %s143, %s146
    %p152 = scmp.eq.s32.totalorder %s10, 0
    %p153 = por %p151, %p152
    %p154 = scmp.ne.s32.totalorder %s143, %s146
    %p155 = scmp.eq.s32.totalorder %s15, 47
    %p156 = por %p154, %p155
    %p157 = scmp.ne.s32.totalorder %s146, %s147
    %p158 = scmp.eq.s32.totalorder %s15, 0
    %p159 = por %p157, %p158
    %p160 = scmp.ne.s32.totalorder %s146, %s147
    %p161 = scmp.eq.s32.totalorder %s16, 47
    %p162 = por %p160, %p161
    %p164 = scmp.ne.s32.totalorder %s147, %s163
    %p165 = scmp.eq.s32.totalorder %s16, 0
    %p166 = por %p164, %p165
    %p167 = scmp.le.s32.totalorder 1, %s10
    %p168 = scmp.lt.s32.totalorder %s10, 49
    %p169 = pnand %p167, %p168
    %p170 = pneg %p169
    // Predicated region
    $region9: #{down_block_forward.6} parent=5 // pred_check
      _
    $region10: #{down_block_forward.6} parent=5 // pred_check_branch
      %172 = sbr.rel (%p169) target = $region12
    $region11: #{down_block_forward.6} parent=5 // pred_region
      %s173 = ssub.s32 %s10, 1
      // Predicated region
      $region13: #{down_block_forward.6} parent=11 // pred_check
        %p174 = pneg %p80
      $region14: #{down_block_forward.6} parent=11 // pred_check_branch
        %176 = sbr.rel (%p174) target = $region16
      $region15: #{down_block_forward.6} parent=11 // pred_region
        _
      $region16: #{down_block_forward.6} parent=11 // pred_fallthru
        _
      // Predicated region
      $region17: #{down_block_forward.6} parent=11 // pred_check
        %p177 = pneg %p101
      $region18: #{down_block_forward.6} parent=11 // pred_check_branch
        %179 = sbr.rel (%p177) target = $region20
      $region19: #{down_block_forward.6} parent=11 // pred_region
        _
      $region20: #{down_block_forward.6} parent=11 // pred_fallthru
        _
    $region12: #{down_block_forward.6} parent=5 // pred_fallthru
      _
    %p180 = scmp.lt.s32.totalorder %s10, 48
    // Predicated region
    $region21: #{down_block_forward.6} parent=5 // pred_check
      %p181 = pneg %p180
    $region22: #{down_block_forward.6} parent=5 // pred_check_branch
      %183 = sbr.rel (%p181) target = $region24
    $region23: #{down_block_forward.6} parent=5 // pred_region
      // Predicated region
      $region25: #{down_block_forward.6} parent=23 // pred_check
        %p184 = pneg %p53
      $region26: #{down_block_forward.6} parent=23 // pred_check_branch
        %186 = sbr.rel (%p184) target = $region28
      $region27: #{down_block_forward.6} parent=23 // pred_region
        %s187 = sadd.s32 %s18, %s19
        %p188 = scmp.lt.s32.totalorder %s17, 1
        %s189 = scalar_select %p188, %s17, 1
        %p190 = scmp.lt.s32.totalorder %s187, 9
        %s191 = scalar_select %p190, %s187, 9
        %s192 = smul.addr %s191, 20
        %s193 = smul.addr %s189, 200
        %s194 = sadd.s32 %s192, %s193
        %s195 = smul.addr %s194, 4
        %s196 = scalar_lea.vmem %s0, %s195
        %s197 = sadd.s32 %s18, %s19
      $region28: #{down_block_forward.6} parent=23 // pred_fallthru
        _
      // Predicated region
      $region29: #{down_block_forward.6} parent=23 // pred_check
        %p198 = pneg %p125
      $region30: #{down_block_forward.6} parent=23 // pred_check_branch
        %200 = sbr.rel (%p198) target = $region32
      $region31: #{down_block_forward.6} parent=23 // pred_region
        %s201 = sadd.s32 %s18, 1
        %p202 = scmp.lt.s32.totalorder %s17, 1
        %s203 = scalar_select %p202, %s17, 1
        %p204 = scmp.lt.s32.totalorder %s201, 9
        %s205 = scalar_select %p204, %s201, 9
        %s206 = smul.addr %s205, 20
        %s207 = smul.addr %s203, 200
        %s208 = sadd.s32 %s206, %s207
        %s209 = smul.addr %s208, 4
        %s210 = scalar_lea.vmem %s3, %s209
        %s211 = sadd.s32 %s18, 1
      $region32: #{down_block_forward.6} parent=23 // pred_fallthru
        _
    $region24: #{down_block_forward.6} parent=5 // pred_fallthru
      _
    %p212 = scmp.le.s32.totalorder 1, %s10
    %p213 = scmp.lt.s32.totalorder %s10, 49
    %p214 = pnand %p212, %p213
    %p215 = pneg %p214
    // Predicated region
    $region33: #{down_block_forward.6} parent=5 // pred_check
      _
    $region34: #{down_block_forward.6} parent=5 // pred_check_branch
      %217 = sbr.rel (%p214) target = $region36
    $region35: #{down_block_forward.6} parent=5 // pred_region
      %s218 = ssub.s32 %s10, 1
      %s219 = sadd.s32 %s21, %s22
      %p220 = scmp.lt.s32.totalorder %s20, 1
      %s221 = scalar_select %p220, %s20, 1
      %p222 = scmp.lt.s32.totalorder %s219, 9
      %s223 = scalar_select %p222, %s219, 9
      %s224 = smul.addr %s223, 20
      %s225 = smul.addr %s221, 200
      %s226 = sadd.s32 %s224, %s225
      %s227 = smul.addr %s226, 4
      %s228 = scalar_lea.vmem %s0, %s227
      %p229 = pneg %p59
      %p230 = pneg %p56
      %p231 = pneg %p80
      %p232 = pneg %p77
      %p233 = pneg %p101
      %p234 = pneg %p98
      %s235 = sadd.s32 %s21, 1
      %p236 = scmp.lt.s32.totalorder %s20, 1
      %s237 = scalar_select %p236, %s20, 1
      %p238 = scmp.lt.s32.totalorder %s235, 9
      %s239 = scalar_select %p238, %s235, 9
      %s240 = smul.addr %s239, 20
      %s241 = smul.addr %s237, 200
      %s242 = sadd.s32 %s240, %s241
      %s243 = smul.addr %s242, 4
      %s244 = scalar_lea.vmem %s3, %s243
      %p245 = pneg %p131
      %p246 = pneg %p128
      %p247 = pneg %p159
      %p248 = pneg %p156
      %p249 = scmp.lt.s32.totalorder %s20, 1
      %s250 = scalar_select %p249, %s20, 1
      %p251 = scmp.lt.s32.totalorder %s21, 7
      %s252 = scalar_select %p251, %s21, 7
      %s253 = smul.addr %s252, 8
      %s254 = smul.addr %s250, 64
      %s255 = sadd.s32 %s253, %s254
      %s256 = smul.addr %s255, 8
      %s257 = scalar_lea.vmem %s4, %s256
      %s258 = sadd.s32 %s21, %s22
      %p259 = scmp.lt.s32.totalorder %s20, 1
      %s260 = scalar_select %p259, %s20, 1
      %p261 = scmp.lt.s32.totalorder %s258, 9
      %s262 = scalar_select %p261, %s258, 9
      %s263 = smul.addr %s262, 20
      %s264 = smul.addr %s260, 200
      %s265 = sadd.s32 %s263, %s264
      %s266 = smul.addr %s265, 4
      %s267 = scalar_lea.vmem %s0, %s266
      %s268 = sadd.s32 %s21, %s22
      %s269 = sadd.s32 %s21, 1
      %p270 = scmp.lt.s32.totalorder %s20, 1
      %s271 = scalar_select %p270, %s20, 1
      %p272 = scmp.lt.s32.totalorder %s269, 9
      %s273 = scalar_select %p272, %s269, 9
      %s274 = smul.addr %s273, 20
      %s275 = smul.addr %s271, 200
      %s276 = sadd.s32 %s274, %s275
      %s277 = smul.addr %s276, 4
      %s278 = scalar_lea.vmem %s3, %s277
      %s279 = sadd.s32 %s21, 1
      %p280 = scmp.lt.s32.totalorder %s20, 1
      %s281 = scalar_select %p280, %s20, 1
      %p282 = scmp.lt.s32.totalorder %s21, 7
      %s283 = scalar_select %p282, %s21, 7
      %s284 = smul.addr %s283, 8
      %s285 = smul.addr %s281, 64
      %s286 = sadd.s32 %s284, %s285
      %s287 = smul.addr %s286, 8
      %s288 = scalar_lea.vmem %s4, %s287
      %p289 = scmp.eq.s32.totalorder %s22, 0
      // Predicated region
      $region37: #{down_block_forward.6} parent=35 // pred_check
        %p290 = pneg %p289
      $region38: #{down_block_forward.6} parent=35 // pred_check_branch
        %292 = sbr.rel (%p290) target = $region40
      $region39: #{down_block_forward.6} parent=35 // pred_region
        %293 = vst [vmem:[#allocation2] sm:$0xff] 0.0
        %294 = vst [vmem:[#allocation2 + $0x8] sm:$0xff] 0.0
        %295 = vst [vmem:[#allocation2 + $0x10] sm:$0xff] 0.0
        %296 = vst [vmem:[#allocation2 + $0x18] sm:$0xff] 0.0
        %297 = vst [vmem:[#allocation2 + $0x20] sm:$0xff] 0.0
        %298 = vst [vmem:[#allocation2 + $0x28] sm:$0xff] 0.0
        %299 = vst [vmem:[#allocation2 + $0x30] sm:$0xff] 0.0
        %300 = vst [vmem:[#allocation2 + $0x38] sm:$0xff] 0.0
      $region40: #{down_block_forward.6} parent=35 // pred_fallthru
        _
      %s301 = sadd.s32 %s21, %s22
      %p302 = scmp.ge.s32.totalorder %s301, 1
      %p303 = scmp.le.s32.totalorder %s301, 8
      %p304 = pnand %p302, %p303
      %p305 = pneg %p304
      // Predicated region
      $region41: #{down_block_forward.6} parent=35 // pred_check
        _
      $region42: #{down_block_forward.6} parent=35 // pred_check_branch
        %307 = sbr.rel (%p304) target = $region44
      $region43: #{down_block_forward.6} parent=35 // pred_region
        %v308 = vld [vmem:[#allocation2] sm:$0xff]
        %v309 = vld [vmem:[#allocation2 + $0x8] sm:$0xff]
        %v310 = vld [vmem:[#allocation2 + $0x10] sm:$0xff]
        %v311 = vld [vmem:[#allocation2 + $0x18] sm:$0xff]
        %v312 = vld [vmem:[#allocation2 + $0x20] sm:$0xff]
        %v313 = vld [vmem:[#allocation2 + $0x28] sm:$0xff]
        %v314 = vld [vmem:[#allocation2 + $0x30] sm:$0xff]
        %v315 = vld [vmem:[#allocation2 + $0x38] sm:$0xff]
        %v316 = vld [vmem:[%s267] sm:$0xf]
        %v317 = vld [vmem:[%s267 + $0x8] sm:$0xf]
        %v318 = vld [vmem:[%s267 + $0x10] sm:$0xf]
        %v319 = vld [vmem:[%s267 + $0x18] sm:$0xf]
        %v320 = vld [vmem:[%s267 + $0x20] sm:$0xf]
        %v321 = vld [vmem:[%s267 + $0x28] sm:$0xf]
        %v322 = vld [vmem:[%s267 + $0x30] sm:$0xf]
        %v323 = vld [vmem:[%s267 + $0x38] sm:$0xf]
        %s324 = smul.u32 %s22, 9
        %s325 = smul.u32 %s324, 16
        %s326 = smul.addr %s325, 4
        %s327 = scalar_lea.vmem %s1, %s326
        %v328 = vld [vmem:[%s327] sm:$0xf]
        %v329 = vld [vmem:[%s327 + $0x4] sm:$0xf]
        %v330 = vld [vmem:[%s327 + $0x8] sm:$0xf]
        %v331 = vld [vmem:[%s327 + $0xc] sm:$0xf]
        %v332 = vld [vmem:[%s327 + $0x10] sm:$0xf]
        %v333 = vld [vmem:[%s327 + $0x14] sm:$0xf]
        %v334 = vld [vmem:[%s327 + $0x18] sm:$0xf]
        %v335 = vld [vmem:[%s327 + $0x1c] sm:$0xf]
        %v336 = vld [vmem:[%s327 + $0x20] sm:$0xf]
        %v337 = vld [vmem:[%s327 + $0x24] sm:$0xf]
        %v338 = vld [vmem:[%s327 + $0x28] sm:$0xf]
        %v339 = vld [vmem:[%s327 + $0x2c] sm:$0xf]
        %v340 = vld [vmem:[%s327 + $0x30] sm:$0xf]
        %v341 = vld [vmem:[%s327 + $0x34] sm:$0xf]
        %v342 = vld [vmem:[%s327 + $0x38] sm:$0xf]
        %v343 = vld [vmem:[%s327 + $0x3c] sm:$0xf]
        %v352 = vunpack.c.l.b16 %v316
        %v353 = vunpack.c.l.b16 %v317
        %v354 = vunpack.c.l.b16 %v318
        %v355 = vunpack.c.l.b16 %v319
        %v356 = vunpack.c.l.b16 %v320
        %v357 = vunpack.c.l.b16 %v321
        %v358 = vunpack.c.l.b16 %v322
        %v359 = vunpack.c.l.b16 %v323
        %v360 = vpack.c.b16 %v353, %v352
        %v361 = vpack.c.b16 %v355, %v354
        %v362 = vpack.c.b16 %v357, %v356
        %v363 = vpack.c.b16 %v359, %v358
        %v384 = vunpack.c.l.b16 %v328
        %v385 = vunpack.c.l.b16 %v329
        %v386 = vunpack.c.l.b16 %v330
        %v387 = vunpack.c.l.b16 %v331
        %v388 = vunpack.c.l.b16 %v332
        %v389 = vunpack.c.l.b16 %v333
        %v390 = vunpack.c.l.b16 %v334
        %v391 = vunpack.c.l.b16 %v335
        %v392 = vunpack.c.l.b16 %v336
        %v393 = vunpack.c.l.b16 %v337
        %v394 = vunpack.c.l.b16 %v338
        %v395 = vunpack.c.l.b16 %v339
        %v396 = vunpack.c.l.b16 %v340
        %v397 = vunpack.c.l.b16 %v341
        %v398 = vunpack.c.l.b16 %v342
        %v399 = vunpack.c.l.b16 %v343
        %v400 = vpack.c.b16 %v385, %v384
        %v401 = vpack.c.b16 %v387, %v386
        %v402 = vpack.c.b16 %v389, %v388
        %v403 = vpack.c.b16 %v391, %v390
        %v404 = vpack.c.b16 %v393, %v392
        %v405 = vpack.c.b16 %v395, %v394
        %v406 = vpack.c.b16 %v397, %v396
        %v407 = vpack.c.b16 %v399, %v398
        %416 = vmatpush.bf16.msra.mxu0 %v407
        %417 = vmatpush.bf16.msra.mxu0 %v406
        %418 = vmatpush.bf16.msra.mxu0 %v405
        %419 = vmatpush.bf16.msra.mxu0 %v404
        %420 = vmatpush.bf16.msra.mxu0 %v403
        %421 = vmatpush.bf16.msra.mxu0 %v402
        %422 = vmatpush.bf16.msra.mxu0 %v401
        %423 = vmatpush.bf16.msra.mxu0 %v400
        %424 = vmatmul.bf16.gmra.mxu0 %v360
        %v425 = vpop.f32.mrf.mxu0
        %v426 = vadd.f32 0.0, %v425
        %v427 = vpop.f32.mrf.mxu0
        %v428 = vadd.f32 0.0, %v427
        %429 = vmatmul.bf16.gmra.mxu0 %v361
        %v430 = vpop.f32.mrf.mxu0
        %v431 = vadd.f32 0.0, %v430
        %v432 = vpop.f32.mrf.mxu0
        %v433 = vadd.f32 0.0, %v432
        %434 = vmatmul.bf16.gmra.mxu0 %v362
        %v435 = vpop.f32.mrf.mxu0
        %v436 = vadd.f32 0.0, %v435
        %v437 = vpop.f32.mrf.mxu0
        %v438 = vadd.f32 0.0, %v437
        %439 = vmatmul.bf16.gmra.mxu0 %v363
        %v440 = vpop.f32.mrf.mxu0
        %v441 = vadd.f32 0.0, %v440
        %v442 = vpop.f32.mrf.mxu0
        %v443 = vadd.f32 0.0, %v442
        %444 = vdwg.mxu0
        %v445 = vadd.f32 %v308, %v426
        %v446 = vadd.f32 %v309, %v428
        %v447 = vadd.f32 %v310, %v431
        %v448 = vadd.f32 %v311, %v433
        %v449 = vadd.f32 %v312, %v436
        %v450 = vadd.f32 %v313, %v438
        %v451 = vadd.f32 %v314, %v441
        %v452 = vadd.f32 %v315, %v443
        %v453 = vld [vmem:[%s267] sm:$0xf]
        %v454 = vld [vmem:[%s267 + $0x4] sm:$0x1]
        %v455 = vld [vmem:[%s267 + $0x8] sm:$0xf]
        %v456 = vld [vmem:[%s267 + $0xc] sm:$0x1]
        %v457 = vld [vmem:[%s267 + $0x10] sm:$0xf]
        %v458 = vld [vmem:[%s267 + $0x14] sm:$0x1]
        %v459 = vld [vmem:[%s267 + $0x18] sm:$0xf]
        %v460 = vld [vmem:[%s267 + $0x1c] sm:$0x1]
        %v461 = vld [vmem:[%s267 + $0x20] sm:$0xf]
        %v462 = vld [vmem:[%s267 + $0x24] sm:$0x1]
        %v463 = vld [vmem:[%s267 + $0x28] sm:$0xf]
        %v464 = vld [vmem:[%s267 + $0x2c] sm:$0x1]
        %v465 = vld [vmem:[%s267 + $0x30] sm:$0xf]
        %v466 = vld [vmem:[%s267 + $0x34] sm:$0x1]
        %v467 = vld [vmem:[%s267 + $0x38] sm:$0xf]
        %v468 = vld [vmem:[%s267 + $0x3c] sm:$0x1]
        %vm469 = vsmask.f32 3328
        %vm470 = vsmask.f32 7440
        %vm471 = vmor %vm469, %vm470
        %v473 = vshrl.u32 %v453, 16
        %v475 = vrot.slane %v473, 4
        %v476 = vshll.u32 %v453, 16
        %v478 = vrot.slane %v476, 5
        %v479 = vor.u32 %v475, %v478
        %v480 = vrot.slane %v479, 4
        %v482 = vshll.u32 %v454, 16
        %v484 = vrot.slane %v482, 5
        %v485 = vsel %vm471, %v480, %v484
        %v487 = vshrl.u32 %v455, 16
        %v489 = vrot.slane %v487, 4
        %v490 = vshll.u32 %v455, 16
        %v492 = vrot.slane %v490, 5
        %v493 = vor.u32 %v489, %v492
        %v494 = vrot.slane %v493, 4
        %v496 = vshll.u32 %v456, 16
        %v498 = vrot.slane %v496, 5
        %v499 = vsel %vm471, %v494, %v498
        %v501 = vshrl.u32 %v457, 16
        %v503 = vrot.slane %v501, 4
        %v504 = vshll.u32 %v457, 16
        %v506 = vrot.slane %v504, 5
        %v507 = vor.u32 %v503, %v506
        %v508 = vrot.slane %v507, 4
        %v510 = vshll.u32 %v458, 16
        %v512 = vrot.slane %v510, 5
        %v513 = vsel %vm471, %v508, %v512
        %v515 = vshrl.u32 %v459, 16
        %v517 = vrot.slane %v515, 4
        %v518 = vshll.u32 %v459, 16
        %v520 = vrot.slane %v518, 5
        %v521 = vor.u32 %v517, %v520
        %v522 = vrot.slane %v521, 4
        %v524 = vshll.u32 %v460, 16
        %v526 = vrot.slane %v524, 5
        %v527 = vsel %vm471, %v522, %v526
        %v529 = vshrl.u32 %v461, 16
        %v531 = vrot.slane %v529, 4
        %v532 = vshll.u32 %v461, 16
        %v534 = vrot.slane %v532, 5
        %v535 = vor.u32 %v531, %v534
        %v536 = vrot.slane %v535, 4
        %v538 = vshll.u32 %v462, 16
        %v540 = vrot.slane %v538, 5
        %v541 = vsel %vm471, %v536, %v540
        %v543 = vshrl.u32 %v463, 16
        %v545 = vrot.slane %v543, 4
        %v546 = vshll.u32 %v463, 16
        %v548 = vrot.slane %v546, 5
        %v549 = vor.u32 %v545, %v548
        %v550 = vrot.slane %v549, 4
        %v552 = vshll.u32 %v464, 16
        %v554 = vrot.slane %v552, 5
        %v555 = vsel %vm471, %v550, %v554
        %v557 = vshrl.u32 %v465, 16
        %v559 = vrot.slane %v557, 4
        %v560 = vshll.u32 %v465, 16
        %v562 = vrot.slane %v560, 5
        %v563 = vor.u32 %v559, %v562
        %v564 = vrot.slane %v563, 4
        %v566 = vshll.u32 %v466, 16
        %v568 = vrot.slane %v566, 5
        %v569 = vsel %vm471, %v564, %v568
        %v571 = vshrl.u32 %v467, 16
        %v573 = vrot.slane %v571, 4
        %v574 = vshll.u32 %v467, 16
        %v576 = vrot.slane %v574, 5
        %v577 = vor.u32 %v573, %v576
        %v578 = vrot.slane %v577, 4
        %v580 = vshll.u32 %v468, 16
        %v582 = vrot.slane %v580, 5
        %v583 = vsel %vm471, %v578, %v582
        %s584 = sadd.s32 %s324, 1
        %s585 = smul.u32 %s584, 16
        %s586 = smul.addr %s585, 4
        %s587 = scalar_lea.vmem %s1, %s586
        %v588 = vld [vmem:[%s587] sm:$0xf]
        %v589 = vld [vmem:[%s587 + $0x4] sm:$0xf]
        %v590 = vld [vmem:[%s587 + $0x8] sm:$0xf]
        %v591 = vld [vmem:[%s587 + $0xc] sm:$0xf]
        %v592 = vld [vmem:[%s587 + $0x10] sm:$0xf]
        %v593 = vld [vmem:[%s587 + $0x14] sm:$0xf]
        %v594 = vld [vmem:[%s587 + $0x18] sm:$0xf]
        %v595 = vld [vmem:[%s587 + $0x1c] sm:$0xf]
        %v596 = vld [vmem:[%s587 + $0x20] sm:$0xf]
        %v597 = vld [vmem:[%s587 + $0x24] sm:$0xf]
        %v598 = vld [vmem:[%s587 + $0x28] sm:$0xf]
        %v599 = vld [vmem:[%s587 + $0x2c] sm:$0xf]
        %v600 = vld [vmem:[%s587 + $0x30] sm:$0xf]
        %v601 = vld [vmem:[%s587 + $0x34] sm:$0xf]
        %v602 = vld [vmem:[%s587 + $0x38] sm:$0xf]
        %v603 = vld [vmem:[%s587 + $0x3c] sm:$0xf]
        %v604 = vunpack.c.l.b16 %v485
        %v605 = vunpack.c.l.b16 %v499
        %v606 = vunpack.c.l.b16 %v513
        %v607 = vunpack.c.l.b16 %v527
        %v608 = vunpack.c.l.b16 %v541
        %v609 = vunpack.c.l.b16 %v555
        %v610 = vunpack.c.l.b16 %v569
        %v611 = vunpack.c.l.b16 %v583
        %v612 = vpack.c.b16 %v605, %v604
        %v613 = vpack.c.b16 %v607, %v606
        %v614 = vpack.c.b16 %v609, %v608
        %v615 = vpack.c.b16 %v611, %v610
        %v636 = vunpack.c.l.b16 %v588
        %v637 = vunpack.c.l.b16 %v589
        %v638 = vunpack.c.l.b16 %v590
        %v639 = vunpack.c.l.b16 %v591
        %v640 = vunpack.c.l.b16 %v592
        %v641 = vunpack.c.l.b16 %v593
        %v642 = vunpack.c.l.b16 %v594
        %v643 = vunpack.c.l.b16 %v595
        %v644 = vunpack.c.l.b16 %v596
        %v645 = vunpack.c.l.b16 %v597
        %v646 = vunpack.c.l.b16 %v598
        %v647 = vunpack.c.l.b16 %v599
        %v648 = vunpack.c.l.b16 %v600
        %v649 = vunpack.c.l.b16 %v601
        %v650 = vunpack.c.l.b16 %v602
        %v651 = vunpack.c.l.b16 %v603
        %v652 = vpack.c.b16 %v637, %v636
        %v653 = vpack.c.b16 %v639, %v638
        %v654 = vpack.c.b16 %v641, %v640
        %v655 = vpack.c.b16 %v643, %v642
        %v656 = vpack.c.b16 %v645, %v644
        %v657 = vpack.c.b16 %v647, %v646
        %v658 = vpack.c.b16 %v649, %v648
        %v659 = vpack.c.b16 %v651, %v650
        %668 = vmatpush.bf16.msra.mxu0 %v659
        %669 = vmatpush.bf16.msra.mxu0 %v658
        %670 = vmatpush.bf16.msra.mxu0 %v657
        %671 = vmatpush.bf16.msra.mxu0 %v656
        %672 = vmatpush.bf16.msra.mxu0 %v655
        %673 = vmatpush.bf16.msra.mxu0 %v654
        %674 = vmatpush.bf16.msra.mxu0 %v653
        %675 = vmatpush.bf16.msra.mxu0 %v652
        %676 = vmatmul.bf16.gmra.mxu0 %v612
        %v677 = vpop.f32.mrf.mxu0
        %v678 = vadd.f32 0.0, %v677
        %v679 = vpop.f32.mrf.mxu0
        %v680 = vadd.f32 0.0, %v679
        %681 = vmatmul.bf16.gmra.mxu0 %v613
        %v682 = vpop.f32.mrf.mxu0
        %v683 = vadd.f32 0.0, %v682
        %v684 = vpop.f32.mrf.mxu0
        %v685 = vadd.f32 0.0, %v684
        %686 = vmatmul.bf16.gmra.mxu0 %v614
        %v687 = vpop.f32.mrf.mxu0
        %v688 = vadd.f32 0.0, %v687
        %v689 = vpop.f32.mrf.mxu0
        %v690 = vadd.f32 0.0, %v689
        %691 = vmatmul.bf16.gmra.mxu0 %v615
        %v692 = vpop.f32.mrf.mxu0
        %v693 = vadd.f32 0.0, %v692
        %v694 = vpop.f32.mrf.mxu0
        %v695 = vadd.f32 0.0, %v694
        %696 = vdwg.mxu0
        %v697 = vadd.f32 %v445, %v678
        %v698 = vadd.f32 %v446, %v680
        %v699 = vadd.f32 %v447, %v683
        %v700 = vadd.f32 %v448, %v685
        %v701 = vadd.f32 %v449, %v688
        %v702 = vadd.f32 %v450, %v690
        %v703 = vadd.f32 %v451, %v693
        %v704 = vadd.f32 %v452, %v695
        %v705 = vld [vmem:[%s267] sm:$0xe]
        %v706 = vld [vmem:[%s267 + $0x8] sm:$0xe]
        %v707 = vld [vmem:[%s267 + $0x10] sm:$0xe]
        %v708 = vld [vmem:[%s267 + $0x18] sm:$0xe]
        %v709 = vld [vmem:[%s267 + $0x20] sm:$0xe]
        %v710 = vld [vmem:[%s267 + $0x28] sm:$0xe]
        %v711 = vld [vmem:[%s267 + $0x30] sm:$0xe]
        %v712 = vld [vmem:[%s267 + $0x38] sm:$0xe]
        %vm729 = vcmask 1042432
        %vm730 = vcmask 1046532
        %vm731 = vmor %vm729, %vm730
        %v732 = vrot.slane %v705, 5
        %v733 = vrot.slane %v732, 4
        %v734 = vrot.slane %v454, 5
        %v735 = vsel %vm731, %v733, %v734
        %v736 = vrot.slane %v706, 5
        %v737 = vrot.slane %v736, 4
        %v738 = vrot.slane %v456, 5
        %v739 = vsel %vm731, %v737, %v738
        %v740 = vrot.slane %v707, 5
        %v741 = vrot.slane %v740, 4
        %v742 = vrot.slane %v458, 5
        %v743 = vsel %vm731, %v741, %v742
        %v744 = vrot.slane %v708, 5
        %v745 = vrot.slane %v744, 4
        %v746 = vrot.slane %v460, 5
        %v747 = vsel %vm731, %v745, %v746
        %v748 = vrot.slane %v709, 5
        %v749 = vrot.slane %v748, 4
        %v750 = vrot.slane %v462, 5
        %v751 = vsel %vm731, %v749, %v750
        %v752 = vrot.slane %v710, 5
        %v753 = vrot.slane %v752, 4
        %v754 = vrot.slane %v464, 5
        %v755 = vsel %vm731, %v753, %v754
        %v756 = vrot.slane %v711, 5
        %v757 = vrot.slane %v756, 4
        %v758 = vrot.slane %v466, 5
        %v759 = vsel %vm731, %v757, %v758
        %v760 = vrot.slane %v712, 5
        %v761 = vrot.slane %v760, 4
        %v762 = vrot.slane %v468, 5
        %v763 = vsel %vm731, %v761, %v762
        %s764 = sadd.s32 %s324, 2
        %s765 = smul.u32 %s764, 16
        %s766 = smul.addr %s765, 4
        %s767 = scalar_lea.vmem %s1, %s766
        %v768 = vld [vmem:[%s767] sm:$0xf]
        %v769 = vld [vmem:[%s767 + $0x4] sm:$0xf]
        %v770 = vld [vmem:[%s767 + $0x8] sm:$0xf]
        %v771 = vld [vmem:[%s767 + $0xc] sm:$0xf]
        %v772 = vld [vmem:[%s767 + $0x10] sm:$0xf]
        %v773 = vld [vmem:[%s767 + $0x14] sm:$0xf]
        %v774 = vld [vmem:[%s767 + $0x18] sm:$0xf]
        %v775 = vld [vmem:[%s767 + $0x1c] sm:$0xf]
        %v776 = vld [vmem:[%s767 + $0x20] sm:$0xf]
        %v777 = vld [vmem:[%s767 + $0x24] sm:$0xf]
        %v778 = vld [vmem:[%s767 + $0x28] sm:$0xf]
        %v779 = vld [vmem:[%s767 + $0x2c] sm:$0xf]
        %v780 = vld [vmem:[%s767 + $0x30] sm:$0xf]
        %v781 = vld [vmem:[%s767 + $0x34] sm:$0xf]
        %v782 = vld [vmem:[%s767 + $0x38] sm:$0xf]
        %v783 = vld [vmem:[%s767 + $0x3c] sm:$0xf]
        %v784 = vunpack.c.l.b16 %v735
        %v785 = vunpack.c.l.b16 %v739
        %v786 = vunpack.c.l.b16 %v743
        %v787 = vunpack.c.l.b16 %v747
        %v788 = vunpack.c.l.b16 %v751
        %v789 = vunpack.c.l.b16 %v755
        %v790 = vunpack.c.l.b16 %v759
        %v791 = vunpack.c.l.b16 %v763
        %v792 = vpack.c.b16 %v785, %v784
        %v793 = vpack.c.b16 %v787, %v786
        %v794 = vpack.c.b16 %v789, %v788
        %v795 = vpack.c.b16 %v791, %v790
        %v816 = vunpack.c.l.b16 %v768
        %v817 = vunpack.c.l.b16 %v769
        %v818 = vunpack.c.l.b16 %v770
        %v819 = vunpack.c.l.b16 %v771
        %v820 = vunpack.c.l.b16 %v772
        %v821 = vunpack.c.l.b16 %v773
        %v822 = vunpack.c.l.b16 %v774
        %v823 = vunpack.c.l.b16 %v775
        %v824 = vunpack.c.l.b16 %v776
        %v825 = vunpack.c.l.b16 %v777
        %v826 = vunpack.c.l.b16 %v778
        %v827 = vunpack.c.l.b16 %v779
        %v828 = vunpack.c.l.b16 %v780
        %v829 = vunpack.c.l.b16 %v781
        %v830 = vunpack.c.l.b16 %v782
        %v831 = vunpack.c.l.b16 %v783
        %v832 = vpack.c.b16 %v817, %v816
        %v833 = vpack.c.b16 %v819, %v818
        %v834 = vpack.c.b16 %v821, %v820
        %v835 = vpack.c.b16 %v823, %v822
        %v836 = vpack.c.b16 %v825, %v824
        %v837 = vpack.c.b16 %v827, %v826
        %v838 = vpack.c.b16 %v829, %v828
        %v839 = vpack.c.b16 %v831, %v830
        %848 = vmatpush.bf16.msra.mxu0 %v839
        %849 = vmatpush.bf16.msra.mxu0 %v838
        %850 = vmatpush.bf16.msra.mxu0 %v837
        %851 = vmatpush.bf16.msra.mxu0 %v836
        %852 = vmatpush.bf16.msra.mxu0 %v835
        %853 = vmatpush.bf16.msra.mxu0 %v834
        %854 = vmatpush.bf16.msra.mxu0 %v833
        %855 = vmatpush.bf16.msra.mxu0 %v832
        %856 = vmatmul.bf16.gmra.mxu0 %v792
        %v857 = vpop.f32.mrf.mxu0
        %v858 = vadd.f32 0.0, %v857
        %v859 = vpop.f32.mrf.mxu0
        %v860 = vadd.f32 0.0, %v859
        %861 = vmatmul.bf16.gmra.mxu0 %v793
        %v862 = vpop.f32.mrf.mxu0
        %v863 = vadd.f32 0.0, %v862
        %v864 = vpop.f32.mrf.mxu0
        %v865 = vadd.f32 0.0, %v864
        %866 = vmatmul.bf16.gmra.mxu0 %v794
        %v867 = vpop.f32.mrf.mxu0
        %v868 = vadd.f32 0.0, %v867
        %v869 = vpop.f32.mrf.mxu0
        %v870 = vadd.f32 0.0, %v869
        %871 = vmatmul.bf16.gmra.mxu0 %v795
        %v872 = vpop.f32.mrf.mxu0
        %v873 = vadd.f32 0.0, %v872
        %v874 = vpop.f32.mrf.mxu0
        %v875 = vadd.f32 0.0, %v874
        %876 = vdwg.mxu0
        %v877 = vadd.f32 %v697, %v858
        %v878 = vadd.f32 %v698, %v860
        %v879 = vadd.f32 %v699, %v863
        %v880 = vadd.f32 %v700, %v865
        %v881 = vadd.f32 %v701, %v868
        %v882 = vadd.f32 %v702, %v870
        %v883 = vadd.f32 %v703, %v873
        %v884 = vadd.f32 %v704, %v875
        %s885 = scalar_lea.vmem %s267, 8
        %v886 = vld [vmem:[%s885] sm:$0xf]
        %v887 = vld [vmem:[%s885 + $0x8] sm:$0xf]
        %v888 = vld [vmem:[%s885 + $0x10] sm:$0xf]
        %v889 = vld [vmem:[%s885 + $0x18] sm:$0xf]
        %v890 = vld [vmem:[%s885 + $0x20] sm:$0xf]
        %v891 = vld [vmem:[%s885 + $0x28] sm:$0xf]
        %v892 = vld [vmem:[%s885 + $0x30] sm:$0xf]
        %v893 = vld [vmem:[%s885 + $0x38] sm:$0xf]
        %s894 = sadd.s32 %s324, 3
        %s895 = smul.u32 %s894, 16
        %s896 = smul.addr %s895, 4
        %s897 = scalar_lea.vmem %s1, %s896
        %v898 = vld [vmem:[%s897] sm:$0xf]
        %v899 = vld [vmem:[%s897 + $0x4] sm:$0xf]
        %v900 = vld [vmem:[%s897 + $0x8] sm:$0xf]
        %v901 = vld [vmem:[%s897 + $0xc] sm:$0xf]
        %v902 = vld [vmem:[%s897 + $0x10] sm:$0xf]
        %v903 = vld [vmem:[%s897 + $0x14] sm:$0xf]
        %v904 = vld [vmem:[%s897 + $0x18] sm:$0xf]
        %v905 = vld [vmem:[%s897 + $0x1c] sm:$0xf]
        %v906 = vld [vmem:[%s897 + $0x20] sm:$0xf]
        %v907 = vld [vmem:[%s897 + $0x24] sm:$0xf]
        %v908 = vld [vmem:[%s897 + $0x28] sm:$0xf]
        %v909 = vld [vmem:[%s897 + $0x2c] sm:$0xf]
        %v910 = vld [vmem:[%s897 + $0x30] sm:$0xf]
        %v911 = vld [vmem:[%s897 + $0x34] sm:$0xf]
        %v912 = vld [vmem:[%s897 + $0x38] sm:$0xf]
        %v913 = vld [vmem:[%s897 + $0x3c] sm:$0xf]
        %v922 = vunpack.c.l.b16 %v886
        %v923 = vunpack.c.l.b16 %v887
        %v924 = vunpack.c.l.b16 %v888
        %v925 = vunpack.c.l.b16 %v889
        %v926 = vunpack.c.l.b16 %v890
        %v927 = vunpack.c.l.b16 %v891
        %v928 = vunpack.c.l.b16 %v892
        %v929 = vunpack.c.l.b16 %v893
        %v930 = vpack.c.b16 %v923, %v922
        %v931 = vpack.c.b16 %v925, %v924
        %v932 = vpack.c.b16 %v927, %v926
        %v933 = vpack.c.b16 %v929, %v928
        %v954 = vunpack.c.l.b16 %v898
        %v955 = vunpack.c.l.b16 %v899
        %v956 = vunpack.c.l.b16 %v900
        %v957 = vunpack.c.l.b16 %v901
        %v958 = vunpack.c.l.b16 %v902
        %v959 = vunpack.c.l.b16 %v903
        %v960 = vunpack.c.l.b16 %v904
        %v961 = vunpack.c.l.b16 %v905
        %v962 = vunpack.c.l.b16 %v906
        %v963 = vunpack.c.l.b16 %v907
        %v964 = vunpack.c.l.b16 %v908
        %v965 = vunpack.c.l.b16 %v909
        %v966 = vunpack.c.l.b16 %v910
        %v967 = vunpack.c.l.b16 %v911
        %v968 = vunpack.c.l.b16 %v912
        %v969 = vunpack.c.l.b16 %v913
        %v970 = vpack.c.b16 %v955, %v954
        %v971 = vpack.c.b16 %v957, %v956
        %v972 = vpack.c.b16 %v959, %v958
        %v973 = vpack.c.b16 %v961, %v960
        %v974 = vpack.c.b16 %v963, %v962
        %v975 = vpack.c.b16 %v965, %v964
        %v976 = vpack.c.b16 %v967, %v966
        %v977 = vpack.c.b16 %v969, %v968
        %986 = vmatpush.bf16.msra.mxu0 %v977
        %987 = vmatpush.bf16.msra.mxu0 %v976
        %988 = vmatpush.bf16.msra.mxu0 %v975
        %989 = vmatpush.bf16.msra.mxu0 %v974
        %990 = vmatpush.bf16.msra.mxu0 %v973
        %991 = vmatpush.bf16.msra.mxu0 %v972
        %992 = vmatpush.bf16.msra.mxu0 %v971
        %993 = vmatpush.bf16.msra.mxu0 %v970
        %994 = vmatmul.bf16.gmra.mxu0 %v930
        %v995 = vpop.f32.mrf.mxu0
        %v996 = vadd.f32 0.0, %v995
        %v997 = vpop.f32.mrf.mxu0
        %v998 = vadd.f32 0.0, %v997
        %999 = vmatmul.bf16.gmra.mxu0 %v931
        %v1000 = vpop.f32.mrf.mxu0
        %v1001 = vadd.f32 0.0, %v1000
        %v1002 = vpop.f32.mrf.mxu0
        %v1003 = vadd.f32 0.0, %v1002
        %1004 = vmatmul.bf16.gmra.mxu0 %v932
        %v1005 = vpop.f32.mrf.mxu0
        %v1006 = vadd.f32 0.0, %v1005
        %v1007 = vpop.f32.mrf.mxu0
        %v1008 = vadd.f32 0.0, %v1007
        %1009 = vmatmul.bf16.gmra.mxu0 %v933
        %v1010 = vpop.f32.mrf.mxu0
        %v1011 = vadd.f32 0.0, %v1010
        %v1012 = vpop.f32.mrf.mxu0
        %v1013 = vadd.f32 0.0, %v1012
        %1014 = vdwg.mxu0
        %v1015 = vadd.f32 %v877, %v996
        %v1016 = vadd.f32 %v878, %v998
        %v1017 = vadd.f32 %v879, %v1001
        %v1018 = vadd.f32 %v880, %v1003
        %v1019 = vadd.f32 %v881, %v1006
        %v1020 = vadd.f32 %v882, %v1008
        %v1021 = vadd.f32 %v883, %v1011
        %v1022 = vadd.f32 %v884, %v1013
        %v1023 = vld [vmem:[%s885] sm:$0xf]
        %v1024 = vld [vmem:[%s885 + $0x4] sm:$0x1]
        %v1025 = vld [vmem:[%s885 + $0x8] sm:$0xf]
        %v1026 = vld [vmem:[%s885 + $0xc] sm:$0x1]
        %v1027 = vld [vmem:[%s885 + $0x10] sm:$0xf]
        %v1028 = vld [vmem:[%s885 + $0x14] sm:$0x1]
        %v1029 = vld [vmem:[%s885 + $0x18] sm:$0xf]
        %v1030 = vld [vmem:[%s885 + $0x1c] sm:$0x1]
        %v1031 = vld [vmem:[%s885 + $0x20] sm:$0xf]
        %v1032 = vld [vmem:[%s885 + $0x24] sm:$0x1]
        %v1033 = vld [vmem:[%s885 + $0x28] sm:$0xf]
        %v1034 = vld [vmem:[%s885 + $0x2c] sm:$0x1]
        %v1035 = vld [vmem:[%s885 + $0x30] sm:$0xf]
        %v1036 = vld [vmem:[%s885 + $0x34] sm:$0x1]
        %v1037 = vld [vmem:[%s885 + $0x38] sm:$0xf]
        %v1038 = vld [vmem:[%s885 + $0x3c] sm:$0x1]
        %v1040 = vshrl.u32 %v1023, 16
        %v1042 = vrot.slane %v1040, 4
        %v1043 = vshll.u32 %v1023, 16
        %v1045 = vrot.slane %v1043, 5
        %v1046 = vor.u32 %v1042, %v1045
        %v1047 = vrot.slane %v1046, 4
        %v1049 = vshll.u32 %v1024, 16
        %v1051 = vrot.slane %v1049, 5
        %v1052 = vsel %vm471, %v1047, %v1051
        %v1054 = vshrl.u32 %v1025, 16
        %v1056 = vrot.slane %v1054, 4
        %v1057 = vshll.u32 %v1025, 16
        %v1059 = vrot.slane %v1057, 5
        %v1060 = vor.u32 %v1056, %v1059
        %v1061 = vrot.slane %v1060, 4
        %v1063 = vshll.u32 %v1026, 16
        %v1065 = vrot.slane %v1063, 5
        %v1066 = vsel %vm471, %v1061, %v1065
        %v1068 = vshrl.u32 %v1027, 16
        %v1070 = vrot.slane %v1068, 4
        %v1071 = vshll.u32 %v1027, 16
        %v1073 = vrot.slane %v1071, 5
        %v1074 = vor.u32 %v1070, %v1073
        %v1075 = vrot.slane %v1074, 4
        %v1077 = vshll.u32 %v1028, 16
        %v1079 = vrot.slane %v1077, 5
        %v1080 = vsel %vm471, %v1075, %v1079
        %v1082 = vshrl.u32 %v1029, 16
        %v1084 = vrot.slane %v1082, 4
        %v1085 = vshll.u32 %v1029, 16
        %v1087 = vrot.slane %v1085, 5
        %v1088 = vor.u32 %v1084, %v1087
        %v1089 = vrot.slane %v1088, 4
        %v1091 = vshll.u32 %v1030, 16
        %v1093 = vrot.slane %v1091, 5
        %v1094 = vsel %vm471, %v1089, %v1093
        %v1096 = vshrl.u32 %v1031, 16
        %v1098 = vrot.slane %v1096, 4
        %v1099 = vshll.u32 %v1031, 16
        %v1101 = vrot.slane %v1099, 5
        %v1102 = vor.u32 %v1098, %v1101
        %v1103 = vrot.slane %v1102, 4
        %v1105 = vshll.u32 %v1032, 16
        %v1107 = vrot.slane %v1105, 5
        %v1108 = vsel %vm471, %v1103, %v1107
        %v1110 = vshrl.u32 %v1033, 16
        %v1112 = vrot.slane %v1110, 4
        %v1113 = vshll.u32 %v1033, 16
        %v1115 = vrot.slane %v1113, 5
        %v1116 = vor.u32 %v1112, %v1115
        %v1117 = vrot.slane %v1116, 4
        %v1119 = vshll.u32 %v1034, 16
        %v1121 = vrot.slane %v1119, 5
        %v1122 = vsel %vm471, %v1117, %v1121
        %v1124 = vshrl.u32 %v1035, 16
        %v1126 = vrot.slane %v1124, 4
        %v1127 = vshll.u32 %v1035, 16
        %v1129 = vrot.slane %v1127, 5
        %v1130 = vor.u32 %v1126, %v1129
        %v1131 = vrot.slane %v1130, 4
        %v1133 = vshll.u32 %v1036, 16
        %v1135 = vrot.slane %v1133, 5
        %v1136 = vsel %vm471, %v1131, %v1135
        %v1138 = vshrl.u32 %v1037, 16
        %v1140 = vrot.slane %v1138, 4
        %v1141 = vshll.u32 %v1037, 16
        %v1143 = vrot.slane %v1141, 5
        %v1144 = vor.u32 %v1140, %v1143
        %v1145 = vrot.slane %v1144, 4
        %v1147 = vshll.u32 %v1038, 16
        %v1149 = vrot.slane %v1147, 5
        %v1150 = vsel %vm471, %v1145, %v1149
        %s1151 = sadd.s32 %s324, 4
        %s1152 = smul.u32 %s1151, 16
        %s1153 = smul.addr %s1152, 4
        %s1154 = scalar_lea.vmem %s1, %s1153
        %v1155 = vld [vmem:[%s1154] sm:$0xf]
        %v1156 = vld [vmem:[%s1154 + $0x4] sm:$0xf]
        %v1157 = vld [vmem:[%s1154 + $0x8] sm:$0xf]
        %v1158 = vld [vmem:[%s1154 + $0xc] sm:$0xf]
        %v1159 = vld [vmem:[%s1154 + $0x10] sm:$0xf]
        %v1160 = vld [vmem:[%s1154 + $0x14] sm:$0xf]
        %v1161 = vld [vmem:[%s1154 + $0x18] sm:$0xf]
        %v1162 = vld [vmem:[%s1154 + $0x1c] sm:$0xf]
        %v1163 = vld [vmem:[%s1154 + $0x20] sm:$0xf]
        %v1164 = vld [vmem:[%s1154 + $0x24] sm:$0xf]
        %v1165 = vld [vmem:[%s1154 + $0x28] sm:$0xf]
        %v1166 = vld [vmem:[%s1154 + $0x2c] sm:$0xf]
        %v1167 = vld [vmem:[%s1154 + $0x30] sm:$0xf]
        %v1168 = vld [vmem:[%s1154 + $0x34] sm:$0xf]
        %v1169 = vld [vmem:[%s1154 + $0x38] sm:$0xf]
        %v1170 = vld [vmem:[%s1154 + $0x3c] sm:$0xf]
        %v1171 = vunpack.c.l.b16 %v1052
        %v1172 = vunpack.c.l.b16 %v1066
        %v1173 = vunpack.c.l.b16 %v1080
        %v1174 = vunpack.c.l.b16 %v1094
        %v1175 = vunpack.c.l.b16 %v1108
        %v1176 = vunpack.c.l.b16 %v1122
        %v1177 = vunpack.c.l.b16 %v1136
        %v1178 = vunpack.c.l.b16 %v1150
        %v1179 = vpack.c.b16 %v1172, %v1171
        %v1180 = vpack.c.b16 %v1174, %v1173
        %v1181 = vpack.c.b16 %v1176, %v1175
        %v1182 = vpack.c.b16 %v1178, %v1177
        %v1203 = vunpack.c.l.b16 %v1155
        %v1204 = vunpack.c.l.b16 %v1156
        %v1205 = vunpack.c.l.b16 %v1157
        %v1206 = vunpack.c.l.b16 %v1158
        %v1207 = vunpack.c.l.b16 %v1159
        %v1208 = vunpack.c.l.b16 %v1160
        %v1209 = vunpack.c.l.b16 %v1161
        %v1210 = vunpack.c.l.b16 %v1162
        %v1211 = vunpack.c.l.b16 %v1163
        %v1212 = vunpack.c.l.b16 %v1164
        %v1213 = vunpack.c.l.b16 %v1165
        %v1214 = vunpack.c.l.b16 %v1166
        %v1215 = vunpack.c.l.b16 %v1167
        %v1216 = vunpack.c.l.b16 %v1168
        %v1217 = vunpack.c.l.b16 %v1169
        %v1218 = vunpack.c.l.b16 %v1170
        %v1219 = vpack.c.b16 %v1204, %v1203
        %v1220 = vpack.c.b16 %v1206, %v1205
        %v1221 = vpack.c.b16 %v1208, %v1207
        %v1222 = vpack.c.b16 %v1210, %v1209
        %v1223 = vpack.c.b16 %v1212, %v1211
        %v1224 = vpack.c.b16 %v1214, %v1213
        %v1225 = vpack.c.b16 %v1216, %v1215
        %v1226 = vpack.c.b16 %v1218, %v1217
        %1235 = vmatpush.bf16.msra.mxu0 %v1226
        %1236 = vmatpush.bf16.msra.mxu0 %v1225
        %1237 = vmatpush.bf16.msra.mxu0 %v1224
        %1238 = vmatpush.bf16.msra.mxu0 %v1223
        %1239 = vmatpush.bf16.msra.mxu0 %v1222
        %1240 = vmatpush.bf16.msra.mxu0 %v1221
        %1241 = vmatpush.bf16.msra.mxu0 %v1220
        %1242 = vmatpush.bf16.msra.mxu0 %v1219
        %1243 = vmatmul.bf16.gmra.mxu0 %v1179
        %v1244 = vpop.f32.mrf.mxu0
        %v1245 = vadd.f32 0.0, %v1244
        %v1246 = vpop.f32.mrf.mxu0
        %v1247 = vadd.f32 0.0, %v1246
        %1248 = vmatmul.bf16.gmra.mxu0 %v1180
        %v1249 = vpop.f32.mrf.mxu0
        %v1250 = vadd.f32 0.0, %v1249
        %v1251 = vpop.f32.mrf.mxu0
        %v1252 = vadd.f32 0.0, %v1251
        %1253 = vmatmul.bf16.gmra.mxu0 %v1181
        %v1254 = vpop.f32.mrf.mxu0
        %v1255 = vadd.f32 0.0, %v1254
        %v1256 = vpop.f32.mrf.mxu0
        %v1257 = vadd.f32 0.0, %v1256
        %1258 = vmatmul.bf16.gmra.mxu0 %v1182
        %v1259 = vpop.f32.mrf.mxu0
        %v1260 = vadd.f32 0.0, %v1259
        %v1261 = vpop.f32.mrf.mxu0
        %v1262 = vadd.f32 0.0, %v1261
        %1263 = vdwg.mxu0
        %v1264 = vadd.f32 %v1015, %v1245
        %v1265 = vadd.f32 %v1016, %v1247
        %v1266 = vadd.f32 %v1017, %v1250
        %v1267 = vadd.f32 %v1018, %v1252
        %v1268 = vadd.f32 %v1019, %v1255
        %v1269 = vadd.f32 %v1020, %v1257
        %v1270 = vadd.f32 %v1021, %v1260
        %v1271 = vadd.f32 %v1022, %v1262
        %v1272 = vld [vmem:[%s885] sm:$0xe]
        %v1273 = vld [vmem:[%s885 + $0x8] sm:$0xe]
        %v1274 = vld [vmem:[%s885 + $0x10] sm:$0xe]
        %v1275 = vld [vmem:[%s885 + $0x18] sm:$0xe]
        %v1276 = vld [vmem:[%s885 + $0x20] sm:$0xe]
        %v1277 = vld [vmem:[%s885 + $0x28] sm:$0xe]
        %v1278 = vld [vmem:[%s885 + $0x30] sm:$0xe]
        %v1279 = vld [vmem:[%s885 + $0x38] sm:$0xe]
        %v1296 = vrot.slane %v1272, 5
        %v1297 = vrot.slane %v1296, 4
        %v1298 = vrot.slane %v1024, 5
        %v1299 = vsel %vm731, %v1297, %v1298
        %v1300 = vrot.slane %v1273, 5
        %v1301 = vrot.slane %v1300, 4
        %v1302 = vrot.slane %v1026, 5
        %v1303 = vsel %vm731, %v1301, %v1302
        %v1304 = vrot.slane %v1274, 5
        %v1305 = vrot.slane %v1304, 4
        %v1306 = vrot.slane %v1028, 5
        %v1307 = vsel %vm731, %v1305, %v1306
        %v1308 = vrot.slane %v1275, 5
        %v1309 = vrot.slane %v1308, 4
        %v1310 = vrot.slane %v1030, 5
        %v1311 = vsel %vm731, %v1309, %v1310
        %v1312 = vrot.slane %v1276, 5
        %v1313 = vrot.slane %v1312, 4
        %v1314 = vrot.slane %v1032, 5
        %v1315 = vsel %vm731, %v1313, %v1314
        %v1316 = vrot.slane %v1277, 5
        %v1317 = vrot.slane %v1316, 4
        %v1318 = vrot.slane %v1034, 5
        %v1319 = vsel %vm731, %v1317, %v1318
        %v1320 = vrot.slane %v1278, 5
        %v1321 = vrot.slane %v1320, 4
        %v1322 = vrot.slane %v1036, 5
        %v1323 = vsel %vm731, %v1321, %v1322
        %v1324 = vrot.slane %v1279, 5
        %v1325 = vrot.slane %v1324, 4
        %v1326 = vrot.slane %v1038, 5
        %v1327 = vsel %vm731, %v1325, %v1326
        %s1328 = sadd.s32 %s324, 5
        %s1329 = smul.u32 %s1328, 16
        %s1330 = smul.addr %s1329, 4
        %s1331 = scalar_lea.vmem %s1, %s1330
        %v1332 = vld [vmem:[%s1331] sm:$0xf]
        %v1333 = vld [vmem:[%s1331 + $0x4] sm:$0xf]
        %v1334 = vld [vmem:[%s1331 + $0x8] sm:$0xf]
        %v1335 = vld [vmem:[%s1331 + $0xc] sm:$0xf]
        %v1336 = vld [vmem:[%s1331 + $0x10] sm:$0xf]
        %v1337 = vld [vmem:[%s1331 + $0x14] sm:$0xf]
        %v1338 = vld [vmem:[%s1331 + $0x18] sm:$0xf]
        %v1339 = vld [vmem:[%s1331 + $0x1c] sm:$0xf]
        %v1340 = vld [vmem:[%s1331 + $0x20] sm:$0xf]
        %v1341 = vld [vmem:[%s1331 + $0x24] sm:$0xf]
        %v1342 = vld [vmem:[%s1331 + $0x28] sm:$0xf]
        %v1343 = vld [vmem:[%s1331 + $0x2c] sm:$0xf]
        %v1344 = vld [vmem:[%s1331 + $0x30] sm:$0xf]
        %v1345 = vld [vmem:[%s1331 + $0x34] sm:$0xf]
        %v1346 = vld [vmem:[%s1331 + $0x38] sm:$0xf]
        %v1347 = vld [vmem:[%s1331 + $0x3c] sm:$0xf]
        %v1348 = vunpack.c.l.b16 %v1299
        %v1349 = vunpack.c.l.b16 %v1303
        %v1350 = vunpack.c.l.b16 %v1307
        %v1351 = vunpack.c.l.b16 %v1311
        %v1352 = vunpack.c.l.b16 %v1315
        %v1353 = vunpack.c.l.b16 %v1319
        %v1354 = vunpack.c.l.b16 %v1323
        %v1355 = vunpack.c.l.b16 %v1327
        %v1356 = vpack.c.b16 %v1349, %v1348
        %v1357 = vpack.c.b16 %v1351, %v1350
        %v1358 = vpack.c.b16 %v1353, %v1352
        %v1359 = vpack.c.b16 %v1355, %v1354
        %v1380 = vunpack.c.l.b16 %v1332
        %v1381 = vunpack.c.l.b16 %v1333
        %v1382 = vunpack.c.l.b16 %v1334
        %v1383 = vunpack.c.l.b16 %v1335
        %v1384 = vunpack.c.l.b16 %v1336
        %v1385 = vunpack.c.l.b16 %v1337
        %v1386 = vunpack.c.l.b16 %v1338
        %v1387 = vunpack.c.l.b16 %v1339
        %v1388 = vunpack.c.l.b16 %v1340
        %v1389 = vunpack.c.l.b16 %v1341
        %v1390 = vunpack.c.l.b16 %v1342
        %v1391 = vunpack.c.l.b16 %v1343
        %v1392 = vunpack.c.l.b16 %v1344
        %v1393 = vunpack.c.l.b16 %v1345
        %v1394 = vunpack.c.l.b16 %v1346
        %v1395 = vunpack.c.l.b16 %v1347
        %v1396 = vpack.c.b16 %v1381, %v1380
        %v1397 = vpack.c.b16 %v1383, %v1382
        %v1398 = vpack.c.b16 %v1385, %v1384
        %v1399 = vpack.c.b16 %v1387, %v1386
        %v1400 = vpack.c.b16 %v1389, %v1388
        %v1401 = vpack.c.b16 %v1391, %v1390
        %v1402 = vpack.c.b16 %v1393, %v1392
        %v1403 = vpack.c.b16 %v1395, %v1394
        %1412 = vmatpush.bf16.msra.mxu0 %v1403
        %1413 = vmatpush.bf16.msra.mxu0 %v1402
        %1414 = vmatpush.bf16.msra.mxu0 %v1401
        %1415 = vmatpush.bf16.msra.mxu0 %v1400
        %1416 = vmatpush.bf16.msra.mxu0 %v1399
        %1417 = vmatpush.bf16.msra.mxu0 %v1398
        %1418 = vmatpush.bf16.msra.mxu0 %v1397
        %1419 = vmatpush.bf16.msra.mxu0 %v1396
        %1420 = vmatmul.bf16.gmra.mxu0 %v1356
        %v1421 = vpop.f32.mrf.mxu0
        %v1422 = vadd.f32 0.0, %v1421
        %v1423 = vpop.f32.mrf.mxu0
        %v1424 = vadd.f32 0.0, %v1423
        %1425 = vmatmul.bf16.gmra.mxu0 %v1357
        %v1426 = vpop.f32.mrf.mxu0
        %v1427 = vadd.f32 0.0, %v1426
        %v1428 = vpop.f32.mrf.mxu0
        %v1429 = vadd.f32 0.0, %v1428
        %1430 = vmatmul.bf16.gmra.mxu0 %v1358
        %v1431 = vpop.f32.mrf.mxu0
        %v1432 = vadd.f32 0.0, %v1431
        %v1433 = vpop.f32.mrf.mxu0
        %v1434 = vadd.f32 0.0, %v1433
        %1435 = vmatmul.bf16.gmra.mxu0 %v1359
        %v1436 = vpop.f32.mrf.mxu0
        %v1437 = vadd.f32 0.0, %v1436
        %v1438 = vpop.f32.mrf.mxu0
        %v1439 = vadd.f32 0.0, %v1438
        %1440 = vdwg.mxu0
        %v1441 = vadd.f32 %v1264, %v1422
        %v1442 = vadd.f32 %v1265, %v1424
        %v1443 = vadd.f32 %v1266, %v1427
        %v1444 = vadd.f32 %v1267, %v1429
        %v1445 = vadd.f32 %v1268, %v1432
        %v1446 = vadd.f32 %v1269, %v1434
        %v1447 = vadd.f32 %v1270, %v1437
        %v1448 = vadd.f32 %v1271, %v1439
        %s1449 = scalar_lea.vmem %s267, 16
        %v1450 = vld [vmem:[%s1449] sm:$0xf]
        %v1451 = vld [vmem:[%s1449 + $0x8] sm:$0xf]
        %v1452 = vld [vmem:[%s1449 + $0x10] sm:$0xf]
        %v1453 = vld [vmem:[%s1449 + $0x18] sm:$0xf]
        %v1454 = vld [vmem:[%s1449 + $0x20] sm:$0xf]
        %v1455 = vld [vmem:[%s1449 + $0x28] sm:$0xf]
        %v1456 = vld [vmem:[%s1449 + $0x30] sm:$0xf]
        %v1457 = vld [vmem:[%s1449 + $0x38] sm:$0xf]
        %s1458 = sadd.s32 %s324, 6
        %s1459 = smul.u32 %s1458, 16
        %s1460 = smul.addr %s1459, 4
        %s1461 = scalar_lea.vmem %s1, %s1460
        %v1462 = vld [vmem:[%s1461] sm:$0xf]
        %v1463 = vld [vmem:[%s1461 + $0x4] sm:$0xf]
        %v1464 = vld [vmem:[%s1461 + $0x8] sm:$0xf]
        %v1465 = vld [vmem:[%s1461 + $0xc] sm:$0xf]
        %v1466 = vld [vmem:[%s1461 + $0x10] sm:$0xf]
        %v1467 = vld [vmem:[%s1461 + $0x14] sm:$0xf]
        %v1468 = vld [vmem:[%s1461 + $0x18] sm:$0xf]
        %v1469 = vld [vmem:[%s1461 + $0x1c] sm:$0xf]
        %v1470 = vld [vmem:[%s1461 + $0x20] sm:$0xf]
        %v1471 = vld [vmem:[%s1461 + $0x24] sm:$0xf]
        %v1472 = vld [vmem:[%s1461 + $0x28] sm:$0xf]
        %v1473 = vld [vmem:[%s1461 + $0x2c] sm:$0xf]
        %v1474 = vld [vmem:[%s1461 + $0x30] sm:$0xf]
        %v1475 = vld [vmem:[%s1461 + $0x34] sm:$0xf]
        %v1476 = vld [vmem:[%s1461 + $0x38] sm:$0xf]
        %v1477 = vld [vmem:[%s1461 + $0x3c] sm:$0xf]
        %v1486 = vunpack.c.l.b16 %v1450
        %v1487 = vunpack.c.l.b16 %v1451
        %v1488 = vunpack.c.l.b16 %v1452
        %v1489 = vunpack.c.l.b16 %v1453
        %v1490 = vunpack.c.l.b16 %v1454
        %v1491 = vunpack.c.l.b16 %v1455
        %v1492 = vunpack.c.l.b16 %v1456
        %v1493 = vunpack.c.l.b16 %v1457
        %v1494 = vpack.c.b16 %v1487, %v1486
        %v1495 = vpack.c.b16 %v1489, %v1488
        %v1496 = vpack.c.b16 %v1491, %v1490
        %v1497 = vpack.c.b16 %v1493, %v1492
        %v1518 = vunpack.c.l.b16 %v1462
        %v1519 = vunpack.c.l.b16 %v1463
        %v1520 = vunpack.c.l.b16 %v1464
        %v1521 = vunpack.c.l.b16 %v1465
        %v1522 = vunpack.c.l.b16 %v1466
        %v1523 = vunpack.c.l.b16 %v1467
        %v1524 = vunpack.c.l.b16 %v1468
        %v1525 = vunpack.c.l.b16 %v1469
        %v1526 = vunpack.c.l.b16 %v1470
        %v1527 = vunpack.c.l.b16 %v1471
        %v1528 = vunpack.c.l.b16 %v1472
        %v1529 = vunpack.c.l.b16 %v1473
        %v1530 = vunpack.c.l.b16 %v1474
        %v1531 = vunpack.c.l.b16 %v1475
        %v1532 = vunpack.c.l.b16 %v1476
        %v1533 = vunpack.c.l.b16 %v1477
        %v1534 = vpack.c.b16 %v1519, %v1518
        %v1535 = vpack.c.b16 %v1521, %v1520
        %v1536 = vpack.c.b16 %v1523, %v1522
        %v1537 = vpack.c.b16 %v1525, %v1524
        %v1538 = vpack.c.b16 %v1527, %v1526
        %v1539 = vpack.c.b16 %v1529, %v1528
        %v1540 = vpack.c.b16 %v1531, %v1530
        %v1541 = vpack.c.b16 %v1533, %v1532
        %1550 = vmatpush.bf16.msra.mxu0 %v1541
        %1551 = vmatpush.bf16.msra.mxu0 %v1540
        %1552 = vmatpush.bf16.msra.mxu0 %v1539
        %1553 = vmatpush.bf16.msra.mxu0 %v1538
        %1554 = vmatpush.bf16.msra.mxu0 %v1537
        %1555 = vmatpush.bf16.msra.mxu0 %v1536
        %1556 = vmatpush.bf16.msra.mxu0 %v1535
        %1557 = vmatpush.bf16.msra.mxu0 %v1534
        %1558 = vmatmul.bf16.gmra.mxu0 %v1494
        %v1559 = vpop.f32.mrf.mxu0
        %v1560 = vadd.f32 0.0, %v1559
        %v1561 = vpop.f32.mrf.mxu0
        %v1562 = vadd.f32 0.0, %v1561
        %1563 = vmatmul.bf16.gmra.mxu0 %v1495
        %v1564 = vpop.f32.mrf.mxu0
        %v1565 = vadd.f32 0.0, %v1564
        %v1566 = vpop.f32.mrf.mxu0
        %v1567 = vadd.f32 0.0, %v1566
        %1568 = vmatmul.bf16.gmra.mxu0 %v1496
        %v1569 = vpop.f32.mrf.mxu0
        %v1570 = vadd.f32 0.0, %v1569
        %v1571 = vpop.f32.mrf.mxu0
        %v1572 = vadd.f32 0.0, %v1571
        %1573 = vmatmul.bf16.gmra.mxu0 %v1497
        %v1574 = vpop.f32.mrf.mxu0
        %v1575 = vadd.f32 0.0, %v1574
        %v1576 = vpop.f32.mrf.mxu0
        %v1577 = vadd.f32 0.0, %v1576
        %1578 = vdwg.mxu0
        %v1579 = vadd.f32 %v1441, %v1560
        %v1580 = vadd.f32 %v1442, %v1562
        %v1581 = vadd.f32 %v1443, %v1565
        %v1582 = vadd.f32 %v1444, %v1567
        %v1583 = vadd.f32 %v1445, %v1570
        %v1584 = vadd.f32 %v1446, %v1572
        %v1585 = vadd.f32 %v1447, %v1575
        %v1586 = vadd.f32 %v1448, %v1577
        %v1587 = vld [vmem:[%s1449] sm:$0xf]
        %v1588 = vld [vmem:[%s1449 + $0x4] sm:$0x1]
        %v1589 = vld [vmem:[%s1449 + $0x8] sm:$0xf]
        %v1590 = vld [vmem:[%s1449 + $0xc] sm:$0x1]
        %v1591 = vld [vmem:[%s1449 + $0x10] sm:$0xf]
        %v1592 = vld [vmem:[%s1449 + $0x14] sm:$0x1]
        %v1593 = vld [vmem:[%s1449 + $0x18] sm:$0xf]
        %v1594 = vld [vmem:[%s1449 + $0x1c] sm:$0x1]
        %v1595 = vld [vmem:[%s1449 + $0x20] sm:$0xf]
        %v1596 = vld [vmem:[%s1449 + $0x24] sm:$0x1]
        %v1597 = vld [vmem:[%s1449 + $0x28] sm:$0xf]
        %v1598 = vld [vmem:[%s1449 + $0x2c] sm:$0x1]
        %v1599 = vld [vmem:[%s1449 + $0x30] sm:$0xf]
        %v1600 = vld [vmem:[%s1449 + $0x34] sm:$0x1]
        %v1601 = vld [vmem:[%s1449 + $0x38] sm:$0xf]
        %v1602 = vld [vmem:[%s1449 + $0x3c] sm:$0x1]
        %v1604 = vshrl.u32 %v1587, 16
        %v1606 = vrot.slane %v1604, 4
        %v1607 = vshll.u32 %v1587, 16
        %v1609 = vrot.slane %v1607, 5
        %v1610 = vor.u32 %v1606, %v1609
        %v1611 = vrot.slane %v1610, 4
        %v1613 = vshll.u32 %v1588, 16
        %v1615 = vrot.slane %v1613, 5
        %v1616 = vsel %vm471, %v1611, %v1615
        %v1618 = vshrl.u32 %v1589, 16
        %v1620 = vrot.slane %v1618, 4
        %v1621 = vshll.u32 %v1589, 16
        %v1623 = vrot.slane %v1621, 5
        %v1624 = vor.u32 %v1620, %v1623
        %v1625 = vrot.slane %v1624, 4
        %v1627 = vshll.u32 %v1590, 16
        %v1629 = vrot.slane %v1627, 5
        %v1630 = vsel %vm471, %v1625, %v1629
        %v1632 = vshrl.u32 %v1591, 16
        %v1634 = vrot.slane %v1632, 4
        %v1635 = vshll.u32 %v1591, 16
        %v1637 = vrot.slane %v1635, 5
        %v1638 = vor.u32 %v1634, %v1637
        %v1639 = vrot.slane %v1638, 4
        %v1641 = vshll.u32 %v1592, 16
        %v1643 = vrot.slane %v1641, 5
        %v1644 = vsel %vm471, %v1639, %v1643
        %v1646 = vshrl.u32 %v1593, 16
        %v1648 = vrot.slane %v1646, 4
        %v1649 = vshll.u32 %v1593, 16
        %v1651 = vrot.slane %v1649, 5
        %v1652 = vor.u32 %v1648, %v1651
        %v1653 = vrot.slane %v1652, 4
        %v1655 = vshll.u32 %v1594, 16
        %v1657 = vrot.slane %v1655, 5
        %v1658 = vsel %vm471, %v1653, %v1657
        %v1660 = vshrl.u32 %v1595, 16
        %v1662 = vrot.slane %v1660, 4
        %v1663 = vshll.u32 %v1595, 16
        %v1665 = vrot.slane %v1663, 5
        %v1666 = vor.u32 %v1662, %v1665
        %v1667 = vrot.slane %v1666, 4
        %v1669 = vshll.u32 %v1596, 16
        %v1671 = vrot.slane %v1669, 5
        %v1672 = vsel %vm471, %v1667, %v1671
        %v1674 = vshrl.u32 %v1597, 16
        %v1676 = vrot.slane %v1674, 4
        %v1677 = vshll.u32 %v1597, 16
        %v1679 = vrot.slane %v1677, 5
        %v1680 = vor.u32 %v1676, %v1679
        %v1681 = vrot.slane %v1680, 4
        %v1683 = vshll.u32 %v1598, 16
        %v1685 = vrot.slane %v1683, 5
        %v1686 = vsel %vm471, %v1681, %v1685
        %v1688 = vshrl.u32 %v1599, 16
        %v1690 = vrot.slane %v1688, 4
        %v1691 = vshll.u32 %v1599, 16
        %v1693 = vrot.slane %v1691, 5
        %v1694 = vor.u32 %v1690, %v1693
        %v1695 = vrot.slane %v1694, 4
        %v1697 = vshll.u32 %v1600, 16
        %v1699 = vrot.slane %v1697, 5
        %v1700 = vsel %vm471, %v1695, %v1699
        %v1702 = vshrl.u32 %v1601, 16
        %v1704 = vrot.slane %v1702, 4
        %v1705 = vshll.u32 %v1601, 16
        %v1707 = vrot.slane %v1705, 5
        %v1708 = vor.u32 %v1704, %v1707
        %v1709 = vrot.slane %v1708, 4
        %v1711 = vshll.u32 %v1602, 16
        %v1713 = vrot.slane %v1711, 5
        %v1714 = vsel %vm471, %v1709, %v1713
        %s1715 = sadd.s32 %s324, 7
        %s1716 = smul.u32 %s1715, 16
        %s1717 = smul.addr %s1716, 4
        %s1718 = scalar_lea.vmem %s1, %s1717
        %v1719 = vld [vmem:[%s1718] sm:$0xf]
        %v1720 = vld [vmem:[%s1718 + $0x4] sm:$0xf]
        %v1721 = vld [vmem:[%s1718 + $0x8] sm:$0xf]
        %v1722 = vld [vmem:[%s1718 + $0xc] sm:$0xf]
        %v1723 = vld [vmem:[%s1718 + $0x10] sm:$0xf]
        %v1724 = vld [vmem:[%s1718 + $0x14] sm:$0xf]
        %v1725 = vld [vmem:[%s1718 + $0x18] sm:$0xf]
        %v1726 = vld [vmem:[%s1718 + $0x1c] sm:$0xf]
        %v1727 = vld [vmem:[%s1718 + $0x20] sm:$0xf]
        %v1728 = vld [vmem:[%s1718 + $0x24] sm:$0xf]
        %v1729 = vld [vmem:[%s1718 + $0x28] sm:$0xf]
        %v1730 = vld [vmem:[%s1718 + $0x2c] sm:$0xf]
        %v1731 = vld [vmem:[%s1718 + $0x30] sm:$0xf]
        %v1732 = vld [vmem:[%s1718 + $0x34] sm:$0xf]
        %v1733 = vld [vmem:[%s1718 + $0x38] sm:$0xf]
        %v1734 = vld [vmem:[%s1718 + $0x3c] sm:$0xf]
        %v1735 = vunpack.c.l.b16 %v1616
        %v1736 = vunpack.c.l.b16 %v1630
        %v1737 = vunpack.c.l.b16 %v1644
        %v1738 = vunpack.c.l.b16 %v1658
        %v1739 = vunpack.c.l.b16 %v1672
        %v1740 = vunpack.c.l.b16 %v1686
        %v1741 = vunpack.c.l.b16 %v1700
        %v1742 = vunpack.c.l.b16 %v1714
        %v1743 = vpack.c.b16 %v1736, %v1735
        %v1744 = vpack.c.b16 %v1738, %v1737
        %v1745 = vpack.c.b16 %v1740, %v1739
        %v1746 = vpack.c.b16 %v1742, %v1741
        %v1767 = vunpack.c.l.b16 %v1719
        %v1768 = vunpack.c.l.b16 %v1720
        %v1769 = vunpack.c.l.b16 %v1721
        %v1770 = vunpack.c.l.b16 %v1722
        %v1771 = vunpack.c.l.b16 %v1723
        %v1772 = vunpack.c.l.b16 %v1724
        %v1773 = vunpack.c.l.b16 %v1725
        %v1774 = vunpack.c.l.b16 %v1726
        %v1775 = vunpack.c.l.b16 %v1727
        %v1776 = vunpack.c.l.b16 %v1728
        %v1777 = vunpack.c.l.b16 %v1729
        %v1778 = vunpack.c.l.b16 %v1730
        %v1779 = vunpack.c.l.b16 %v1731
        %v1780 = vunpack.c.l.b16 %v1732
        %v1781 = vunpack.c.l.b16 %v1733
        %v1782 = vunpack.c.l.b16 %v1734
        %v1783 = vpack.c.b16 %v1768, %v1767
        %v1784 = vpack.c.b16 %v1770, %v1769
        %v1785 = vpack.c.b16 %v1772, %v1771
        %v1786 = vpack.c.b16 %v1774, %v1773
        %v1787 = vpack.c.b16 %v1776, %v1775
        %v1788 = vpack.c.b16 %v1778, %v1777
        %v1789 = vpack.c.b16 %v1780, %v1779
        %v1790 = vpack.c.b16 %v1782, %v1781
        %1799 = vmatpush.bf16.msra.mxu0 %v1790
        %1800 = vmatpush.bf16.msra.mxu0 %v1789
        %1801 = vmatpush.bf16.msra.mxu0 %v1788
        %1802 = vmatpush.bf16.msra.mxu0 %v1787
        %1803 = vmatpush.bf16.msra.mxu0 %v1786
        %1804 = vmatpush.bf16.msra.mxu0 %v1785
        %1805 = vmatpush.bf16.msra.mxu0 %v1784
        %1806 = vmatpush.bf16.msra.mxu0 %v1783
        %1807 = vmatmul.bf16.gmra.mxu0 %v1743
        %v1808 = vpop.f32.mrf.mxu0
        %v1809 = vadd.f32 0.0, %v1808
        %v1810 = vpop.f32.mrf.mxu0
        %v1811 = vadd.f32 0.0, %v1810
        %1812 = vmatmul.bf16.gmra.mxu0 %v1744
        %v1813 = vpop.f32.mrf.mxu0
        %v1814 = vadd.f32 0.0, %v1813
        %v1815 = vpop.f32.mrf.mxu0
        %v1816 = vadd.f32 0.0, %v1815
        %1817 = vmatmul.bf16.gmra.mxu0 %v1745
        %v1818 = vpop.f32.mrf.mxu0
        %v1819 = vadd.f32 0.0, %v1818
        %v1820 = vpop.f32.mrf.mxu0
        %v1821 = vadd.f32 0.0, %v1820
        %1822 = vmatmul.bf16.gmra.mxu0 %v1746
        %v1823 = vpop.f32.mrf.mxu0
        %v1824 = vadd.f32 0.0, %v1823
        %v1825 = vpop.f32.mrf.mxu0
        %v1826 = vadd.f32 0.0, %v1825
        %1827 = vdwg.mxu0
        %v1828 = vadd.f32 %v1579, %v1809
        %v1829 = vadd.f32 %v1580, %v1811
        %v1830 = vadd.f32 %v1581, %v1814
        %v1831 = vadd.f32 %v1582, %v1816
        %v1832 = vadd.f32 %v1583, %v1819
        %v1833 = vadd.f32 %v1584, %v1821
        %v1834 = vadd.f32 %v1585, %v1824
        %v1835 = vadd.f32 %v1586, %v1826
        %v1836 = vld [vmem:[%s1449] sm:$0xe]
        %v1837 = vld [vmem:[%s1449 + $0x8] sm:$0xe]
        %v1838 = vld [vmem:[%s1449 + $0x10] sm:$0xe]
        %v1839 = vld [vmem:[%s1449 + $0x18] sm:$0xe]
        %v1840 = vld [vmem:[%s1449 + $0x20] sm:$0xe]
        %v1841 = vld [vmem:[%s1449 + $0x28] sm:$0xe]
        %v1842 = vld [vmem:[%s1449 + $0x30] sm:$0xe]
        %v1843 = vld [vmem:[%s1449 + $0x38] sm:$0xe]
        %v1860 = vrot.slane %v1836, 5
        %v1861 = vrot.slane %v1860, 4
        %v1862 = vrot.slane %v1588, 5
        %v1863 = vsel %vm731, %v1861, %v1862
        %v1864 = vrot.slane %v1837, 5
        %v1865 = vrot.slane %v1864, 4
        %v1866 = vrot.slane %v1590, 5
        %v1867 = vsel %vm731, %v1865, %v1866
        %v1868 = vrot.slane %v1838, 5
        %v1869 = vrot.slane %v1868, 4
        %v1870 = vrot.slane %v1592, 5
        %v1871 = vsel %vm731, %v1869, %v1870
        %v1872 = vrot.slane %v1839, 5
        %v1873 = vrot.slane %v1872, 4
        %v1874 = vrot.slane %v1594, 5
        %v1875 = vsel %vm731, %v1873, %v1874
        %v1876 = vrot.slane %v1840, 5
        %v1877 = vrot.slane %v1876, 4
        %v1878 = vrot.slane %v1596, 5
        %v1879 = vsel %vm731, %v1877, %v1878
        %v1880 = vrot.slane %v1841, 5
        %v1881 = vrot.slane %v1880, 4
        %v1882 = vrot.slane %v1598, 5
        %v1883 = vsel %vm731, %v1881, %v1882
        %v1884 = vrot.slane %v1842, 5
        %v1885 = vrot.slane %v1884, 4
        %v1886 = vrot.slane %v1600, 5
        %v1887 = vsel %vm731, %v1885, %v1886
        %v1888 = vrot.slane %v1843, 5
        %v1889 = vrot.slane %v1888, 4
        %v1890 = vrot.slane %v1602, 5
        %v1891 = vsel %vm731, %v1889, %v1890
        %s1892 = sadd.s32 %s324, 8
        %s1893 = smul.u32 %s1892, 16
        %s1894 = smul.addr %s1893, 4
        %s1895 = scalar_lea.vmem %s1, %s1894
        %v1896 = vld [vmem:[%s1895] sm:$0xf]
        %v1897 = vld [vmem:[%s1895 + $0x4] sm:$0xf]
        %v1898 = vld [vmem:[%s1895 + $0x8] sm:$0xf]
        %v1899 = vld [vmem:[%s1895 + $0xc] sm:$0xf]
        %v1900 = vld [vmem:[%s1895 + $0x10] sm:$0xf]
        %v1901 = vld [vmem:[%s1895 + $0x14] sm:$0xf]
        %v1902 = vld [vmem:[%s1895 + $0x18] sm:$0xf]
        %v1903 = vld [vmem:[%s1895 + $0x1c] sm:$0xf]
        %v1904 = vld [vmem:[%s1895 + $0x20] sm:$0xf]
        %v1905 = vld [vmem:[%s1895 + $0x24] sm:$0xf]
        %v1906 = vld [vmem:[%s1895 + $0x28] sm:$0xf]
        %v1907 = vld [vmem:[%s1895 + $0x2c] sm:$0xf]
        %v1908 = vld [vmem:[%s1895 + $0x30] sm:$0xf]
        %v1909 = vld [vmem:[%s1895 + $0x34] sm:$0xf]
        %v1910 = vld [vmem:[%s1895 + $0x38] sm:$0xf]
        %v1911 = vld [vmem:[%s1895 + $0x3c] sm:$0xf]
        %v1912 = vunpack.c.l.b16 %v1863
        %v1913 = vunpack.c.l.b16 %v1867
        %v1914 = vunpack.c.l.b16 %v1871
        %v1915 = vunpack.c.l.b16 %v1875
        %v1916 = vunpack.c.l.b16 %v1879
        %v1917 = vunpack.c.l.b16 %v1883
        %v1918 = vunpack.c.l.b16 %v1887
        %v1919 = vunpack.c.l.b16 %v1891
        %v1920 = vpack.c.b16 %v1913, %v1912
        %v1921 = vpack.c.b16 %v1915, %v1914
        %v1922 = vpack.c.b16 %v1917, %v1916
        %v1923 = vpack.c.b16 %v1919, %v1918
        %v1944 = vunpack.c.l.b16 %v1896
        %v1945 = vunpack.c.l.b16 %v1897
        %v1946 = vunpack.c.l.b16 %v1898
        %v1947 = vunpack.c.l.b16 %v1899
        %v1948 = vunpack.c.l.b16 %v1900
        %v1949 = vunpack.c.l.b16 %v1901
        %v1950 = vunpack.c.l.b16 %v1902
        %v1951 = vunpack.c.l.b16 %v1903
        %v1952 = vunpack.c.l.b16 %v1904
        %v1953 = vunpack.c.l.b16 %v1905
        %v1954 = vunpack.c.l.b16 %v1906
        %v1955 = vunpack.c.l.b16 %v1907
        %v1956 = vunpack.c.l.b16 %v1908
        %v1957 = vunpack.c.l.b16 %v1909
        %v1958 = vunpack.c.l.b16 %v1910
        %v1959 = vunpack.c.l.b16 %v1911
        %v1960 = vpack.c.b16 %v1945, %v1944
        %v1961 = vpack.c.b16 %v1947, %v1946
        %v1962 = vpack.c.b16 %v1949, %v1948
        %v1963 = vpack.c.b16 %v1951, %v1950
        %v1964 = vpack.c.b16 %v1953, %v1952
        %v1965 = vpack.c.b16 %v1955, %v1954
        %v1966 = vpack.c.b16 %v1957, %v1956
        %v1967 = vpack.c.b16 %v1959, %v1958
        %1976 = vmatpush.bf16.msra.mxu0 %v1967
        %1977 = vmatpush.bf16.msra.mxu0 %v1966
        %1978 = vmatpush.bf16.msra.mxu0 %v1965
        %1979 = vmatpush.bf16.msra.mxu0 %v1964
        %1980 = vmatpush.bf16.msra.mxu0 %v1963
        %1981 = vmatpush.bf16.msra.mxu0 %v1962
        %1982 = vmatpush.bf16.msra.mxu0 %v1961
        %1983 = vmatpush.bf16.msra.mxu0 %v1960
        %1984 = vmatmul.bf16.gmra.mxu0 %v1920
        %v1985 = vpop.f32.mrf.mxu0
        %v1986 = vadd.f32 0.0, %v1985
        %v1987 = vpop.f32.mrf.mxu0
        %v1988 = vadd.f32 0.0, %v1987
        %1989 = vmatmul.bf16.gmra.mxu0 %v1921
        %v1990 = vpop.f32.mrf.mxu0
        %v1991 = vadd.f32 0.0, %v1990
        %v1992 = vpop.f32.mrf.mxu0
        %v1993 = vadd.f32 0.0, %v1992
        %1994 = vmatmul.bf16.gmra.mxu0 %v1922
        %v1995 = vpop.f32.mrf.mxu0
        %v1996 = vadd.f32 0.0, %v1995
        %v1997 = vpop.f32.mrf.mxu0
        %v1998 = vadd.f32 0.0, %v1997
        %1999 = vmatmul.bf16.gmra.mxu0 %v1923
        %v2000 = vpop.f32.mrf.mxu0
        %v2001 = vadd.f32 0.0, %v2000
        %v2002 = vpop.f32.mrf.mxu0
        %v2003 = vadd.f32 0.0, %v2002
        %2004 = vdwg.mxu0
        %v2005 = vadd.f32 %v1828, %v1986
        %v2006 = vadd.f32 %v1829, %v1988
        %v2007 = vadd.f32 %v1830, %v1991
        %v2008 = vadd.f32 %v1831, %v1993
        %v2009 = vadd.f32 %v1832, %v1996
        %v2010 = vadd.f32 %v1833, %v1998
        %v2011 = vadd.f32 %v1834, %v2001
        %v2012 = vadd.f32 %v1835, %v2003
        %2013 = vst [vmem:[#allocation2] sm:$0xff] %v2005
        %2014 = vst [vmem:[#allocation2 + $0x8] sm:$0xff] %v2006
        %2015 = vst [vmem:[#allocation2 + $0x10] sm:$0xff] %v2007
        %2016 = vst [vmem:[#allocation2 + $0x18] sm:$0xff] %v2008
        %2017 = vst [vmem:[#allocation2 + $0x20] sm:$0xff] %v2009
        %2018 = vst [vmem:[#allocation2 + $0x28] sm:$0xff] %v2010
        %2019 = vst [vmem:[#allocation2 + $0x30] sm:$0xff] %v2011
        %2020 = vst [vmem:[#allocation2 + $0x38] sm:$0xff] %v2012
      $region44: #{down_block_forward.6} parent=35 // pred_fallthru
        _
      %p2021 = scmp.eq.s32.totalorder %s22, 2
      // Predicated region
      $region45: #{down_block_forward.6} parent=35 // pred_check
        %p2022 = pneg %p2021
      $region46: #{down_block_forward.6} parent=35 // pred_check_branch
        %2024 = sbr.rel (%p2022) target = $region48
      $region47: #{down_block_forward.6} parent=35 // pred_region
        %v2025 = vld [vmem:[#allocation2] sm:$0xff]
        %v2026 = vld [vmem:[#allocation2 + $0x8] sm:$0xff]
        %v2027 = vld [vmem:[#allocation2 + $0x10] sm:$0xff]
        %v2028 = vld [vmem:[#allocation2 + $0x18] sm:$0xff]
        %v2029 = vld [vmem:[#allocation2 + $0x20] sm:$0xff]
        %v2030 = vld [vmem:[#allocation2 + $0x28] sm:$0xff]
        %v2031 = vld [vmem:[#allocation2 + $0x30] sm:$0xff]
        %v2032 = vld [vmem:[#allocation2 + $0x38] sm:$0xff]
        %v2033 = vld [vmem:[%s2] sm:$0x1]
        %v2035 = vperm.slane %v2033, 0
        %v2037 = vadd.f32 %v2025, %v2035
        %v2038 = vadd.f32 %v2026, %v2035
        %v2039 = vadd.f32 %v2027, %v2035
        %v2040 = vadd.f32 %v2028, %v2035
        %v2041 = vadd.f32 %v2029, %v2035
        %v2042 = vadd.f32 %v2030, %v2035
        %v2043 = vadd.f32 %v2031, %v2035
        %v2044 = vadd.f32 %v2032, %v2035
        %v2045 = vmax.f32 %v2037, 0.0
        %v2046 = vmax.f32 %v2038, 0.0
        %v2047 = vmax.f32 %v2039, 0.0
        %v2048 = vmax.f32 %v2040, 0.0
        %v2049 = vmax.f32 %v2041, 0.0
        %v2050 = vmax.f32 %v2042, 0.0
        %v2051 = vmax.f32 %v2043, 0.0
        %v2052 = vmax.f32 %v2044, 0.0
        %s2053 = scalar_lea.vmem %s278, 8
        %v2054 = vld [vmem:[%s2053] sm:$0xf]
        %v2055 = vld [vmem:[%s2053 + $0x4] sm:$0x1]
        %v2056 = vld [vmem:[%s2053 + $0x8] sm:$0xf]
        %v2057 = vld [vmem:[%s2053 + $0xc] sm:$0x1]
        %v2058 = vld [vmem:[%s2053 + $0x10] sm:$0xf]
        %v2059 = vld [vmem:[%s2053 + $0x14] sm:$0x1]
        %v2060 = vld [vmem:[%s2053 + $0x18] sm:$0xf]
        %v2061 = vld [vmem:[%s2053 + $0x1c] sm:$0x1]
        %v2062 = vld [vmem:[%s2053 + $0x20] sm:$0xf]
        %v2063 = vld [vmem:[%s2053 + $0x24] sm:$0x1]
        %v2064 = vld [vmem:[%s2053 + $0x28] sm:$0xf]
        %v2065 = vld [vmem:[%s2053 + $0x2c] sm:$0x1]
        %v2066 = vld [vmem:[%s2053 + $0x30] sm:$0xf]
        %v2067 = vld [vmem:[%s2053 + $0x34] sm:$0x1]
        %v2068 = vld [vmem:[%s2053 + $0x38] sm:$0xf]
        %v2069 = vld [vmem:[%s2053 + $0x3c] sm:$0x1]
        %vm2070 = vsmask.f32 3328
        %vm2071 = vsmask.f32 7440
        %vm2072 = vmor %vm2070, %vm2071
        %v2074 = vshrl.u32 %v2054, 16
        %v2076 = vrot.slane %v2074, 4
        %v2077 = vshll.u32 %v2054, 16
        %v2079 = vrot.slane %v2077, 5
        %v2080 = vor.u32 %v2076, %v2079
        %v2081 = vrot.slane %v2080, 4
        %v2083 = vshll.u32 %v2055, 16
        %v2085 = vrot.slane %v2083, 5
        %v2086 = vsel %vm2072, %v2081, %v2085
        %v2088 = vshrl.u32 %v2056, 16
        %v2090 = vrot.slane %v2088, 4
        %v2091 = vshll.u32 %v2056, 16
        %v2093 = vrot.slane %v2091, 5
        %v2094 = vor.u32 %v2090, %v2093
        %v2095 = vrot.slane %v2094, 4
        %v2097 = vshll.u32 %v2057, 16
        %v2099 = vrot.slane %v2097, 5
        %v2100 = vsel %vm2072, %v2095, %v2099
        %v2102 = vshrl.u32 %v2058, 16
        %v2104 = vrot.slane %v2102, 4
        %v2105 = vshll.u32 %v2058, 16
        %v2107 = vrot.slane %v2105, 5
        %v2108 = vor.u32 %v2104, %v2107
        %v2109 = vrot.slane %v2108, 4
        %v2111 = vshll.u32 %v2059, 16
        %v2113 = vrot.slane %v2111, 5
        %v2114 = vsel %vm2072, %v2109, %v2113
        %v2116 = vshrl.u32 %v2060, 16
        %v2118 = vrot.slane %v2116, 4
        %v2119 = vshll.u32 %v2060, 16
        %v2121 = vrot.slane %v2119, 5
        %v2122 = vor.u32 %v2118, %v2121
        %v2123 = vrot.slane %v2122, 4
        %v2125 = vshll.u32 %v2061, 16
        %v2127 = vrot.slane %v2125, 5
        %v2128 = vsel %vm2072, %v2123, %v2127
        %v2130 = vshrl.u32 %v2062, 16
        %v2132 = vrot.slane %v2130, 4
        %v2133 = vshll.u32 %v2062, 16
        %v2135 = vrot.slane %v2133, 5
        %v2136 = vor.u32 %v2132, %v2135
        %v2137 = vrot.slane %v2136, 4
        %v2139 = vshll.u32 %v2063, 16
        %v2141 = vrot.slane %v2139, 5
        %v2142 = vsel %vm2072, %v2137, %v2141
        %v2144 = vshrl.u32 %v2064, 16
        %v2146 = vrot.slane %v2144, 4
        %v2147 = vshll.u32 %v2064, 16
        %v2149 = vrot.slane %v2147, 5
        %v2150 = vor.u32 %v2146, %v2149
        %v2151 = vrot.slane %v2150, 4
        %v2153 = vshll.u32 %v2065, 16
        %v2155 = vrot.slane %v2153, 5
        %v2156 = vsel %vm2072, %v2151, %v2155
        %v2158 = vshrl.u32 %v2066, 16
        %v2160 = vrot.slane %v2158, 4
        %v2161 = vshll.u32 %v2066, 16
        %v2163 = vrot.slane %v2161, 5
        %v2164 = vor.u32 %v2160, %v2163
        %v2165 = vrot.slane %v2164, 4
        %v2167 = vshll.u32 %v2067, 16
        %v2169 = vrot.slane %v2167, 5
        %v2170 = vsel %vm2072, %v2165, %v2169
        %v2172 = vshrl.u32 %v2068, 16
        %v2174 = vrot.slane %v2172, 4
        %v2175 = vshll.u32 %v2068, 16
        %v2177 = vrot.slane %v2175, 5
        %v2178 = vor.u32 %v2174, %v2177
        %v2179 = vrot.slane %v2178, 4
        %v2181 = vshll.u32 %v2069, 16
        %v2183 = vrot.slane %v2181, 5
        %v2184 = vsel %vm2072, %v2179, %v2183
        %v2193 = vunpack.c.l.bf16 %v2086
        %v2194 = vunpack.c.l.bf16 %v2100
        %v2195 = vunpack.c.l.bf16 %v2114
        %v2196 = vunpack.c.l.bf16 %v2128
        %v2197 = vunpack.c.l.bf16 %v2142
        %v2198 = vunpack.c.l.bf16 %v2156
        %v2199 = vunpack.c.l.bf16 %v2170
        %v2200 = vunpack.c.l.bf16 %v2184
        %v2201 = vadd.f32 %v2045, %v2193
        %v2202 = vadd.f32 %v2046, %v2194
        %v2203 = vadd.f32 %v2047, %v2195
        %v2204 = vadd.f32 %v2048, %v2196
        %v2205 = vadd.f32 %v2049, %v2197
        %v2206 = vadd.f32 %v2050, %v2198
        %v2207 = vadd.f32 %v2051, %v2199
        %v2208 = vadd.f32 %v2052, %v2200
        %2209 = vst [vmem:[%s288] sm:$0xff] %v2201
        %2210 = vst [vmem:[%s288 + $0x8] sm:$0xff] %v2202
        %2211 = vst [vmem:[%s288 + $0x10] sm:$0xff] %v2203
        %2212 = vst [vmem:[%s288 + $0x18] sm:$0xff] %v2204
        %2213 = vst [vmem:[%s288 + $0x20] sm:$0xff] %v2205
        %2214 = vst [vmem:[%s288 + $0x28] sm:$0xff] %v2206
        %2215 = vst [vmem:[%s288 + $0x30] sm:$0xff] %v2207
        %2216 = vst [vmem:[%s288 + $0x38] sm:$0xff] %v2208
      $region48: #{down_block_forward.6} parent=35 // pred_fallthru
        _
      %p2217 = scmp.lt.s32.totalorder %s20, 1
      %s2218 = scalar_select %p2217, %s20, 1
      %p2219 = scmp.lt.s32.totalorder %s21, 7
      %s2220 = scalar_select %p2219, %s21, 7
      %s2221 = smul.addr %s2220, 8
      %s2222 = smul.addr %s2218, 64
      %s2223 = sadd.s32 %s2221, %s2222
      %s2224 = smul.addr %s2223, 8
      %s2225 = scalar_lea.vmem %s4, %s2224
      // Predicated region
      $region49: #{down_block_forward.6} parent=35 // pred_check
        %p2226 = pneg %p156
      $region50: #{down_block_forward.6} parent=35 // pred_check_branch
        %2228 = sbr.rel (%p2226) target = $region52
      $region51: #{down_block_forward.6} parent=35 // pred_region
        _
      $region52: #{down_block_forward.6} parent=35 // pred_fallthru
        _
    $region36: #{down_block_forward.6} parent=5 // pred_fallthru
      _
    %p2229 = scmp.le.s32.totalorder 2, %s10
    // Predicated region
    $region53: #{down_block_forward.6} parent=5 // pred_check
      %p2230 = pneg %p2229
    $region54: #{down_block_forward.6} parent=5 // pred_check_branch
      %2232 = sbr.rel (%p2230) target = $region56
    $region55: #{down_block_forward.6} parent=5 // pred_region
      %s2233 = ssub.s32 %s10, 2
      // Predicated region
      $region57: #{down_block_forward.6} parent=55 // pred_check
        %p2234 = pneg %p162
      $region58: #{down_block_forward.6} parent=55 // pred_check_branch
        %2236 = sbr.rel (%p2234) target = $region60
      $region59: #{down_block_forward.6} parent=55 // pred_region
        %p2237 = scmp.lt.s32.totalorder %s23, 1
        %s2238 = scalar_select %p2237, %s23, 1
        %p2239 = scmp.lt.s32.totalorder %s24, 7
        %s2240 = scalar_select %p2239, %s24, 7
        %s2241 = smul.addr %s2240, 8
        %s2242 = smul.addr %s2238, 64
        %s2243 = sadd.s32 %s2241, %s2242
        %s2244 = smul.addr %s2243, 8
        %s2245 = scalar_lea.vmem %s4, %s2244
      $region60: #{down_block_forward.6} parent=55 // pred_fallthru
        _
    $region56: #{down_block_forward.6} parent=5 // pred_fallthru
      _
  $region6: #{down_block_forward.6} parent=0 // loop_footer
    %s14 = sadd.s32 1, %s10
  $region7: #{down_block_forward.6} parent=0 // loop_footer_branch
    %9 = sbr.rel target = $region3
  $region8: #{down_block_forward.6} parent=0 // loop_exit
    _

</llo_original>
